<compile_context>
chip_gen: v7x
topology: tpu7x:2x2x1
jax: 0.10.0
libtpu: 0.0.40
codegen_flags: <defaults>
</compile_context>

<pallas_src>
import jax
import jax.numpy as jnp
from jax import lax
from jax.experimental import pallas as pl
from jax.experimental.pallas import tpu as pltpu

n_embed = 384
num_heads = 6
head_size = n_embed // num_heads  # 64


# ---------------------------------------------------------------------------
# Fused kernel: QKV proj + causal attention (all heads) + output proj + bias
# ---------------------------------------------------------------------------
def fused_mha_kernel(x_ref, wqkv_ref, wproj_ref, b_ref, o_ref):
    Bblk, T, C = x_ref.shape
    hs = head_size
    H = num_heads
    M = Bblk * T  # rows fed to the MXU for the projection matmuls

    # Cast activations to bf16 in-kernel (x arrives f32; no HBM bf16 copy).
    x = x_ref[...].reshape(M, C).astype(jnp.bfloat16)  # (M, C)

    # Fused QKV projection: one (M, C) @ (C, 3C) bf16 MXU matmul, f32 accum.
    # The 1/sqrt(hs) scale is already folded into the W_q columns of wqkv.
    qkv = jnp.dot(x, wqkv_ref[...], preferred_element_type=jnp.float32)  # (M, 3C)

    # bf16 attention operands (single-pass MXU issue); softmax math stays f32.
    q = qkv[:, 0 * C:1 * C].astype(jnp.bfloat16).reshape(Bblk, T, C)
    k = qkv[:, 1 * C:2 * C].astype(jnp.bfloat16).reshape(Bblk, T, C)
    v = qkv[:, 2 * C:3 * C].astype(jnp.bfloat16).reshape(Bblk, T, C)

    # Causal (tril) mask, shared by all heads and all batches in the slab.
    row = lax.broadcasted_iota(jnp.int32, (T, T), 0)
    col = lax.broadcasted_iota(jnp.int32, (T, T), 1)
    causal = col <= row

    # Per-head attention; the projection of the concatenated heads is
    # accumulated as a sum of per-head partial projections on the full M-row
    # slab:  concat(out_0..out_5) @ W_proj == sum_h out_h @ W_proj[h*hs:(h+1)*hs, :]
    proj_acc = jnp.zeros((M, C), jnp.float32)
    for h in range(H):  # static unroll, H = 6
        lo = h * hs
        q_h = q[:, :, lo:lo + hs]  # (Bblk, T, hs) bf16
        k_h = k[:, :, lo:lo + hs]
        v_h = v[:, :, lo:lo + hs]

        # Batched q @ k^T (contract last dims, no explicit transpose).
        s = jnp.einsum('bqd,bkd->bqk', q_h, k_h,
                       preferred_element_type=jnp.float32)      # (Bblk, T, T)
        s = jnp.where(causal, s, -jnp.inf)

        # Numerically stable softmax, all in f32.
        s = s - jnp.max(s, axis=-1, keepdims=True)
        p = jnp.exp(s)
        p = p * pl.reciprocal(jnp.sum(p, axis=-1, keepdims=True), approx=True)

        out_h = jnp.einsum('bqk,bkd->bqd', p.astype(jnp.bfloat16), v_h,
                           preferred_element_type=jnp.float32)   # (Bblk, T, hs)

        # Partial output projection for this head's row-block of W_proj,
        # done on the full (M, hs) slab to keep the MXU rows filled.
        w_h = wproj_ref[lo:lo + hs, :]                           # (hs, C) bf16
        proj_acc = proj_acc + jnp.dot(
            out_h.reshape(M, hs).astype(jnp.bfloat16), w_h,
            preferred_element_type=jnp.float32)

    out = proj_acc + b_ref[...]                                  # f32 bias add
    o_ref[...] = out.reshape(Bblk, T, C).astype(o_ref.dtype)


# ---------------------------------------------------------------------------
# One-time parameter prep (hoisted out of the per-call hot path)
# ---------------------------------------------------------------------------
def prepare_params(wq, wk, wv, w_proj, b_proj):
    """wq/wk/wv/w_proj stored transposed (y = x @ w); returns bf16 fused weights.

    Folds the attention scale 1/sqrt(head_size) into W_q so the kernel never
    multiplies the (T,T) score matrix by the scale.
    """
    scale = head_size ** -0.5
    w_qkv = jnp.concatenate([wq * scale, wk, wv], axis=1).astype(jnp.bfloat16)
    return w_qkv, w_proj.astype(jnp.bfloat16), b_proj.astype(jnp.float32)


def _choose_block_b(B, T, target_rows=256):
    """Largest divisor of B such that Bblk*T reaches ~256 MXU rows while
    keeping >= 2 grid steps (so 'parallel' can use both v7x TensorCores)."""
    best = 1
    for cand in range(1, B + 1):
        if B % cand != 0:
            continue
        if B >= 2 and B // cand < 2:
            continue
        best = cand
        if cand * T >= target_rows:
            break
    return best


# ---------------------------------------------------------------------------
# Wrapper
# ---------------------------------------------------------------------------
@jax.jit
def multi_head_forward(x, w_qkv, w_proj_bf, b_proj):
    """x: (B, T, C) float32.
    w_qkv:     (C, 3C) bf16 — [W_q*scale | W_k | W_v], from prepare_params.
    w_proj_bf: (C, C)  bf16 — output projection (transposed), from prepare_params.
    b_proj:    (1, C)  f32  — projection bias.
    Returns (B, T, C) bfloat16.
    """
    B, T, C = x.shape
    bblk = _choose_block_b(B, T)
    grid = (B // bblk,)

    return pl.pallas_call(
        fused_mha_kernel,
        out_shape=jax.ShapeDtypeStruct((B, T, C), jnp.bfloat16),
        grid_spec=pltpu.PrefetchScalarGridSpec(
            num_scalar_prefetch=0,
            grid=grid,
            in_specs=[
                # Activations: one (Bblk, T, C) slab per grid step.
                pl.BlockSpec((bblk, T, C), lambda b: (b, 0, 0)),
                # Resident weights/bias: constant index_map -> single-buffered.
                pl.BlockSpec((C, 3 * C), lambda b: (0, 0),
                             pipeline_mode=pl.Buffered(1)),
                pl.BlockSpec((C, C), lambda b: (0, 0),
                             pipeline_mode=pl.Buffered(1)),
                pl.BlockSpec((1, C), lambda b: (0, 0),
                             pipeline_mode=pl.Buffered(1)),
            ],
            out_specs=pl.BlockSpec((bblk, T, C), lambda b: (b, 0, 0)),
        ),
        compiler_params=pltpu.CompilerParams(
            dimension_semantics=("parallel",),       # feed both v7x TensorCores
            vmem_limit_bytes=32 * 1024 * 1024,       # above v5e's 16 MiB default
        ),
    )(x, w_qkv, w_proj_bf, b_proj)


# ---------------------------------------------------------------------------
# Pure-JAX reference (mirrors the kernel's bf16 matmul-operand policy)
# ---------------------------------------------------------------------------
def reference_forward(x, wq, wk, wv, w_proj, b_proj):
    B, T, C = x.shape
    hs = head_size
    x_bf = x.astype(jnp.bfloat16)

    def proj(w):
        return jnp.einsum('btc,cd->btd', x_bf, w.astype(jnp.bfloat16),
                          preferred_element_type=jnp.float32).astype(jnp.bfloat16)

    q, k, v = proj(wq), proj(wk), proj(wv)
    mask = jnp.tril(jnp.ones((T, T), bool))
    outs = []
    for h in range(num_heads):
        lo = h * hs
        qh, kh, vh = q[..., lo:lo + hs], k[..., lo:lo + hs], v[..., lo:lo + hs]
        s = jnp.einsum('btd,bsd->bts', qh, kh,
                       preferred_element_type=jnp.float32) * hs ** -0.5
        s = jnp.where(mask, s, -jnp.inf)
        p = jax.nn.softmax(s, axis=-1).astype(jnp.bfloat16)
        outs.append(jnp.einsum('bts,bsd->btd', p, vh,
                               preferred_element_type=jnp.float32))
    att = jnp.concatenate(outs, axis=-1).astype(jnp.bfloat16)
    return jnp.einsum('btc,cd->btd', att, w_proj.astype(jnp.bfloat16),
                      preferred_element_type=jnp.float32) + b_proj


if __name__ == "__main__":
    B, T = 8, 32  # small; 8/Bblk=2 grid steps of 128 rows each fill the MXU

    key = jax.random.PRNGKey(0)
    kx, kq, kk, kv, kw, kb = jax.random.split(key, 6)

    x = jax.random.normal(kx, (B, T, n_embed), dtype=jnp.float32)

    # Per-head weights stored transposed + head-stacked: (C, H*hs) = (384, 384).
    scale = n_embed ** -0.5
    wq = jax.random.normal(kq, (n_embed, n_embed), jnp.float32) * scale
    wk = jax.random.normal(kk, (n_embed, n_embed), jnp.float32) * scale
    wv = jax.random.normal(kv, (n_embed, n_embed), jnp.float32) * scale

    # Output projection: stored transposed (C, C) plus bias (1, C).
    w_proj = jax.random.normal(kw, (n_embed, n_embed), jnp.float32) * scale
    b_proj = jax.random.normal(kb, (1, n_embed), jnp.float32) * 0.01

    # One-time parameter prep (hoisted out of the hot path).
    w_qkv, w_proj_bf, b_proj_f32 = prepare_params(wq, wk, wv, w_proj, b_proj)
    w_qkv = jax.block_until_ready(w_qkv)

    out = multi_head_forward(x, w_qkv, w_proj_bf, b_proj_f32)
    out = jax.block_until_ready(out)
    assert out.shape == (B, T, n_embed)
    assert out.dtype == jnp.bfloat16

    ref = reference_forward(x, wq, wk, wv, w_proj, b_proj)
    max_err = float(jnp.max(jnp.abs(out.astype(jnp.float32) - ref)))
    assert max_err < 5e-2, f"max abs error vs reference: {max_err}"

    print("KERNEL_OK")
</pallas_src>

<mosaic_0001>
module attributes {stable_mosaic.version = 11 : i64} {
  func.func @fused_mha_kernel(%arg0: i32, %arg1: memref<4x32x384xf32, #tpu.memory_space<vmem>>, %arg2: memref<384x1152xbf16, #tpu.memory_space<vmem>>, %arg3: memref<384x384xbf16, #tpu.memory_space<vmem>>, %arg4: memref<1x384xf32, #tpu.memory_space<vmem>>, %arg5: memref<4x32x384xbf16, #tpu.memory_space<vmem>>) attributes {dimension_semantics = [#tpu.dimension_semantics<parallel>], iteration_bounds = array<i64: 2>, scalar_prefetch = 0 : i64, scratch_operands = 0 : i64, tpu.core_type = #tpu.core_type<tc>, window_params = [{transform_indices = @transform_0, window_bounds = array<i64: 4, 32, 384>}, {pipeline_mode = #tpu.pipeline_mode<synchronous>, transform_indices = @transform_1, window_bounds = array<i64: 384, 1152>}, {pipeline_mode = #tpu.pipeline_mode<synchronous>, transform_indices = @transform_2, window_bounds = array<i64: 384, 384>}, {pipeline_mode = #tpu.pipeline_mode<synchronous>, transform_indices = @transform_3, window_bounds = array<i64: 1, 384>}, {transform_indices = @transform_4, window_bounds = array<i64: 4, 32, 384>}]} {
    %c0 = arith.constant 0 : index
    %c0_0 = arith.constant 0 : index
    %c0_1 = arith.constant 0 : index
    %0 = vector.load %arg1[%c0, %c0_0, %c0_1] : memref<4x32x384xf32, #tpu.memory_space<vmem>>, vector<4x32x384xf32>
    %1 = vector.shape_cast %0 : vector<4x32x384xf32> to vector<128x384xf32>
    %2 = arith.truncf %1 : vector<128x384xf32> to vector<128x384xbf16>
    %c0_2 = arith.constant 0 : index
    %c0_3 = arith.constant 0 : index
    %3 = vector.load %arg2[%c0_2, %c0_3] : memref<384x1152xbf16, #tpu.memory_space<vmem>>, vector<384x1152xbf16>
    %cst = arith.constant dense<0.000000e+00> : vector<128x1152xf32>
    %4 = tpu.matmul %2, %3, %cst {dimension_numbers = #tpu.dot_dimension_numbers<[1], [0], [0], [1], [0, 0, 1, 1], [], []>} : vector<128x384xbf16>, vector<384x1152xbf16>, vector<128x1152xf32> -> vector<128x1152xf32>
    %5 = vector.extract_strided_slice %4 {offsets = [0, 0], sizes = [128, 384], strides = [1, 1]} : vector<128x1152xf32> to vector<128x384xf32>
    %6 = arith.truncf %5 : vector<128x384xf32> to vector<128x384xbf16>
    %7 = vector.shape_cast %6 : vector<128x384xbf16> to vector<4x32x384xbf16>
    %8 = vector.extract_strided_slice %4 {offsets = [0, 384], sizes = [128, 384], strides = [1, 1]} : vector<128x1152xf32> to vector<128x384xf32>
    %9 = arith.truncf %8 : vector<128x384xf32> to vector<128x384xbf16>
    %10 = vector.shape_cast %9 : vector<128x384xbf16> to vector<4x32x384xbf16>
    %11 = vector.extract_strided_slice %4 {offsets = [0, 768], sizes = [128, 384], strides = [1, 1]} : vector<128x1152xf32> to vector<128x384xf32>
    %12 = arith.truncf %11 : vector<128x384xf32> to vector<128x384xbf16>
    %13 = vector.shape_cast %12 : vector<128x384xbf16> to vector<4x32x384xbf16>
    %14 = tpu.iota {dimensions = array<i32: 0>} : vector<32x32xi32>
    %15 = tpu.iota {dimensions = array<i32: 1>} : vector<32x32xi32>
    %16 = arith.cmpi sle, %15, %14 : vector<32x32xi32>
    %cst_4 = arith.constant 0.000000e+00 : f32
    %17 = vector.broadcast %cst_4 : f32 to vector<128x384xf32>
    %18 = vector.extract_strided_slice %7 {offsets = [0, 0, 0], sizes = [4, 32, 64], strides = [1, 1, 1]} : vector<4x32x384xbf16> to vector<4x32x64xbf16>
    %19 = vector.extract_strided_slice %10 {offsets = [0, 0, 0], sizes = [4, 32, 64], strides = [1, 1, 1]} : vector<4x32x384xbf16> to vector<4x32x64xbf16>
    %20 = vector.extract_strided_slice %13 {offsets = [0, 0, 0], sizes = [4, 32, 64], strides = [1, 1, 1]} : vector<4x32x384xbf16> to vector<4x32x64xbf16>
    "tpu.trace_start"() <{level = 10 : i32, message = "bqd,bkd->bqk"}> : () -> ()
    %cst_5 = arith.constant dense<0.000000e+00> : vector<4x32x32xf32>
    %21 = tpu.matmul %18, %19, %cst_5 {dimension_numbers = #tpu.dot_dimension_numbers<[2], [2], [1], [1], [0, 0, 0, 1, 1, 1], [0], [0]>} : vector<4x32x64xbf16>, vector<4x32x64xbf16>, vector<4x32x32xf32> -> vector<4x32x32xf32>
    %cst_6 = arith.constant 0xFF800000 : f32
    "tpu.trace_stop"() : () -> ()
    %22 = vector.shape_cast %16 : vector<32x32xi1> to vector<1x32x32xi1>
    %23 = vector.broadcast %22 : vector<1x32x32xi1> to vector<4x32x32xi1>
    %24 = vector.broadcast %cst_6 : f32 to vector<4x32x32xf32>
    %25 = arith.select %23, %21, %24 : vector<4x32x32xi1>, vector<4x32x32xf32>
    %cst_7 = arith.constant dense<0xFF800000> : vector<4x32xf32>
    %26 = vector.multi_reduction <maximumf>, %25, %cst_7 [2] : vector<4x32x32xf32> to vector<4x32xf32>
    %27 = vector.shape_cast %26 : vector<4x32xf32> to vector<4x32x1xf32>
    %28 = vector.broadcast %27 : vector<4x32x1xf32> to vector<4x32x32xf32>
    %29 = arith.subf %25, %28 : vector<4x32x32xf32>
    %30 = math.exp %29 : vector<4x32x32xf32>
    %cst_8 = arith.constant dense<0.000000e+00> : vector<4x32xf32>
    %31 = vector.multi_reduction <add>, %30, %cst_8 [2] : vector<4x32x32xf32> to vector<4x32xf32>
    %32 = vector.shape_cast %31 : vector<4x32xf32> to vector<4x32x1xf32>
    %33 = tpu.reciprocal %32 {approx = true} : vector<4x32x1xf32> -> vector<4x32x1xf32>
    %34 = vector.broadcast %33 : vector<4x32x1xf32> to vector<4x32x32xf32>
    %35 = arith.mulf %30, %34 : vector<4x32x32xf32>
    %36 = arith.truncf %35 : vector<4x32x32xf32> to vector<4x32x32xbf16>
    "tpu.trace_start"() <{level = 10 : i32, message = "bqk,bkd->bqd"}> : () -> ()
    %cst_9 = arith.constant dense<0.000000e+00> : vector<4x32x64xf32>
    %37 = tpu.matmul %36, %20, %cst_9 {dimension_numbers = #tpu.dot_dimension_numbers<[2], [1], [1], [2], [0, 0, 0, 1, 1, 2], [0], [0]>} : vector<4x32x32xbf16>, vector<4x32x64xbf16>, vector<4x32x64xf32> -> vector<4x32x64xf32>
    "tpu.trace_stop"() : () -> ()
    %c0_10 = arith.constant 0 : index
    %c0_11 = arith.constant 0 : index
    %38 = vector.load %arg3[%c0_10, %c0_11] : memref<384x384xbf16, #tpu.memory_space<vmem>>, vector<64x384xbf16>
    %39 = vector.shape_cast %37 : vector<4x32x64xf32> to vector<128x64xf32>
    %40 = arith.truncf %39 : vector<128x64xf32> to vector<128x64xbf16>
    %cst_12 = arith.constant dense<0.000000e+00> : vector<128x384xf32>
    %41 = tpu.matmul %40, %38, %cst_12 {dimension_numbers = #tpu.dot_dimension_numbers<[1], [0], [0], [1], [0, 0, 1, 1], [], []>} : vector<128x64xbf16>, vector<64x384xbf16>, vector<128x384xf32> -> vector<128x384xf32>
    %42 = arith.addf %17, %41 : vector<128x384xf32>
    %43 = vector.extract_strided_slice %7 {offsets = [0, 0, 64], sizes = [4, 32, 64], strides = [1, 1, 1]} : vector<4x32x384xbf16> to vector<4x32x64xbf16>
    %44 = vector.extract_strided_slice %10 {offsets = [0, 0, 64], sizes = [4, 32, 64], strides = [1, 1, 1]} : vector<4x32x384xbf16> to vector<4x32x64xbf16>
    %45 = vector.extract_strided_slice %13 {offsets = [0, 0, 64], sizes = [4, 32, 64], strides = [1, 1, 1]} : vector<4x32x384xbf16> to vector<4x32x64xbf16>
    "tpu.trace_start"() <{level = 10 : i32, message = "bqd,bkd->bqk"}> : () -> ()
    %cst_13 = arith.constant dense<0.000000e+00> : vector<4x32x32xf32>
    %46 = tpu.matmul %43, %44, %cst_13 {dimension_numbers = #tpu.dot_dimension_numbers<[2], [2], [1], [1], [0, 0, 0, 1, 1, 1], [0], [0]>} : vector<4x32x64xbf16>, vector<4x32x64xbf16>, vector<4x32x32xf32> -> vector<4x32x32xf32>
    %cst_14 = arith.constant 0xFF800000 : f32
    "tpu.trace_stop"() : () -> ()
    %47 = vector.shape_cast %16 : vector<32x32xi1> to vector<1x32x32xi1>
    %48 = vector.broadcast %47 : vector<1x32x32xi1> to vector<4x32x32xi1>
    %49 = vector.broadcast %cst_14 : f32 to vector<4x32x32xf32>
    %50 = arith.select %48, %46, %49 : vector<4x32x32xi1>, vector<4x32x32xf32>
    %cst_15 = arith.constant dense<0xFF800000> : vector<4x32xf32>
    %51 = vector.multi_reduction <maximumf>, %50, %cst_15 [2] : vector<4x32x32xf32> to vector<4x32xf32>
    %52 = vector.shape_cast %51 : vector<4x32xf32> to vector<4x32x1xf32>
    %53 = vector.broadcast %52 : vector<4x32x1xf32> to vector<4x32x32xf32>
    %54 = arith.subf %50, %53 : vector<4x32x32xf32>
    %55 = math.exp %54 : vector<4x32x32xf32>
    %cst_16 = arith.constant dense<0.000000e+00> : vector<4x32xf32>
    %56 = vector.multi_reduction <add>, %55, %cst_16 [2] : vector<4x32x32xf32> to vector<4x32xf32>
    %57 = vector.shape_cast %56 : vector<4x32xf32> to vector<4x32x1xf32>
    %58 = tpu.reciprocal %57 {approx = true} : vector<4x32x1xf32> -> vector<4x32x1xf32>
    %59 = vector.broadcast %58 : vector<4x32x1xf32> to vector<4x32x32xf32>
    %60 = arith.mulf %55, %59 : vector<4x32x32xf32>
    %61 = arith.truncf %60 : vector<4x32x32xf32> to vector<4x32x32xbf16>
    "tpu.trace_start"() <{level = 10 : i32, message = "bqk,bkd->bqd"}> : () -> ()
    %cst_17 = arith.constant dense<0.000000e+00> : vector<4x32x64xf32>
    %62 = tpu.matmul %61, %45, %cst_17 {dimension_numbers = #tpu.dot_dimension_numbers<[2], [1], [1], [2], [0, 0, 0, 1, 1, 2], [0], [0]>} : vector<4x32x32xbf16>, vector<4x32x64xbf16>, vector<4x32x64xf32> -> vector<4x32x64xf32>
    "tpu.trace_stop"() : () -> ()
    %c64 = arith.constant 64 : index
    %c0_18 = arith.constant 0 : index
    %63 = vector.load %arg3[%c64, %c0_18] : memref<384x384xbf16, #tpu.memory_space<vmem>>, vector<64x384xbf16>
    %64 = vector.shape_cast %62 : vector<4x32x64xf32> to vector<128x64xf32>
    %65 = arith.truncf %64 : vector<128x64xf32> to vector<128x64xbf16>
    %cst_19 = arith.constant dense<0.000000e+00> : vector<128x384xf32>
    %66 = tpu.matmul %65, %63, %cst_19 {dimension_numbers = #tpu.dot_dimension_numbers<[1], [0], [0], [1], [0, 0, 1, 1], [], []>} : vector<128x64xbf16>, vector<64x384xbf16>, vector<128x384xf32> -> vector<128x384xf32>
    %67 = arith.addf %42, %66 : vector<128x384xf32>
    %68 = vector.extract_strided_slice %7 {offsets = [0, 0, 128], sizes = [4, 32, 64], strides = [1, 1, 1]} : vector<4x32x384xbf16> to vector<4x32x64xbf16>
    %69 = vector.extract_strided_slice %10 {offsets = [0, 0, 128], sizes = [4, 32, 64], strides = [1, 1, 1]} : vector<4x32x384xbf16> to vector<4x32x64xbf16>
    %70 = vector.extract_strided_slice %13 {offsets = [0, 0, 128], sizes = [4, 32, 64], strides = [1, 1, 1]} : vector<4x32x384xbf16> to vector<4x32x64xbf16>
    "tpu.trace_start"() <{level = 10 : i32, message = "bqd,bkd->bqk"}> : () -> ()
    %cst_20 = arith.constant dense<0.000000e+00> : vector<4x32x32xf32>
    %71 = tpu.matmul %68, %69, %cst_20 {dimension_numbers = #tpu.dot_dimension_numbers<[2], [2], [1], [1], [0, 0, 0, 1, 1, 1], [0], [0]>} : vector<4x32x64xbf16>, vector<4x32x64xbf16>, vector<4x32x32xf32> -> vector<4x32x32xf32>
    %cst_21 = arith.constant 0xFF800000 : f32
    "tpu.trace_stop"() : () -> ()
    %72 = vector.shape_cast %16 : vector<32x32xi1> to vector<1x32x32xi1>
    %73 = vector.broadcast %72 : vector<1x32x32xi1> to vector<4x32x32xi1>
    %74 = vector.broadcast %cst_21 : f32 to vector<4x32x32xf32>
    %75 = arith.select %73, %71, %74 : vector<4x32x32xi1>, vector<4x32x32xf32>
    %cst_22 = arith.constant dense<0xFF800000> : vector<4x32xf32>
    %76 = vector.multi_reduction <maximumf>, %75, %cst_22 [2] : vector<4x32x32xf32> to vector<4x32xf32>
    %77 = vector.shape_cast %76 : vector<4x32xf32> to vector<4x32x1xf32>
    %78 = vector.broadcast %77 : vector<4x32x1xf32> to vector<4x32x32xf32>
    %79 = arith.subf %75, %78 : vector<4x32x32xf32>
    %80 = math.exp %79 : vector<4x32x32xf32>
    %cst_23 = arith.constant dense<0.000000e+00> : vector<4x32xf32>
    %81 = vector.multi_reduction <add>, %80, %cst_23 [2] : vector<4x32x32xf32> to vector<4x32xf32>
    %82 = vector.shape_cast %81 : vector<4x32xf32> to vector<4x32x1xf32>
    %83 = tpu.reciprocal %82 {approx = true} : vector<4x32x1xf32> -> vector<4x32x1xf32>
    %84 = vector.broadcast %83 : vector<4x32x1xf32> to vector<4x32x32xf32>
    %85 = arith.mulf %80, %84 : vector<4x32x32xf32>
    %86 = arith.truncf %85 : vector<4x32x32xf32> to vector<4x32x32xbf16>
    "tpu.trace_start"() <{level = 10 : i32, message = "bqk,bkd->bqd"}> : () -> ()
    %cst_24 = arith.constant dense<0.000000e+00> : vector<4x32x64xf32>
    %87 = tpu.matmul %86, %70, %cst_24 {dimension_numbers = #tpu.dot_dimension_numbers<[2], [1], [1], [2], [0, 0, 0, 1, 1, 2], [0], [0]>} : vector<4x32x32xbf16>, vector<4x32x64xbf16>, vector<4x32x64xf32> -> vector<4x32x64xf32>
    "tpu.trace_stop"() : () -> ()
    %c128 = arith.constant 128 : index
    %c0_25 = arith.constant 0 : index
    %88 = vector.load %arg3[%c128, %c0_25] : memref<384x384xbf16, #tpu.memory_space<vmem>>, vector<64x384xbf16>
    %89 = vector.shape_cast %87 : vector<4x32x64xf32> to vector<128x64xf32>
    %90 = arith.truncf %89 : vector<128x64xf32> to vector<128x64xbf16>
    %cst_26 = arith.constant dense<0.000000e+00> : vector<128x384xf32>
    %91 = tpu.matmul %90, %88, %cst_26 {dimension_numbers = #tpu.dot_dimension_numbers<[1], [0], [0], [1], [0, 0, 1, 1], [], []>} : vector<128x64xbf16>, vector<64x384xbf16>, vector<128x384xf32> -> vector<128x384xf32>
    %92 = arith.addf %67, %91 : vector<128x384xf32>
    %93 = vector.extract_strided_slice %7 {offsets = [0, 0, 192], sizes = [4, 32, 64], strides = [1, 1, 1]} : vector<4x32x384xbf16> to vector<4x32x64xbf16>
    %94 = vector.extract_strided_slice %10 {offsets = [0, 0, 192], sizes = [4, 32, 64], strides = [1, 1, 1]} : vector<4x32x384xbf16> to vector<4x32x64xbf16>
    %95 = vector.extract_strided_slice %13 {offsets = [0, 0, 192], sizes = [4, 32, 64], strides = [1, 1, 1]} : vector<4x32x384xbf16> to vector<4x32x64xbf16>
    "tpu.trace_start"() <{level = 10 : i32, message = "bqd,bkd->bqk"}> : () -> ()
    %cst_27 = arith.constant dense<0.000000e+00> : vector<4x32x32xf32>
    %96 = tpu.matmul %93, %94, %cst_27 {dimension_numbers = #tpu.dot_dimension_numbers<[2], [2], [1], [1], [0, 0, 0, 1, 1, 1], [0], [0]>} : vector<4x32x64xbf16>, vector<4x32x64xbf16>, vector<4x32x32xf32> -> vector<4x32x32xf32>
    %cst_28 = arith.constant 0xFF800000 : f32
    "tpu.trace_stop"() : () -> ()
    %97 = vector.shape_cast %16 : vector<32x32xi1> to vector<1x32x32xi1>
    %98 = vector.broadcast %97 : vector<1x32x32xi1> to vector<4x32x32xi1>
    %99 = vector.broadcast %cst_28 : f32 to vector<4x32x32xf32>
    %100 = arith.select %98, %96, %99 : vector<4x32x32xi1>, vector<4x32x32xf32>
    %cst_29 = arith.constant dense<0xFF800000> : vector<4x32xf32>
    %101 = vector.multi_reduction <maximumf>, %100, %cst_29 [2] : vector<4x32x32xf32> to vector<4x32xf32>
    %102 = vector.shape_cast %101 : vector<4x32xf32> to vector<4x32x1xf32>
    %103 = vector.broadcast %102 : vector<4x32x1xf32> to vector<4x32x32xf32>
    %104 = arith.subf %100, %103 : vector<4x32x32xf32>
    %105 = math.exp %104 : vector<4x32x32xf32>
    %cst_30 = arith.constant dense<0.000000e+00> : vector<4x32xf32>
    %106 = vector.multi_reduction <add>, %105, %cst_30 [2] : vector<4x32x32xf32> to vector<4x32xf32>
    %107 = vector.shape_cast %106 : vector<4x32xf32> to vector<4x32x1xf32>
    %108 = tpu.reciprocal %107 {approx = true} : vector<4x32x1xf32> -> vector<4x32x1xf32>
    %109 = vector.broadcast %108 : vector<4x32x1xf32> to vector<4x32x32xf32>
    %110 = arith.mulf %105, %109 : vector<4x32x32xf32>
    %111 = arith.truncf %110 : vector<4x32x32xf32> to vector<4x32x32xbf16>
    "tpu.trace_start"() <{level = 10 : i32, message = "bqk,bkd->bqd"}> : () -> ()
    %cst_31 = arith.constant dense<0.000000e+00> : vector<4x32x64xf32>
    %112 = tpu.matmul %111, %95, %cst_31 {dimension_numbers = #tpu.dot_dimension_numbers<[2], [1], [1], [2], [0, 0, 0, 1, 1, 2], [0], [0]>} : vector<4x32x32xbf16>, vector<4x32x64xbf16>, vector<4x32x64xf32> -> vector<4x32x64xf32>
    "tpu.trace_stop"() : () -> ()
    %c192 = arith.constant 192 : index
    %c0_32 = arith.constant 0 : index
    %113 = vector.load %arg3[%c192, %c0_32] : memref<384x384xbf16, #tpu.memory_space<vmem>>, vector<64x384xbf16>
    %114 = vector.shape_cast %112 : vector<4x32x64xf32> to vector<128x64xf32>
    %115 = arith.truncf %114 : vector<128x64xf32> to vector<128x64xbf16>
    %cst_33 = arith.constant dense<0.000000e+00> : vector<128x384xf32>
    %116 = tpu.matmul %115, %113, %cst_33 {dimension_numbers = #tpu.dot_dimension_numbers<[1], [0], [0], [1], [0, 0, 1, 1], [], []>} : vector<128x64xbf16>, vector<64x384xbf16>, vector<128x384xf32> -> vector<128x384xf32>
    %117 = arith.addf %92, %116 : vector<128x384xf32>
    %118 = vector.extract_strided_slice %7 {offsets = [0, 0, 256], sizes = [4, 32, 64], strides = [1, 1, 1]} : vector<4x32x384xbf16> to vector<4x32x64xbf16>
    %119 = vector.extract_strided_slice %10 {offsets = [0, 0, 256], sizes = [4, 32, 64], strides = [1, 1, 1]} : vector<4x32x384xbf16> to vector<4x32x64xbf16>
    %120 = vector.extract_strided_slice %13 {offsets = [0, 0, 256], sizes = [4, 32, 64], strides = [1, 1, 1]} : vector<4x32x384xbf16> to vector<4x32x64xbf16>
    "tpu.trace_start"() <{level = 10 : i32, message = "bqd,bkd->bqk"}> : () -> ()
    %cst_34 = arith.constant dense<0.000000e+00> : vector<4x32x32xf32>
    %121 = tpu.matmul %118, %119, %cst_34 {dimension_numbers = #tpu.dot_dimension_numbers<[2], [2], [1], [1], [0, 0, 0, 1, 1, 1], [0], [0]>} : vector<4x32x64xbf16>, vector<4x32x64xbf16>, vector<4x32x32xf32> -> vector<4x32x32xf32>
    %cst_35 = arith.constant 0xFF800000 : f32
    "tpu.trace_stop"() : () -> ()
    %122 = vector.shape_cast %16 : vector<32x32xi1> to vector<1x32x32xi1>
    %123 = vector.broadcast %122 : vector<1x32x32xi1> to vector<4x32x32xi1>
    %124 = vector.broadcast %cst_35 : f32 to vector<4x32x32xf32>
    %125 = arith.select %123, %121, %124 : vector<4x32x32xi1>, vector<4x32x32xf32>
    %cst_36 = arith.constant dense<0xFF800000> : vector<4x32xf32>
    %126 = vector.multi_reduction <maximumf>, %125, %cst_36 [2] : vector<4x32x32xf32> to vector<4x32xf32>
    %127 = vector.shape_cast %126 : vector<4x32xf32> to vector<4x32x1xf32>
    %128 = vector.broadcast %127 : vector<4x32x1xf32> to vector<4x32x32xf32>
    %129 = arith.subf %125, %128 : vector<4x32x32xf32>
    %130 = math.exp %129 : vector<4x32x32xf32>
    %cst_37 = arith.constant dense<0.000000e+00> : vector<4x32xf32>
    %131 = vector.multi_reduction <add>, %130, %cst_37 [2] : vector<4x32x32xf32> to vector<4x32xf32>
    %132 = vector.shape_cast %131 : vector<4x32xf32> to vector<4x32x1xf32>
    %133 = tpu.reciprocal %132 {approx = true} : vector<4x32x1xf32> -> vector<4x32x1xf32>
    %134 = vector.broadcast %133 : vector<4x32x1xf32> to vector<4x32x32xf32>
    %135 = arith.mulf %130, %134 : vector<4x32x32xf32>
    %136 = arith.truncf %135 : vector<4x32x32xf32> to vector<4x32x32xbf16>
    "tpu.trace_start"() <{level = 10 : i32, message = "bqk,bkd->bqd"}> : () -> ()
    %cst_38 = arith.constant dense<0.000000e+00> : vector<4x32x64xf32>
    %137 = tpu.matmul %136, %120, %cst_38 {dimension_numbers = #tpu.dot_dimension_numbers<[2], [1], [1], [2], [0, 0, 0, 1, 1, 2], [0], [0]>} : vector<4x32x32xbf16>, vector<4x32x64xbf16>, vector<4x32x64xf32> -> vector<4x32x64xf32>
    "tpu.trace_stop"() : () -> ()
    %c256 = arith.constant 256 : index
    %c0_39 = arith.constant 0 : index
    %138 = vector.load %arg3[%c256, %c0_39] : memref<384x384xbf16, #tpu.memory_space<vmem>>, vector<64x384xbf16>
    %139 = vector.shape_cast %137 : vector<4x32x64xf32> to vector<128x64xf32>
    %140 = arith.truncf %139 : vector<128x64xf32> to vector<128x64xbf16>
    %cst_40 = arith.constant dense<0.000000e+00> : vector<128x384xf32>
    %141 = tpu.matmul %140, %138, %cst_40 {dimension_numbers = #tpu.dot_dimension_numbers<[1], [0], [0], [1], [0, 0, 1, 1], [], []>} : vector<128x64xbf16>, vector<64x384xbf16>, vector<128x384xf32> -> vector<128x384xf32>
    %142 = arith.addf %117, %141 : vector<128x384xf32>
    %143 = vector.extract_strided_slice %7 {offsets = [0, 0, 320], sizes = [4, 32, 64], strides = [1, 1, 1]} : vector<4x32x384xbf16> to vector<4x32x64xbf16>
    %144 = vector.extract_strided_slice %10 {offsets = [0, 0, 320], sizes = [4, 32, 64], strides = [1, 1, 1]} : vector<4x32x384xbf16> to vector<4x32x64xbf16>
    %145 = vector.extract_strided_slice %13 {offsets = [0, 0, 320], sizes = [4, 32, 64], strides = [1, 1, 1]} : vector<4x32x384xbf16> to vector<4x32x64xbf16>
    "tpu.trace_start"() <{level = 10 : i32, message = "bqd,bkd->bqk"}> : () -> ()
    %cst_41 = arith.constant dense<0.000000e+00> : vector<4x32x32xf32>
    %146 = tpu.matmul %143, %144, %cst_41 {dimension_numbers = #tpu.dot_dimension_numbers<[2], [2], [1], [1], [0, 0, 0, 1, 1, 1], [0], [0]>} : vector<4x32x64xbf16>, vector<4x32x64xbf16>, vector<4x32x32xf32> -> vector<4x32x32xf32>
    %cst_42 = arith.constant 0xFF800000 : f32
    "tpu.trace_stop"() : () -> ()
    %147 = vector.shape_cast %16 : vector<32x32xi1> to vector<1x32x32xi1>
    %148 = vector.broadcast %147 : vector<1x32x32xi1> to vector<4x32x32xi1>
    %149 = vector.broadcast %cst_42 : f32 to vector<4x32x32xf32>
    %150 = arith.select %148, %146, %149 : vector<4x32x32xi1>, vector<4x32x32xf32>
    %cst_43 = arith.constant dense<0xFF800000> : vector<4x32xf32>
    %151 = vector.multi_reduction <maximumf>, %150, %cst_43 [2] : vector<4x32x32xf32> to vector<4x32xf32>
    %152 = vector.shape_cast %151 : vector<4x32xf32> to vector<4x32x1xf32>
    %153 = vector.broadcast %152 : vector<4x32x1xf32> to vector<4x32x32xf32>
    %154 = arith.subf %150, %153 : vector<4x32x32xf32>
    %155 = math.exp %154 : vector<4x32x32xf32>
    %cst_44 = arith.constant dense<0.000000e+00> : vector<4x32xf32>
    %156 = vector.multi_reduction <add>, %155, %cst_44 [2] : vector<4x32x32xf32> to vector<4x32xf32>
    %157 = vector.shape_cast %156 : vector<4x32xf32> to vector<4x32x1xf32>
    %158 = tpu.reciprocal %157 {approx = true} : vector<4x32x1xf32> -> vector<4x32x1xf32>
    %159 = vector.broadcast %158 : vector<4x32x1xf32> to vector<4x32x32xf32>
    %160 = arith.mulf %155, %159 : vector<4x32x32xf32>
    %161 = arith.truncf %160 : vector<4x32x32xf32> to vector<4x32x32xbf16>
    "tpu.trace_start"() <{level = 10 : i32, message = "bqk,bkd->bqd"}> : () -> ()
    %cst_45 = arith.constant dense<0.000000e+00> : vector<4x32x64xf32>
    %162 = tpu.matmul %161, %145, %cst_45 {dimension_numbers = #tpu.dot_dimension_numbers<[2], [1], [1], [2], [0, 0, 0, 1, 1, 2], [0], [0]>} : vector<4x32x32xbf16>, vector<4x32x64xbf16>, vector<4x32x64xf32> -> vector<4x32x64xf32>
    "tpu.trace_stop"() : () -> ()
    %c320 = arith.constant 320 : index
    %c0_46 = arith.constant 0 : index
    %163 = vector.load %arg3[%c320, %c0_46] : memref<384x384xbf16, #tpu.memory_space<vmem>>, vector<64x384xbf16>
    %164 = vector.shape_cast %162 : vector<4x32x64xf32> to vector<128x64xf32>
    %165 = arith.truncf %164 : vector<128x64xf32> to vector<128x64xbf16>
    %cst_47 = arith.constant dense<0.000000e+00> : vector<128x384xf32>
    %166 = tpu.matmul %165, %163, %cst_47 {dimension_numbers = #tpu.dot_dimension_numbers<[1], [0], [0], [1], [0, 0, 1, 1], [], []>} : vector<128x64xbf16>, vector<64x384xbf16>, vector<128x384xf32> -> vector<128x384xf32>
    %167 = arith.addf %142, %166 : vector<128x384xf32>
    %c0_48 = arith.constant 0 : index
    %c0_49 = arith.constant 0 : index
    %168 = vector.load %arg4[%c0_48, %c0_49] : memref<1x384xf32, #tpu.memory_space<vmem>>, vector<1x384xf32>
    %169 = vector.broadcast %168 : vector<1x384xf32> to vector<128x384xf32>
    %170 = arith.addf %167, %169 : vector<128x384xf32>
    %171 = vector.shape_cast %170 : vector<128x384xf32> to vector<4x32x384xf32>
    %172 = arith.truncf %171 : vector<4x32x384xf32> to vector<4x32x384xbf16>
    %c0_50 = arith.constant 0 : index
    %c0_51 = arith.constant 0 : index
    %c0_52 = arith.constant 0 : index
    %173 = vector.load %arg5[%c0_50, %c0_51, %c0_52] : memref<4x32x384xbf16, #tpu.memory_space<vmem>>, vector<4x32x384xbf16>
    tpu.vector_store %arg5[%c0_50, %c0_51, %c0_52], %172 {strides = array<i32>} : memref<4x32x384xbf16, #tpu.memory_space<vmem>>, vector<4x32x384xbf16>,
    return
  }
  func.func @transform_0(%arg0: i32) -> (i32, i32, i32) {
    %c0_i32 = arith.constant 0 : i32
    %c0_i32_0 = arith.constant 0 : i32
    %c0_i32_1 = arith.constant 0 : i32
    return %arg0, %c0_i32, %c0_i32_0 : i32, i32, i32
  }
  func.func @transform_1(%arg0: i32) -> (i32, i32) {
    %c0_i32 = arith.constant 0 : i32
    %c0_i32_0 = arith.constant 0 : i32
    %c0_i32_1 = arith.constant 0 : i32
    return %c0_i32, %c0_i32_0 : i32, i32
  }
  func.func @transform_2(%arg0: i32) -> (i32, i32) {
    %c0_i32 = arith.constant 0 : i32
    %c0_i32_0 = arith.constant 0 : i32
    %c0_i32_1 = arith.constant 0 : i32
    return %c0_i32, %c0_i32_0 : i32, i32
  }
  func.func @transform_3(%arg0: i32) -> (i32, i32) {
    %c0_i32 = arith.constant 0 : i32
    %c0_i32_0 = arith.constant 0 : i32
    %c0_i32_1 = arith.constant 0 : i32
    return %c0_i32, %c0_i32_0 : i32, i32
  }
  func.func @transform_4(%arg0: i32) -> (i32, i32, i32) {
    %c0_i32 = arith.constant 0 : i32
    %c0_i32_0 = arith.constant 0 : i32
    %c0_i32_1 = arith.constant 0 : i32
    return %arg0, %c0_i32, %c0_i32_0 : i32, i32, i32
  }
}

</mosaic_0001>

<llo_original>
// kernel: multi_head_forward.1
$region0: #{multi_head_forward.1}
  #allocation0 [shape = 'u32[]', space=smem, size = 0x4, offset = 0x4, fixed_abs, tag = 'smem constant byte address 0x4 - core index']
  #allocation1 [shape = 'u32[144,128]{1,0:T(1,128)}', space=vmem, size = 0x12000, scoped, tag = 'internal scratch']
  %s0 = inlined_call_operand.hbm [shape: f32[8,32,384], index: 0, kind: input, shape index: {}]
  %s1 = inlined_call_operand.hbm [shape: bf16[384,1152], index: 1, kind: input, shape index: {}]
  %s2 = inlined_call_operand.hbm [shape: bf16[384,384], index: 2, kind: input, shape index: {}]
  %s3 = inlined_call_operand.vmem [shape: f32[1,384], index: 3, kind: input, shape index: {}]
  %s4 = inlined_call_operand.hbm [shape: bf16[8,32,384], index: 4, kind: output, shape index: {}]
  %s5 = sld [smem:[#allocation0]]
  $region61: #{multi_head_forward.1} parent=0
    _
  %s7 = ssub.s32 1, %s5
  %s8 = scalar_select 0, %s7, %s5
  $region1: #{multi_head_forward.1} parent=0
    #allocation2 [shape = 'u8[393216]{0}', space=vmem, size = 0x60000, scoped, tag = 'input window, operand 0']
    #allocation3 [shape = 's32[2]{0}', space=sflag, size = 0x8, scoped, tag = 'scoped memory for multi_head_forward.1']
    #allocation4 [shape = 's32[2]{0}', space=sflag, size = 0x8, scoped, tag = 'scoped memory for multi_head_forward.1']
    #allocation5 [shape = 'u8[884736]{0}', space=vmem, size = 0xd8000, scoped, tag = 'input window, operand 1, single buffered']
    #allocation6 [shape = 's32[1]{0}', space=sflag, size = 0x4, scoped, tag = 'scoped memory for multi_head_forward.1']
    #allocation7 [shape = 'u8[294912]{0}', space=vmem, size = 0x48000, scoped, tag = 'input window, operand 2, single buffered']
    #allocation8 [shape = 'u8[196608]{0}', space=vmem, size = 0x30000, scoped, tag = 'output window, operand 0']
    %9 = vsyncpa [#allocation3], 0
    %s10 = scalar_lea.sflag [#allocation3], 1
    %11 = vsyncpa %s10, 0
    %12 = vsyncpa [#allocation6], 0
    %13 = vsyncpa [#allocation4], 0
    %s14 = scalar_lea.sflag [#allocation4], 1
    %15 = vsyncpa %s14, 0
    loop: start=0, step=1, limit=4
    $region2: #{multi_head_forward.1} parent=1 // loop_pre_header
      _
    $region3: #{multi_head_forward.1} parent=1 // loop_header
      %s17 = sphi 0, %s21
      %p18 = scmp.ge.s32.totalorder %s17, 4
      %s27 = sphi 0, %s29
      %s30 = sphi 0, %s27
      %s31 = sphi 0, %s30
      %s47 = sphi 0, %s31
      %s51 = sphi 0, %s51
      %s53 = sphi 0, %s51
      %s54 = sphi 0, %s53
      %s68 = sphi 0, %s54
      %s72 = sphi 0, %s72
      %s74 = sphi 0, %s72
      %s75 = sphi 0, %s74
      %s89 = sphi 0, %s75
      %s93 = sphi 0, %s93
      %s95 = sphi 0, %s93
      %s96 = sphi 0, %s95
      %s110 = sphi 0, %s96
      %s116 = sphi 0, %s118
      %s119 = sphi 0, %s116
      %s120 = sphi 0, %s119
      %s136 = sphi 0, %s120
    $region4: #{multi_head_forward.1} parent=1 // loop_header_branch
      %20 = sbr.rel (%p18) target = $region8
    $region5: #{multi_head_forward.1} parent=1 // loop_body
      %s22 = ssub.s32 %s17, 1
      %s23 = ssub.s32 %s17, 2
      %s24 = sadd.s32 %s17, 1
      %s25 = ssub.s32 %s17, %s24
      %p26 = scmp.eq.s32.totalorder %s25, 0
      %s28 = sadd.s32 %s27, 1
      %s29 = scalar_select %p26, %s27, %s28
      %p32 = pneg %p26
      %p33 = scmp.eq.s32.totalorder %s17, 1
      %p34 = por %p32, %p33
      %p35 = scmp.ne.s32.totalorder %s27, %s30
      %p36 = scmp.eq.s32.totalorder %s17, 0
      %p37 = por %p35, %p36
      %p38 = scmp.ne.s32.totalorder %s27, %s30
      %p39 = scmp.eq.s32.totalorder %s22, 1
      %p40 = por %p38, %p39
      %p41 = scmp.ne.s32.totalorder %s30, %s31
      %p42 = scmp.eq.s32.totalorder %s22, 0
      %p43 = por %p41, %p42
      %p44 = scmp.ne.s32.totalorder %s30, %s31
      %p45 = scmp.eq.s32.totalorder %s23, 1
      %p46 = por %p44, %p45
      %p48 = scmp.ne.s32.totalorder %s31, %s47
      %p49 = scmp.eq.s32.totalorder %s23, 0
      %p50 = por %p48, %p49
      %s52 = sadd.s32 %s51, 1
      %p55 = scmp.eq.s32.totalorder %s17, 1
      %p56 = scmp.ne.s32.totalorder %s51, %s53
      %p57 = scmp.eq.s32.totalorder %s17, 0
      %p58 = por %p56, %p57
      %p59 = scmp.ne.s32.totalorder %s51, %s53
      %p60 = scmp.eq.s32.totalorder %s22, 1
      %p61 = por %p59, %p60
      %p62 = scmp.ne.s32.totalorder %s53, %s54
      %p63 = scmp.eq.s32.totalorder %s22, 0
      %p64 = por %p62, %p63
      %p65 = scmp.ne.s32.totalorder %s53, %s54
      %p66 = scmp.eq.s32.totalorder %s23, 1
      %p67 = por %p65, %p66
      %p69 = scmp.ne.s32.totalorder %s54, %s68
      %p70 = scmp.eq.s32.totalorder %s23, 0
      %p71 = por %p69, %p70
      %s73 = sadd.s32 %s72, 1
      %p76 = scmp.eq.s32.totalorder %s17, 1
      %p77 = scmp.ne.s32.totalorder %s72, %s74
      %p78 = scmp.eq.s32.totalorder %s17, 0
      %p79 = por %p77, %p78
      %p80 = scmp.ne.s32.totalorder %s72, %s74
      %p81 = scmp.eq.s32.totalorder %s22, 1
      %p82 = por %p80, %p81
      %p83 = scmp.ne.s32.totalorder %s74, %s75
      %p84 = scmp.eq.s32.totalorder %s22, 0
      %p85 = por %p83, %p84
      %p86 = scmp.ne.s32.totalorder %s74, %s75
      %p87 = scmp.eq.s32.totalorder %s23, 1
      %p88 = por %p86, %p87
      %p90 = scmp.ne.s32.totalorder %s75, %s89
      %p91 = scmp.eq.s32.totalorder %s23, 0
      %p92 = por %p90, %p91
      %s94 = sadd.s32 %s93, 1
      %p97 = scmp.eq.s32.totalorder %s17, 1
      %p98 = scmp.ne.s32.totalorder %s93, %s95
      %p99 = scmp.eq.s32.totalorder %s17, 0
      %p100 = por %p98, %p99
      %p101 = scmp.ne.s32.totalorder %s93, %s95
      %p102 = scmp.eq.s32.totalorder %s22, 1
      %p103 = por %p101, %p102
      %p104 = scmp.ne.s32.totalorder %s95, %s96
      %p105 = scmp.eq.s32.totalorder %s22, 0
      %p106 = por %p104, %p105
      %p107 = scmp.ne.s32.totalorder %s95, %s96
      %p108 = scmp.eq.s32.totalorder %s23, 1
      %p109 = por %p107, %p108
      %p111 = scmp.ne.s32.totalorder %s96, %s110
      %p112 = scmp.eq.s32.totalorder %s23, 0
      %p113 = por %p111, %p112
      %s114 = ssub.s32 %s17, %s24
      %p115 = scmp.eq.s32.totalorder %s114, 0
      %s117 = sadd.s32 %s116, 1
      %s118 = scalar_select %p115, %s116, %s117
      %p121 = pneg %p115
      %p122 = scmp.eq.s32.totalorder %s17, 1
      %p123 = por %p121, %p122
      %p124 = scmp.ne.s32.totalorder %s116, %s119
      %p125 = scmp.eq.s32.totalorder %s17, 0
      %p126 = por %p124, %p125
      %p127 = scmp.ne.s32.totalorder %s116, %s119
      %p128 = scmp.eq.s32.totalorder %s22, 1
      %p129 = por %p127, %p128
      %p130 = scmp.ne.s32.totalorder %s119, %s120
      %p131 = scmp.eq.s32.totalorder %s22, 0
      %p132 = por %p130, %p131
      %p133 = scmp.ne.s32.totalorder %s119, %s120
      %p134 = scmp.eq.s32.totalorder %s23, 1
      %p135 = por %p133, %p134
      %p137 = scmp.ne.s32.totalorder %s120, %s136
      %p138 = scmp.eq.s32.totalorder %s23, 0
      %p139 = por %p137, %p138
      %p140 = scmp.le.s32.totalorder 1, %s17
      %p141 = scmp.lt.s32.totalorder %s17, 3
      %p142 = pnand %p140, %p141
      %p143 = pneg %p142
      // Predicated region
      $region9: #{multi_head_forward.1} parent=5 // pred_check
        _
      $region10: #{multi_head_forward.1} parent=5 // pred_check_branch
        %145 = sbr.rel (%p142) target = $region12
      $region11: #{multi_head_forward.1} parent=5 // pred_region
        %s146 = ssub.s32 %s17, 1
        // Predicated region
        $region13: #{multi_head_forward.1} parent=11 // pred_check
          %p147 = pneg %p64
        $region14: #{multi_head_forward.1} parent=11 // pred_check_branch
          %149 = sbr.rel (%p147) target = $region16
        $region15: #{multi_head_forward.1} parent=11 // pred_region
          %s151 = ssub.s32 27648, 27648
          %152 = vsyncadd [#allocation6], %s151
          %s153 = sshll.u32 [#allocation5], 4
          %s154 = int_to_ptr.vmem [resolvable:$true] %s153
          %159 = dma.hbm_to_vmem [thread:$0]  %s1, 27648, %s154, [#allocation6], 576, 576, 36
        $region16: #{multi_head_forward.1} parent=11 // pred_fallthru
          _
        // Predicated region
        $region17: #{multi_head_forward.1} parent=11 // pred_check
          %p160 = pneg %p85
        $region18: #{multi_head_forward.1} parent=11 // pred_check_branch
          %162 = sbr.rel (%p160) target = $region20
        $region19: #{multi_head_forward.1} parent=11 // pred_region
          %s164 = ssub.s32 9216, 9216
          %165 = vsyncadd [#allocation6], %s164
          %s166 = sshll.u32 [#allocation7], 4
          %s167 = int_to_ptr.vmem [resolvable:$true] %s166
          %172 = dma.hbm_to_vmem [thread:$0]  %s2, 9216, %s167, [#allocation6], 192, 192, 12
        $region20: #{multi_head_forward.1} parent=11 // pred_fallthru
          _
        // Predicated region
        $region21: #{multi_head_forward.1} parent=11 // pred_check
          %p173 = pneg %p106
        $region22: #{multi_head_forward.1} parent=11 // pred_check_branch
          %175 = sbr.rel (%p173) target = $region24
        $region23: #{multi_head_forward.1} parent=11 // pred_region
          _
        $region24: #{multi_head_forward.1} parent=11 // pred_fallthru
          _
      $region12: #{multi_head_forward.1} parent=5 // pred_fallthru
        _
      %p176 = scmp.lt.s32.totalorder %s17, 2
      // Predicated region
      $region25: #{multi_head_forward.1} parent=5 // pred_check
        %p177 = pneg %p176
      $region26: #{multi_head_forward.1} parent=5 // pred_check_branch
        %179 = sbr.rel (%p177) target = $region28
      $region27: #{multi_head_forward.1} parent=5 // pred_region
        // Predicated region
        $region29: #{multi_head_forward.1} parent=27 // pred_check
          %p180 = pneg %p37
        $region30: #{multi_head_forward.1} parent=27 // pred_check_branch
          %182 = sbr.rel (%p180) target = $region32
        $region31: #{multi_head_forward.1} parent=27 // pred_region
          %s183 = sand.u32 %s27, 1
          %s184 = scalar_lea.sflag [#allocation3], %s183
          %s185 = sand.u32 %s27, 1
          %s186 = smul.addr %s185, 384
          %s187 = scalar_lea.vmem [#allocation2], %s186
          %s188 = smul.u32 4, %s17
          %s190 = ssub.s32 6144, 6144
          %191 = vsyncadd %s184, %s190
          %s192 = smul.addr %s188, 12
          %s193 = smul.addr %s192, 128
          %s194 = scalar_lea.hbm %s0, %s193
          %s195 = sshll.u32 %s187, 4
          %s196 = int_to_ptr.vmem [resolvable:$true] %s195
          %201 = dma.hbm_to_vmem [thread:$0]  %s194, 6144, %s196, %s184, 384, 384, 24
        $region32: #{multi_head_forward.1} parent=27 // pred_fallthru
          _
      $region28: #{multi_head_forward.1} parent=5 // pred_fallthru
        _
      %p202 = scmp.le.s32.totalorder 1, %s17
      %p203 = scmp.lt.s32.totalorder %s17, 3
      %p204 = pnand %p202, %p203
      %p205 = pneg %p204
      // Predicated region
      $region33: #{multi_head_forward.1} parent=5 // pred_check
        _
      $region34: #{multi_head_forward.1} parent=5 // pred_check_branch
        %207 = sbr.rel (%p204) target = $region36
      $region35: #{multi_head_forward.1} parent=5 // pred_region
        %s208 = ssub.s32 %s17, 1
        %s209 = sand.u32 %s30, 1
        %s210 = scalar_lea.sflag [#allocation3], %s209
        %s211 = sand.u32 %s30, 1
        %s212 = smul.addr %s211, 384
        %s213 = scalar_lea.vmem [#allocation2], %s212
        // Predicated region
        $region37: #{multi_head_forward.1} parent=35 // pred_check
          %p214 = pneg %p43
        $region38: #{multi_head_forward.1} parent=35 // pred_check_branch
          %216 = sbr.rel (%p214) target = $region40
        $region39: #{multi_head_forward.1} parent=35 // pred_region
          %217 = dma.done %s210, 6144
        $region40: #{multi_head_forward.1} parent=35 // pred_fallthru
          _
        // Predicated region
        $region41: #{multi_head_forward.1} parent=35 // pred_check
          %p218 = pneg %p64
        $region42: #{multi_head_forward.1} parent=35 // pred_check_branch
          %220 = sbr.rel (%p218) target = $region44
        $region43: #{multi_head_forward.1} parent=35 // pred_region
          %221 = dma.done [#allocation6], 27648
        $region44: #{multi_head_forward.1} parent=35 // pred_fallthru
          _
        // Predicated region
        $region45: #{multi_head_forward.1} parent=35 // pred_check
          %p222 = pneg %p85
        $region46: #{multi_head_forward.1} parent=35 // pred_check_branch
          %224 = sbr.rel (%p222) target = $region48
        $region47: #{multi_head_forward.1} parent=35 // pred_region
          %225 = dma.done [#allocation6], 9216
        $region48: #{multi_head_forward.1} parent=35 // pred_fallthru
          _
        %s226 = sand.u32 %s30, 1
        %s227 = scalar_lea.sflag [#allocation3], %s226
        %s228 = sand.u32 %s30, 1
        %s229 = smul.addr %s228, 384
        %s230 = scalar_lea.vmem [#allocation2], %s229
        %p231 = pneg %p43
        %p232 = pneg %p40
        %p233 = pneg %p64
        %p234 = pneg %p61
        %p235 = pneg %p85
        %p236 = pneg %p82
        %p237 = pneg %p106
        %p238 = pneg %p103
        %p239 = pneg %p132
        %p240 = pneg %p129
        %s241 = sand.u32 %s119, 1
        %s242 = scalar_lea.sflag [#allocation4], %s241
        %s243 = sand.u32 %s119, 1
        %s244 = smul.addr %s243, 192
        %s245 = scalar_lea.vmem [#allocation8], %s244
        %s246 = smul.u32 4, %s22
        %s247 = smul.u32 4, %s22
        %v249 = vld [vmem:[%s213] sm:$0xff]
        %v250 = vld [vmem:[%s213 + $0x8] sm:$0xff]
        %v251 = vld [vmem:[%s213 + $0x10] sm:$0xff]
        %v252 = vld [vmem:[%s213 + $0x18] sm:$0xff]
        %v253 = vld [vmem:[%s213 + $0x20] sm:$0xff]
        %v254 = vld [vmem:[%s213 + $0x28] sm:$0xff]
        %v255 = vld [vmem:[%s213 + $0x30] sm:$0xff]
        %v256 = vld [vmem:[%s213 + $0x38] sm:$0xff]
        %v257 = vld [vmem:[%s213 + $0x40] sm:$0xff]
        %v258 = vld [vmem:[%s213 + $0x48] sm:$0xff]
        %v259 = vld [vmem:[%s213 + $0x50] sm:$0xff]
        %v260 = vld [vmem:[%s213 + $0x58] sm:$0xff]
        %v261 = vld [vmem:[%s213 + $0x60] sm:$0xff]
        %v262 = vld [vmem:[%s213 + $0x68] sm:$0xff]
        %v263 = vld [vmem:[%s213 + $0x70] sm:$0xff]
        %v264 = vld [vmem:[%s213 + $0x78] sm:$0xff]
        %v265 = vld [vmem:[%s213 + $0x80] sm:$0xff]
        %v266 = vld [vmem:[%s213 + $0x88] sm:$0xff]
        %v267 = vld [vmem:[%s213 + $0x90] sm:$0xff]
        %v268 = vld [vmem:[%s213 + $0x98] sm:$0xff]
        %v269 = vld [vmem:[%s213 + $0xa0] sm:$0xff]
        %v270 = vld [vmem:[%s213 + $0xa8] sm:$0xff]
        %v271 = vld [vmem:[%s213 + $0xb0] sm:$0xff]
        %v272 = vld [vmem:[%s213 + $0xb8] sm:$0xff]
        %v273 = vld [vmem:[%s213 + $0xc0] sm:$0xff]
        %v274 = vld [vmem:[%s213 + $0xc8] sm:$0xff]
        %v275 = vld [vmem:[%s213 + $0xd0] sm:$0xff]
        %v276 = vld [vmem:[%s213 + $0xd8] sm:$0xff]
        %v277 = vld [vmem:[%s213 + $0xe0] sm:$0xff]
        %v278 = vld [vmem:[%s213 + $0xe8] sm:$0xff]
        %v279 = vld [vmem:[%s213 + $0xf0] sm:$0xff]
        %v280 = vld [vmem:[%s213 + $0xf8] sm:$0xff]
        %v281 = vld [vmem:[%s213 + $0x100] sm:$0xff]
        %v282 = vld [vmem:[%s213 + $0x108] sm:$0xff]
        %v283 = vld [vmem:[%s213 + $0x110] sm:$0xff]
        %v284 = vld [vmem:[%s213 + $0x118] sm:$0xff]
        %v285 = vld [vmem:[%s213 + $0x120] sm:$0xff]
        %v286 = vld [vmem:[%s213 + $0x128] sm:$0xff]
        %v287 = vld [vmem:[%s213 + $0x130] sm:$0xff]
        %v288 = vld [vmem:[%s213 + $0x138] sm:$0xff]
        %v289 = vld [vmem:[%s213 + $0x140] sm:$0xff]
        %v290 = vld [vmem:[%s213 + $0x148] sm:$0xff]
        %v291 = vld [vmem:[%s213 + $0x150] sm:$0xff]
        %v292 = vld [vmem:[%s213 + $0x158] sm:$0xff]
        %v293 = vld [vmem:[%s213 + $0x160] sm:$0xff]
        %v294 = vld [vmem:[%s213 + $0x168] sm:$0xff]
        %v295 = vld [vmem:[%s213 + $0x170] sm:$0xff]
        %v296 = vld [vmem:[%s213 + $0x178] sm:$0xff]
        %v297 = vpack.c.bf16 %v252, %v249
        %v298 = vpack.c.bf16 %v253, %v250
        %v299 = vpack.c.bf16 %v254, %v251
        %v300 = vpack.c.bf16 %v258, %v255
        %v301 = vpack.c.bf16 %v259, %v256
        %v302 = vpack.c.bf16 %v260, %v257
        %v303 = vpack.c.bf16 %v264, %v261
        %v304 = vpack.c.bf16 %v265, %v262
        %v305 = vpack.c.bf16 %v266, %v263
        %v306 = vpack.c.bf16 %v270, %v267
        %v307 = vpack.c.bf16 %v271, %v268
        %v308 = vpack.c.bf16 %v272, %v269
        %v309 = vpack.c.bf16 %v276, %v273
        %v310 = vpack.c.bf16 %v277, %v274
        %v311 = vpack.c.bf16 %v278, %v275
        %v312 = vpack.c.bf16 %v282, %v279
        %v313 = vpack.c.bf16 %v283, %v280
        %v314 = vpack.c.bf16 %v284, %v281
        %v315 = vpack.c.bf16 %v288, %v285
        %v316 = vpack.c.bf16 %v289, %v286
        %v317 = vpack.c.bf16 %v290, %v287
        %v318 = vpack.c.bf16 %v294, %v291
        %v319 = vpack.c.bf16 %v295, %v292
        %v320 = vpack.c.bf16 %v296, %v293
        %v321 = vld [vmem:[#allocation5] sm:$0xff]
        %v322 = vld [vmem:[#allocation5 + $0x8] sm:$0xff]
        %v323 = vld [vmem:[#allocation5 + $0x10] sm:$0xff]
        %v324 = vld [vmem:[#allocation5 + $0x18] sm:$0xff]
        %v325 = vld [vmem:[#allocation5 + $0x20] sm:$0xf]
        %v326 = vld [vmem:[#allocation5 + $0x24] sm:$0xff]
        %v327 = vld [vmem:[#allocation5 + $0x2c] sm:$0xff]
        %v328 = vld [vmem:[#allocation5 + $0x34] sm:$0xff]
        %v329 = vld [vmem:[#allocation5 + $0x3c] sm:$0xff]
        %v330 = vld [vmem:[#allocation5 + $0x44] sm:$0xf]
        %v331 = vld [vmem:[#allocation5 + $0x48] sm:$0xff]
        %v332 = vld [vmem:[#allocation5 + $0x50] sm:$0xff]
        %v333 = vld [vmem:[#allocation5 + $0x58] sm:$0xff]
        %v334 = vld [vmem:[#allocation5 + $0x60] sm:$0xff]
        %v335 = vld [vmem:[#allocation5 + $0x68] sm:$0xf]
        %v336 = vld [vmem:[#allocation5 + $0x6c] sm:$0xff]
        %v337 = vld [vmem:[#allocation5 + $0x74] sm:$0xff]
        %v338 = vld [vmem:[#allocation5 + $0x7c] sm:$0xff]
        %v339 = vld [vmem:[#allocation5 + $0x84] sm:$0xff]
        %v340 = vld [vmem:[#allocation5 + $0x8c] sm:$0xf]
        %v341 = vld [vmem:[#allocation5 + $0x90] sm:$0xff]
        %v342 = vld [vmem:[#allocation5 + $0x98] sm:$0xff]
        %v343 = vld [vmem:[#allocation5 + $0xa0] sm:$0xff]
        %v344 = vld [vmem:[#allocation5 + $0xa8] sm:$0xff]
        %v345 = vld [vmem:[#allocation5 + $0xb0] sm:$0xf]
        %v346 = vld [vmem:[#allocation5 + $0xb4] sm:$0xff]
        %v347 = vld [vmem:[#allocation5 + $0xbc] sm:$0xff]
        %v348 = vld [vmem:[#allocation5 + $0xc4] sm:$0xff]
        %v349 = vld [vmem:[#allocation5 + $0xcc] sm:$0xff]
        %v350 = vld [vmem:[#allocation5 + $0xd4] sm:$0xf]
        %v351 = vld [vmem:[#allocation5 + $0xd8] sm:$0xff]
        %v352 = vld [vmem:[#allocation5 + $0xe0] sm:$0xff]
        %v353 = vld [vmem:[#allocation5 + $0xe8] sm:$0xff]
        %v354 = vld [vmem:[#allocation5 + $0xf0] sm:$0xff]
        %v355 = vld [vmem:[#allocation5 + $0xf8] sm:$0xf]
        %v356 = vld [vmem:[#allocation5 + $0xfc] sm:$0xff]
        %v357 = vld [vmem:[#allocation5 + $0x104] sm:$0xff]
        %v358 = vld [vmem:[#allocation5 + $0x10c] sm:$0xff]
        %v359 = vld [vmem:[#allocation5 + $0x114] sm:$0xff]
        %v360 = vld [vmem:[#allocation5 + $0x11c] sm:$0xf]
        %v361 = vld [vmem:[#allocation5 + $0x120] sm:$0xff]
        %v362 = vld [vmem:[#allocation5 + $0x128] sm:$0xff]
        %v363 = vld [vmem:[#allocation5 + $0x130] sm:$0xff]
        %v364 = vld [vmem:[#allocation5 + $0x138] sm:$0xff]
        %v365 = vld [vmem:[#allocation5 + $0x140] sm:$0xf]
        %v366 = vld [vmem:[#allocation5 + $0x144] sm:$0xff]
        %v367 = vld [vmem:[#allocation5 + $0x14c] sm:$0xff]
        %v368 = vld [vmem:[#allocation5 + $0x154] sm:$0xff]
        %v369 = vld [vmem:[#allocation5 + $0x15c] sm:$0xff]
        %v370 = vld [vmem:[#allocation5 + $0x164] sm:$0xf]
        %v371 = vld [vmem:[#allocation5 + $0x168] sm:$0xff]
        %v372 = vld [vmem:[#allocation5 + $0x170] sm:$0xff]
        %v373 = vld [vmem:[#allocation5 + $0x178] sm:$0xff]
        %v374 = vld [vmem:[#allocation5 + $0x180] sm:$0xff]
        %v375 = vld [vmem:[#allocation5 + $0x188] sm:$0xf]
        %v376 = vld [vmem:[#allocation5 + $0x18c] sm:$0xff]
        %v377 = vld [vmem:[#allocation5 + $0x194] sm:$0xff]
        %v378 = vld [vmem:[#allocation5 + $0x19c] sm:$0xff]
        %v379 = vld [vmem:[#allocation5 + $0x1a4] sm:$0xff]
        %v380 = vld [vmem:[#allocation5 + $0x1ac] sm:$0xf]
        %v381 = vld [vmem:[#allocation5 + $0x1b0] sm:$0xff]
        %v382 = vld [vmem:[#allocation5 + $0x1b8] sm:$0xff]
        %v383 = vld [vmem:[#allocation5 + $0x1c0] sm:$0xff]
        %v384 = vld [vmem:[#allocation5 + $0x1c8] sm:$0xff]
        %v385 = vld [vmem:[#allocation5 + $0x1d0] sm:$0xf]
        %v386 = vld [vmem:[#allocation5 + $0x1d4] sm:$0xff]
        %v387 = vld [vmem:[#allocation5 + $0x1dc] sm:$0xff]
        %v388 = vld [vmem:[#allocation5 + $0x1e4] sm:$0xff]
        %v389 = vld [vmem:[#allocation5 + $0x1ec] sm:$0xff]
        %v390 = vld [vmem:[#allocation5 + $0x1f4] sm:$0xf]
        %v391 = vld [vmem:[#allocation5 + $0x1f8] sm:$0xff]
        %v392 = vld [vmem:[#allocation5 + $0x200] sm:$0xff]
        %v393 = vld [vmem:[#allocation5 + $0x208] sm:$0xff]
        %v394 = vld [vmem:[#allocation5 + $0x210] sm:$0xff]
        %v395 = vld [vmem:[#allocation5 + $0x218] sm:$0xf]
        %v396 = vld [vmem:[#allocation5 + $0x21c] sm:$0xff]
        %v397 = vld [vmem:[#allocation5 + $0x224] sm:$0xff]
        %v398 = vld [vmem:[#allocation5 + $0x22c] sm:$0xff]
        %v399 = vld [vmem:[#allocation5 + $0x234] sm:$0xff]
        %v400 = vld [vmem:[#allocation5 + $0x23c] sm:$0xf]
        %v401 = vld [vmem:[#allocation5 + $0x240] sm:$0xff]
        %v402 = vld [vmem:[#allocation5 + $0x248] sm:$0xff]
        %v403 = vld [vmem:[#allocation5 + $0x250] sm:$0xff]
        %v404 = vld [vmem:[#allocation5 + $0x258] sm:$0xff]
        %v405 = vld [vmem:[#allocation5 + $0x260] sm:$0xf]
        %v406 = vld [vmem:[#allocation5 + $0x264] sm:$0xff]
        %v407 = vld [vmem:[#allocation5 + $0x26c] sm:$0xff]
        %v408 = vld [vmem:[#allocation5 + $0x274] sm:$0xff]
        %v409 = vld [vmem:[#allocation5 + $0x27c] sm:$0xff]
        %v410 = vld [vmem:[#allocation5 + $0x284] sm:$0xf]
        %v411 = vld [vmem:[#allocation5 + $0x288] sm:$0xff]
        %v412 = vld [vmem:[#allocation5 + $0x290] sm:$0xff]
        %v413 = vld [vmem:[#allocation5 + $0x298] sm:$0xff]
        %v414 = vld [vmem:[#allocation5 + $0x2a0] sm:$0xff]
        %v415 = vld [vmem:[#allocation5 + $0x2a8] sm:$0xf]
        %v416 = vld [vmem:[#allocation5 + $0x2ac] sm:$0xff]
        %v417 = vld [vmem:[#allocation5 + $0x2b4] sm:$0xff]
        %v418 = vld [vmem:[#allocation5 + $0x2bc] sm:$0xff]
        %v419 = vld [vmem:[#allocation5 + $0x2c4] sm:$0xff]
        %v420 = vld [vmem:[#allocation5 + $0x2cc] sm:$0xf]
        %v421 = vld [vmem:[#allocation5 + $0x2d0] sm:$0xff]
        %v422 = vld [vmem:[#allocation5 + $0x2d8] sm:$0xff]
        %v423 = vld [vmem:[#allocation5 + $0x2e0] sm:$0xff]
        %v424 = vld [vmem:[#allocation5 + $0x2e8] sm:$0xff]
        %v425 = vld [vmem:[#allocation5 + $0x2f0] sm:$0xf]
        %v426 = vld [vmem:[#allocation5 + $0x2f4] sm:$0xff]
        %v427 = vld [vmem:[#allocation5 + $0x2fc] sm:$0xff]
        %v428 = vld [vmem:[#allocation5 + $0x304] sm:$0xff]
        %v429 = vld [vmem:[#allocation5 + $0x30c] sm:$0xff]
        %v430 = vld [vmem:[#allocation5 + $0x314] sm:$0xf]
        %v431 = vld [vmem:[#allocation5 + $0x318] sm:$0xff]
        %v432 = vld [vmem:[#allocation5 + $0x320] sm:$0xff]
        %v433 = vld [vmem:[#allocation5 + $0x328] sm:$0xff]
        %v434 = vld [vmem:[#allocation5 + $0x330] sm:$0xff]
        %v435 = vld [vmem:[#allocation5 + $0x338] sm:$0xf]
        %v436 = vld [vmem:[#allocation5 + $0x33c] sm:$0xff]
        %v437 = vld [vmem:[#allocation5 + $0x344] sm:$0xff]
        %v438 = vld [vmem:[#allocation5 + $0x34c] sm:$0xff]
        %v439 = vld [vmem:[#allocation5 + $0x354] sm:$0xff]
        %v440 = vld [vmem:[#allocation5 + $0x35c] sm:$0xf]
        %v441 = vld [vmem:[#allocation5 + $0x360] sm:$0xff]
        %v442 = vld [vmem:[#allocation5 + $0x368] sm:$0xff]
        %v443 = vld [vmem:[#allocation5 + $0x370] sm:$0xff]
        %v444 = vld [vmem:[#allocation5 + $0x378] sm:$0xff]
        %v445 = vld [vmem:[#allocation5 + $0x380] sm:$0xf]
        %v446 = vld [vmem:[#allocation5 + $0x384] sm:$0xff]
        %v447 = vld [vmem:[#allocation5 + $0x38c] sm:$0xff]
        %v448 = vld [vmem:[#allocation5 + $0x394] sm:$0xff]
        %v449 = vld [vmem:[#allocation5 + $0x39c] sm:$0xff]
        %v450 = vld [vmem:[#allocation5 + $0x3a4] sm:$0xf]
        %v451 = vld [vmem:[#allocation5 + $0x3a8] sm:$0xff]
        %v452 = vld [vmem:[#allocation5 + $0x3b0] sm:$0xff]
        %v453 = vld [vmem:[#allocation5 + $0x3b8] sm:$0xff]
        %v454 = vld [vmem:[#allocation5 + $0x3c0] sm:$0xff]
        %v455 = vld [vmem:[#allocation5 + $0x3c8] sm:$0xf]
        %v456 = vld [vmem:[#allocation5 + $0x3cc] sm:$0xff]
        %v457 = vld [vmem:[#allocation5 + $0x3d4] sm:$0xff]
        %v458 = vld [vmem:[#allocation5 + $0x3dc] sm:$0xff]
        %v459 = vld [vmem:[#allocation5 + $0x3e4] sm:$0xff]
        %v460 = vld [vmem:[#allocation5 + $0x3ec] sm:$0xf]
        %v461 = vld [vmem:[#allocation5 + $0x3f0] sm:$0xff]
        %v462 = vld [vmem:[#allocation5 + $0x3f8] sm:$0xff]
        %v463 = vld [vmem:[#allocation5 + $0x400] sm:$0xff]
        %v464 = vld [vmem:[#allocation5 + $0x408] sm:$0xff]
        %v465 = vld [vmem:[#allocation5 + $0x410] sm:$0xf]
        %v466 = vld [vmem:[#allocation5 + $0x414] sm:$0xff]
        %v467 = vld [vmem:[#allocation5 + $0x41c] sm:$0xff]
        %v468 = vld [vmem:[#allocation5 + $0x424] sm:$0xff]
        %v469 = vld [vmem:[#allocation5 + $0x42c] sm:$0xff]
        %v470 = vld [vmem:[#allocation5 + $0x434] sm:$0xf]
        %v471 = vld [vmem:[#allocation5 + $0x438] sm:$0xff]
        %v472 = vld [vmem:[#allocation5 + $0x440] sm:$0xff]
        %v473 = vld [vmem:[#allocation5 + $0x448] sm:$0xff]
        %v474 = vld [vmem:[#allocation5 + $0x450] sm:$0xff]
        %v475 = vld [vmem:[#allocation5 + $0x458] sm:$0xf]
        %v476 = vld [vmem:[#allocation5 + $0x45c] sm:$0xff]
        %v477 = vld [vmem:[#allocation5 + $0x464] sm:$0xff]
        %v478 = vld [vmem:[#allocation5 + $0x46c] sm:$0xff]
        %v479 = vld [vmem:[#allocation5 + $0x474] sm:$0xff]
        %v480 = vld [vmem:[#allocation5 + $0x47c] sm:$0xf]
        %v481 = vld [vmem:[#allocation5 + $0x480] sm:$0xff]
        %v482 = vld [vmem:[#allocation5 + $0x488] sm:$0xff]
        %v483 = vld [vmem:[#allocation5 + $0x490] sm:$0xff]
        %v484 = vld [vmem:[#allocation5 + $0x498] sm:$0xff]
        %v485 = vld [vmem:[#allocation5 + $0x4a0] sm:$0xf]
        %v486 = vld [vmem:[#allocation5 + $0x4a4] sm:$0xff]
        %v487 = vld [vmem:[#allocation5 + $0x4ac] sm:$0xff]
        %v488 = vld [vmem:[#allocation5 + $0x4b4] sm:$0xff]
        %v489 = vld [vmem:[#allocation5 + $0x4bc] sm:$0xff]
        %v490 = vld [vmem:[#allocation5 + $0x4c4] sm:$0xf]
        %v491 = vld [vmem:[#allocation5 + $0x4c8] sm:$0xff]
        %v492 = vld [vmem:[#allocation5 + $0x4d0] sm:$0xff]
        %v493 = vld [vmem:[#allocation5 + $0x4d8] sm:$0xff]
        %v494 = vld [vmem:[#allocation5 + $0x4e0] sm:$0xff]
        %v495 = vld [vmem:[#allocation5 + $0x4e8] sm:$0xf]
        %v496 = vld [vmem:[#allocation5 + $0x4ec] sm:$0xff]
        %v497 = vld [vmem:[#allocation5 + $0x4f4] sm:$0xff]
        %v498 = vld [vmem:[#allocation5 + $0x4fc] sm:$0xff]
        %v499 = vld [vmem:[#allocation5 + $0x504] sm:$0xff]
        %v500 = vld [vmem:[#allocation5 + $0x50c] sm:$0xf]
        %v501 = vld [vmem:[#allocation5 + $0x510] sm:$0xff]
        %v502 = vld [vmem:[#allocation5 + $0x518] sm:$0xff]
        %v503 = vld [vmem:[#allocation5 + $0x520] sm:$0xff]
        %v504 = vld [vmem:[#allocation5 + $0x528] sm:$0xff]
        %v505 = vld [vmem:[#allocation5 + $0x530] sm:$0xf]
        %v506 = vld [vmem:[#allocation5 + $0x534] sm:$0xff]
        %v507 = vld [vmem:[#allocation5 + $0x53c] sm:$0xff]
        %v508 = vld [vmem:[#allocation5 + $0x544] sm:$0xff]
        %v509 = vld [vmem:[#allocation5 + $0x54c] sm:$0xff]
        %v510 = vld [vmem:[#allocation5 + $0x554] sm:$0xf]
        %v511 = vld [vmem:[#allocation5 + $0x558] sm:$0xff]
        %v512 = vld [vmem:[#allocation5 + $0x560] sm:$0xff]
        %v513 = vld [vmem:[#allocation5 + $0x568] sm:$0xff]
        %v514 = vld [vmem:[#allocation5 + $0x570] sm:$0xff]
        %v515 = vld [vmem:[#allocation5 + $0x578] sm:$0xf]
        %v516 = vld [vmem:[#allocation5 + $0x57c] sm:$0xff]
        %v517 = vld [vmem:[#allocation5 + $0x584] sm:$0xff]
        %v518 = vld [vmem:[#allocation5 + $0x58c] sm:$0xff]
        %v519 = vld [vmem:[#allocation5 + $0x594] sm:$0xff]
        %v520 = vld [vmem:[#allocation5 + $0x59c] sm:$0xf]
        %v521 = vld [vmem:[#allocation5 + $0x5a0] sm:$0xff]
        %v522 = vld [vmem:[#allocation5 + $0x5a8] sm:$0xff]
        %v523 = vld [vmem:[#allocation5 + $0x5b0] sm:$0xff]
        %v524 = vld [vmem:[#allocation5 + $0x5b8] sm:$0xff]
        %v525 = vld [vmem:[#allocation5 + $0x5c0] sm:$0xf]
        %v526 = vld [vmem:[#allocation5 + $0x5c4] sm:$0xff]
        %v527 = vld [vmem:[#allocation5 + $0x5cc] sm:$0xff]
        %v528 = vld [vmem:[#allocation5 + $0x5d4] sm:$0xff]
        %v529 = vld [vmem:[#allocation5 + $0x5dc] sm:$0xff]
        %v530 = vld [vmem:[#allocation5 + $0x5e4] sm:$0xf]
        %v531 = vld [vmem:[#allocation5 + $0x5e8] sm:$0xff]
        %v532 = vld [vmem:[#allocation5 + $0x5f0] sm:$0xff]
        %v533 = vld [vmem:[#allocation5 + $0x5f8] sm:$0xff]
        %v534 = vld [vmem:[#allocation5 + $0x600] sm:$0xff]
        %v535 = vld [vmem:[#allocation5 + $0x608] sm:$0xf]
        %v536 = vld [vmem:[#allocation5 + $0x60c] sm:$0xff]
        %v537 = vld [vmem:[#allocation5 + $0x614] sm:$0xff]
        %v538 = vld [vmem:[#allocation5 + $0x61c] sm:$0xff]
        %v539 = vld [vmem:[#allocation5 + $0x624] sm:$0xff]
        %v540 = vld [vmem:[#allocation5 + $0x62c] sm:$0xf]
        %v541 = vld [vmem:[#allocation5 + $0x630] sm:$0xff]
        %v542 = vld [vmem:[#allocation5 + $0x638] sm:$0xff]
        %v543 = vld [vmem:[#allocation5 + $0x640] sm:$0xff]
        %v544 = vld [vmem:[#allocation5 + $0x648] sm:$0xff]
        %v545 = vld [vmem:[#allocation5 + $0x650] sm:$0xf]
        %v546 = vld [vmem:[#allocation5 + $0x654] sm:$0xff]
        %v547 = vld [vmem:[#allocation5 + $0x65c] sm:$0xff]
        %v548 = vld [vmem:[#allocation5 + $0x664] sm:$0xff]
        %v549 = vld [vmem:[#allocation5 + $0x66c] sm:$0xff]
        %v550 = vld [vmem:[#allocation5 + $0x674] sm:$0xf]
        %v551 = vld [vmem:[#allocation5 + $0x678] sm:$0xff]
        %v552 = vld [vmem:[#allocation5 + $0x680] sm:$0xff]
        %v553 = vld [vmem:[#allocation5 + $0x688] sm:$0xff]
        %v554 = vld [vmem:[#allocation5 + $0x690] sm:$0xff]
        %v555 = vld [vmem:[#allocation5 + $0x698] sm:$0xf]
        %v556 = vld [vmem:[#allocation5 + $0x69c] sm:$0xff]
        %v557 = vld [vmem:[#allocation5 + $0x6a4] sm:$0xff]
        %v558 = vld [vmem:[#allocation5 + $0x6ac] sm:$0xff]
        %v559 = vld [vmem:[#allocation5 + $0x6b4] sm:$0xff]
        %v560 = vld [vmem:[#allocation5 + $0x6bc] sm:$0xf]
        %v801 = vunpack.c.l.b16 %v321
        %v802 = vunpack.c.h.b16 %v321
        %v803 = vunpack.c.l.b16 %v322
        %v804 = vunpack.c.h.b16 %v322
        %v805 = vunpack.c.l.b16 %v323
        %v806 = vunpack.c.h.b16 %v323
        %v807 = vunpack.c.l.b16 %v324
        %v808 = vunpack.c.h.b16 %v324
        %v809 = vunpack.c.l.b16 %v325
        %v810 = vunpack.c.l.b16 %v326
        %v811 = vunpack.c.h.b16 %v326
        %v812 = vunpack.c.l.b16 %v327
        %v813 = vunpack.c.h.b16 %v327
        %v814 = vunpack.c.l.b16 %v328
        %v815 = vunpack.c.h.b16 %v328
        %v816 = vunpack.c.l.b16 %v329
        %v817 = vunpack.c.h.b16 %v329
        %v818 = vunpack.c.l.b16 %v330
        %v819 = vunpack.c.l.b16 %v331
        %v820 = vunpack.c.h.b16 %v331
        %v821 = vunpack.c.l.b16 %v332
        %v822 = vunpack.c.h.b16 %v332
        %v823 = vunpack.c.l.b16 %v333
        %v824 = vunpack.c.h.b16 %v333
        %v825 = vunpack.c.l.b16 %v334
        %v826 = vunpack.c.h.b16 %v334
        %v827 = vunpack.c.l.b16 %v335
        %v828 = vunpack.c.l.b16 %v336
        %v829 = vunpack.c.h.b16 %v336
        %v830 = vunpack.c.l.b16 %v337
        %v831 = vunpack.c.h.b16 %v337
        %v832 = vunpack.c.l.b16 %v338
        %v833 = vunpack.c.h.b16 %v338
        %v834 = vunpack.c.l.b16 %v339
        %v835 = vunpack.c.h.b16 %v339
        %v836 = vunpack.c.l.b16 %v340
        %v837 = vunpack.c.l.b16 %v341
        %v838 = vunpack.c.h.b16 %v341
        %v839 = vunpack.c.l.b16 %v342
        %v840 = vunpack.c.h.b16 %v342
        %v841 = vunpack.c.l.b16 %v343
        %v842 = vunpack.c.h.b16 %v343
        %v843 = vunpack.c.l.b16 %v344
        %v844 = vunpack.c.h.b16 %v344
        %v845 = vunpack.c.l.b16 %v345
        %v846 = vunpack.c.l.b16 %v346
        %v847 = vunpack.c.h.b16 %v346
        %v848 = vunpack.c.l.b16 %v347
        %v849 = vunpack.c.h.b16 %v347
        %v850 = vunpack.c.l.b16 %v348
        %v851 = vunpack.c.h.b16 %v348
        %v852 = vunpack.c.l.b16 %v349
        %v853 = vunpack.c.h.b16 %v349
        %v854 = vunpack.c.l.b16 %v350
        %v855 = vunpack.c.l.b16 %v351
        %v856 = vunpack.c.h.b16 %v351
        %v857 = vunpack.c.l.b16 %v352
        %v858 = vunpack.c.h.b16 %v352
        %v859 = vunpack.c.l.b16 %v353
        %v860 = vunpack.c.h.b16 %v353
        %v861 = vunpack.c.l.b16 %v354
        %v862 = vunpack.c.h.b16 %v354
        %v863 = vunpack.c.l.b16 %v355
        %v864 = vunpack.c.l.b16 %v356
        %v865 = vunpack.c.h.b16 %v356
        %v866 = vunpack.c.l.b16 %v357
        %v867 = vunpack.c.h.b16 %v357
        %v868 = vunpack.c.l.b16 %v358
        %v869 = vunpack.c.h.b16 %v358
        %v870 = vunpack.c.l.b16 %v359
        %v871 = vunpack.c.h.b16 %v359
        %v872 = vunpack.c.l.b16 %v360
        %v873 = vunpack.c.l.b16 %v361
        %v874 = vunpack.c.h.b16 %v361
        %v875 = vunpack.c.l.b16 %v362
        %v876 = vunpack.c.h.b16 %v362
        %v877 = vunpack.c.l.b16 %v363
        %v878 = vunpack.c.h.b16 %v363
        %v879 = vunpack.c.l.b16 %v364
        %v880 = vunpack.c.h.b16 %v364
        %v881 = vunpack.c.l.b16 %v365
        %v882 = vunpack.c.l.b16 %v366
        %v883 = vunpack.c.h.b16 %v366
        %v884 = vunpack.c.l.b16 %v367
        %v885 = vunpack.c.h.b16 %v367
        %v886 = vunpack.c.l.b16 %v368
        %v887 = vunpack.c.h.b16 %v368
        %v888 = vunpack.c.l.b16 %v369
        %v889 = vunpack.c.h.b16 %v369
        %v890 = vunpack.c.l.b16 %v370
        %v891 = vunpack.c.l.b16 %v371
        %v892 = vunpack.c.h.b16 %v371
        %v893 = vunpack.c.l.b16 %v372
        %v894 = vunpack.c.h.b16 %v372
        %v895 = vunpack.c.l.b16 %v373
        %v896 = vunpack.c.h.b16 %v373
        %v897 = vunpack.c.l.b16 %v374
        %v898 = vunpack.c.h.b16 %v374
        %v899 = vunpack.c.l.b16 %v375
        %v900 = vunpack.c.l.b16 %v376
        %v901 = vunpack.c.h.b16 %v376
        %v902 = vunpack.c.l.b16 %v377
        %v903 = vunpack.c.h.b16 %v377
        %v904 = vunpack.c.l.b16 %v378
        %v905 = vunpack.c.h.b16 %v378
        %v906 = vunpack.c.l.b16 %v379
        %v907 = vunpack.c.h.b16 %v379
        %v908 = vunpack.c.l.b16 %v380
        %v909 = vunpack.c.l.b16 %v381
        %v910 = vunpack.c.h.b16 %v381
        %v911 = vunpack.c.l.b16 %v382
        %v912 = vunpack.c.h.b16 %v382
        %v913 = vunpack.c.l.b16 %v383
        %v914 = vunpack.c.h.b16 %v383
        %v915 = vunpack.c.l.b16 %v384
        %v916 = vunpack.c.h.b16 %v384
        %v917 = vunpack.c.l.b16 %v385
        %v918 = vunpack.c.l.b16 %v386
        %v919 = vunpack.c.h.b16 %v386
        %v920 = vunpack.c.l.b16 %v387
        %v921 = vunpack.c.h.b16 %v387
        %v922 = vunpack.c.l.b16 %v388
        %v923 = vunpack.c.h.b16 %v388
        %v924 = vunpack.c.l.b16 %v389
        %v925 = vunpack.c.h.b16 %v389
        %v926 = vunpack.c.l.b16 %v390
        %v927 = vunpack.c.l.b16 %v391
        %v928 = vunpack.c.h.b16 %v391
        %v929 = vunpack.c.l.b16 %v392
        %v930 = vunpack.c.h.b16 %v392
        %v931 = vunpack.c.l.b16 %v393
        %v932 = vunpack.c.h.b16 %v393
        %v933 = vunpack.c.l.b16 %v394
        %v934 = vunpack.c.h.b16 %v394
        %v935 = vunpack.c.l.b16 %v395
        %v936 = vunpack.c.l.b16 %v396
        %v937 = vunpack.c.h.b16 %v396
        %v938 = vunpack.c.l.b16 %v397
        %v939 = vunpack.c.h.b16 %v397
        %v940 = vunpack.c.l.b16 %v398
        %v941 = vunpack.c.h.b16 %v398
        %v942 = vunpack.c.l.b16 %v399
        %v943 = vunpack.c.h.b16 %v399
        %v944 = vunpack.c.l.b16 %v400
        %v945 = vunpack.c.l.b16 %v401
        %v946 = vunpack.c.h.b16 %v401
        %v947 = vunpack.c.l.b16 %v402
        %v948 = vunpack.c.h.b16 %v402
        %v949 = vunpack.c.l.b16 %v403
        %v950 = vunpack.c.h.b16 %v403
        %v951 = vunpack.c.l.b16 %v404
        %v952 = vunpack.c.h.b16 %v404
        %v953 = vunpack.c.l.b16 %v405
        %v954 = vunpack.c.l.b16 %v406
        %v955 = vunpack.c.h.b16 %v406
        %v956 = vunpack.c.l.b16 %v407
        %v957 = vunpack.c.h.b16 %v407
        %v958 = vunpack.c.l.b16 %v408
        %v959 = vunpack.c.h.b16 %v408
        %v960 = vunpack.c.l.b16 %v409
        %v961 = vunpack.c.h.b16 %v409
        %v962 = vunpack.c.l.b16 %v410
        %v963 = vunpack.c.l.b16 %v411
        %v964 = vunpack.c.h.b16 %v411
        %v965 = vunpack.c.l.b16 %v412
        %v966 = vunpack.c.h.b16 %v412
        %v967 = vunpack.c.l.b16 %v413
        %v968 = vunpack.c.h.b16 %v413
        %v969 = vunpack.c.l.b16 %v414
        %v970 = vunpack.c.h.b16 %v414
        %v971 = vunpack.c.l.b16 %v415
        %v972 = vunpack.c.l.b16 %v416
        %v973 = vunpack.c.h.b16 %v416
        %v974 = vunpack.c.l.b16 %v417
        %v975 = vunpack.c.h.b16 %v417
        %v976 = vunpack.c.l.b16 %v418
        %v977 = vunpack.c.h.b16 %v418
        %v978 = vunpack.c.l.b16 %v419
        %v979 = vunpack.c.h.b16 %v419
        %v980 = vunpack.c.l.b16 %v420
        %v981 = vunpack.c.l.b16 %v421
        %v982 = vunpack.c.h.b16 %v421
        %v983 = vunpack.c.l.b16 %v422
        %v984 = vunpack.c.h.b16 %v422
        %v985 = vunpack.c.l.b16 %v423
        %v986 = vunpack.c.h.b16 %v423
        %v987 = vunpack.c.l.b16 %v424
        %v988 = vunpack.c.h.b16 %v424
        %v989 = vunpack.c.l.b16 %v425
        %v990 = vunpack.c.l.b16 %v426
        %v991 = vunpack.c.h.b16 %v426
        %v992 = vunpack.c.l.b16 %v427
        %v993 = vunpack.c.h.b16 %v427
        %v994 = vunpack.c.l.b16 %v428
        %v995 = vunpack.c.h.b16 %v428
        %v996 = vunpack.c.l.b16 %v429
        %v997 = vunpack.c.h.b16 %v429
        %v998 = vunpack.c.l.b16 %v430
        %v999 = vunpack.c.l.b16 %v431
        %v1000 = vunpack.c.h.b16 %v431
        %v1001 = vunpack.c.l.b16 %v432
        %v1002 = vunpack.c.h.b16 %v432
        %v1003 = vunpack.c.l.b16 %v433
        %v1004 = vunpack.c.h.b16 %v433
        %v1005 = vunpack.c.l.b16 %v434
        %v1006 = vunpack.c.h.b16 %v434
        %v1007 = vunpack.c.l.b16 %v435
        %v1008 = vunpack.c.l.b16 %v436
        %v1009 = vunpack.c.h.b16 %v436
        %v1010 = vunpack.c.l.b16 %v437
        %v1011 = vunpack.c.h.b16 %v437
        %v1012 = vunpack.c.l.b16 %v438
        %v1013 = vunpack.c.h.b16 %v438
        %v1014 = vunpack.c.l.b16 %v439
        %v1015 = vunpack.c.h.b16 %v439
        %v1016 = vunpack.c.l.b16 %v440
        %v1017 = vunpack.c.l.b16 %v441
        %v1018 = vunpack.c.h.b16 %v441
        %v1019 = vunpack.c.l.b16 %v442
        %v1020 = vunpack.c.h.b16 %v442
        %v1021 = vunpack.c.l.b16 %v443
        %v1022 = vunpack.c.h.b16 %v443
        %v1023 = vunpack.c.l.b16 %v444
        %v1024 = vunpack.c.h.b16 %v444
        %v1025 = vunpack.c.l.b16 %v445
        %v1026 = vunpack.c.l.b16 %v446
        %v1027 = vunpack.c.h.b16 %v446
        %v1028 = vunpack.c.l.b16 %v447
        %v1029 = vunpack.c.h.b16 %v447
        %v1030 = vunpack.c.l.b16 %v448
        %v1031 = vunpack.c.h.b16 %v448
        %v1032 = vunpack.c.l.b16 %v449
        %v1033 = vunpack.c.h.b16 %v449
        %v1034 = vunpack.c.l.b16 %v450
        %v1035 = vunpack.c.l.b16 %v451
        %v1036 = vunpack.c.h.b16 %v451
        %v1037 = vunpack.c.l.b16 %v452
        %v1038 = vunpack.c.h.b16 %v452
        %v1039 = vunpack.c.l.b16 %v453
        %v1040 = vunpack.c.h.b16 %v453
        %v1041 = vunpack.c.l.b16 %v454
        %v1042 = vunpack.c.h.b16 %v454
        %v1043 = vunpack.c.l.b16 %v455
        %v1044 = vunpack.c.l.b16 %v456
        %v1045 = vunpack.c.h.b16 %v456
        %v1046 = vunpack.c.l.b16 %v457
        %v1047 = vunpack.c.h.b16 %v457
        %v1048 = vunpack.c.l.b16 %v458
        %v1049 = vunpack.c.h.b16 %v458
        %v1050 = vunpack.c.l.b16 %v459
        %v1051 = vunpack.c.h.b16 %v459
        %v1052 = vunpack.c.l.b16 %v460
        %v1053 = vunpack.c.l.b16 %v461
        %v1054 = vunpack.c.h.b16 %v461
        %v1055 = vunpack.c.l.b16 %v462
        %v1056 = vunpack.c.h.b16 %v462
        %v1057 = vunpack.c.l.b16 %v463
        %v1058 = vunpack.c.h.b16 %v463
        %v1059 = vunpack.c.l.b16 %v464
        %v1060 = vunpack.c.h.b16 %v464
        %v1061 = vunpack.c.l.b16 %v465
        %v1062 = vunpack.c.l.b16 %v466
        %v1063 = vunpack.c.h.b16 %v466
        %v1064 = vunpack.c.l.b16 %v467
        %v1065 = vunpack.c.h.b16 %v467
        %v1066 = vunpack.c.l.b16 %v468
        %v1067 = vunpack.c.h.b16 %v468
        %v1068 = vunpack.c.l.b16 %v469
        %v1069 = vunpack.c.h.b16 %v469
        %v1070 = vunpack.c.l.b16 %v470
        %v1071 = vunpack.c.l.b16 %v471
        %v1072 = vunpack.c.h.b16 %v471
        %v1073 = vunpack.c.l.b16 %v472
        %v1074 = vunpack.c.h.b16 %v472
        %v1075 = vunpack.c.l.b16 %v473
        %v1076 = vunpack.c.h.b16 %v473
        %v1077 = vunpack.c.l.b16 %v474
        %v1078 = vunpack.c.h.b16 %v474
        %v1079 = vunpack.c.l.b16 %v475
        %v1080 = vunpack.c.l.b16 %v476
        %v1081 = vunpack.c.h.b16 %v476
        %v1082 = vunpack.c.l.b16 %v477
        %v1083 = vunpack.c.h.b16 %v477
        %v1084 = vunpack.c.l.b16 %v478
        %v1085 = vunpack.c.h.b16 %v478
        %v1086 = vunpack.c.l.b16 %v479
        %v1087 = vunpack.c.h.b16 %v479
        %v1088 = vunpack.c.l.b16 %v480
        %v1089 = vunpack.c.l.b16 %v481
        %v1090 = vunpack.c.h.b16 %v481
        %v1091 = vunpack.c.l.b16 %v482
        %v1092 = vunpack.c.h.b16 %v482
        %v1093 = vunpack.c.l.b16 %v483
        %v1094 = vunpack.c.h.b16 %v483
        %v1095 = vunpack.c.l.b16 %v484
        %v1096 = vunpack.c.h.b16 %v484
        %v1097 = vunpack.c.l.b16 %v485
        %v1098 = vunpack.c.l.b16 %v486
        %v1099 = vunpack.c.h.b16 %v486
        %v1100 = vunpack.c.l.b16 %v487
        %v1101 = vunpack.c.h.b16 %v487
        %v1102 = vunpack.c.l.b16 %v488
        %v1103 = vunpack.c.h.b16 %v488
        %v1104 = vunpack.c.l.b16 %v489
        %v1105 = vunpack.c.h.b16 %v489
        %v1106 = vunpack.c.l.b16 %v490
        %v1107 = vunpack.c.l.b16 %v491
        %v1108 = vunpack.c.h.b16 %v491
        %v1109 = vunpack.c.l.b16 %v492
        %v1110 = vunpack.c.h.b16 %v492
        %v1111 = vunpack.c.l.b16 %v493
        %v1112 = vunpack.c.h.b16 %v493
        %v1113 = vunpack.c.l.b16 %v494
        %v1114 = vunpack.c.h.b16 %v494
        %v1115 = vunpack.c.l.b16 %v495
        %v1116 = vunpack.c.l.b16 %v496
        %v1117 = vunpack.c.h.b16 %v496
        %v1118 = vunpack.c.l.b16 %v497
        %v1119 = vunpack.c.h.b16 %v497
        %v1120 = vunpack.c.l.b16 %v498
        %v1121 = vunpack.c.h.b16 %v498
        %v1122 = vunpack.c.l.b16 %v499
        %v1123 = vunpack.c.h.b16 %v499
        %v1124 = vunpack.c.l.b16 %v500
        %v1125 = vunpack.c.l.b16 %v501
        %v1126 = vunpack.c.h.b16 %v501
        %v1127 = vunpack.c.l.b16 %v502
        %v1128 = vunpack.c.h.b16 %v502
        %v1129 = vunpack.c.l.b16 %v503
        %v1130 = vunpack.c.h.b16 %v503
        %v1131 = vunpack.c.l.b16 %v504
        %v1132 = vunpack.c.h.b16 %v504
        %v1133 = vunpack.c.l.b16 %v505
        %v1134 = vunpack.c.l.b16 %v506
        %v1135 = vunpack.c.h.b16 %v506
        %v1136 = vunpack.c.l.b16 %v507
        %v1137 = vunpack.c.h.b16 %v507
        %v1138 = vunpack.c.l.b16 %v508
        %v1139 = vunpack.c.h.b16 %v508
        %v1140 = vunpack.c.l.b16 %v509
        %v1141 = vunpack.c.h.b16 %v509
        %v1142 = vunpack.c.l.b16 %v510
        %v1143 = vunpack.c.l.b16 %v511
        %v1144 = vunpack.c.h.b16 %v511
        %v1145 = vunpack.c.l.b16 %v512
        %v1146 = vunpack.c.h.b16 %v512
        %v1147 = vunpack.c.l.b16 %v513
        %v1148 = vunpack.c.h.b16 %v513
        %v1149 = vunpack.c.l.b16 %v514
        %v1150 = vunpack.c.h.b16 %v514
        %v1151 = vunpack.c.l.b16 %v515
        %v1152 = vunpack.c.l.b16 %v516
        %v1153 = vunpack.c.h.b16 %v516
        %v1154 = vunpack.c.l.b16 %v517
        %v1155 = vunpack.c.h.b16 %v517
        %v1156 = vunpack.c.l.b16 %v518
        %v1157 = vunpack.c.h.b16 %v518
        %v1158 = vunpack.c.l.b16 %v519
        %v1159 = vunpack.c.h.b16 %v519
        %v1160 = vunpack.c.l.b16 %v520
        %v1161 = vunpack.c.l.b16 %v521
        %v1162 = vunpack.c.h.b16 %v521
        %v1163 = vunpack.c.l.b16 %v522
        %v1164 = vunpack.c.h.b16 %v522
        %v1165 = vunpack.c.l.b16 %v523
        %v1166 = vunpack.c.h.b16 %v523
        %v1167 = vunpack.c.l.b16 %v524
        %v1168 = vunpack.c.h.b16 %v524
        %v1169 = vunpack.c.l.b16 %v525
        %v1170 = vunpack.c.l.b16 %v526
        %v1171 = vunpack.c.h.b16 %v526
        %v1172 = vunpack.c.l.b16 %v527
        %v1173 = vunpack.c.h.b16 %v527
        %v1174 = vunpack.c.l.b16 %v528
        %v1175 = vunpack.c.h.b16 %v528
        %v1176 = vunpack.c.l.b16 %v529
        %v1177 = vunpack.c.h.b16 %v529
        %v1178 = vunpack.c.l.b16 %v530
        %v1179 = vunpack.c.l.b16 %v531
        %v1180 = vunpack.c.h.b16 %v531
        %v1181 = vunpack.c.l.b16 %v532
        %v1182 = vunpack.c.h.b16 %v532
        %v1183 = vunpack.c.l.b16 %v533
        %v1184 = vunpack.c.h.b16 %v533
        %v1185 = vunpack.c.l.b16 %v534
        %v1186 = vunpack.c.h.b16 %v534
        %v1187 = vunpack.c.l.b16 %v535
        %v1188 = vunpack.c.l.b16 %v536
        %v1189 = vunpack.c.h.b16 %v536
        %v1190 = vunpack.c.l.b16 %v537
        %v1191 = vunpack.c.h.b16 %v537
        %v1192 = vunpack.c.l.b16 %v538
        %v1193 = vunpack.c.h.b16 %v538
        %v1194 = vunpack.c.l.b16 %v539
        %v1195 = vunpack.c.h.b16 %v539
        %v1196 = vunpack.c.l.b16 %v540
        %v1197 = vunpack.c.l.b16 %v541
        %v1198 = vunpack.c.h.b16 %v541
        %v1199 = vunpack.c.l.b16 %v542
        %v1200 = vunpack.c.h.b16 %v542
        %v1201 = vunpack.c.l.b16 %v543
        %v1202 = vunpack.c.h.b16 %v543
        %v1203 = vunpack.c.l.b16 %v544
        %v1204 = vunpack.c.h.b16 %v544
        %v1205 = vunpack.c.l.b16 %v545
        %v1206 = vunpack.c.l.b16 %v546
        %v1207 = vunpack.c.h.b16 %v546
        %v1208 = vunpack.c.l.b16 %v547
        %v1209 = vunpack.c.h.b16 %v547
        %v1210 = vunpack.c.l.b16 %v548
        %v1211 = vunpack.c.h.b16 %v548
        %v1212 = vunpack.c.l.b16 %v549
        %v1213 = vunpack.c.h.b16 %v549
        %v1214 = vunpack.c.l.b16 %v550
        %v1215 = vunpack.c.l.b16 %v551
        %v1216 = vunpack.c.h.b16 %v551
        %v1217 = vunpack.c.l.b16 %v552
        %v1218 = vunpack.c.h.b16 %v552
        %v1219 = vunpack.c.l.b16 %v553
        %v1220 = vunpack.c.h.b16 %v553
        %v1221 = vunpack.c.l.b16 %v554
        %v1222 = vunpack.c.h.b16 %v554
        %v1223 = vunpack.c.l.b16 %v555
        %v1224 = vunpack.c.l.b16 %v556
        %v1225 = vunpack.c.h.b16 %v556
        %v1226 = vunpack.c.l.b16 %v557
        %v1227 = vunpack.c.h.b16 %v557
        %v1228 = vunpack.c.l.b16 %v558
        %v1229 = vunpack.c.h.b16 %v558
        %v1230 = vunpack.c.l.b16 %v559
        %v1231 = vunpack.c.h.b16 %v559
        %v1232 = vunpack.c.l.b16 %v560
        %v1233 = vpack.c.b16 %v810, %v801
        %v1234 = vpack.c.b16 %v811, %v802
        %v1235 = vpack.c.b16 %v812, %v803
        %v1236 = vpack.c.b16 %v813, %v804
        %v1237 = vpack.c.b16 %v814, %v805
        %v1238 = vpack.c.b16 %v815, %v806
        %v1239 = vpack.c.b16 %v816, %v807
        %v1240 = vpack.c.b16 %v817, %v808
        %v1241 = vpack.c.b16 %v818, %v809
        %v1242 = vpack.c.b16 %v828, %v819
        %v1243 = vpack.c.b16 %v829, %v820
        %v1244 = vpack.c.b16 %v830, %v821
        %v1245 = vpack.c.b16 %v831, %v822
        %v1246 = vpack.c.b16 %v832, %v823
        %v1247 = vpack.c.b16 %v833, %v824
        %v1248 = vpack.c.b16 %v834, %v825
        %v1249 = vpack.c.b16 %v835, %v826
        %v1250 = vpack.c.b16 %v836, %v827
        %v1251 = vpack.c.b16 %v846, %v837
        %v1252 = vpack.c.b16 %v847, %v838
        %v1253 = vpack.c.b16 %v848, %v839
        %v1254 = vpack.c.b16 %v849, %v840
        %v1255 = vpack.c.b16 %v850, %v841
        %v1256 = vpack.c.b16 %v851, %v842
        %v1257 = vpack.c.b16 %v852, %v843
        %v1258 = vpack.c.b16 %v853, %v844
        %v1259 = vpack.c.b16 %v854, %v845
        %v1260 = vpack.c.b16 %v864, %v855
        %v1261 = vpack.c.b16 %v865, %v856
        %v1262 = vpack.c.b16 %v866, %v857
        %v1263 = vpack.c.b16 %v867, %v858
        %v1264 = vpack.c.b16 %v868, %v859
        %v1265 = vpack.c.b16 %v869, %v860
        %v1266 = vpack.c.b16 %v870, %v861
        %v1267 = vpack.c.b16 %v871, %v862
        %v1268 = vpack.c.b16 %v872, %v863
        %v1269 = vpack.c.b16 %v882, %v873
        %v1270 = vpack.c.b16 %v883, %v874
        %v1271 = vpack.c.b16 %v884, %v875
        %v1272 = vpack.c.b16 %v885, %v876
        %v1273 = vpack.c.b16 %v886, %v877
        %v1274 = vpack.c.b16 %v887, %v878
        %v1275 = vpack.c.b16 %v888, %v879
        %v1276 = vpack.c.b16 %v889, %v880
        %v1277 = vpack.c.b16 %v890, %v881
        %v1278 = vpack.c.b16 %v900, %v891
        %v1279 = vpack.c.b16 %v901, %v892
        %v1280 = vpack.c.b16 %v902, %v893
        %v1281 = vpack.c.b16 %v903, %v894
        %v1282 = vpack.c.b16 %v904, %v895
        %v1283 = vpack.c.b16 %v905, %v896
        %v1284 = vpack.c.b16 %v906, %v897
        %v1285 = vpack.c.b16 %v907, %v898
        %v1286 = vpack.c.b16 %v908, %v899
        %v1287 = vpack.c.b16 %v918, %v909
        %v1288 = vpack.c.b16 %v919, %v910
        %v1289 = vpack.c.b16 %v920, %v911
        %v1290 = vpack.c.b16 %v921, %v912
        %v1291 = vpack.c.b16 %v922, %v913
        %v1292 = vpack.c.b16 %v923, %v914
        %v1293 = vpack.c.b16 %v924, %v915
        %v1294 = vpack.c.b16 %v925, %v916
        %v1295 = vpack.c.b16 %v926, %v917
        %v1296 = vpack.c.b16 %v936, %v927
        %v1297 = vpack.c.b16 %v937, %v928
        %v1298 = vpack.c.b16 %v938, %v929
        %v1299 = vpack.c.b16 %v939, %v930
        %v1300 = vpack.c.b16 %v940, %v931
        %v1301 = vpack.c.b16 %v941, %v932
        %v1302 = vpack.c.b16 %v942, %v933
        %v1303 = vpack.c.b16 %v943, %v934
        %v1304 = vpack.c.b16 %v944, %v935
        %v1305 = vpack.c.b16 %v954, %v945
        %v1306 = vpack.c.b16 %v955, %v946
        %v1307 = vpack.c.b16 %v956, %v947
        %v1308 = vpack.c.b16 %v957, %v948
        %v1309 = vpack.c.b16 %v958, %v949
        %v1310 = vpack.c.b16 %v959, %v950
        %v1311 = vpack.c.b16 %v960, %v951
        %v1312 = vpack.c.b16 %v961, %v952
        %v1313 = vpack.c.b16 %v962, %v953
        %v1314 = vpack.c.b16 %v972, %v963
        %v1315 = vpack.c.b16 %v973, %v964
        %v1316 = vpack.c.b16 %v974, %v965
        %v1317 = vpack.c.b16 %v975, %v966
        %v1318 = vpack.c.b16 %v976, %v967
        %v1319 = vpack.c.b16 %v977, %v968
        %v1320 = vpack.c.b16 %v978, %v969
        %v1321 = vpack.c.b16 %v979, %v970
        %v1322 = vpack.c.b16 %v980, %v971
        %v1323 = vpack.c.b16 %v990, %v981
        %v1324 = vpack.c.b16 %v991, %v982
        %v1325 = vpack.c.b16 %v992, %v983
        %v1326 = vpack.c.b16 %v993, %v984
        %v1327 = vpack.c.b16 %v994, %v985
        %v1328 = vpack.c.b16 %v995, %v986
        %v1329 = vpack.c.b16 %v996, %v987
        %v1330 = vpack.c.b16 %v997, %v988
        %v1331 = vpack.c.b16 %v998, %v989
        %v1332 = vpack.c.b16 %v1008, %v999
        %v1333 = vpack.c.b16 %v1009, %v1000
        %v1334 = vpack.c.b16 %v1010, %v1001
        %v1335 = vpack.c.b16 %v1011, %v1002
        %v1336 = vpack.c.b16 %v1012, %v1003
        %v1337 = vpack.c.b16 %v1013, %v1004
        %v1338 = vpack.c.b16 %v1014, %v1005
        %v1339 = vpack.c.b16 %v1015, %v1006
        %v1340 = vpack.c.b16 %v1016, %v1007
        %v1341 = vpack.c.b16 %v1026, %v1017
        %v1342 = vpack.c.b16 %v1027, %v1018
        %v1343 = vpack.c.b16 %v1028, %v1019
        %v1344 = vpack.c.b16 %v1029, %v1020
        %v1345 = vpack.c.b16 %v1030, %v1021
        %v1346 = vpack.c.b16 %v1031, %v1022
        %v1347 = vpack.c.b16 %v1032, %v1023
        %v1348 = vpack.c.b16 %v1033, %v1024
        %v1349 = vpack.c.b16 %v1034, %v1025
        %v1350 = vpack.c.b16 %v1044, %v1035
        %v1351 = vpack.c.b16 %v1045, %v1036
        %v1352 = vpack.c.b16 %v1046, %v1037
        %v1353 = vpack.c.b16 %v1047, %v1038
        %v1354 = vpack.c.b16 %v1048, %v1039
        %v1355 = vpack.c.b16 %v1049, %v1040
        %v1356 = vpack.c.b16 %v1050, %v1041
        %v1357 = vpack.c.b16 %v1051, %v1042
        %v1358 = vpack.c.b16 %v1052, %v1043
        %v1359 = vpack.c.b16 %v1062, %v1053
        %v1360 = vpack.c.b16 %v1063, %v1054
        %v1361 = vpack.c.b16 %v1064, %v1055
        %v1362 = vpack.c.b16 %v1065, %v1056
        %v1363 = vpack.c.b16 %v1066, %v1057
        %v1364 = vpack.c.b16 %v1067, %v1058
        %v1365 = vpack.c.b16 %v1068, %v1059
        %v1366 = vpack.c.b16 %v1069, %v1060
        %v1367 = vpack.c.b16 %v1070, %v1061
        %v1368 = vpack.c.b16 %v1080, %v1071
        %v1369 = vpack.c.b16 %v1081, %v1072
        %v1370 = vpack.c.b16 %v1082, %v1073
        %v1371 = vpack.c.b16 %v1083, %v1074
        %v1372 = vpack.c.b16 %v1084, %v1075
        %v1373 = vpack.c.b16 %v1085, %v1076
        %v1374 = vpack.c.b16 %v1086, %v1077
        %v1375 = vpack.c.b16 %v1087, %v1078
        %v1376 = vpack.c.b16 %v1088, %v1079
        %v1377 = vpack.c.b16 %v1098, %v1089
        %v1378 = vpack.c.b16 %v1099, %v1090
        %v1379 = vpack.c.b16 %v1100, %v1091
        %v1380 = vpack.c.b16 %v1101, %v1092
        %v1381 = vpack.c.b16 %v1102, %v1093
        %v1382 = vpack.c.b16 %v1103, %v1094
        %v1383 = vpack.c.b16 %v1104, %v1095
        %v1384 = vpack.c.b16 %v1105, %v1096
        %v1385 = vpack.c.b16 %v1106, %v1097
        %v1386 = vpack.c.b16 %v1116, %v1107
        %v1387 = vpack.c.b16 %v1117, %v1108
        %v1388 = vpack.c.b16 %v1118, %v1109
        %v1389 = vpack.c.b16 %v1119, %v1110
        %v1390 = vpack.c.b16 %v1120, %v1111
        %v1391 = vpack.c.b16 %v1121, %v1112
        %v1392 = vpack.c.b16 %v1122, %v1113
        %v1393 = vpack.c.b16 %v1123, %v1114
        %v1394 = vpack.c.b16 %v1124, %v1115
        %v1395 = vpack.c.b16 %v1134, %v1125
        %v1396 = vpack.c.b16 %v1135, %v1126
        %v1397 = vpack.c.b16 %v1136, %v1127
        %v1398 = vpack.c.b16 %v1137, %v1128
        %v1399 = vpack.c.b16 %v1138, %v1129
        %v1400 = vpack.c.b16 %v1139, %v1130
        %v1401 = vpack.c.b16 %v1140, %v1131
        %v1402 = vpack.c.b16 %v1141, %v1132
        %v1403 = vpack.c.b16 %v1142, %v1133
        %v1404 = vpack.c.b16 %v1152, %v1143
        %v1405 = vpack.c.b16 %v1153, %v1144
        %v1406 = vpack.c.b16 %v1154, %v1145
        %v1407 = vpack.c.b16 %v1155, %v1146
        %v1408 = vpack.c.b16 %v1156, %v1147
        %v1409 = vpack.c.b16 %v1157, %v1148
        %v1410 = vpack.c.b16 %v1158, %v1149
        %v1411 = vpack.c.b16 %v1159, %v1150
        %v1412 = vpack.c.b16 %v1160, %v1151
        %v1413 = vpack.c.b16 %v1170, %v1161
        %v1414 = vpack.c.b16 %v1171, %v1162
        %v1415 = vpack.c.b16 %v1172, %v1163
        %v1416 = vpack.c.b16 %v1173, %v1164
        %v1417 = vpack.c.b16 %v1174, %v1165
        %v1418 = vpack.c.b16 %v1175, %v1166
        %v1419 = vpack.c.b16 %v1176, %v1167
        %v1420 = vpack.c.b16 %v1177, %v1168
        %v1421 = vpack.c.b16 %v1178, %v1169
        %v1422 = vpack.c.b16 %v1188, %v1179
        %v1423 = vpack.c.b16 %v1189, %v1180
        %v1424 = vpack.c.b16 %v1190, %v1181
        %v1425 = vpack.c.b16 %v1191, %v1182
        %v1426 = vpack.c.b16 %v1192, %v1183
        %v1427 = vpack.c.b16 %v1193, %v1184
        %v1428 = vpack.c.b16 %v1194, %v1185
        %v1429 = vpack.c.b16 %v1195, %v1186
        %v1430 = vpack.c.b16 %v1196, %v1187
        %v1431 = vpack.c.b16 %v1206, %v1197
        %v1432 = vpack.c.b16 %v1207, %v1198
        %v1433 = vpack.c.b16 %v1208, %v1199
        %v1434 = vpack.c.b16 %v1209, %v1200
        %v1435 = vpack.c.b16 %v1210, %v1201
        %v1436 = vpack.c.b16 %v1211, %v1202
        %v1437 = vpack.c.b16 %v1212, %v1203
        %v1438 = vpack.c.b16 %v1213, %v1204
        %v1439 = vpack.c.b16 %v1214, %v1205
        %v1440 = vpack.c.b16 %v1224, %v1215
        %v1441 = vpack.c.b16 %v1225, %v1216
        %v1442 = vpack.c.b16 %v1226, %v1217
        %v1443 = vpack.c.b16 %v1227, %v1218
        %v1444 = vpack.c.b16 %v1228, %v1219
        %v1445 = vpack.c.b16 %v1229, %v1220
        %v1446 = vpack.c.b16 %v1230, %v1221
        %v1447 = vpack.c.b16 %v1231, %v1222
        %v1448 = vpack.c.b16 %v1232, %v1223
        %1665 = vmatprep.subr.bf16.mxu0 %v1234
        %1666 = vmatpush1.bf16.msra.mxu0 %v1233
        %1667 = vmatprep.subr.bf16.mxu0 %v1243
        %1668 = vmatpush1.bf16.msra.mxu0 %v1242
        %1669 = vmatprep.subr.bf16.mxu0 %v1252
        %1670 = vmatpush1.bf16.msra.mxu0 %v1251
        %1671 = vmatprep.subr.bf16.mxu0 %v1261
        %1672 = vmatpush1.bf16.msra.mxu0 %v1260
        %1673 = vmatprep.subr.bf16.mxu0 %v1270
        %1674 = vmatpush1.bf16.msra.mxu0 %v1269
        %1675 = vmatprep.subr.bf16.mxu0 %v1279
        %1676 = vmatpush1.bf16.msra.mxu0 %v1278
        %1677 = vmatprep.subr.bf16.mxu0 %v1288
        %1678 = vmatpush1.bf16.msra.mxu0 %v1287
        %1679 = vmatprep.subr.bf16.mxu0 %v1297
        %1680 = vmatpush1.bf16.msra.mxu0 %v1296
        %1681 = vmatprep.subr.bf16.mxu0 %v1306
        %1682 = vmatpush1.bf16.msra.mxu0 %v1305
        %1683 = vmatprep.subr.bf16.mxu0 %v1315
        %1684 = vmatpush1.bf16.msra.mxu0 %v1314
        %1685 = vmatprep.subr.bf16.mxu0 %v1324
        %1686 = vmatpush1.bf16.msra.mxu0 %v1323
        %1687 = vmatprep.subr.bf16.mxu0 %v1333
        %1688 = vmatpush1.bf16.msra.mxu0 %v1332
        %1689 = vmatprep.subr.bf16.mxu0 %v1342
        %1690 = vmatpush1.bf16.msra.mxu0 %v1341
        %1691 = vmatprep.subr.bf16.mxu0 %v1351
        %1692 = vmatpush1.bf16.msra.mxu0 %v1350
        %1693 = vmatprep.subr.bf16.mxu0 %v1360
        %1694 = vmatpush1.bf16.msra.mxu0 %v1359
        %1695 = vmatprep.subr.bf16.mxu0 %v1369
        %1696 = vmatpush1.bf16.msra.mxu0 %v1368
        %1697 = vmatprep.mubr.bf16.mxu0 %v298
        %1698 = vmatmul.mubr.bf16.gmra.mrb[0].mxu0 %v297
        %v1699 = vpop.f32.mrb[0].mxu0
        %v1700 = vadd.f32 0.0, %v1699
        %v1701 = vpop.f32.mrb[0].mxu0
        %v1702 = vadd.f32 0.0, %v1701
        %v1703 = vpop.f32.mrb[0].mxu0
        %v1704 = vadd.f32 0.0, %v1703
        %v1705 = vpop.f32.mrb[0].mxu0
        %v1706 = vadd.f32 0.0, %v1705
        %1707 = vmatprep.mubr.bf16.mxu0 %v301
        %1708 = vmatmul.mubr.bf16.gmra.mrb[0].mxu0 %v300
        %v1709 = vpop.f32.mrb[0].mxu0
        %v1710 = vadd.f32 0.0, %v1709
        %v1711 = vpop.f32.mrb[0].mxu0
        %v1712 = vadd.f32 0.0, %v1711
        %v1713 = vpop.f32.mrb[0].mxu0
        %v1714 = vadd.f32 0.0, %v1713
        %v1715 = vpop.f32.mrb[0].mxu0
        %v1716 = vadd.f32 0.0, %v1715
        %1717 = vmatprep.mubr.bf16.mxu0 %v304
        %1718 = vmatmul.mubr.bf16.gmra.mrb[0].mxu0 %v303
        %v1719 = vpop.f32.mrb[0].mxu0
        %v1720 = vadd.f32 0.0, %v1719
        %v1721 = vpop.f32.mrb[0].mxu0
        %v1722 = vadd.f32 0.0, %v1721
        %v1723 = vpop.f32.mrb[0].mxu0
        %v1724 = vadd.f32 0.0, %v1723
        %v1725 = vpop.f32.mrb[0].mxu0
        %v1726 = vadd.f32 0.0, %v1725
        %1727 = vmatprep.mubr.bf16.mxu0 %v307
        %1728 = vmatmul.mubr.bf16.gmra.mrb[0].mxu0 %v306
        %v1729 = vpop.f32.mrb[0].mxu0
        %v1730 = vadd.f32 0.0, %v1729
        %v1731 = vpop.f32.mrb[0].mxu0
        %v1732 = vadd.f32 0.0, %v1731
        %v1733 = vpop.f32.mrb[0].mxu0
        %v1734 = vadd.f32 0.0, %v1733
        %v1735 = vpop.f32.mrb[0].mxu0
        %v1736 = vadd.f32 0.0, %v1735
        %1737 = vmatprep.mubr.bf16.mxu0 %v310
        %1738 = vmatmul.mubr.bf16.gmra.mrb[0].mxu0 %v309
        %v1739 = vpop.f32.mrb[0].mxu0
        %v1740 = vadd.f32 0.0, %v1739
        %v1741 = vpop.f32.mrb[0].mxu0
        %v1742 = vadd.f32 0.0, %v1741
        %v1743 = vpop.f32.mrb[0].mxu0
        %v1744 = vadd.f32 0.0, %v1743
        %v1745 = vpop.f32.mrb[0].mxu0
        %v1746 = vadd.f32 0.0, %v1745
        %1747 = vmatprep.mubr.bf16.mxu0 %v313
        %1748 = vmatmul.mubr.bf16.gmra.mrb[0].mxu0 %v312
        %v1749 = vpop.f32.mrb[0].mxu0
        %v1750 = vadd.f32 0.0, %v1749
        %v1751 = vpop.f32.mrb[0].mxu0
        %v1752 = vadd.f32 0.0, %v1751
        %v1753 = vpop.f32.mrb[0].mxu0
        %v1754 = vadd.f32 0.0, %v1753
        %v1755 = vpop.f32.mrb[0].mxu0
        %v1756 = vadd.f32 0.0, %v1755
        %1757 = vmatprep.mubr.bf16.mxu0 %v316
        %1758 = vmatmul.mubr.bf16.gmra.mrb[0].mxu0 %v315
        %v1759 = vpop.f32.mrb[0].mxu0
        %v1760 = vadd.f32 0.0, %v1759
        %v1761 = vpop.f32.mrb[0].mxu0
        %v1762 = vadd.f32 0.0, %v1761
        %v1763 = vpop.f32.mrb[0].mxu0
        %v1764 = vadd.f32 0.0, %v1763
        %v1765 = vpop.f32.mrb[0].mxu0
        %v1766 = vadd.f32 0.0, %v1765
        %1767 = vmatprep.mubr.bf16.mxu0 %v319
        %1768 = vmatmul.mubr.bf16.gmra.mrb[0].mxu0 %v318
        %v1769 = vpop.f32.mrb[0].mxu0
        %v1770 = vadd.f32 0.0, %v1769
        %v1771 = vpop.f32.mrb[0].mxu0
        %v1772 = vadd.f32 0.0, %v1771
        %v1773 = vpop.f32.mrb[0].mxu0
        %v1774 = vadd.f32 0.0, %v1773
        %v1775 = vpop.f32.mrb[0].mxu0
        %v1776 = vadd.f32 0.0, %v1775
        %1777 = vdwg.mxu0
        %1778 = vmatprep.subr.bf16.mxu0 %v1378
        %1779 = vmatpush1.bf16.msra.mxu0 %v1377
        %1780 = vmatprep.subr.bf16.mxu0 %v1387
        %1781 = vmatpush1.bf16.msra.mxu0 %v1386
        %1782 = vmatprep.subr.bf16.mxu0 %v1396
        %1783 = vmatpush1.bf16.msra.mxu0 %v1395
        %1784 = vmatprep.subr.bf16.mxu0 %v1405
        %1785 = vmatpush1.bf16.msra.mxu0 %v1404
        %1786 = vmatprep.subr.bf16.mxu0 %v1414
        %1787 = vmatpush1.bf16.msra.mxu0 %v1413
        %1788 = vmatprep.subr.bf16.mxu0 %v1423
        %1789 = vmatpush1.bf16.msra.mxu0 %v1422
        %1790 = vmatprep.subr.bf16.mxu0 %v1432
        %1791 = vmatpush1.bf16.msra.mxu0 %v1431
        %1792 = vmatprep.subr.bf16.mxu0 %v1441
        %1793 = vmatpush1.bf16.msra.mxu0 %v1440
        %1794 = vmatprep.subr.bf16.mxu0 0
        %1795 = vmatpush1.bf16.msra.mxu0 0
        %1796 = vmatprep.subr.bf16.mxu0 0
        %1797 = vmatpush1.bf16.msra.mxu0 0
        %1798 = vmatprep.subr.bf16.mxu0 0
        %1799 = vmatpush1.bf16.msra.mxu0 0
        %1800 = vmatprep.subr.bf16.mxu0 0
        %1801 = vmatpush1.bf16.msra.mxu0 0
        %1802 = vmatprep.subr.bf16.mxu0 0
        %1803 = vmatpush1.bf16.msra.mxu0 0
        %1804 = vmatprep.subr.bf16.mxu0 0
        %1805 = vmatpush1.bf16.msra.mxu0 0
        %1806 = vmatprep.subr.bf16.mxu0 0
        %1807 = vmatpush1.bf16.msra.mxu0 0
        %1808 = vmatprep.subr.bf16.mxu0 0
        %1809 = vmatpush1.bf16.msra.mxu0 0
        %1810 = vmatprep.mubr.bf16.mxu0 0
        %1811 = vmatmul.mubr.bf16.gmra.mrb[0].mxu0 %v299
        %v1812 = vpop.f32.mrb[0].mxu0
        %v1813 = vadd.f32 %v1700, %v1812
        %v1814 = vpop.f32.mrb[0].mxu0
        %v1815 = vadd.f32 %v1702, %v1814
        %v1816 = vpop.f32.mrb[0].mxu0
        %v1817 = vadd.f32 %v1704, %v1816
        %v1818 = vpop.f32.mrb[0].mxu0
        %v1819 = vadd.f32 %v1706, %v1818
        %1820 = vmatprep.mubr.bf16.mxu0 0
        %1821 = vmatmul.mubr.bf16.gmra.mrb[0].mxu0 %v302
        %v1822 = vpop.f32.mrb[0].mxu0
        %v1823 = vadd.f32 %v1710, %v1822
        %v1824 = vpop.f32.mrb[0].mxu0
        %v1825 = vadd.f32 %v1712, %v1824
        %v1826 = vpop.f32.mrb[0].mxu0
        %v1827 = vadd.f32 %v1714, %v1826
        %v1828 = vpop.f32.mrb[0].mxu0
        %v1829 = vadd.f32 %v1716, %v1828
        %1830 = vmatprep.mubr.bf16.mxu0 0
        %1831 = vmatmul.mubr.bf16.gmra.mrb[0].mxu0 %v305
        %v1832 = vpop.f32.mrb[0].mxu0
        %v1833 = vadd.f32 %v1720, %v1832
        %v1834 = vpop.f32.mrb[0].mxu0
        %v1835 = vadd.f32 %v1722, %v1834
        %v1836 = vpop.f32.mrb[0].mxu0
        %v1837 = vadd.f32 %v1724, %v1836
        %v1838 = vpop.f32.mrb[0].mxu0
        %v1839 = vadd.f32 %v1726, %v1838
        %1840 = vmatprep.mubr.bf16.mxu0 0
        %1841 = vmatmul.mubr.bf16.gmra.mrb[0].mxu0 %v308
        %v1842 = vpop.f32.mrb[0].mxu0
        %v1843 = vadd.f32 %v1730, %v1842
        %v1844 = vpop.f32.mrb[0].mxu0
        %v1845 = vadd.f32 %v1732, %v1844
        %v1846 = vpop.f32.mrb[0].mxu0
        %v1847 = vadd.f32 %v1734, %v1846
        %v1848 = vpop.f32.mrb[0].mxu0
        %v1849 = vadd.f32 %v1736, %v1848
        %1850 = vmatprep.mubr.bf16.mxu0 0
        %1851 = vmatmul.mubr.bf16.gmra.mrb[0].mxu0 %v311
        %v1852 = vpop.f32.mrb[0].mxu0
        %v1853 = vadd.f32 %v1740, %v1852
        %v1854 = vpop.f32.mrb[0].mxu0
        %v1855 = vadd.f32 %v1742, %v1854
        %v1856 = vpop.f32.mrb[0].mxu0
        %v1857 = vadd.f32 %v1744, %v1856
        %v1858 = vpop.f32.mrb[0].mxu0
        %v1859 = vadd.f32 %v1746, %v1858
        %1860 = vmatprep.mubr.bf16.mxu0 0
        %1861 = vmatmul.mubr.bf16.gmra.mrb[0].mxu0 %v314
        %v1862 = vpop.f32.mrb[0].mxu0
        %v1863 = vadd.f32 %v1750, %v1862
        %v1864 = vpop.f32.mrb[0].mxu0
        %v1865 = vadd.f32 %v1752, %v1864
        %v1866 = vpop.f32.mrb[0].mxu0
        %v1867 = vadd.f32 %v1754, %v1866
        %v1868 = vpop.f32.mrb[0].mxu0
        %v1869 = vadd.f32 %v1756, %v1868
        %1870 = vmatprep.mubr.bf16.mxu0 0
        %1871 = vmatmul.mubr.bf16.gmra.mrb[0].mxu0 %v317
        %v1872 = vpop.f32.mrb[0].mxu0
        %v1873 = vadd.f32 %v1760, %v1872
        %v1874 = vpop.f32.mrb[0].mxu0
        %v1875 = vadd.f32 %v1762, %v1874
        %v1876 = vpop.f32.mrb[0].mxu0
        %v1877 = vadd.f32 %v1764, %v1876
        %v1878 = vpop.f32.mrb[0].mxu0
        %v1879 = vadd.f32 %v1766, %v1878
        %1880 = vmatprep.mubr.bf16.mxu0 0
        %1881 = vmatmul.mubr.bf16.gmra.mrb[0].mxu0 %v320
        %v1882 = vpop.f32.mrb[0].mxu0
        %v1883 = vadd.f32 %v1770, %v1882
        %v1884 = vpop.f32.mrb[0].mxu0
        %v1885 = vadd.f32 %v1772, %v1884
        %v1886 = vpop.f32.mrb[0].mxu0
        %v1887 = vadd.f32 %v1774, %v1886
        %v1888 = vpop.f32.mrb[0].mxu0
        %v1889 = vadd.f32 %v1776, %v1888
        %1890 = vdwg.mxu0
        %1891 = vmatprep.subr.bf16.mxu0 %v1236
        %1892 = vmatpush1.bf16.msra.mxu0 %v1235
        %1893 = vmatprep.subr.bf16.mxu0 %v1245
        %1894 = vmatpush1.bf16.msra.mxu0 %v1244
        %1895 = vmatprep.subr.bf16.mxu0 %v1254
        %1896 = vmatpush1.bf16.msra.mxu0 %v1253
        %1897 = vmatprep.subr.bf16.mxu0 %v1263
        %1898 = vmatpush1.bf16.msra.mxu0 %v1262
        %1899 = vmatprep.subr.bf16.mxu0 %v1272
        %1900 = vmatpush1.bf16.msra.mxu0 %v1271
        %1901 = vmatprep.subr.bf16.mxu0 %v1281
        %1902 = vmatpush1.bf16.msra.mxu0 %v1280
        %1903 = vmatprep.subr.bf16.mxu0 %v1290
        %1904 = vmatpush1.bf16.msra.mxu0 %v1289
        %1905 = vmatprep.subr.bf16.mxu0 %v1299
        %1906 = vmatpush1.bf16.msra.mxu0 %v1298
        %1907 = vmatprep.subr.bf16.mxu0 %v1308
        %1908 = vmatpush1.bf16.msra.mxu0 %v1307
        %1909 = vmatprep.subr.bf16.mxu0 %v1317
        %1910 = vmatpush1.bf16.msra.mxu0 %v1316
        %1911 = vmatprep.subr.bf16.mxu0 %v1326
        %1912 = vmatpush1.bf16.msra.mxu0 %v1325
        %1913 = vmatprep.subr.bf16.mxu0 %v1335
        %1914 = vmatpush1.bf16.msra.mxu0 %v1334
        %1915 = vmatprep.subr.bf16.mxu0 %v1344
        %1916 = vmatpush1.bf16.msra.mxu0 %v1343
        %1917 = vmatprep.subr.bf16.mxu0 %v1353
        %1918 = vmatpush1.bf16.msra.mxu0 %v1352
        %1919 = vmatprep.subr.bf16.mxu0 %v1362
        %1920 = vmatpush1.bf16.msra.mxu0 %v1361
        %1921 = vmatprep.subr.bf16.mxu0 %v1371
        %1922 = vmatpush1.bf16.msra.mxu0 %v1370
        %1923 = vmatprep.mubr.bf16.mxu0 %v298
        %1924 = vmatmul.mubr.bf16.gmra.mrb[0].mxu0 %v297
        %v1925 = vpop.f32.mrb[0].mxu0
        %v1926 = vadd.f32 0.0, %v1925
        %v1927 = vpop.f32.mrb[0].mxu0
        %v1928 = vadd.f32 0.0, %v1927
        %v1929 = vpop.f32.mrb[0].mxu0
        %v1930 = vadd.f32 0.0, %v1929
        %v1931 = vpop.f32.mrb[0].mxu0
        %v1932 = vadd.f32 0.0, %v1931
        %1933 = vmatprep.mubr.bf16.mxu0 %v301
        %1934 = vmatmul.mubr.bf16.gmra.mrb[0].mxu0 %v300
        %v1935 = vpop.f32.mrb[0].mxu0
        %v1936 = vadd.f32 0.0, %v1935
        %v1937 = vpop.f32.mrb[0].mxu0
        %v1938 = vadd.f32 0.0, %v1937
        %v1939 = vpop.f32.mrb[0].mxu0
        %v1940 = vadd.f32 0.0, %v1939
        %v1941 = vpop.f32.mrb[0].mxu0
        %v1942 = vadd.f32 0.0, %v1941
        %1943 = vmatprep.mubr.bf16.mxu0 %v304
        %1944 = vmatmul.mubr.bf16.gmra.mrb[0].mxu0 %v303
        %v1945 = vpop.f32.mrb[0].mxu0
        %v1946 = vadd.f32 0.0, %v1945
        %v1947 = vpop.f32.mrb[0].mxu0
        %v1948 = vadd.f32 0.0, %v1947
        %v1949 = vpop.f32.mrb[0].mxu0
        %v1950 = vadd.f32 0.0, %v1949
        %v1951 = vpop.f32.mrb[0].mxu0
        %v1952 = vadd.f32 0.0, %v1951
        %1953 = vmatprep.mubr.bf16.mxu0 %v307
        %1954 = vmatmul.mubr.bf16.gmra.mrb[0].mxu0 %v306
        %v1955 = vpop.f32.mrb[0].mxu0
        %v1956 = vadd.f32 0.0, %v1955
        %v1957 = vpop.f32.mrb[0].mxu0
        %v1958 = vadd.f32 0.0, %v1957
        %v1959 = vpop.f32.mrb[0].mxu0
        %v1960 = vadd.f32 0.0, %v1959
        %v1961 = vpop.f32.mrb[0].mxu0
        %v1962 = vadd.f32 0.0, %v1961
        %1963 = vmatprep.mubr.bf16.mxu0 %v310
        %1964 = vmatmul.mubr.bf16.gmra.mrb[0].mxu0 %v309
        %v1965 = vpop.f32.mrb[0].mxu0
        %v1966 = vadd.f32 0.0, %v1965
        %v1967 = vpop.f32.mrb[0].mxu0
        %v1968 = vadd.f32 0.0, %v1967
        %v1969 = vpop.f32.mrb[0].mxu0
        %v1970 = vadd.f32 0.0, %v1969
        %v1971 = vpop.f32.mrb[0].mxu0
        %v1972 = vadd.f32 0.0, %v1971
        %1973 = vmatprep.mubr.bf16.mxu0 %v313
        %1974 = vmatmul.mubr.bf16.gmra.mrb[0].mxu0 %v312
        %v1975 = vpop.f32.mrb[0].mxu0
        %v1976 = vadd.f32 0.0, %v1975
        %v1977 = vpop.f32.mrb[0].mxu0
        %v1978 = vadd.f32 0.0, %v1977
        %v1979 = vpop.f32.mrb[0].mxu0
        %v1980 = vadd.f32 0.0, %v1979
        %v1981 = vpop.f32.mrb[0].mxu0
        %v1982 = vadd.f32 0.0, %v1981
        %1983 = vmatprep.mubr.bf16.mxu0 %v316
        %1984 = vmatmul.mubr.bf16.gmra.mrb[0].mxu0 %v315
        %v1985 = vpop.f32.mrb[0].mxu0
        %v1986 = vadd.f32 0.0, %v1985
        %v1987 = vpop.f32.mrb[0].mxu0
        %v1988 = vadd.f32 0.0, %v1987
        %v1989 = vpop.f32.mrb[0].mxu0
        %v1990 = vadd.f32 0.0, %v1989
        %v1991 = vpop.f32.mrb[0].mxu0
        %v1992 = vadd.f32 0.0, %v1991
        %1993 = vmatprep.mubr.bf16.mxu0 %v319
        %1994 = vmatmul.mubr.bf16.gmra.mrb[0].mxu0 %v318
        %v1995 = vpop.f32.mrb[0].mxu0
        %v1996 = vadd.f32 0.0, %v1995
        %v1997 = vpop.f32.mrb[0].mxu0
        %v1998 = vadd.f32 0.0, %v1997
        %v1999 = vpop.f32.mrb[0].mxu0
        %v2000 = vadd.f32 0.0, %v1999
        %v2001 = vpop.f32.mrb[0].mxu0
        %v2002 = vadd.f32 0.0, %v2001
        %2003 = vdwg.mxu0
        %2004 = vmatprep.subr.bf16.mxu0 %v1380
        %2005 = vmatpush1.bf16.msra.mxu0 %v1379
        %2006 = vmatprep.subr.bf16.mxu0 %v1389
        %2007 = vmatpush1.bf16.msra.mxu0 %v1388
        %2008 = vmatprep.subr.bf16.mxu0 %v1398
        %2009 = vmatpush1.bf16.msra.mxu0 %v1397
        %2010 = vmatprep.subr.bf16.mxu0 %v1407
        %2011 = vmatpush1.bf16.msra.mxu0 %v1406
        %2012 = vmatprep.subr.bf16.mxu0 %v1416
        %2013 = vmatpush1.bf16.msra.mxu0 %v1415
        %2014 = vmatprep.subr.bf16.mxu0 %v1425
        %2015 = vmatpush1.bf16.msra.mxu0 %v1424
        %2016 = vmatprep.subr.bf16.mxu0 %v1434
        %2017 = vmatpush1.bf16.msra.mxu0 %v1433
        %2018 = vmatprep.subr.bf16.mxu0 %v1443
        %2019 = vmatpush1.bf16.msra.mxu0 %v1442
        %2020 = vmatprep.subr.bf16.mxu0 0
        %2021 = vmatpush1.bf16.msra.mxu0 0
        %2022 = vmatprep.subr.bf16.mxu0 0
        %2023 = vmatpush1.bf16.msra.mxu0 0
        %2024 = vmatprep.subr.bf16.mxu0 0
        %2025 = vmatpush1.bf16.msra.mxu0 0
        %2026 = vmatprep.subr.bf16.mxu0 0
        %2027 = vmatpush1.bf16.msra.mxu0 0
        %2028 = vmatprep.subr.bf16.mxu0 0
        %2029 = vmatpush1.bf16.msra.mxu0 0
        %2030 = vmatprep.subr.bf16.mxu0 0
        %2031 = vmatpush1.bf16.msra.mxu0 0
        %2032 = vmatprep.subr.bf16.mxu0 0
        %2033 = vmatpush1.bf16.msra.mxu0 0
        %2034 = vmatprep.subr.bf16.mxu0 0
        %2035 = vmatpush1.bf16.msra.mxu0 0
        %2036 = vmatprep.mubr.bf16.mxu0 0
        %2037 = vmatmul.mubr.bf16.gmra.mrb[0].mxu0 %v299
        %v2038 = vpop.f32.mrb[0].mxu0
        %v2039 = vadd.f32 %v1926, %v2038
        %v2040 = vpop.f32.mrb[0].mxu0
        %v2041 = vadd.f32 %v1928, %v2040
        %v2042 = vpop.f32.mrb[0].mxu0
        %v2043 = vadd.f32 %v1930, %v2042
        %v2044 = vpop.f32.mrb[0].mxu0
        %v2045 = vadd.f32 %v1932, %v2044
        %2046 = vmatprep.mubr.bf16.mxu0 0
        %2047 = vmatmul.mubr.bf16.gmra.mrb[0].mxu0 %v302
        %v2048 = vpop.f32.mrb[0].mxu0
        %v2049 = vadd.f32 %v1936, %v2048
        %v2050 = vpop.f32.mrb[0].mxu0
        %v2051 = vadd.f32 %v1938, %v2050
        %v2052 = vpop.f32.mrb[0].mxu0
        %v2053 = vadd.f32 %v1940, %v2052
        %v2054 = vpop.f32.mrb[0].mxu0
        %v2055 = vadd.f32 %v1942, %v2054
        %2056 = vmatprep.mubr.bf16.mxu0 0
        %2057 = vmatmul.mubr.bf16.gmra.mrb[0].mxu0 %v305
        %v2058 = vpop.f32.mrb[0].mxu0
        %v2059 = vadd.f32 %v1946, %v2058
        %v2060 = vpop.f32.mrb[0].mxu0
        %v2061 = vadd.f32 %v1948, %v2060
        %v2062 = vpop.f32.mrb[0].mxu0
        %v2063 = vadd.f32 %v1950, %v2062
        %v2064 = vpop.f32.mrb[0].mxu0
        %v2065 = vadd.f32 %v1952, %v2064
        %2066 = vmatprep.mubr.bf16.mxu0 0
        %2067 = vmatmul.mubr.bf16.gmra.mrb[0].mxu0 %v308
        %v2068 = vpop.f32.mrb[0].mxu0
        %v2069 = vadd.f32 %v1956, %v2068
        %v2070 = vpop.f32.mrb[0].mxu0
        %v2071 = vadd.f32 %v1958, %v2070
        %v2072 = vpop.f32.mrb[0].mxu0
        %v2073 = vadd.f32 %v1960, %v2072
        %v2074 = vpop.f32.mrb[0].mxu0
        %v2075 = vadd.f32 %v1962, %v2074
        %2076 = vmatprep.mubr.bf16.mxu0 0
        %2077 = vmatmul.mubr.bf16.gmra.mrb[0].mxu0 %v311
        %v2078 = vpop.f32.mrb[0].mxu0
        %v2079 = vadd.f32 %v1966, %v2078
        %v2080 = vpop.f32.mrb[0].mxu0
        %v2081 = vadd.f32 %v1968, %v2080
        %v2082 = vpop.f32.mrb[0].mxu0
        %v2083 = vadd.f32 %v1970, %v2082
        %v2084 = vpop.f32.mrb[0].mxu0
        %v2085 = vadd.f32 %v1972, %v2084
        %2086 = vmatprep.mubr.bf16.mxu0 0
        %2087 = vmatmul.mubr.bf16.gmra.mrb[0].mxu0 %v314
        %v2088 = vpop.f32.mrb[0].mxu0
        %v2089 = vadd.f32 %v1976, %v2088
        %v2090 = vpop.f32.mrb[0].mxu0
        %v2091 = vadd.f32 %v1978, %v2090
        %v2092 = vpop.f32.mrb[0].mxu0
        %v2093 = vadd.f32 %v1980, %v2092
        %v2094 = vpop.f32.mrb[0].mxu0
        %v2095 = vadd.f32 %v1982, %v2094
        %2096 = vmatprep.mubr.bf16.mxu0 0
        %2097 = vmatmul.mubr.bf16.gmra.mrb[0].mxu0 %v317
        %v2098 = vpop.f32.mrb[0].mxu0
        %v2099 = vadd.f32 %v1986, %v2098
        %v2100 = vpop.f32.mrb[0].mxu0
        %v2101 = vadd.f32 %v1988, %v2100
        %v2102 = vpop.f32.mrb[0].mxu0
        %v2103 = vadd.f32 %v1990, %v2102
        %v2104 = vpop.f32.mrb[0].mxu0
        %v2105 = vadd.f32 %v1992, %v2104
        %2106 = vmatprep.mubr.bf16.mxu0 0
        %2107 = vmatmul.mubr.bf16.gmra.mrb[0].mxu0 %v320
        %v2108 = vpop.f32.mrb[0].mxu0
        %v2109 = vadd.f32 %v1996, %v2108
        %v2110 = vpop.f32.mrb[0].mxu0
        %v2111 = vadd.f32 %v1998, %v2110
        %v2112 = vpop.f32.mrb[0].mxu0
        %v2113 = vadd.f32 %v2000, %v2112
        %v2114 = vpop.f32.mrb[0].mxu0
        %v2115 = vadd.f32 %v2002, %v2114
        %2116 = vdwg.mxu0
        %2117 = vmatprep.subr.bf16.mxu0 %v1238
        %2118 = vmatpush1.bf16.msra.mxu0 %v1237
        %2119 = vmatprep.subr.bf16.mxu0 %v1247
        %2120 = vmatpush1.bf16.msra.mxu0 %v1246
        %2121 = vmatprep.subr.bf16.mxu0 %v1256
        %2122 = vmatpush1.bf16.msra.mxu0 %v1255
        %2123 = vmatprep.subr.bf16.mxu0 %v1265
        %2124 = vmatpush1.bf16.msra.mxu0 %v1264
        %2125 = vmatprep.subr.bf16.mxu0 %v1274
        %2126 = vmatpush1.bf16.msra.mxu0 %v1273
        %2127 = vmatprep.subr.bf16.mxu0 %v1283
        %2128 = vmatpush1.bf16.msra.mxu0 %v1282
        %2129 = vmatprep.subr.bf16.mxu0 %v1292
        %2130 = vmatpush1.bf16.msra.mxu0 %v1291
        %2131 = vmatprep.subr.bf16.mxu0 %v1301
        %2132 = vmatpush1.bf16.msra.mxu0 %v1300
        %2133 = vmatprep.subr.bf16.mxu0 %v1310
        %2134 = vmatpush1.bf16.msra.mxu0 %v1309
        %2135 = vmatprep.subr.bf16.mxu0 %v1319
        %2136 = vmatpush1.bf16.msra.mxu0 %v1318
        %2137 = vmatprep.subr.bf16.mxu0 %v1328
        %2138 = vmatpush1.bf16.msra.mxu0 %v1327
        %2139 = vmatprep.subr.bf16.mxu0 %v1337
        %2140 = vmatpush1.bf16.msra.mxu0 %v1336
        %2141 = vmatprep.subr.bf16.mxu0 %v1346
        %2142 = vmatpush1.bf16.msra.mxu0 %v1345
        %2143 = vmatprep.subr.bf16.mxu0 %v1355
        %2144 = vmatpush1.bf16.msra.mxu0 %v1354
        %2145 = vmatprep.subr.bf16.mxu0 %v1364
        %2146 = vmatpush1.bf16.msra.mxu0 %v1363
        %2147 = vmatprep.subr.bf16.mxu0 %v1373
        %2148 = vmatpush1.bf16.msra.mxu0 %v1372
        %2149 = vmatprep.mubr.bf16.mxu0 %v298
        %2150 = vmatmul.mubr.bf16.gmra.mrb[0].mxu0 %v297
        %v2151 = vpop.f32.mrb[0].mxu0
        %v2152 = vadd.f32 0.0, %v2151
        %v2153 = vpop.f32.mrb[0].mxu0
        %v2154 = vadd.f32 0.0, %v2153
        %v2155 = vpop.f32.mrb[0].mxu0
        %v2156 = vadd.f32 0.0, %v2155
        %v2157 = vpop.f32.mrb[0].mxu0
        %v2158 = vadd.f32 0.0, %v2157
        %2159 = vmatprep.mubr.bf16.mxu0 %v301
        %2160 = vmatmul.mubr.bf16.gmra.mrb[0].mxu0 %v300
        %v2161 = vpop.f32.mrb[0].mxu0
        %v2162 = vadd.f32 0.0, %v2161
        %v2163 = vpop.f32.mrb[0].mxu0
        %v2164 = vadd.f32 0.0, %v2163
        %v2165 = vpop.f32.mrb[0].mxu0
        %v2166 = vadd.f32 0.0, %v2165
        %v2167 = vpop.f32.mrb[0].mxu0
        %v2168 = vadd.f32 0.0, %v2167
        %2169 = vmatprep.mubr.bf16.mxu0 %v304
        %2170 = vmatmul.mubr.bf16.gmra.mrb[0].mxu0 %v303
        %v2171 = vpop.f32.mrb[0].mxu0
        %v2172 = vadd.f32 0.0, %v2171
        %v2173 = vpop.f32.mrb[0].mxu0
        %v2174 = vadd.f32 0.0, %v2173
        %v2175 = vpop.f32.mrb[0].mxu0
        %v2176 = vadd.f32 0.0, %v2175
        %v2177 = vpop.f32.mrb[0].mxu0
        %v2178 = vadd.f32 0.0, %v2177
        %2179 = vmatprep.mubr.bf16.mxu0 %v307
        %2180 = vmatmul.mubr.bf16.gmra.mrb[0].mxu0 %v306
        %v2181 = vpop.f32.mrb[0].mxu0
        %v2182 = vadd.f32 0.0, %v2181
        %v2183 = vpop.f32.mrb[0].mxu0
        %v2184 = vadd.f32 0.0, %v2183
        %v2185 = vpop.f32.mrb[0].mxu0
        %v2186 = vadd.f32 0.0, %v2185
        %v2187 = vpop.f32.mrb[0].mxu0
        %v2188 = vadd.f32 0.0, %v2187
        %2189 = vmatprep.mubr.bf16.mxu0 %v310
        %2190 = vmatmul.mubr.bf16.gmra.mrb[0].mxu0 %v309
        %v2191 = vpop.f32.mrb[0].mxu0
        %v2192 = vadd.f32 0.0, %v2191
        %v2193 = vpop.f32.mrb[0].mxu0
        %v2194 = vadd.f32 0.0, %v2193
        %v2195 = vpop.f32.mrb[0].mxu0
        %v2196 = vadd.f32 0.0, %v2195
        %v2197 = vpop.f32.mrb[0].mxu0
        %v2198 = vadd.f32 0.0, %v2197
        %2199 = vmatprep.mubr.bf16.mxu0 %v313
        %2200 = vmatmul.mubr.bf16.gmra.mrb[0].mxu0 %v312
        %v2201 = vpop.f32.mrb[0].mxu0
        %v2202 = vadd.f32 0.0, %v2201
        %v2203 = vpop.f32.mrb[0].mxu0
        %v2204 = vadd.f32 0.0, %v2203
        %v2205 = vpop.f32.mrb[0].mxu0
        %v2206 = vadd.f32 0.0, %v2205
        %v2207 = vpop.f32.mrb[0].mxu0
        %v2208 = vadd.f32 0.0, %v2207
        %2209 = vmatprep.mubr.bf16.mxu0 %v316
        %2210 = vmatmul.mubr.bf16.gmra.mrb[0].mxu0 %v315
        %v2211 = vpop.f32.mrb[0].mxu0
        %v2212 = vadd.f32 0.0, %v2211
        %v2213 = vpop.f32.mrb[0].mxu0
        %v2214 = vadd.f32 0.0, %v2213
        %v2215 = vpop.f32.mrb[0].mxu0
        %v2216 = vadd.f32 0.0, %v2215
        %v2217 = vpop.f32.mrb[0].mxu0
        %v2218 = vadd.f32 0.0, %v2217
        %2219 = vmatprep.mubr.bf16.mxu0 %v319
        %2220 = vmatmul.mubr.bf16.gmra.mrb[0].mxu0 %v318
        %v2221 = vpop.f32.mrb[0].mxu0
        %v2222 = vadd.f32 0.0, %v2221
        %v2223 = vpop.f32.mrb[0].mxu0
        %v2224 = vadd.f32 0.0, %v2223
        %v2225 = vpop.f32.mrb[0].mxu0
        %v2226 = vadd.f32 0.0, %v2225
        %v2227 = vpop.f32.mrb[0].mxu0
        %v2228 = vadd.f32 0.0, %v2227
        %2229 = vdwg.mxu0
        %2230 = vmatprep.subr.bf16.mxu0 %v1382
        %2231 = vmatpush1.bf16.msra.mxu0 %v1381
        %2232 = vmatprep.subr.bf16.mxu0 %v1391
        %2233 = vmatpush1.bf16.msra.mxu0 %v1390
        %2234 = vmatprep.subr.bf16.mxu0 %v1400
        %2235 = vmatpush1.bf16.msra.mxu0 %v1399
        %2236 = vmatprep.subr.bf16.mxu0 %v1409
        %2237 = vmatpush1.bf16.msra.mxu0 %v1408
        %2238 = vmatprep.subr.bf16.mxu0 %v1418
        %2239 = vmatpush1.bf16.msra.mxu0 %v1417
        %2240 = vmatprep.subr.bf16.mxu0 %v1427
        %2241 = vmatpush1.bf16.msra.mxu0 %v1426
        %2242 = vmatprep.subr.bf16.mxu0 %v1436
        %2243 = vmatpush1.bf16.msra.mxu0 %v1435
        %2244 = vmatprep.subr.bf16.mxu0 %v1445
        %2245 = vmatpush1.bf16.msra.mxu0 %v1444
        %2246 = vmatprep.subr.bf16.mxu0 0
        %2247 = vmatpush1.bf16.msra.mxu0 0
        %2248 = vmatprep.subr.bf16.mxu0 0
        %2249 = vmatpush1.bf16.msra.mxu0 0
        %2250 = vmatprep.subr.bf16.mxu0 0
        %2251 = vmatpush1.bf16.msra.mxu0 0
        %2252 = vmatprep.subr.bf16.mxu0 0
        %2253 = vmatpush1.bf16.msra.mxu0 0
        %2254 = vmatprep.subr.bf16.mxu0 0
        %2255 = vmatpush1.bf16.msra.mxu0 0
        %2256 = vmatprep.subr.bf16.mxu0 0
        %2257 = vmatpush1.bf16.msra.mxu0 0
        %2258 = vmatprep.subr.bf16.mxu0 0
        %2259 = vmatpush1.bf16.msra.mxu0 0
        %2260 = vmatprep.subr.bf16.mxu0 0
        %2261 = vmatpush1.bf16.msra.mxu0 0
        %2262 = vmatprep.mubr.bf16.mxu0 0
        %2263 = vmatmul.mubr.bf16.gmra.mrb[0].mxu0 %v299
        %v2264 = vpop.f32.mrb[0].mxu0
        %v2265 = vadd.f32 %v2152, %v2264
        %v2266 = vpop.f32.mrb[0].mxu0
        %v2267 = vadd.f32 %v2154, %v2266
        %v2268 = vpop.f32.mrb[0].mxu0
        %v2269 = vadd.f32 %v2156, %v2268
        %v2270 = vpop.f32.mrb[0].mxu0
        %v2271 = vadd.f32 %v2158, %v2270
        %2272 = vmatprep.mubr.bf16.mxu0 0
        %2273 = vmatmul.mubr.bf16.gmra.mrb[0].mxu0 %v302
        %v2274 = vpop.f32.mrb[0].mxu0
        %v2275 = vadd.f32 %v2162, %v2274
        %v2276 = vpop.f32.mrb[0].mxu0
        %v2277 = vadd.f32 %v2164, %v2276
        %v2278 = vpop.f32.mrb[0].mxu0
        %v2279 = vadd.f32 %v2166, %v2278
        %v2280 = vpop.f32.mrb[0].mxu0
        %v2281 = vadd.f32 %v2168, %v2280
        %2282 = vmatprep.mubr.bf16.mxu0 0
        %2283 = vmatmul.mubr.bf16.gmra.mrb[0].mxu0 %v305
        %v2284 = vpop.f32.mrb[0].mxu0
        %v2285 = vadd.f32 %v2172, %v2284
        %v2286 = vpop.f32.mrb[0].mxu0
        %v2287 = vadd.f32 %v2174, %v2286
        %v2288 = vpop.f32.mrb[0].mxu0
        %v2289 = vadd.f32 %v2176, %v2288
        %v2290 = vpop.f32.mrb[0].mxu0
        %v2291 = vadd.f32 %v2178, %v2290
        %2292 = vmatprep.mubr.bf16.mxu0 0
        %2293 = vmatmul.mubr.bf16.gmra.mrb[0].mxu0 %v308
        %v2294 = vpop.f32.mrb[0].mxu0
        %v2295 = vadd.f32 %v2182, %v2294
        %v2296 = vpop.f32.mrb[0].mxu0
        %v2297 = vadd.f32 %v2184, %v2296
        %v2298 = vpop.f32.mrb[0].mxu0
        %v2299 = vadd.f32 %v2186, %v2298
        %v2300 = vpop.f32.mrb[0].mxu0
        %v2301 = vadd.f32 %v2188, %v2300
        %2302 = vmatprep.mubr.bf16.mxu0 0
        %2303 = vmatmul.mubr.bf16.gmra.mrb[0].mxu0 %v311
        %v2304 = vpop.f32.mrb[0].mxu0
        %v2305 = vadd.f32 %v2192, %v2304
        %v2306 = vpop.f32.mrb[0].mxu0
        %v2307 = vadd.f32 %v2194, %v2306
        %v2308 = vpop.f32.mrb[0].mxu0
        %v2309 = vadd.f32 %v2196, %v2308
        %v2310 = vpop.f32.mrb[0].mxu0
        %v2311 = vadd.f32 %v2198, %v2310
        %2312 = vmatprep.mubr.bf16.mxu0 0
        %2313 = vmatmul.mubr.bf16.gmra.mrb[0].mxu0 %v314
        %v2314 = vpop.f32.mrb[0].mxu0
        %v2315 = vadd.f32 %v2202, %v2314
        %v2316 = vpop.f32.mrb[0].mxu0
        %v2317 = vadd.f32 %v2204, %v2316
        %v2318 = vpop.f32.mrb[0].mxu0
        %v2319 = vadd.f32 %v2206, %v2318
        %v2320 = vpop.f32.mrb[0].mxu0
        %v2321 = vadd.f32 %v2208, %v2320
        %2322 = vmatprep.mubr.bf16.mxu0 0
        %2323 = vmatmul.mubr.bf16.gmra.mrb[0].mxu0 %v317
        %v2324 = vpop.f32.mrb[0].mxu0
        %v2325 = vadd.f32 %v2212, %v2324
        %v2326 = vpop.f32.mrb[0].mxu0
        %v2327 = vadd.f32 %v2214, %v2326
        %v2328 = vpop.f32.mrb[0].mxu0
        %v2329 = vadd.f32 %v2216, %v2328
        %v2330 = vpop.f32.mrb[0].mxu0
        %v2331 = vadd.f32 %v2218, %v2330
        %2332 = vmatprep.mubr.bf16.mxu0 0
        %2333 = vmatmul.mubr.bf16.gmra.mrb[0].mxu0 %v320
        %v2334 = vpop.f32.mrb[0].mxu0
        %v2335 = vadd.f32 %v2222, %v2334
        %v2336 = vpop.f32.mrb[0].mxu0
        %v2337 = vadd.f32 %v2224, %v2336
        %v2338 = vpop.f32.mrb[0].mxu0
        %v2339 = vadd.f32 %v2226, %v2338
        %v2340 = vpop.f32.mrb[0].mxu0
        %v2341 = vadd.f32 %v2228, %v2340
        %2342 = vdwg.mxu0
        %2343 = vmatprep.subr.bf16.mxu0 %v1240
        %2344 = vmatpush1.bf16.msra.mxu0 %v1239
        %2345 = vmatprep.subr.bf16.mxu0 %v1249
        %2346 = vmatpush1.bf16.msra.mxu0 %v1248
        %2347 = vmatprep.subr.bf16.mxu0 %v1258
        %2348 = vmatpush1.bf16.msra.mxu0 %v1257
        %2349 = vmatprep.subr.bf16.mxu0 %v1267
        %2350 = vmatpush1.bf16.msra.mxu0 %v1266
        %2351 = vmatprep.subr.bf16.mxu0 %v1276
        %2352 = vmatpush1.bf16.msra.mxu0 %v1275
        %2353 = vmatprep.subr.bf16.mxu0 %v1285
        %2354 = vmatpush1.bf16.msra.mxu0 %v1284
        %2355 = vmatprep.subr.bf16.mxu0 %v1294
        %2356 = vmatpush1.bf16.msra.mxu0 %v1293
        %2357 = vmatprep.subr.bf16.mxu0 %v1303
        %2358 = vmatpush1.bf16.msra.mxu0 %v1302
        %2359 = vmatprep.subr.bf16.mxu0 %v1312
        %2360 = vmatpush1.bf16.msra.mxu0 %v1311
        %2361 = vmatprep.subr.bf16.mxu0 %v1321
        %2362 = vmatpush1.bf16.msra.mxu0 %v1320
        %2363 = vmatprep.subr.bf16.mxu0 %v1330
        %2364 = vmatpush1.bf16.msra.mxu0 %v1329
        %2365 = vmatprep.subr.bf16.mxu0 %v1339
        %2366 = vmatpush1.bf16.msra.mxu0 %v1338
        %2367 = vmatprep.subr.bf16.mxu0 %v1348
        %2368 = vmatpush1.bf16.msra.mxu0 %v1347
        %2369 = vmatprep.subr.bf16.mxu0 %v1357
        %2370 = vmatpush1.bf16.msra.mxu0 %v1356
        %2371 = vmatprep.subr.bf16.mxu0 %v1366
        %2372 = vmatpush1.bf16.msra.mxu0 %v1365
        %2373 = vmatprep.subr.bf16.mxu0 %v1375
        %2374 = vmatpush1.bf16.msra.mxu0 %v1374
        %2375 = vmatprep.mubr.bf16.mxu0 %v298
        %2376 = vmatmul.mubr.bf16.gmra.mrb[0].mxu0 %v297
        %v2377 = vpop.f32.mrb[0].mxu0
        %v2378 = vadd.f32 0.0, %v2377
        %v2379 = vpop.f32.mrb[0].mxu0
        %v2380 = vadd.f32 0.0, %v2379
        %v2381 = vpop.f32.mrb[0].mxu0
        %v2382 = vadd.f32 0.0, %v2381
        %v2383 = vpop.f32.mrb[0].mxu0
        %v2384 = vadd.f32 0.0, %v2383
        %2385 = vmatprep.mubr.bf16.mxu0 %v301
        %2386 = vmatmul.mubr.bf16.gmra.mrb[0].mxu0 %v300
        %v2387 = vpop.f32.mrb[0].mxu0
        %v2388 = vadd.f32 0.0, %v2387
        %v2389 = vpop.f32.mrb[0].mxu0
        %v2390 = vadd.f32 0.0, %v2389
        %v2391 = vpop.f32.mrb[0].mxu0
        %v2392 = vadd.f32 0.0, %v2391
        %v2393 = vpop.f32.mrb[0].mxu0
        %v2394 = vadd.f32 0.0, %v2393
        %2395 = vmatprep.mubr.bf16.mxu0 %v304
        %2396 = vmatmul.mubr.bf16.gmra.mrb[0].mxu0 %v303
        %v2397 = vpop.f32.mrb[0].mxu0
        %v2398 = vadd.f32 0.0, %v2397
        %v2399 = vpop.f32.mrb[0].mxu0
        %v2400 = vadd.f32 0.0, %v2399
        %v2401 = vpop.f32.mrb[0].mxu0
        %v2402 = vadd.f32 0.0, %v2401
        %v2403 = vpop.f32.mrb[0].mxu0
        %v2404 = vadd.f32 0.0, %v2403
        %2405 = vmatprep.mubr.bf16.mxu0 %v307
        %2406 = vmatmul.mubr.bf16.gmra.mrb[0].mxu0 %v306
        %v2407 = vpop.f32.mrb[0].mxu0
        %v2408 = vadd.f32 0.0, %v2407
        %v2409 = vpop.f32.mrb[0].mxu0
        %v2410 = vadd.f32 0.0, %v2409
        %v2411 = vpop.f32.mrb[0].mxu0
        %v2412 = vadd.f32 0.0, %v2411
        %v2413 = vpop.f32.mrb[0].mxu0
        %v2414 = vadd.f32 0.0, %v2413
        %2415 = vmatprep.mubr.bf16.mxu0 %v310
        %2416 = vmatmul.mubr.bf16.gmra.mrb[0].mxu0 %v309
        %v2417 = vpop.f32.mrb[0].mxu0
        %v2418 = vadd.f32 0.0, %v2417
        %v2419 = vpop.f32.mrb[0].mxu0
        %v2420 = vadd.f32 0.0, %v2419
        %v2421 = vpop.f32.mrb[0].mxu0
        %v2422 = vadd.f32 0.0, %v2421
        %v2423 = vpop.f32.mrb[0].mxu0
        %v2424 = vadd.f32 0.0, %v2423
        %2425 = vmatprep.mubr.bf16.mxu0 %v313
        %2426 = vmatmul.mubr.bf16.gmra.mrb[0].mxu0 %v312
        %v2427 = vpop.f32.mrb[0].mxu0
        %v2428 = vadd.f32 0.0, %v2427
        %v2429 = vpop.f32.mrb[0].mxu0
        %v2430 = vadd.f32 0.0, %v2429
        %v2431 = vpop.f32.mrb[0].mxu0
        %v2432 = vadd.f32 0.0, %v2431
        %v2433 = vpop.f32.mrb[0].mxu0
        %v2434 = vadd.f32 0.0, %v2433
        %2435 = vmatprep.mubr.bf16.mxu0 %v316
        %2436 = vmatmul.mubr.bf16.gmra.mrb[0].mxu0 %v315
        %v2437 = vpop.f32.mrb[0].mxu0
        %v2438 = vadd.f32 0.0, %v2437
        %v2439 = vpop.f32.mrb[0].mxu0
        %v2440 = vadd.f32 0.0, %v2439
        %v2441 = vpop.f32.mrb[0].mxu0
        %v2442 = vadd.f32 0.0, %v2441
        %v2443 = vpop.f32.mrb[0].mxu0
        %v2444 = vadd.f32 0.0, %v2443
        %2445 = vmatprep.mubr.bf16.mxu0 %v319
        %2446 = vmatmul.mubr.bf16.gmra.mrb[0].mxu0 %v318
        %v2447 = vpop.f32.mrb[0].mxu0
        %v2448 = vadd.f32 0.0, %v2447
        %v2449 = vpop.f32.mrb[0].mxu0
        %v2450 = vadd.f32 0.0, %v2449
        %v2451 = vpop.f32.mrb[0].mxu0
        %v2452 = vadd.f32 0.0, %v2451
        %v2453 = vpop.f32.mrb[0].mxu0
        %v2454 = vadd.f32 0.0, %v2453
        %2455 = vdwg.mxu0
        %2456 = vmatprep.subr.bf16.mxu0 %v1384
        %2457 = vmatpush1.bf16.msra.mxu0 %v1383
        %2458 = vmatprep.subr.bf16.mxu0 %v1393
        %2459 = vmatpush1.bf16.msra.mxu0 %v1392
        %2460 = vmatprep.subr.bf16.mxu0 %v1402
        %2461 = vmatpush1.bf16.msra.mxu0 %v1401
        %2462 = vmatprep.subr.bf16.mxu0 %v1411
        %2463 = vmatpush1.bf16.msra.mxu0 %v1410
        %2464 = vmatprep.subr.bf16.mxu0 %v1420
        %2465 = vmatpush1.bf16.msra.mxu0 %v1419
        %2466 = vmatprep.subr.bf16.mxu0 %v1429
        %2467 = vmatpush1.bf16.msra.mxu0 %v1428
        %2468 = vmatprep.subr.bf16.mxu0 %v1438
        %2469 = vmatpush1.bf16.msra.mxu0 %v1437
        %2470 = vmatprep.subr.bf16.mxu0 %v1447
        %2471 = vmatpush1.bf16.msra.mxu0 %v1446
        %2472 = vmatprep.subr.bf16.mxu0 0
        %2473 = vmatpush1.bf16.msra.mxu0 0
        %2474 = vmatprep.subr.bf16.mxu0 0
        %2475 = vmatpush1.bf16.msra.mxu0 0
        %2476 = vmatprep.subr.bf16.mxu0 0
        %2477 = vmatpush1.bf16.msra.mxu0 0
        %2478 = vmatprep.subr.bf16.mxu0 0
        %2479 = vmatpush1.bf16.msra.mxu0 0
        %2480 = vmatprep.subr.bf16.mxu0 0
        %2481 = vmatpush1.bf16.msra.mxu0 0
        %2482 = vmatprep.subr.bf16.mxu0 0
        %2483 = vmatpush1.bf16.msra.mxu0 0
        %2484 = vmatprep.subr.bf16.mxu0 0
        %2485 = vmatpush1.bf16.msra.mxu0 0
        %2486 = vmatprep.subr.bf16.mxu0 0
        %2487 = vmatpush1.bf16.msra.mxu0 0
        %2488 = vmatprep.mubr.bf16.mxu0 0
        %2489 = vmatmul.mubr.bf16.gmra.mrb[0].mxu0 %v299
        %v2490 = vpop.f32.mrb[0].mxu0
        %v2491 = vadd.f32 %v2378, %v2490
        %v2492 = vpop.f32.mrb[0].mxu0
        %v2493 = vadd.f32 %v2380, %v2492
        %v2494 = vpop.f32.mrb[0].mxu0
        %v2495 = vadd.f32 %v2382, %v2494
        %v2496 = vpop.f32.mrb[0].mxu0
        %v2497 = vadd.f32 %v2384, %v2496
        %2498 = vmatprep.mubr.bf16.mxu0 0
        %2499 = vmatmul.mubr.bf16.gmra.mrb[0].mxu0 %v302
        %v2500 = vpop.f32.mrb[0].mxu0
        %v2501 = vadd.f32 %v2388, %v2500
        %v2502 = vpop.f32.mrb[0].mxu0
        %v2503 = vadd.f32 %v2390, %v2502
        %v2504 = vpop.f32.mrb[0].mxu0
        %v2505 = vadd.f32 %v2392, %v2504
        %v2506 = vpop.f32.mrb[0].mxu0
        %v2507 = vadd.f32 %v2394, %v2506
        %2508 = vmatprep.mubr.bf16.mxu0 0
        %2509 = vmatmul.mubr.bf16.gmra.mrb[0].mxu0 %v305
        %v2510 = vpop.f32.mrb[0].mxu0
        %v2511 = vadd.f32 %v2398, %v2510
        %v2512 = vpop.f32.mrb[0].mxu0
        %v2513 = vadd.f32 %v2400, %v2512
        %v2514 = vpop.f32.mrb[0].mxu0
        %v2515 = vadd.f32 %v2402, %v2514
        %v2516 = vpop.f32.mrb[0].mxu0
        %v2517 = vadd.f32 %v2404, %v2516
        %2518 = vmatprep.mubr.bf16.mxu0 0
        %2519 = vmatmul.mubr.bf16.gmra.mrb[0].mxu0 %v308
        %v2520 = vpop.f32.mrb[0].mxu0
        %v2521 = vadd.f32 %v2408, %v2520
        %v2522 = vpop.f32.mrb[0].mxu0
        %v2523 = vadd.f32 %v2410, %v2522
        %v2524 = vpop.f32.mrb[0].mxu0
        %v2525 = vadd.f32 %v2412, %v2524
        %v2526 = vpop.f32.mrb[0].mxu0
        %v2527 = vadd.f32 %v2414, %v2526
        %2528 = vmatprep.mubr.bf16.mxu0 0
        %2529 = vmatmul.mubr.bf16.gmra.mrb[0].mxu0 %v311
        %v2530 = vpop.f32.mrb[0].mxu0
        %v2531 = vadd.f32 %v2418, %v2530
        %v2532 = vpop.f32.mrb[0].mxu0
        %v2533 = vadd.f32 %v2420, %v2532
        %v2534 = vpop.f32.mrb[0].mxu0
        %v2535 = vadd.f32 %v2422, %v2534
        %v2536 = vpop.f32.mrb[0].mxu0
        %v2537 = vadd.f32 %v2424, %v2536
        %2538 = vmatprep.mubr.bf16.mxu0 0
        %2539 = vmatmul.mubr.bf16.gmra.mrb[0].mxu0 %v314
        %v2540 = vpop.f32.mrb[0].mxu0
        %v2541 = vadd.f32 %v2428, %v2540
        %v2542 = vpop.f32.mrb[0].mxu0
        %v2543 = vadd.f32 %v2430, %v2542
        %v2544 = vpop.f32.mrb[0].mxu0
        %v2545 = vadd.f32 %v2432, %v2544
        %v2546 = vpop.f32.mrb[0].mxu0
        %v2547 = vadd.f32 %v2434, %v2546
        %2548 = vmatprep.mubr.bf16.mxu0 0
        %2549 = vmatmul.mubr.bf16.gmra.mrb[0].mxu0 %v317
        %v2550 = vpop.f32.mrb[0].mxu0
        %v2551 = vadd.f32 %v2438, %v2550
        %v2552 = vpop.f32.mrb[0].mxu0
        %v2553 = vadd.f32 %v2440, %v2552
        %v2554 = vpop.f32.mrb[0].mxu0
        %v2555 = vadd.f32 %v2442, %v2554
        %v2556 = vpop.f32.mrb[0].mxu0
        %v2557 = vadd.f32 %v2444, %v2556
        %2558 = vmatprep.mubr.bf16.mxu0 0
        %2559 = vmatmul.mubr.bf16.gmra.mrb[0].mxu0 %v320
        %v2560 = vpop.f32.mrb[0].mxu0
        %v2561 = vadd.f32 %v2448, %v2560
        %v2562 = vpop.f32.mrb[0].mxu0
        %v2563 = vadd.f32 %v2450, %v2562
        %v2564 = vpop.f32.mrb[0].mxu0
        %v2565 = vadd.f32 %v2452, %v2564
        %v2566 = vpop.f32.mrb[0].mxu0
        %v2567 = vadd.f32 %v2454, %v2566
        %2568 = vdwg.mxu0
        %2569 = vmatprep.subr.bf16.mxu0 0
        %2570 = vmatpush1.bf16.msra.mxu0 %v1241
        %2571 = vmatprep.subr.bf16.mxu0 0
        %2572 = vmatpush1.bf16.msra.mxu0 %v1250
        %2573 = vmatprep.subr.bf16.mxu0 0
        %2574 = vmatpush1.bf16.msra.mxu0 %v1259
        %2575 = vmatprep.subr.bf16.mxu0 0
        %2576 = vmatpush1.bf16.msra.mxu0 %v1268
        %2577 = vmatprep.subr.bf16.mxu0 0
        %2578 = vmatpush1.bf16.msra.mxu0 %v1277
        %2579 = vmatprep.subr.bf16.mxu0 0
        %2580 = vmatpush1.bf16.msra.mxu0 %v1286
        %2581 = vmatprep.subr.bf16.mxu0 0
        %2582 = vmatpush1.bf16.msra.mxu0 %v1295
        %2583 = vmatprep.subr.bf16.mxu0 0
        %2584 = vmatpush1.bf16.msra.mxu0 %v1304
        %2585 = vmatprep.subr.bf16.mxu0 0
        %2586 = vmatpush1.bf16.msra.mxu0 %v1313
        %2587 = vmatprep.subr.bf16.mxu0 0
        %2588 = vmatpush1.bf16.msra.mxu0 %v1322
        %2589 = vmatprep.subr.bf16.mxu0 0
        %2590 = vmatpush1.bf16.msra.mxu0 %v1331
        %2591 = vmatprep.subr.bf16.mxu0 0
        %2592 = vmatpush1.bf16.msra.mxu0 %v1340
        %2593 = vmatprep.subr.bf16.mxu0 0
        %2594 = vmatpush1.bf16.msra.mxu0 %v1349
        %2595 = vmatprep.subr.bf16.mxu0 0
        %2596 = vmatpush1.bf16.msra.mxu0 %v1358
        %2597 = vmatprep.subr.bf16.mxu0 0
        %2598 = vmatpush1.bf16.msra.mxu0 %v1367
        %2599 = vmatprep.subr.bf16.mxu0 0
        %2600 = vmatpush1.bf16.msra.mxu0 %v1376
        %2601 = vmatprep.mubr.bf16.mxu0 %v298
        %2602 = vmatmul.mubr.bf16.gmra.mrb[0].mxu0 %v297
        %v2603 = vpop.f32.mrb[0].mxu0
        %v2604 = vadd.f32 0.0, %v2603
        %v2605 = vpop.f32.mrb[0].mxu0
        %v2606 = vpop.f32.mrb[0].mxu0
        %v2607 = vadd.f32 0.0, %v2606
        %v2608 = vpop.f32.mrb[0].mxu0
        %2609 = vmatprep.mubr.bf16.mxu0 %v301
        %2610 = vmatmul.mubr.bf16.gmra.mrb[0].mxu0 %v300
        %v2611 = vpop.f32.mrb[0].mxu0
        %v2612 = vadd.f32 0.0, %v2611
        %v2613 = vpop.f32.mrb[0].mxu0
        %v2614 = vpop.f32.mrb[0].mxu0
        %v2615 = vadd.f32 0.0, %v2614
        %v2616 = vpop.f32.mrb[0].mxu0
        %2617 = vmatprep.mubr.bf16.mxu0 %v304
        %2618 = vmatmul.mubr.bf16.gmra.mrb[0].mxu0 %v303
        %v2619 = vpop.f32.mrb[0].mxu0
        %v2620 = vadd.f32 0.0, %v2619
        %v2621 = vpop.f32.mrb[0].mxu0
        %v2622 = vpop.f32.mrb[0].mxu0
        %v2623 = vadd.f32 0.0, %v2622
        %v2624 = vpop.f32.mrb[0].mxu0
        %2625 = vmatprep.mubr.bf16.mxu0 %v307
        %2626 = vmatmul.mubr.bf16.gmra.mrb[0].mxu0 %v306
        %v2627 = vpop.f32.mrb[0].mxu0
        %v2628 = vadd.f32 0.0, %v2627
        %v2629 = vpop.f32.mrb[0].mxu0
        %v2630 = vpop.f32.mrb[0].mxu0
        %v2631 = vadd.f32 0.0, %v2630
        %v2632 = vpop.f32.mrb[0].mxu0
        %2633 = vmatprep.mubr.bf16.mxu0 %v310
        %2634 = vmatmul.mubr.bf16.gmra.mrb[0].mxu0 %v309
        %v2635 = vpop.f32.mrb[0].mxu0
        %v2636 = vadd.f32 0.0, %v2635
        %v2637 = vpop.f32.mrb[0].mxu0
        %v2638 = vpop.f32.mrb[0].mxu0
        %v2639 = vadd.f32 0.0, %v2638
        %v2640 = vpop.f32.mrb[0].mxu0
        %2641 = vmatprep.mubr.bf16.mxu0 %v313
        %2642 = vmatmul.mubr.bf16.gmra.mrb[0].mxu0 %v312
        %v2643 = vpop.f32.mrb[0].mxu0
        %v2644 = vadd.f32 0.0, %v2643
        %v2645 = vpop.f32.mrb[0].mxu0
        %v2646 = vpop.f32.mrb[0].mxu0
        %v2647 = vadd.f32 0.0, %v2646
        %v2648 = vpop.f32.mrb[0].mxu0
        %2649 = vmatprep.mubr.bf16.mxu0 %v316
        %2650 = vmatmul.mubr.bf16.gmra.mrb[0].mxu0 %v315
        %v2651 = vpop.f32.mrb[0].mxu0
        %v2652 = vadd.f32 0.0, %v2651
        %v2653 = vpop.f32.mrb[0].mxu0
        %v2654 = vpop.f32.mrb[0].mxu0
        %v2655 = vadd.f32 0.0, %v2654
        %v2656 = vpop.f32.mrb[0].mxu0
        %2657 = vmatprep.mubr.bf16.mxu0 %v319
        %2658 = vmatmul.mubr.bf16.gmra.mrb[0].mxu0 %v318
        %v2659 = vpop.f32.mrb[0].mxu0
        %v2660 = vadd.f32 0.0, %v2659
        %v2661 = vpop.f32.mrb[0].mxu0
        %v2662 = vpop.f32.mrb[0].mxu0
        %v2663 = vadd.f32 0.0, %v2662
        %v2664 = vpop.f32.mrb[0].mxu0
        %2665 = vdwg.mxu0
        %2666 = vmatprep.subr.bf16.mxu0 0
        %2667 = vmatpush1.bf16.msra.mxu0 %v1385
        %2668 = vmatprep.subr.bf16.mxu0 0
        %2669 = vmatpush1.bf16.msra.mxu0 %v1394
        %2670 = vmatprep.subr.bf16.mxu0 0
        %2671 = vmatpush1.bf16.msra.mxu0 %v1403
        %2672 = vmatprep.subr.bf16.mxu0 0
        %2673 = vmatpush1.bf16.msra.mxu0 %v1412
        %2674 = vmatprep.subr.bf16.mxu0 0
        %2675 = vmatpush1.bf16.msra.mxu0 %v1421
        %2676 = vmatprep.subr.bf16.mxu0 0
        %2677 = vmatpush1.bf16.msra.mxu0 %v1430
        %2678 = vmatprep.subr.bf16.mxu0 0
        %2679 = vmatpush1.bf16.msra.mxu0 %v1439
        %2680 = vmatprep.subr.bf16.mxu0 0
        %2681 = vmatpush1.bf16.msra.mxu0 %v1448
        %2682 = vmatprep.subr.bf16.mxu0 0
        %2683 = vmatpush1.bf16.msra.mxu0 0
        %2684 = vmatprep.subr.bf16.mxu0 0
        %2685 = vmatpush1.bf16.msra.mxu0 0
        %2686 = vmatprep.subr.bf16.mxu0 0
        %2687 = vmatpush1.bf16.msra.mxu0 0
        %2688 = vmatprep.subr.bf16.mxu0 0
        %2689 = vmatpush1.bf16.msra.mxu0 0
        %2690 = vmatprep.subr.bf16.mxu0 0
        %2691 = vmatpush1.bf16.msra.mxu0 0
        %2692 = vmatprep.subr.bf16.mxu0 0
        %2693 = vmatpush1.bf16.msra.mxu0 0
        %2694 = vmatprep.subr.bf16.mxu0 0
        %2695 = vmatpush1.bf16.msra.mxu0 0
        %2696 = vmatprep.subr.bf16.mxu0 0
        %2697 = vmatpush1.bf16.msra.mxu0 0
        %2698 = vmatprep.mubr.bf16.mxu0 0
        %2699 = vmatmul.mubr.bf16.gmra.mrb[0].mxu0 %v299
        %v2700 = vpop.f32.mrb[0].mxu0
        %v2701 = vadd.f32 %v2604, %v2700
        %v2702 = vpop.f32.mrb[0].mxu0
        %v2703 = vpop.f32.mrb[0].mxu0
        %v2704 = vadd.f32 %v2607, %v2703
        %v2705 = vpop.f32.mrb[0].mxu0
        %2706 = vmatprep.mubr.bf16.mxu0 0
        %2707 = vmatmul.mubr.bf16.gmra.mrb[0].mxu0 %v302
        %v2708 = vpop.f32.mrb[0].mxu0
        %v2709 = vadd.f32 %v2612, %v2708
        %v2710 = vpop.f32.mrb[0].mxu0
        %v2711 = vpop.f32.mrb[0].mxu0
        %v2712 = vadd.f32 %v2615, %v2711
        %v2713 = vpop.f32.mrb[0].mxu0
        %2714 = vmatprep.mubr.bf16.mxu0 0
        %2715 = vmatmul.mubr.bf16.gmra.mrb[0].mxu0 %v305
        %v2716 = vpop.f32.mrb[0].mxu0
        %v2717 = vadd.f32 %v2620, %v2716
        %v2718 = vpop.f32.mrb[0].mxu0
        %v2719 = vpop.f32.mrb[0].mxu0
        %v2720 = vadd.f32 %v2623, %v2719
        %v2721 = vpop.f32.mrb[0].mxu0
        %2722 = vmatprep.mubr.bf16.mxu0 0
        %2723 = vmatmul.mubr.bf16.gmra.mrb[0].mxu0 %v308
        %v2724 = vpop.f32.mrb[0].mxu0
        %v2725 = vadd.f32 %v2628, %v2724
        %v2726 = vpop.f32.mrb[0].mxu0
        %v2727 = vpop.f32.mrb[0].mxu0
        %v2728 = vadd.f32 %v2631, %v2727
        %v2729 = vpop.f32.mrb[0].mxu0
        %2730 = vmatprep.mubr.bf16.mxu0 0
        %2731 = vmatmul.mubr.bf16.gmra.mrb[0].mxu0 %v311
        %v2732 = vpop.f32.mrb[0].mxu0
        %v2733 = vadd.f32 %v2636, %v2732
        %v2734 = vpop.f32.mrb[0].mxu0
        %v2735 = vpop.f32.mrb[0].mxu0
        %v2736 = vadd.f32 %v2639, %v2735
        %v2737 = vpop.f32.mrb[0].mxu0
        %2738 = vmatprep.mubr.bf16.mxu0 0
        %2739 = vmatmul.mubr.bf16.gmra.mrb[0].mxu0 %v314
        %v2740 = vpop.f32.mrb[0].mxu0
        %v2741 = vadd.f32 %v2644, %v2740
        %v2742 = vpop.f32.mrb[0].mxu0
        %v2743 = vpop.f32.mrb[0].mxu0
        %v2744 = vadd.f32 %v2647, %v2743
        %v2745 = vpop.f32.mrb[0].mxu0
        %2746 = vmatprep.mubr.bf16.mxu0 0
        %2747 = vmatmul.mubr.bf16.gmra.mrb[0].mxu0 %v317
        %v2748 = vpop.f32.mrb[0].mxu0
        %v2749 = vadd.f32 %v2652, %v2748
        %v2750 = vpop.f32.mrb[0].mxu0
        %v2751 = vpop.f32.mrb[0].mxu0
        %v2752 = vadd.f32 %v2655, %v2751
        %v2753 = vpop.f32.mrb[0].mxu0
        %2754 = vmatprep.mubr.bf16.mxu0 0
        %2755 = vmatmul.mubr.bf16.gmra.mrb[0].mxu0 %v320
        %v2756 = vpop.f32.mrb[0].mxu0
        %v2757 = vadd.f32 %v2660, %v2756
        %v2758 = vpop.f32.mrb[0].mxu0
        %v2759 = vpop.f32.mrb[0].mxu0
        %v2760 = vadd.f32 %v2663, %v2759
        %v2761 = vpop.f32.mrb[0].mxu0
        %2762 = vdwg.mxu0
        %v2763 = vpack.c.bf16 %v1817, %v1813
        %v2764 = vpack.c.bf16 %v1819, %v1815
        %v2765 = vpack.c.bf16 %v2043, %v2039
        %v2766 = vpack.c.bf16 %v1827, %v1823
        %v2767 = vpack.c.bf16 %v1829, %v1825
        %v2768 = vpack.c.bf16 %v2053, %v2049
        %v2769 = vpack.c.bf16 %v1837, %v1833
        %v2770 = vpack.c.bf16 %v1839, %v1835
        %v2771 = vpack.c.bf16 %v2063, %v2059
        %v2772 = vpack.c.bf16 %v1847, %v1843
        %v2773 = vpack.c.bf16 %v1849, %v1845
        %v2774 = vpack.c.bf16 %v2073, %v2069
        %v2775 = vpack.c.bf16 %v1857, %v1853
        %v2776 = vpack.c.bf16 %v1859, %v1855
        %v2777 = vpack.c.bf16 %v2083, %v2079
        %v2778 = vpack.c.bf16 %v1867, %v1863
        %v2779 = vpack.c.bf16 %v1869, %v1865
        %v2780 = vpack.c.bf16 %v2093, %v2089
        %v2781 = vpack.c.bf16 %v1877, %v1873
        %v2782 = vpack.c.bf16 %v1879, %v1875
        %v2783 = vpack.c.bf16 %v2103, %v2099
        %v2784 = vpack.c.bf16 %v1887, %v1883
        %v2785 = vpack.c.bf16 %v1889, %v1885
        %v2786 = vpack.c.bf16 %v2113, %v2109
        %v2787 = vpack.c.bf16 %v2045, %v2041
        %v2788 = vpack.c.bf16 %v2269, %v2265
        %v2789 = vpack.c.bf16 %v2271, %v2267
        %v2790 = vpack.c.bf16 %v2055, %v2051
        %v2791 = vpack.c.bf16 %v2279, %v2275
        %v2792 = vpack.c.bf16 %v2281, %v2277
        %v2793 = vpack.c.bf16 %v2065, %v2061
        %v2794 = vpack.c.bf16 %v2289, %v2285
        %v2795 = vpack.c.bf16 %v2291, %v2287
        %v2796 = vpack.c.bf16 %v2075, %v2071
        %v2797 = vpack.c.bf16 %v2299, %v2295
        %v2798 = vpack.c.bf16 %v2301, %v2297
        %v2799 = vpack.c.bf16 %v2085, %v2081
        %v2800 = vpack.c.bf16 %v2309, %v2305
        %v2801 = vpack.c.bf16 %v2311, %v2307
        %v2802 = vpack.c.bf16 %v2095, %v2091
        %v2803 = vpack.c.bf16 %v2319, %v2315
        %v2804 = vpack.c.bf16 %v2321, %v2317
        %v2805 = vpack.c.bf16 %v2105, %v2101
        %v2806 = vpack.c.bf16 %v2329, %v2325
        %v2807 = vpack.c.bf16 %v2331, %v2327
        %v2808 = vpack.c.bf16 %v2115, %v2111
        %v2809 = vpack.c.bf16 %v2339, %v2335
        %v2810 = vpack.c.bf16 %v2341, %v2337
        %v2811 = vpack.c.bf16 %v2495, %v2491
        %v2812 = vpack.c.bf16 %v2497, %v2493
        %v2813 = vpack.c.bf16 %v2704, %v2701
        %v2814 = vpack.c.bf16 %v2505, %v2501
        %v2815 = vpack.c.bf16 %v2507, %v2503
        %v2816 = vpack.c.bf16 %v2712, %v2709
        %v2817 = vpack.c.bf16 %v2515, %v2511
        %v2818 = vpack.c.bf16 %v2517, %v2513
        %v2819 = vpack.c.bf16 %v2720, %v2717
        %v2820 = vpack.c.bf16 %v2525, %v2521
        %v2821 = vpack.c.bf16 %v2527, %v2523
        %v2822 = vpack.c.bf16 %v2728, %v2725
        %v2823 = vpack.c.bf16 %v2535, %v2531
        %v2824 = vpack.c.bf16 %v2537, %v2533
        %v2825 = vpack.c.bf16 %v2736, %v2733
        %v2826 = vpack.c.bf16 %v2545, %v2541
        %v2827 = vpack.c.bf16 %v2547, %v2543
        %v2828 = vpack.c.bf16 %v2744, %v2741
        %v2829 = vpack.c.bf16 %v2555, %v2551
        %v2830 = vpack.c.bf16 %v2557, %v2553
        %v2831 = vpack.c.bf16 %v2752, %v2749
        %v2832 = vpack.c.bf16 %v2565, %v2561
        %v2833 = vpack.c.bf16 %v2567, %v2563
        %v2834 = vpack.c.bf16 %v2760, %v2757
        %v2835 = vlaneseq
        %v2836 = vshrl.u32 %v2835, 7
        %v2837 = vadd.s32 %v2836, 8
        %v2838 = vadd.s32 %v2836, 16
        %v2839 = vadd.s32 %v2836, 24
        %v2840 = vlaneseq
        %v2841 = vand.u32 %v2840, 127
        %vm2842 = vcmp.le.s32.totalorder %v2841, %v2836
        %vm2843 = vcmp.le.s32.totalorder %v2841, %v2837
        %vm2844 = vcmp.le.s32.totalorder %v2841, %v2838
        %vm2845 = vcmp.le.s32.totalorder %v2841, %v2839
        %vm2846 = vcmask 523264
        %v2848 = vsel %vm2846, %v2763, 0
        %v2851 = vsel %vm2846, %v2766, 0
        %v2854 = vsel %vm2846, %v2787, 0
        %v2857 = vsel %vm2846, %v2790, 0
        %2859 = vmatprep.subr.bf16.mxu0 0
        %2860 = vmatpush1.bf16.xpose.msra.mxu0 %v2854
        %2861 = vmatprep.subr.bf16.mxu0 0
        %2862 = vmatpush1.bf16.xpose.msra.mxu0 %v2857
        %2863 = vmatprep.subr.bf16.mxu0 0
        %2864 = vmatpush1.bf16.xpose.msra.mxu0 0
        %2865 = vmatprep.subr.bf16.mxu0 0
        %2866 = vmatpush1.bf16.xpose.msra.mxu0 0
        %2867 = vmatprep.subr.bf16.mxu0 0
        %2868 = vmatpush1.bf16.xpose.msra.mxu0 0
        %2869 = vmatprep.subr.bf16.mxu0 0
        %2870 = vmatpush1.bf16.xpose.msra.mxu0 0
        %2871 = vmatprep.subr.bf16.mxu0 0
        %2872 = vmatpush1.bf16.xpose.msra.mxu0 0
        %2873 = vmatprep.subr.bf16.mxu0 0
        %2874 = vmatpush1.bf16.xpose.msra.mxu0 0
        %2875 = vmatprep.subr.bf16.mxu0 0
        %2876 = vmatpush1.bf16.xpose.msra.mxu0 0
        %2877 = vmatprep.subr.bf16.mxu0 0
        %2878 = vmatpush1.bf16.xpose.msra.mxu0 0
        %2879 = vmatprep.subr.bf16.mxu0 0
        %2880 = vmatpush1.bf16.xpose.msra.mxu0 0
        %2881 = vmatprep.subr.bf16.mxu0 0
        %2882 = vmatpush1.bf16.xpose.msra.mxu0 0
        %2883 = vmatprep.subr.bf16.mxu0 0
        %2884 = vmatpush1.bf16.xpose.msra.mxu0 0
        %2885 = vmatprep.subr.bf16.mxu0 0
        %2886 = vmatpush1.bf16.xpose.msra.mxu0 0
        %2887 = vmatprep.subr.bf16.mxu0 0
        %2888 = vmatpush1.bf16.xpose.msra.mxu0 0
        %2889 = vmatprep.subr.bf16.mxu0 0
        %2890 = vmatpush1.bf16.xpose.msra.mxu0 0
        %2891 = vmatprep.mubr.bf16.mxu0 0
        %2892 = vmatmul.mubr.bf16.gmra.mrb[0].mxu0 %v2848
        %v2893 = vpop.f32.mrb[0].mxu0
        %v2894 = vadd.f32 0.0, %v2893
        %v2895 = vpop.f32.mrb[0].mxu0
        %v2896 = vpop.f32.mrb[0].mxu0
        %v2897 = vadd.f32 0.0, %v2896
        %v2898 = vpop.f32.mrb[0].mxu0
        %2899 = vmatprep.mubr.bf16.mxu0 0
        %2900 = vmatmul.mubr.bf16.gmra.mrb[0].mxu0 %v2851
        %v2901 = vpop.f32.mrb[0].mxu0
        %v2902 = vadd.f32 0.0, %v2901
        %v2903 = vpop.f32.mrb[0].mxu0
        %v2904 = vpop.f32.mrb[0].mxu0
        %v2905 = vadd.f32 0.0, %v2904
        %v2906 = vpop.f32.mrb[0].mxu0
        %2907 = vdwg.mxu0
        %v2909 = vsel %vm2846, %v2769, 0
        %v2912 = vsel %vm2846, %v2772, 0
        %v2915 = vsel %vm2846, %v2793, 0
        %v2918 = vsel %vm2846, %v2796, 0
        %2920 = vmatprep.subr.bf16.mxu0 0
        %2921 = vmatpush1.bf16.xpose.msra.mxu0 %v2915
        %2922 = vmatprep.subr.bf16.mxu0 0
        %2923 = vmatpush1.bf16.xpose.msra.mxu0 %v2918
        %2924 = vmatprep.subr.bf16.mxu0 0
        %2925 = vmatpush1.bf16.xpose.msra.mxu0 0
        %2926 = vmatprep.subr.bf16.mxu0 0
        %2927 = vmatpush1.bf16.xpose.msra.mxu0 0
        %2928 = vmatprep.subr.bf16.mxu0 0
        %2929 = vmatpush1.bf16.xpose.msra.mxu0 0
        %2930 = vmatprep.subr.bf16.mxu0 0
        %2931 = vmatpush1.bf16.xpose.msra.mxu0 0
        %2932 = vmatprep.subr.bf16.mxu0 0
        %2933 = vmatpush1.bf16.xpose.msra.mxu0 0
        %2934 = vmatprep.subr.bf16.mxu0 0
        %2935 = vmatpush1.bf16.xpose.msra.mxu0 0
        %2936 = vmatprep.subr.bf16.mxu0 0
        %2937 = vmatpush1.bf16.xpose.msra.mxu0 0
        %2938 = vmatprep.subr.bf16.mxu0 0
        %2939 = vmatpush1.bf16.xpose.msra.mxu0 0
        %2940 = vmatprep.subr.bf16.mxu0 0
        %2941 = vmatpush1.bf16.xpose.msra.mxu0 0
        %2942 = vmatprep.subr.bf16.mxu0 0
        %2943 = vmatpush1.bf16.xpose.msra.mxu0 0
        %2944 = vmatprep.subr.bf16.mxu0 0
        %2945 = vmatpush1.bf16.xpose.msra.mxu0 0
        %2946 = vmatprep.subr.bf16.mxu0 0
        %2947 = vmatpush1.bf16.xpose.msra.mxu0 0
        %2948 = vmatprep.subr.bf16.mxu0 0
        %2949 = vmatpush1.bf16.xpose.msra.mxu0 0
        %2950 = vmatprep.subr.bf16.mxu0 0
        %2951 = vmatpush1.bf16.xpose.msra.mxu0 0
        %2952 = vmatprep.mubr.bf16.mxu0 0
        %2953 = vmatmul.mubr.bf16.gmra.mrb[0].mxu0 %v2909
        %v2954 = vpop.f32.mrb[0].mxu0
        %v2955 = vadd.f32 0.0, %v2954
        %v2956 = vpop.f32.mrb[0].mxu0
        %v2957 = vpop.f32.mrb[0].mxu0
        %v2958 = vadd.f32 0.0, %v2957
        %v2959 = vpop.f32.mrb[0].mxu0
        %2960 = vmatprep.mubr.bf16.mxu0 0
        %2961 = vmatmul.mubr.bf16.gmra.mrb[0].mxu0 %v2912
        %v2962 = vpop.f32.mrb[0].mxu0
        %v2963 = vadd.f32 0.0, %v2962
        %v2964 = vpop.f32.mrb[0].mxu0
        %v2965 = vpop.f32.mrb[0].mxu0
        %v2966 = vadd.f32 0.0, %v2965
        %v2967 = vpop.f32.mrb[0].mxu0
        %2968 = vdwg.mxu0
        %v2970 = vsel %vm2846, %v2775, 0
        %v2973 = vsel %vm2846, %v2778, 0
        %v2976 = vsel %vm2846, %v2799, 0
        %v2979 = vsel %vm2846, %v2802, 0
        %2981 = vmatprep.subr.bf16.mxu0 0
        %2982 = vmatpush1.bf16.xpose.msra.mxu0 %v2976
        %2983 = vmatprep.subr.bf16.mxu0 0
        %2984 = vmatpush1.bf16.xpose.msra.mxu0 %v2979
        %2985 = vmatprep.subr.bf16.mxu0 0
        %2986 = vmatpush1.bf16.xpose.msra.mxu0 0
        %2987 = vmatprep.subr.bf16.mxu0 0
        %2988 = vmatpush1.bf16.xpose.msra.mxu0 0
        %2989 = vmatprep.subr.bf16.mxu0 0
        %2990 = vmatpush1.bf16.xpose.msra.mxu0 0
        %2991 = vmatprep.subr.bf16.mxu0 0
        %2992 = vmatpush1.bf16.xpose.msra.mxu0 0
        %2993 = vmatprep.subr.bf16.mxu0 0
        %2994 = vmatpush1.bf16.xpose.msra.mxu0 0
        %2995 = vmatprep.subr.bf16.mxu0 0
        %2996 = vmatpush1.bf16.xpose.msra.mxu0 0
        %2997 = vmatprep.subr.bf16.mxu0 0
        %2998 = vmatpush1.bf16.xpose.msra.mxu0 0
        %2999 = vmatprep.subr.bf16.mxu0 0
        %3000 = vmatpush1.bf16.xpose.msra.mxu0 0
        %3001 = vmatprep.subr.bf16.mxu0 0
        %3002 = vmatpush1.bf16.xpose.msra.mxu0 0
        %3003 = vmatprep.subr.bf16.mxu0 0
        %3004 = vmatpush1.bf16.xpose.msra.mxu0 0
        %3005 = vmatprep.subr.bf16.mxu0 0
        %3006 = vmatpush1.bf16.xpose.msra.mxu0 0
        %3007 = vmatprep.subr.bf16.mxu0 0
        %3008 = vmatpush1.bf16.xpose.msra.mxu0 0
        %3009 = vmatprep.subr.bf16.mxu0 0
        %3010 = vmatpush1.bf16.xpose.msra.mxu0 0
        %3011 = vmatprep.subr.bf16.mxu0 0
        %3012 = vmatpush1.bf16.xpose.msra.mxu0 0
        %3013 = vmatprep.mubr.bf16.mxu0 0
        %3014 = vmatmul.mubr.bf16.gmra.mrb[0].mxu0 %v2970
        %v3015 = vpop.f32.mrb[0].mxu0
        %v3016 = vadd.f32 0.0, %v3015
        %v3017 = vpop.f32.mrb[0].mxu0
        %v3018 = vpop.f32.mrb[0].mxu0
        %v3019 = vadd.f32 0.0, %v3018
        %v3020 = vpop.f32.mrb[0].mxu0
        %3021 = vmatprep.mubr.bf16.mxu0 0
        %3022 = vmatmul.mubr.bf16.gmra.mrb[0].mxu0 %v2973
        %v3023 = vpop.f32.mrb[0].mxu0
        %v3024 = vadd.f32 0.0, %v3023
        %v3025 = vpop.f32.mrb[0].mxu0
        %v3026 = vpop.f32.mrb[0].mxu0
        %v3027 = vadd.f32 0.0, %v3026
        %v3028 = vpop.f32.mrb[0].mxu0
        %3029 = vdwg.mxu0
        %v3031 = vsel %vm2846, %v2781, 0
        %v3034 = vsel %vm2846, %v2784, 0
        %v3037 = vsel %vm2846, %v2805, 0
        %v3040 = vsel %vm2846, %v2808, 0
        %3042 = vmatprep.subr.bf16.mxu0 0
        %3043 = vmatpush1.bf16.xpose.msra.mxu0 %v3037
        %3044 = vmatprep.subr.bf16.mxu0 0
        %3045 = vmatpush1.bf16.xpose.msra.mxu0 %v3040
        %3046 = vmatprep.subr.bf16.mxu0 0
        %3047 = vmatpush1.bf16.xpose.msra.mxu0 0
        %3048 = vmatprep.subr.bf16.mxu0 0
        %3049 = vmatpush1.bf16.xpose.msra.mxu0 0
        %3050 = vmatprep.subr.bf16.mxu0 0
        %3051 = vmatpush1.bf16.xpose.msra.mxu0 0
        %3052 = vmatprep.subr.bf16.mxu0 0
        %3053 = vmatpush1.bf16.xpose.msra.mxu0 0
        %3054 = vmatprep.subr.bf16.mxu0 0
        %3055 = vmatpush1.bf16.xpose.msra.mxu0 0
        %3056 = vmatprep.subr.bf16.mxu0 0
        %3057 = vmatpush1.bf16.xpose.msra.mxu0 0
        %3058 = vmatprep.subr.bf16.mxu0 0
        %3059 = vmatpush1.bf16.xpose.msra.mxu0 0
        %3060 = vmatprep.subr.bf16.mxu0 0
        %3061 = vmatpush1.bf16.xpose.msra.mxu0 0
        %3062 = vmatprep.subr.bf16.mxu0 0
        %3063 = vmatpush1.bf16.xpose.msra.mxu0 0
        %3064 = vmatprep.subr.bf16.mxu0 0
        %3065 = vmatpush1.bf16.xpose.msra.mxu0 0
        %3066 = vmatprep.subr.bf16.mxu0 0
        %3067 = vmatpush1.bf16.xpose.msra.mxu0 0
        %3068 = vmatprep.subr.bf16.mxu0 0
        %3069 = vmatpush1.bf16.xpose.msra.mxu0 0
        %3070 = vmatprep.subr.bf16.mxu0 0
        %3071 = vmatpush1.bf16.xpose.msra.mxu0 0
        %3072 = vmatprep.subr.bf16.mxu0 0
        %3073 = vmatpush1.bf16.xpose.msra.mxu0 0
        %3074 = vmatprep.mubr.bf16.mxu0 0
        %3075 = vmatmul.mubr.bf16.gmra.mrb[0].mxu0 %v3031
        %v3076 = vpop.f32.mrb[0].mxu0
        %v3077 = vadd.f32 0.0, %v3076
        %v3078 = vpop.f32.mrb[0].mxu0
        %v3079 = vpop.f32.mrb[0].mxu0
        %v3080 = vadd.f32 0.0, %v3079
        %v3081 = vpop.f32.mrb[0].mxu0
        %3082 = vmatprep.mubr.bf16.mxu0 0
        %3083 = vmatmul.mubr.bf16.gmra.mrb[0].mxu0 %v3034
        %v3084 = vpop.f32.mrb[0].mxu0
        %v3085 = vadd.f32 0.0, %v3084
        %v3086 = vpop.f32.mrb[0].mxu0
        %v3087 = vpop.f32.mrb[0].mxu0
        %v3088 = vadd.f32 0.0, %v3087
        %v3089 = vpop.f32.mrb[0].mxu0
        %3090 = vdwg.mxu0
        %v3091 = vsel %vm2842, 1, 0
        %v3092 = vsel %vm2843, 1, 0
        %v3093 = vsel %vm2844, 1, 0
        %v3094 = vsel %vm2845, 1, 0
        %vm3095 = vcmp.eq.s32.totalorder %v3091, 1
        %vm3096 = vcmp.eq.s32.totalorder %v3092, 1
        %vm3097 = vcmp.eq.s32.totalorder %v3093, 1
        %vm3098 = vcmp.eq.s32.totalorder %v3094, 1
        %v3099 = vsel %vm3095, %v2894, -inf
        %v3100 = vsel %vm3096, %v2897, -inf
        %v3101 = vsel %vm3097, %v2902, -inf
        %v3102 = vsel %vm3098, %v2905, -inf
        %v3103 = vsel %vm3095, %v2955, -inf
        %v3104 = vsel %vm3096, %v2958, -inf
        %v3105 = vsel %vm3097, %v2963, -inf
        %v3106 = vsel %vm3098, %v2966, -inf
        %v3107 = vsel %vm3095, %v3016, -inf
        %v3108 = vsel %vm3096, %v3019, -inf
        %v3109 = vsel %vm3097, %v3024, -inf
        %v3110 = vsel %vm3098, %v3027, -inf
        %v3111 = vsel %vm3095, %v3077, -inf
        %v3112 = vsel %vm3096, %v3080, -inf
        %v3113 = vsel %vm3097, %v3085, -inf
        %v3114 = vsel %vm3098, %v3088, -inf
        %vm3115 = vcmask 261120
        %v3116 = vsel %vm3115, %v3099, -inf
        %3117 = vmax.xlane.f32.xlu0 %v3116
        %v3118 = vpop.xlane.xlu0 %3117
        %v3119 = vsel %vm3115, %v3100, -inf
        %3120 = vmax.xlane.f32.xlu0 %v3119
        %v3121 = vpop.xlane.xlu0 %3120
        %v3122 = vsel %vm3115, %v3101, -inf
        %3123 = vmax.xlane.f32.xlu0 %v3122
        %v3124 = vpop.xlane.xlu0 %3123
        %v3125 = vsel %vm3115, %v3102, -inf
        %3126 = vmax.xlane.f32.xlu0 %v3125
        %v3127 = vpop.xlane.xlu0 %3126
        %v3128 = vsel %vm3115, %v3103, -inf
        %3129 = vmax.xlane.f32.xlu0 %v3128
        %v3130 = vpop.xlane.xlu0 %3129
        %v3131 = vsel %vm3115, %v3104, -inf
        %3132 = vmax.xlane.f32.xlu0 %v3131
        %v3133 = vpop.xlane.xlu0 %3132
        %v3134 = vsel %vm3115, %v3105, -inf
        %3135 = vmax.xlane.f32.xlu0 %v3134
        %v3136 = vpop.xlane.xlu0 %3135
        %v3137 = vsel %vm3115, %v3106, -inf
        %3138 = vmax.xlane.f32.xlu0 %v3137
        %v3139 = vpop.xlane.xlu0 %3138
        %v3140 = vsel %vm3115, %v3107, -inf
        %3141 = vmax.xlane.f32.xlu0 %v3140
        %v3142 = vpop.xlane.xlu0 %3141
        %v3143 = vsel %vm3115, %v3108, -inf
        %3144 = vmax.xlane.f32.xlu0 %v3143
        %v3145 = vpop.xlane.xlu0 %3144
        %v3146 = vsel %vm3115, %v3109, -inf
        %3147 = vmax.xlane.f32.xlu0 %v3146
        %v3148 = vpop.xlane.xlu0 %3147
        %v3149 = vsel %vm3115, %v3110, -inf
        %3150 = vmax.xlane.f32.xlu0 %v3149
        %v3151 = vpop.xlane.xlu0 %3150
        %v3152 = vsel %vm3115, %v3111, -inf
        %3153 = vmax.xlane.f32.xlu0 %v3152
        %v3154 = vpop.xlane.xlu0 %3153
        %v3155 = vsel %vm3115, %v3112, -inf
        %3156 = vmax.xlane.f32.xlu0 %v3155
        %v3157 = vpop.xlane.xlu0 %3156
        %v3158 = vsel %vm3115, %v3113, -inf
        %3159 = vmax.xlane.f32.xlu0 %v3158
        %v3160 = vpop.xlane.xlu0 %3159
        %v3161 = vsel %vm3115, %v3114, -inf
        %3162 = vmax.xlane.f32.xlu0 %v3161
        %v3163 = vpop.xlane.xlu0 %3162
        %v3164 = vsub.f32 %v3099, %v3118
        %v3165 = vsub.f32 %v3100, %v3121
        %v3166 = vsub.f32 %v3101, %v3124
        %v3167 = vsub.f32 %v3102, %v3127
        %v3168 = vsub.f32 %v3103, %v3130
        %v3169 = vsub.f32 %v3104, %v3133
        %v3170 = vsub.f32 %v3105, %v3136
        %v3171 = vsub.f32 %v3106, %v3139
        %v3172 = vsub.f32 %v3107, %v3142
        %v3173 = vsub.f32 %v3108, %v3145
        %v3174 = vsub.f32 %v3109, %v3148
        %v3175 = vsub.f32 %v3110, %v3151
        %v3176 = vsub.f32 %v3111, %v3154
        %v3177 = vsub.f32 %v3112, %v3157
        %v3178 = vsub.f32 %v3113, %v3160
        %v3179 = vsub.f32 %v3114, %v3163
        %v3180 = vmul.f32 %v3164, 1.442695
        %v3181 = vpow.pop %v3180
        %v3182 = vmul.f32 %v3165, 1.442695
        %v3183 = vpow.pop %v3182
        %v3184 = vmul.f32 %v3166, 1.442695
        %v3185 = vpow.pop %v3184
        %v3186 = vmul.f32 %v3167, 1.442695
        %v3187 = vpow.pop %v3186
        %v3188 = vmul.f32 %v3168, 1.442695
        %v3189 = vpow.pop %v3188
        %v3190 = vmul.f32 %v3169, 1.442695
        %v3191 = vpow.pop %v3190
        %v3192 = vmul.f32 %v3170, 1.442695
        %v3193 = vpow.pop %v3192
        %v3194 = vmul.f32 %v3171, 1.442695
        %v3195 = vpow.pop %v3194
        %v3196 = vmul.f32 %v3172, 1.442695
        %v3197 = vpow.pop %v3196
        %v3198 = vmul.f32 %v3173, 1.442695
        %v3199 = vpow.pop %v3198
        %v3200 = vmul.f32 %v3174, 1.442695
        %v3201 = vpow.pop %v3200
        %v3202 = vmul.f32 %v3175, 1.442695
        %v3203 = vpow.pop %v3202
        %v3204 = vmul.f32 %v3176, 1.442695
        %v3205 = vpow.pop %v3204
        %v3206 = vmul.f32 %v3177, 1.442695
        %v3207 = vpow.pop %v3206
        %v3208 = vmul.f32 %v3178, 1.442695
        %v3209 = vpow.pop %v3208
        %v3210 = vmul.f32 %v3179, 1.442695
        %v3211 = vpow.pop %v3210
        %v3212 = vsel %vm3115, %v3181, 0.0
        %3213 = vadd.xlane.f32.xlu0 %v3212
        %v3214 = vpop.xlane.xlu0 %3213
        %v3215 = vsel %vm3115, %v3183, 0.0
        %3216 = vadd.xlane.f32.xlu0 %v3215
        %v3217 = vpop.xlane.xlu0 %3216
        %v3218 = vsel %vm3115, %v3185, 0.0
        %3219 = vadd.xlane.f32.xlu0 %v3218
        %v3220 = vpop.xlane.xlu0 %3219
        %v3221 = vsel %vm3115, %v3187, 0.0
        %3222 = vadd.xlane.f32.xlu0 %v3221
        %v3223 = vpop.xlane.xlu0 %3222
        %v3224 = vsel %vm3115, %v3189, 0.0
        %3225 = vadd.xlane.f32.xlu0 %v3224
        %v3226 = vpop.xlane.xlu0 %3225
        %v3227 = vsel %vm3115, %v3191, 0.0
        %3228 = vadd.xlane.f32.xlu0 %v3227
        %v3229 = vpop.xlane.xlu0 %3228
        %v3230 = vsel %vm3115, %v3193, 0.0
        %3231 = vadd.xlane.f32.xlu0 %v3230
        %v3232 = vpop.xlane.xlu0 %3231
        %v3233 = vsel %vm3115, %v3195, 0.0
        %3234 = vadd.xlane.f32.xlu0 %v3233
        %v3235 = vpop.xlane.xlu0 %3234
        %v3236 = vsel %vm3115, %v3197, 0.0
        %3237 = vadd.xlane.f32.xlu0 %v3236
        %v3238 = vpop.xlane.xlu0 %3237
        %v3239 = vsel %vm3115, %v3199, 0.0
        %3240 = vadd.xlane.f32.xlu0 %v3239
        %v3241 = vpop.xlane.xlu0 %3240
        %v3242 = vsel %vm3115, %v3201, 0.0
        %3243 = vadd.xlane.f32.xlu0 %v3242
        %v3244 = vpop.xlane.xlu0 %3243
        %v3245 = vsel %vm3115, %v3203, 0.0
        %3246 = vadd.xlane.f32.xlu0 %v3245
        %v3247 = vpop.xlane.xlu0 %3246
        %v3248 = vsel %vm3115, %v3205, 0.0
        %3249 = vadd.xlane.f32.xlu0 %v3248
        %v3250 = vpop.xlane.xlu0 %3249
        %v3251 = vsel %vm3115, %v3207, 0.0
        %3252 = vadd.xlane.f32.xlu0 %v3251
        %v3253 = vpop.xlane.xlu0 %3252
        %v3254 = vsel %vm3115, %v3209, 0.0
        %3255 = vadd.xlane.f32.xlu0 %v3254
        %v3256 = vpop.xlane.xlu0 %3255
        %v3257 = vsel %vm3115, %v3211, 0.0
        %3258 = vadd.xlane.f32.xlu0 %v3257
        %v3259 = vpop.xlane.xlu0 %3258
        %v3260 = vrcp.pop %v3214
        %v3261 = vrcp.pop %v3217
        %v3262 = vrcp.pop %v3220
        %v3263 = vrcp.pop %v3223
        %v3264 = vrcp.pop %v3226
        %v3265 = vrcp.pop %v3229
        %v3266 = vrcp.pop %v3232
        %v3267 = vrcp.pop %v3235
        %v3268 = vrcp.pop %v3238
        %v3269 = vrcp.pop %v3241
        %v3270 = vrcp.pop %v3244
        %v3271 = vrcp.pop %v3247
        %v3272 = vrcp.pop %v3250
        %v3273 = vrcp.pop %v3253
        %v3274 = vrcp.pop %v3256
        %v3275 = vrcp.pop %v3259
        %v3276 = vmul.f32 %v3181, %v3260
        %v3277 = vmul.f32 %v3183, %v3261
        %v3278 = vmul.f32 %v3185, %v3262
        %v3279 = vmul.f32 %v3187, %v3263
        %v3280 = vmul.f32 %v3189, %v3264
        %v3281 = vmul.f32 %v3191, %v3265
        %v3282 = vmul.f32 %v3193, %v3266
        %v3283 = vmul.f32 %v3195, %v3267
        %v3284 = vmul.f32 %v3197, %v3268
        %v3285 = vmul.f32 %v3199, %v3269
        %v3286 = vmul.f32 %v3201, %v3270
        %v3287 = vmul.f32 %v3203, %v3271
        %v3288 = vmul.f32 %v3205, %v3272
        %v3289 = vmul.f32 %v3207, %v3273
        %v3290 = vmul.f32 %v3209, %v3274
        %v3291 = vmul.f32 %v3211, %v3275
        %v3292 = vpack.c.bf16 %v3277, %v3276
        %v3293 = vpack.c.bf16 %v3279, %v3278
        %v3294 = vpack.c.bf16 %v3281, %v3280
        %v3295 = vpack.c.bf16 %v3283, %v3282
        %v3296 = vpack.c.bf16 %v3285, %v3284
        %v3297 = vpack.c.bf16 %v3287, %v3286
        %v3298 = vpack.c.bf16 %v3289, %v3288
        %v3299 = vpack.c.bf16 %v3291, %v3290
        %v3301 = vsel %vm3115, %v3292, 0
        %v3304 = vsel %vm3115, %v3293, 0
        %3306 = vmatprep.subr.bf16.mxu0 0
        %3307 = vmatpush1.bf16.msra.mxu0 %v2811
        %3308 = vmatprep.subr.bf16.mxu0 0
        %3309 = vmatpush1.bf16.msra.mxu0 %v2814
        %3310 = vmatprep.subr.bf16.mxu0 0
        %3311 = vmatpush1.bf16.msra.mxu0 0
        %3312 = vmatprep.subr.bf16.mxu0 0
        %3313 = vmatpush1.bf16.msra.mxu0 0
        %3314 = vmatprep.subr.bf16.mxu0 0
        %3315 = vmatpush1.bf16.msra.mxu0 0
        %3316 = vmatprep.subr.bf16.mxu0 0
        %3317 = vmatpush1.bf16.msra.mxu0 0
        %3318 = vmatprep.subr.bf16.mxu0 0
        %3319 = vmatpush1.bf16.msra.mxu0 0
        %3320 = vmatprep.subr.bf16.mxu0 0
        %3321 = vmatpush1.bf16.msra.mxu0 0
        %3322 = vmatprep.subr.bf16.mxu0 0
        %3323 = vmatpush1.bf16.msra.mxu0 0
        %3324 = vmatprep.subr.bf16.mxu0 0
        %3325 = vmatpush1.bf16.msra.mxu0 0
        %3326 = vmatprep.subr.bf16.mxu0 0
        %3327 = vmatpush1.bf16.msra.mxu0 0
        %3328 = vmatprep.subr.bf16.mxu0 0
        %3329 = vmatpush1.bf16.msra.mxu0 0
        %3330 = vmatprep.subr.bf16.mxu0 0
        %3331 = vmatpush1.bf16.msra.mxu0 0
        %3332 = vmatprep.subr.bf16.mxu0 0
        %3333 = vmatpush1.bf16.msra.mxu0 0
        %3334 = vmatprep.subr.bf16.mxu0 0
        %3335 = vmatpush1.bf16.msra.mxu0 0
        %3336 = vmatprep.subr.bf16.mxu0 0
        %3337 = vmatpush1.bf16.msra.mxu0 0
        %3338 = vmatprep.mubr.bf16.mxu0 0
        %3339 = vmatmul.mubr.bf16.gmra.mrb[0].mxu0 %v3301
        %v3340 = vpop.f32.mrb[0].mxu0
        %v3341 = vadd.f32 0.0, %v3340
        %v3342 = vpop.f32.mrb[0].mxu0
        %v3343 = vpop.f32.mrb[0].mxu0
        %v3344 = vadd.f32 0.0, %v3343
        %v3345 = vpop.f32.mrb[0].mxu0
        %3346 = vmatprep.mubr.bf16.mxu0 0
        %3347 = vmatmul.mubr.bf16.gmra.mrb[0].mxu0 %v3304
        %v3348 = vpop.f32.mrb[0].mxu0
        %v3349 = vadd.f32 0.0, %v3348
        %v3350 = vpop.f32.mrb[0].mxu0
        %v3351 = vpop.f32.mrb[0].mxu0
        %v3352 = vadd.f32 0.0, %v3351
        %v3353 = vpop.f32.mrb[0].mxu0
        %3354 = vdwg.mxu0
        %v3356 = vsel %vm3115, %v3294, 0
        %v3359 = vsel %vm3115, %v3295, 0
        %3361 = vmatprep.subr.bf16.mxu0 0
        %3362 = vmatpush1.bf16.msra.mxu0 %v2817
        %3363 = vmatprep.subr.bf16.mxu0 0
        %3364 = vmatpush1.bf16.msra.mxu0 %v2820
        %3365 = vmatprep.subr.bf16.mxu0 0
        %3366 = vmatpush1.bf16.msra.mxu0 0
        %3367 = vmatprep.subr.bf16.mxu0 0
        %3368 = vmatpush1.bf16.msra.mxu0 0
        %3369 = vmatprep.subr.bf16.mxu0 0
        %3370 = vmatpush1.bf16.msra.mxu0 0
        %3371 = vmatprep.subr.bf16.mxu0 0
        %3372 = vmatpush1.bf16.msra.mxu0 0
        %3373 = vmatprep.subr.bf16.mxu0 0
        %3374 = vmatpush1.bf16.msra.mxu0 0
        %3375 = vmatprep.subr.bf16.mxu0 0
        %3376 = vmatpush1.bf16.msra.mxu0 0
        %3377 = vmatprep.subr.bf16.mxu0 0
        %3378 = vmatpush1.bf16.msra.mxu0 0
        %3379 = vmatprep.subr.bf16.mxu0 0
        %3380 = vmatpush1.bf16.msra.mxu0 0
        %3381 = vmatprep.subr.bf16.mxu0 0
        %3382 = vmatpush1.bf16.msra.mxu0 0
        %3383 = vmatprep.subr.bf16.mxu0 0
        %3384 = vmatpush1.bf16.msra.mxu0 0
        %3385 = vmatprep.subr.bf16.mxu0 0
        %3386 = vmatpush1.bf16.msra.mxu0 0
        %3387 = vmatprep.subr.bf16.mxu0 0
        %3388 = vmatpush1.bf16.msra.mxu0 0
        %3389 = vmatprep.subr.bf16.mxu0 0
        %3390 = vmatpush1.bf16.msra.mxu0 0
        %3391 = vmatprep.subr.bf16.mxu0 0
        %3392 = vmatpush1.bf16.msra.mxu0 0
        %3393 = vmatprep.mubr.bf16.mxu0 0
        %3394 = vmatmul.mubr.bf16.gmra.mrb[0].mxu0 %v3356
        %v3395 = vpop.f32.mrb[0].mxu0
        %v3396 = vadd.f32 0.0, %v3395
        %v3397 = vpop.f32.mrb[0].mxu0
        %v3398 = vpop.f32.mrb[0].mxu0
        %v3399 = vadd.f32 0.0, %v3398
        %v3400 = vpop.f32.mrb[0].mxu0
        %3401 = vmatprep.mubr.bf16.mxu0 0
        %3402 = vmatmul.mubr.bf16.gmra.mrb[0].mxu0 %v3359
        %v3403 = vpop.f32.mrb[0].mxu0
        %v3404 = vadd.f32 0.0, %v3403
        %v3405 = vpop.f32.mrb[0].mxu0
        %v3406 = vpop.f32.mrb[0].mxu0
        %v3407 = vadd.f32 0.0, %v3406
        %v3408 = vpop.f32.mrb[0].mxu0
        %3409 = vdwg.mxu0
        %v3411 = vsel %vm3115, %v3296, 0
        %v3414 = vsel %vm3115, %v3297, 0
        %3416 = vmatprep.subr.bf16.mxu0 0
        %3417 = vmatpush1.bf16.msra.mxu0 %v2823
        %3418 = vmatprep.subr.bf16.mxu0 0
        %3419 = vmatpush1.bf16.msra.mxu0 %v2826
        %3420 = vmatprep.subr.bf16.mxu0 0
        %3421 = vmatpush1.bf16.msra.mxu0 0
        %3422 = vmatprep.subr.bf16.mxu0 0
        %3423 = vmatpush1.bf16.msra.mxu0 0
        %3424 = vmatprep.subr.bf16.mxu0 0
        %3425 = vmatpush1.bf16.msra.mxu0 0
        %3426 = vmatprep.subr.bf16.mxu0 0
        %3427 = vmatpush1.bf16.msra.mxu0 0
        %3428 = vmatprep.subr.bf16.mxu0 0
        %3429 = vmatpush1.bf16.msra.mxu0 0
        %3430 = vmatprep.subr.bf16.mxu0 0
        %3431 = vmatpush1.bf16.msra.mxu0 0
        %3432 = vmatprep.subr.bf16.mxu0 0
        %3433 = vmatpush1.bf16.msra.mxu0 0
        %3434 = vmatprep.subr.bf16.mxu0 0
        %3435 = vmatpush1.bf16.msra.mxu0 0
        %3436 = vmatprep.subr.bf16.mxu0 0
        %3437 = vmatpush1.bf16.msra.mxu0 0
        %3438 = vmatprep.subr.bf16.mxu0 0
        %3439 = vmatpush1.bf16.msra.mxu0 0
        %3440 = vmatprep.subr.bf16.mxu0 0
        %3441 = vmatpush1.bf16.msra.mxu0 0
        %3442 = vmatprep.subr.bf16.mxu0 0
        %3443 = vmatpush1.bf16.msra.mxu0 0
        %3444 = vmatprep.subr.bf16.mxu0 0
        %3445 = vmatpush1.bf16.msra.mxu0 0
        %3446 = vmatprep.subr.bf16.mxu0 0
        %3447 = vmatpush1.bf16.msra.mxu0 0
        %3448 = vmatprep.mubr.bf16.mxu0 0
        %3449 = vmatmul.mubr.bf16.gmra.mrb[0].mxu0 %v3411
        %v3450 = vpop.f32.mrb[0].mxu0
        %v3451 = vadd.f32 0.0, %v3450
        %v3452 = vpop.f32.mrb[0].mxu0
        %v3453 = vpop.f32.mrb[0].mxu0
        %v3454 = vadd.f32 0.0, %v3453
        %v3455 = vpop.f32.mrb[0].mxu0
        %3456 = vmatprep.mubr.bf16.mxu0 0
        %3457 = vmatmul.mubr.bf16.gmra.mrb[0].mxu0 %v3414
        %v3458 = vpop.f32.mrb[0].mxu0
        %v3459 = vadd.f32 0.0, %v3458
        %v3460 = vpop.f32.mrb[0].mxu0
        %v3461 = vpop.f32.mrb[0].mxu0
        %v3462 = vadd.f32 0.0, %v3461
        %v3463 = vpop.f32.mrb[0].mxu0
        %3464 = vdwg.mxu0
        %v3466 = vsel %vm3115, %v3298, 0
        %v3469 = vsel %vm3115, %v3299, 0
        %3471 = vmatprep.subr.bf16.mxu0 0
        %3472 = vmatpush1.bf16.msra.mxu0 %v2829
        %3473 = vmatprep.subr.bf16.mxu0 0
        %3474 = vmatpush1.bf16.msra.mxu0 %v2832
        %3475 = vmatprep.subr.bf16.mxu0 0
        %3476 = vmatpush1.bf16.msra.mxu0 0
        %3477 = vmatprep.subr.bf16.mxu0 0
        %3478 = vmatpush1.bf16.msra.mxu0 0
        %3479 = vmatprep.subr.bf16.mxu0 0
        %3480 = vmatpush1.bf16.msra.mxu0 0
        %3481 = vmatprep.subr.bf16.mxu0 0
        %3482 = vmatpush1.bf16.msra.mxu0 0
        %3483 = vmatprep.subr.bf16.mxu0 0
        %3484 = vmatpush1.bf16.msra.mxu0 0
        %3485 = vmatprep.subr.bf16.mxu0 0
        %3486 = vmatpush1.bf16.msra.mxu0 0
        %3487 = vmatprep.subr.bf16.mxu0 0
        %3488 = vmatpush1.bf16.msra.mxu0 0
        %3489 = vmatprep.subr.bf16.mxu0 0
        %3490 = vmatpush1.bf16.msra.mxu0 0
        %3491 = vmatprep.subr.bf16.mxu0 0
        %3492 = vmatpush1.bf16.msra.mxu0 0
        %3493 = vmatprep.subr.bf16.mxu0 0
        %3494 = vmatpush1.bf16.msra.mxu0 0
        %3495 = vmatprep.subr.bf16.mxu0 0
        %3496 = vmatpush1.bf16.msra.mxu0 0
        %3497 = vmatprep.subr.bf16.mxu0 0
        %3498 = vmatpush1.bf16.msra.mxu0 0
        %3499 = vmatprep.subr.bf16.mxu0 0
        %3500 = vmatpush1.bf16.msra.mxu0 0
        %3501 = vmatprep.subr.bf16.mxu0 0
        %3502 = vmatpush1.bf16.msra.mxu0 0
        %3503 = vmatprep.mubr.bf16.mxu0 0
        %3504 = vmatmul.mubr.bf16.gmra.mrb[0].mxu0 %v3466
        %v3505 = vpop.f32.mrb[0].mxu0
        %v3506 = vadd.f32 0.0, %v3505
        %v3507 = vpop.f32.mrb[0].mxu0
        %v3508 = vpop.f32.mrb[0].mxu0
        %v3509 = vadd.f32 0.0, %v3508
        %v3510 = vpop.f32.mrb[0].mxu0
        %3511 = vmatprep.mubr.bf16.mxu0 0
        %3512 = vmatmul.mubr.bf16.gmra.mrb[0].mxu0 %v3469
        %v3513 = vpop.f32.mrb[0].mxu0
        %v3514 = vadd.f32 0.0, %v3513
        %v3515 = vpop.f32.mrb[0].mxu0
        %v3516 = vpop.f32.mrb[0].mxu0
        %v3517 = vadd.f32 0.0, %v3516
        %v3518 = vpop.f32.mrb[0].mxu0
        %3519 = vdwg.mxu0
        %v3520 = vld [vmem:[#allocation7] sm:$0xff]
        %v3521 = vld [vmem:[#allocation7 + $0x8] sm:$0xf]
        %v3522 = vld [vmem:[#allocation7 + $0xc] sm:$0xff]
        %v3523 = vld [vmem:[#allocation7 + $0x14] sm:$0xf]
        %v3524 = vld [vmem:[#allocation7 + $0x18] sm:$0xff]
        %v3525 = vld [vmem:[#allocation7 + $0x20] sm:$0xf]
        %v3526 = vld [vmem:[#allocation7 + $0x24] sm:$0xff]
        %v3527 = vld [vmem:[#allocation7 + $0x2c] sm:$0xf]
        %v3528 = vld [vmem:[#allocation7 + $0x30] sm:$0xff]
        %v3529 = vld [vmem:[#allocation7 + $0x38] sm:$0xf]
        %v3530 = vld [vmem:[#allocation7 + $0x3c] sm:$0xff]
        %v3531 = vld [vmem:[#allocation7 + $0x44] sm:$0xf]
        %v3532 = vld [vmem:[#allocation7 + $0x48] sm:$0xff]
        %v3533 = vld [vmem:[#allocation7 + $0x50] sm:$0xf]
        %v3534 = vld [vmem:[#allocation7 + $0x54] sm:$0xff]
        %v3535 = vld [vmem:[#allocation7 + $0x5c] sm:$0xf]
        %v3536 = vpack.c.bf16 %v3344, %v3341
        %v3537 = vpack.c.bf16 %v3352, %v3349
        %v3538 = vpack.c.bf16 %v3399, %v3396
        %v3539 = vpack.c.bf16 %v3407, %v3404
        %v3540 = vpack.c.bf16 %v3454, %v3451
        %v3541 = vpack.c.bf16 %v3462, %v3459
        %v3542 = vpack.c.bf16 %v3509, %v3506
        %v3543 = vpack.c.bf16 %v3517, %v3514
        %3546 = vrot.lane.b32.xlu0 %v2763, 64
        %v3547 = vpop.permute.xlu0 %3546
        %3548 = vrot.lane.b32.xlu0 %v2766, 64
        %v3549 = vpop.permute.xlu0 %3548
        %3552 = vrot.lane.b32.xlu0 %v2787, 64
        %v3553 = vpop.permute.xlu0 %3552
        %3554 = vrot.lane.b32.xlu0 %v2790, 64
        %v3555 = vpop.permute.xlu0 %3554
        %v3557 = vsel %vm2846, %v3547, 0
        %v3560 = vsel %vm2846, %v3549, 0
        %v3563 = vsel %vm2846, %v3553, 0
        %v3566 = vsel %vm2846, %v3555, 0
        %3568 = vmatprep.subr.bf16.mxu0 0
        %3569 = vmatpush1.bf16.xpose.msra.mxu0 %v3563
        %3570 = vmatprep.subr.bf16.mxu0 0
        %3571 = vmatpush1.bf16.xpose.msra.mxu0 %v3566
        %3572 = vmatprep.subr.bf16.mxu0 0
        %3573 = vmatpush1.bf16.xpose.msra.mxu0 0
        %3574 = vmatprep.subr.bf16.mxu0 0
        %3575 = vmatpush1.bf16.xpose.msra.mxu0 0
        %3576 = vmatprep.subr.bf16.mxu0 0
        %3577 = vmatpush1.bf16.xpose.msra.mxu0 0
        %3578 = vmatprep.subr.bf16.mxu0 0
        %3579 = vmatpush1.bf16.xpose.msra.mxu0 0
        %3580 = vmatprep.subr.bf16.mxu0 0
        %3581 = vmatpush1.bf16.xpose.msra.mxu0 0
        %3582 = vmatprep.subr.bf16.mxu0 0
        %3583 = vmatpush1.bf16.xpose.msra.mxu0 0
        %3584 = vmatprep.subr.bf16.mxu0 0
        %3585 = vmatpush1.bf16.xpose.msra.mxu0 0
        %3586 = vmatprep.subr.bf16.mxu0 0
        %3587 = vmatpush1.bf16.xpose.msra.mxu0 0
        %3588 = vmatprep.subr.bf16.mxu0 0
        %3589 = vmatpush1.bf16.xpose.msra.mxu0 0
        %3590 = vmatprep.subr.bf16.mxu0 0
        %3591 = vmatpush1.bf16.xpose.msra.mxu0 0
        %3592 = vmatprep.subr.bf16.mxu0 0
        %3593 = vmatpush1.bf16.xpose.msra.mxu0 0
        %3594 = vmatprep.subr.bf16.mxu0 0
        %3595 = vmatpush1.bf16.xpose.msra.mxu0 0
        %3596 = vmatprep.subr.bf16.mxu0 0
        %3597 = vmatpush1.bf16.xpose.msra.mxu0 0
        %3598 = vmatprep.subr.bf16.mxu0 0
        %3599 = vmatpush1.bf16.xpose.msra.mxu0 0
        %3600 = vmatprep.mubr.bf16.mxu0 0
        %3601 = vmatmul.mubr.bf16.gmra.mrb[0].mxu0 %v3557
        %v3602 = vpop.f32.mrb[0].mxu0
        %v3603 = vadd.f32 0.0, %v3602
        %v3604 = vpop.f32.mrb[0].mxu0
        %v3605 = vpop.f32.mrb[0].mxu0
        %v3606 = vadd.f32 0.0, %v3605
        %v3607 = vpop.f32.mrb[0].mxu0
        %3608 = vmatprep.mubr.bf16.mxu0 0
        %3609 = vmatmul.mubr.bf16.gmra.mrb[0].mxu0 %v3560
        %v3610 = vpop.f32.mrb[0].mxu0
        %v3611 = vadd.f32 0.0, %v3610
        %v3612 = vpop.f32.mrb[0].mxu0
        %v3613 = vpop.f32.mrb[0].mxu0
        %v3614 = vadd.f32 0.0, %v3613
        %v3615 = vpop.f32.mrb[0].mxu0
        %3616 = vdwg.mxu0
        %3619 = vrot.lane.b32.xlu0 %v2769, 64
        %v3620 = vpop.permute.xlu0 %3619
        %3621 = vrot.lane.b32.xlu0 %v2772, 64
        %v3622 = vpop.permute.xlu0 %3621
        %3625 = vrot.lane.b32.xlu0 %v2793, 64
        %v3626 = vpop.permute.xlu0 %3625
        %3627 = vrot.lane.b32.xlu0 %v2796, 64
        %v3628 = vpop.permute.xlu0 %3627
        %v3630 = vsel %vm2846, %v3620, 0
        %v3633 = vsel %vm2846, %v3622, 0
        %v3636 = vsel %vm2846, %v3626, 0
        %v3639 = vsel %vm2846, %v3628, 0
        %3641 = vmatprep.subr.bf16.mxu0 0
        %3642 = vmatpush1.bf16.xpose.msra.mxu0 %v3636
        %3643 = vmatprep.subr.bf16.mxu0 0
        %3644 = vmatpush1.bf16.xpose.msra.mxu0 %v3639
        %3645 = vmatprep.subr.bf16.mxu0 0
        %3646 = vmatpush1.bf16.xpose.msra.mxu0 0
        %3647 = vmatprep.subr.bf16.mxu0 0
        %3648 = vmatpush1.bf16.xpose.msra.mxu0 0
        %3649 = vmatprep.subr.bf16.mxu0 0
        %3650 = vmatpush1.bf16.xpose.msra.mxu0 0
        %3651 = vmatprep.subr.bf16.mxu0 0
        %3652 = vmatpush1.bf16.xpose.msra.mxu0 0
        %3653 = vmatprep.subr.bf16.mxu0 0
        %3654 = vmatpush1.bf16.xpose.msra.mxu0 0
        %3655 = vmatprep.subr.bf16.mxu0 0
        %3656 = vmatpush1.bf16.xpose.msra.mxu0 0
        %3657 = vmatprep.subr.bf16.mxu0 0
        %3658 = vmatpush1.bf16.xpose.msra.mxu0 0
        %3659 = vmatprep.subr.bf16.mxu0 0
        %3660 = vmatpush1.bf16.xpose.msra.mxu0 0
        %3661 = vmatprep.subr.bf16.mxu0 0
        %3662 = vmatpush1.bf16.xpose.msra.mxu0 0
        %3663 = vmatprep.subr.bf16.mxu0 0
        %3664 = vmatpush1.bf16.xpose.msra.mxu0 0
        %3665 = vmatprep.subr.bf16.mxu0 0
        %3666 = vmatpush1.bf16.xpose.msra.mxu0 0
        %3667 = vmatprep.subr.bf16.mxu0 0
        %3668 = vmatpush1.bf16.xpose.msra.mxu0 0
        %3669 = vmatprep.subr.bf16.mxu0 0
        %3670 = vmatpush1.bf16.xpose.msra.mxu0 0
        %3671 = vmatprep.subr.bf16.mxu0 0
        %3672 = vmatpush1.bf16.xpose.msra.mxu0 0
        %3673 = vmatprep.mubr.bf16.mxu0 0
        %3674 = vmatmul.mubr.bf16.gmra.mrb[0].mxu0 %v3630
        %v3675 = vpop.f32.mrb[0].mxu0
        %v3676 = vadd.f32 0.0, %v3675
        %v3677 = vpop.f32.mrb[0].mxu0
        %v3678 = vpop.f32.mrb[0].mxu0
        %v3679 = vadd.f32 0.0, %v3678
        %v3680 = vpop.f32.mrb[0].mxu0
        %3681 = vmatprep.mubr.bf16.mxu0 0
        %3682 = vmatmul.mubr.bf16.gmra.mrb[0].mxu0 %v3633
        %v3683 = vpop.f32.mrb[0].mxu0
        %v3684 = vadd.f32 0.0, %v3683
        %v3685 = vpop.f32.mrb[0].mxu0
        %v3686 = vpop.f32.mrb[0].mxu0
        %v3687 = vadd.f32 0.0, %v3686
        %v3688 = vpop.f32.mrb[0].mxu0
        %3689 = vdwg.mxu0
        %3692 = vrot.lane.b32.xlu0 %v2775, 64
        %v3693 = vpop.permute.xlu0 %3692
        %3694 = vrot.lane.b32.xlu0 %v2778, 64
        %v3695 = vpop.permute.xlu0 %3694
        %3698 = vrot.lane.b32.xlu0 %v2799, 64
        %v3699 = vpop.permute.xlu0 %3698
        %3700 = vrot.lane.b32.xlu0 %v2802, 64
        %v3701 = vpop.permute.xlu0 %3700
        %v3703 = vsel %vm2846, %v3693, 0
        %v3706 = vsel %vm2846, %v3695, 0
        %v3709 = vsel %vm2846, %v3699, 0
        %v3712 = vsel %vm2846, %v3701, 0
        %3714 = vmatprep.subr.bf16.mxu0 0
        %3715 = vmatpush1.bf16.xpose.msra.mxu0 %v3709
        %3716 = vmatprep.subr.bf16.mxu0 0
        %3717 = vmatpush1.bf16.xpose.msra.mxu0 %v3712
        %3718 = vmatprep.subr.bf16.mxu0 0
        %3719 = vmatpush1.bf16.xpose.msra.mxu0 0
        %3720 = vmatprep.subr.bf16.mxu0 0
        %3721 = vmatpush1.bf16.xpose.msra.mxu0 0
        %3722 = vmatprep.subr.bf16.mxu0 0
        %3723 = vmatpush1.bf16.xpose.msra.mxu0 0
        %3724 = vmatprep.subr.bf16.mxu0 0
        %3725 = vmatpush1.bf16.xpose.msra.mxu0 0
        %3726 = vmatprep.subr.bf16.mxu0 0
        %3727 = vmatpush1.bf16.xpose.msra.mxu0 0
        %3728 = vmatprep.subr.bf16.mxu0 0
        %3729 = vmatpush1.bf16.xpose.msra.mxu0 0
        %3730 = vmatprep.subr.bf16.mxu0 0
        %3731 = vmatpush1.bf16.xpose.msra.mxu0 0
        %3732 = vmatprep.subr.bf16.mxu0 0
        %3733 = vmatpush1.bf16.xpose.msra.mxu0 0
        %3734 = vmatprep.subr.bf16.mxu0 0
        %3735 = vmatpush1.bf16.xpose.msra.mxu0 0
        %3736 = vmatprep.subr.bf16.mxu0 0
        %3737 = vmatpush1.bf16.xpose.msra.mxu0 0
        %3738 = vmatprep.subr.bf16.mxu0 0
        %3739 = vmatpush1.bf16.xpose.msra.mxu0 0
        %3740 = vmatprep.subr.bf16.mxu0 0
        %3741 = vmatpush1.bf16.xpose.msra.mxu0 0
        %3742 = vmatprep.subr.bf16.mxu0 0
        %3743 = vmatpush1.bf16.xpose.msra.mxu0 0
        %3744 = vmatprep.subr.bf16.mxu0 0
        %3745 = vmatpush1.bf16.xpose.msra.mxu0 0
        %3746 = vmatprep.mubr.bf16.mxu0 0
        %3747 = vmatmul.mubr.bf16.gmra.mrb[0].mxu0 %v3703
        %v3748 = vpop.f32.mrb[0].mxu0
        %v3749 = vadd.f32 0.0, %v3748
        %v3750 = vpop.f32.mrb[0].mxu0
        %v3751 = vpop.f32.mrb[0].mxu0
        %v3752 = vadd.f32 0.0, %v3751
        %v3753 = vpop.f32.mrb[0].mxu0
        %3754 = vmatprep.mubr.bf16.mxu0 0
        %3755 = vmatmul.mubr.bf16.gmra.mrb[0].mxu0 %v3706
        %v3756 = vpop.f32.mrb[0].mxu0
        %v3757 = vadd.f32 0.0, %v3756
        %v3758 = vpop.f32.mrb[0].mxu0
        %v3759 = vpop.f32.mrb[0].mxu0
        %v3760 = vadd.f32 0.0, %v3759
        %v3761 = vpop.f32.mrb[0].mxu0
        %3762 = vdwg.mxu0
        %3765 = vrot.lane.b32.xlu0 %v2781, 64
        %v3766 = vpop.permute.xlu0 %3765
        %3767 = vrot.lane.b32.xlu0 %v2784, 64
        %v3768 = vpop.permute.xlu0 %3767
        %3771 = vrot.lane.b32.xlu0 %v2805, 64
        %v3772 = vpop.permute.xlu0 %3771
        %3773 = vrot.lane.b32.xlu0 %v2808, 64
        %v3774 = vpop.permute.xlu0 %3773
        %v3776 = vsel %vm2846, %v3766, 0
        %v3779 = vsel %vm2846, %v3768, 0
        %v3782 = vsel %vm2846, %v3772, 0
        %v3785 = vsel %vm2846, %v3774, 0
        %3787 = vmatprep.subr.bf16.mxu0 0
        %3788 = vmatpush1.bf16.xpose.msra.mxu0 %v3782
        %3789 = vmatprep.subr.bf16.mxu0 0
        %3790 = vmatpush1.bf16.xpose.msra.mxu0 %v3785
        %3791 = vmatprep.subr.bf16.mxu0 0
        %3792 = vmatpush1.bf16.xpose.msra.mxu0 0
        %3793 = vmatprep.subr.bf16.mxu0 0
        %3794 = vmatpush1.bf16.xpose.msra.mxu0 0
        %3795 = vmatprep.subr.bf16.mxu0 0
        %3796 = vmatpush1.bf16.xpose.msra.mxu0 0
        %3797 = vmatprep.subr.bf16.mxu0 0
        %3798 = vmatpush1.bf16.xpose.msra.mxu0 0
        %3799 = vmatprep.subr.bf16.mxu0 0
        %3800 = vmatpush1.bf16.xpose.msra.mxu0 0
        %3801 = vmatprep.subr.bf16.mxu0 0
        %3802 = vmatpush1.bf16.xpose.msra.mxu0 0
        %3803 = vmatprep.subr.bf16.mxu0 0
        %3804 = vmatpush1.bf16.xpose.msra.mxu0 0
        %3805 = vmatprep.subr.bf16.mxu0 0
        %3806 = vmatpush1.bf16.xpose.msra.mxu0 0
        %3807 = vmatprep.subr.bf16.mxu0 0
        %3808 = vmatpush1.bf16.xpose.msra.mxu0 0
        %3809 = vmatprep.subr.bf16.mxu0 0
        %3810 = vmatpush1.bf16.xpose.msra.mxu0 0
        %3811 = vmatprep.subr.bf16.mxu0 0
        %3812 = vmatpush1.bf16.xpose.msra.mxu0 0
        %3813 = vmatprep.subr.bf16.mxu0 0
        %3814 = vmatpush1.bf16.xpose.msra.mxu0 0
        %3815 = vmatprep.subr.bf16.mxu0 0
        %3816 = vmatpush1.bf16.xpose.msra.mxu0 0
        %3817 = vmatprep.subr.bf16.mxu0 0
        %3818 = vmatpush1.bf16.xpose.msra.mxu0 0
        %3819 = vmatprep.mubr.bf16.mxu0 0
        %3820 = vmatmul.mubr.bf16.gmra.mrb[0].mxu0 %v3776
        %v3821 = vpop.f32.mrb[0].mxu0
        %v3822 = vadd.f32 0.0, %v3821
        %v3823 = vpop.f32.mrb[0].mxu0
        %v3824 = vpop.f32.mrb[0].mxu0
        %v3825 = vadd.f32 0.0, %v3824
        %v3826 = vpop.f32.mrb[0].mxu0
        %3827 = vmatprep.mubr.bf16.mxu0 0
        %3828 = vmatmul.mubr.bf16.gmra.mrb[0].mxu0 %v3779
        %v3829 = vpop.f32.mrb[0].mxu0
        %v3830 = vadd.f32 0.0, %v3829
        %v3831 = vpop.f32.mrb[0].mxu0
        %v3832 = vpop.f32.mrb[0].mxu0
        %v3833 = vadd.f32 0.0, %v3832
        %v3834 = vpop.f32.mrb[0].mxu0
        %3835 = vdwg.mxu0
        %v3836 = vsel %vm3095, %v3603, -inf
        %v3837 = vsel %vm3096, %v3606, -inf
        %v3838 = vsel %vm3097, %v3611, -inf
        %v3839 = vsel %vm3098, %v3614, -inf
        %v3840 = vsel %vm3095, %v3676, -inf
        %v3841 = vsel %vm3096, %v3679, -inf
        %v3842 = vsel %vm3097, %v3684, -inf
        %v3843 = vsel %vm3098, %v3687, -inf
        %v3844 = vsel %vm3095, %v3749, -inf
        %v3845 = vsel %vm3096, %v3752, -inf
        %v3846 = vsel %vm3097, %v3757, -inf
        %v3847 = vsel %vm3098, %v3760, -inf
        %v3848 = vsel %vm3095, %v3822, -inf
        %v3849 = vsel %vm3096, %v3825, -inf
        %v3850 = vsel %vm3097, %v3830, -inf
        %v3851 = vsel %vm3098, %v3833, -inf
        %v3852 = vsel %vm3115, %v3836, -inf
        %3853 = vmax.xlane.f32.xlu0 %v3852
        %v3854 = vpop.xlane.xlu0 %3853
        %v3855 = vsel %vm3115, %v3837, -inf
        %3856 = vmax.xlane.f32.xlu0 %v3855
        %v3857 = vpop.xlane.xlu0 %3856
        %v3858 = vsel %vm3115, %v3838, -inf
        %3859 = vmax.xlane.f32.xlu0 %v3858
        %v3860 = vpop.xlane.xlu0 %3859
        %v3861 = vsel %vm3115, %v3839, -inf
        %3862 = vmax.xlane.f32.xlu0 %v3861
        %v3863 = vpop.xlane.xlu0 %3862
        %v3864 = vsel %vm3115, %v3840, -inf
        %3865 = vmax.xlane.f32.xlu0 %v3864
        %v3866 = vpop.xlane.xlu0 %3865
        %v3867 = vsel %vm3115, %v3841, -inf
        %3868 = vmax.xlane.f32.xlu0 %v3867
        %v3869 = vpop.xlane.xlu0 %3868
        %v3870 = vsel %vm3115, %v3842, -inf
        %3871 = vmax.xlane.f32.xlu0 %v3870
        %v3872 = vpop.xlane.xlu0 %3871
        %v3873 = vsel %vm3115, %v3843, -inf
        %3874 = vmax.xlane.f32.xlu0 %v3873
        %v3875 = vpop.xlane.xlu0 %3874
        %v3876 = vsel %vm3115, %v3844, -inf
        %3877 = vmax.xlane.f32.xlu0 %v3876
        %v3878 = vpop.xlane.xlu0 %3877
        %v3879 = vsel %vm3115, %v3845, -inf
        %3880 = vmax.xlane.f32.xlu0 %v3879
        %v3881 = vpop.xlane.xlu0 %3880
        %v3882 = vsel %vm3115, %v3846, -inf
        %3883 = vmax.xlane.f32.xlu0 %v3882
        %v3884 = vpop.xlane.xlu0 %3883
        %v3885 = vsel %vm3115, %v3847, -inf
        %3886 = vmax.xlane.f32.xlu0 %v3885
        %v3887 = vpop.xlane.xlu0 %3886
        %v3888 = vsel %vm3115, %v3848, -inf
        %3889 = vmax.xlane.f32.xlu0 %v3888
        %v3890 = vpop.xlane.xlu0 %3889
        %v3891 = vsel %vm3115, %v3849, -inf
        %3892 = vmax.xlane.f32.xlu0 %v3891
        %v3893 = vpop.xlane.xlu0 %3892
        %v3894 = vsel %vm3115, %v3850, -inf
        %3895 = vmax.xlane.f32.xlu0 %v3894
        %v3896 = vpop.xlane.xlu0 %3895
        %v3897 = vsel %vm3115, %v3851, -inf
        %3898 = vmax.xlane.f32.xlu0 %v3897
        %v3899 = vpop.xlane.xlu0 %3898
        %v3900 = vsub.f32 %v3836, %v3854
        %v3901 = vsub.f32 %v3837, %v3857
        %v3902 = vsub.f32 %v3838, %v3860
        %v3903 = vsub.f32 %v3839, %v3863
        %v3904 = vsub.f32 %v3840, %v3866
        %v3905 = vsub.f32 %v3841, %v3869
        %v3906 = vsub.f32 %v3842, %v3872
        %v3907 = vsub.f32 %v3843, %v3875
        %v3908 = vsub.f32 %v3844, %v3878
        %v3909 = vsub.f32 %v3845, %v3881
        %v3910 = vsub.f32 %v3846, %v3884
        %v3911 = vsub.f32 %v3847, %v3887
        %v3912 = vsub.f32 %v3848, %v3890
        %v3913 = vsub.f32 %v3849, %v3893
        %v3914 = vsub.f32 %v3850, %v3896
        %v3915 = vsub.f32 %v3851, %v3899
        %v3916 = vmul.f32 %v3900, 1.442695
        %v3917 = vpow.pop %v3916
        %v3918 = vmul.f32 %v3901, 1.442695
        %v3919 = vpow.pop %v3918
        %v3920 = vmul.f32 %v3902, 1.442695
        %v3921 = vpow.pop %v3920
        %v3922 = vmul.f32 %v3903, 1.442695
        %v3923 = vpow.pop %v3922
        %v3924 = vmul.f32 %v3904, 1.442695
        %v3925 = vpow.pop %v3924
        %v3926 = vmul.f32 %v3905, 1.442695
        %v3927 = vpow.pop %v3926
        %v3928 = vmul.f32 %v3906, 1.442695
        %v3929 = vpow.pop %v3928
        %v3930 = vmul.f32 %v3907, 1.442695
        %v3931 = vpow.pop %v3930
        %v3932 = vmul.f32 %v3908, 1.442695
        %v3933 = vpow.pop %v3932
        %v3934 = vmul.f32 %v3909, 1.442695
        %v3935 = vpow.pop %v3934
        %v3936 = vmul.f32 %v3910, 1.442695
        %v3937 = vpow.pop %v3936
        %v3938 = vmul.f32 %v3911, 1.442695
        %v3939 = vpow.pop %v3938
        %v3940 = vmul.f32 %v3912, 1.442695
        %v3941 = vpow.pop %v3940
        %v3942 = vmul.f32 %v3913, 1.442695
        %v3943 = vpow.pop %v3942
        %v3944 = vmul.f32 %v3914, 1.442695
        %v3945 = vpow.pop %v3944
        %v3946 = vmul.f32 %v3915, 1.442695
        %v3947 = vpow.pop %v3946
        %v3948 = vsel %vm3115, %v3917, 0.0
        %3949 = vadd.xlane.f32.xlu0 %v3948
        %v3950 = vpop.xlane.xlu0 %3949
        %v3951 = vsel %vm3115, %v3919, 0.0
        %3952 = vadd.xlane.f32.xlu0 %v3951
        %v3953 = vpop.xlane.xlu0 %3952
        %v3954 = vsel %vm3115, %v3921, 0.0
        %3955 = vadd.xlane.f32.xlu0 %v3954
        %v3956 = vpop.xlane.xlu0 %3955
        %v3957 = vsel %vm3115, %v3923, 0.0
        %3958 = vadd.xlane.f32.xlu0 %v3957
        %v3959 = vpop.xlane.xlu0 %3958
        %v3960 = vsel %vm3115, %v3925, 0.0
        %3961 = vadd.xlane.f32.xlu0 %v3960
        %v3962 = vpop.xlane.xlu0 %3961
        %v3963 = vsel %vm3115, %v3927, 0.0
        %3964 = vadd.xlane.f32.xlu0 %v3963
        %v3965 = vpop.xlane.xlu0 %3964
        %v3966 = vsel %vm3115, %v3929, 0.0
        %3967 = vadd.xlane.f32.xlu0 %v3966
        %v3968 = vpop.xlane.xlu0 %3967
        %v3969 = vsel %vm3115, %v3931, 0.0
        %3970 = vadd.xlane.f32.xlu0 %v3969
        %v3971 = vpop.xlane.xlu0 %3970
        %v3972 = vsel %vm3115, %v3933, 0.0
        %3973 = vadd.xlane.f32.xlu0 %v3972
        %v3974 = vpop.xlane.xlu0 %3973
        %v3975 = vsel %vm3115, %v3935, 0.0
        %3976 = vadd.xlane.f32.xlu0 %v3975
        %v3977 = vpop.xlane.xlu0 %3976
        %v3978 = vsel %vm3115, %v3937, 0.0
        %3979 = vadd.xlane.f32.xlu0 %v3978
        %v3980 = vpop.xlane.xlu0 %3979
        %v3981 = vsel %vm3115, %v3939, 0.0
        %3982 = vadd.xlane.f32.xlu0 %v3981
        %v3983 = vpop.xlane.xlu0 %3982
        %v3984 = vsel %vm3115, %v3941, 0.0
        %3985 = vadd.xlane.f32.xlu0 %v3984
        %v3986 = vpop.xlane.xlu0 %3985
        %v3987 = vsel %vm3115, %v3943, 0.0
        %3988 = vadd.xlane.f32.xlu0 %v3987
        %v3989 = vpop.xlane.xlu0 %3988
        %v3990 = vsel %vm3115, %v3945, 0.0
        %3991 = vadd.xlane.f32.xlu0 %v3990
        %v3992 = vpop.xlane.xlu0 %3991
        %v3993 = vsel %vm3115, %v3947, 0.0
        %3994 = vadd.xlane.f32.xlu0 %v3993
        %v3995 = vpop.xlane.xlu0 %3994
        %v3996 = vrcp.pop %v3950
        %v3997 = vrcp.pop %v3953
        %v3998 = vrcp.pop %v3956
        %v3999 = vrcp.pop %v3959
        %v4000 = vrcp.pop %v3962
        %v4001 = vrcp.pop %v3965
        %v4002 = vrcp.pop %v3968
        %v4003 = vrcp.pop %v3971
        %v4004 = vrcp.pop %v3974
        %v4005 = vrcp.pop %v3977
        %v4006 = vrcp.pop %v3980
        %v4007 = vrcp.pop %v3983
        %v4008 = vrcp.pop %v3986
        %v4009 = vrcp.pop %v3989
        %v4010 = vrcp.pop %v3992
        %v4011 = vrcp.pop %v3995
        %v4012 = vmul.f32 %v3917, %v3996
        %v4013 = vmul.f32 %v3919, %v3997
        %v4014 = vmul.f32 %v3921, %v3998
        %v4015 = vmul.f32 %v3923, %v3999
        %v4016 = vmul.f32 %v3925, %v4000
        %v4017 = vmul.f32 %v3927, %v4001
        %v4018 = vmul.f32 %v3929, %v4002
        %v4019 = vmul.f32 %v3931, %v4003
        %v4020 = vmul.f32 %v3933, %v4004
        %v4021 = vmul.f32 %v3935, %v4005
        %v4022 = vmul.f32 %v3937, %v4006
        %v4023 = vmul.f32 %v3939, %v4007
        %v4024 = vmul.f32 %v3941, %v4008
        %v4025 = vmul.f32 %v3943, %v4009
        %v4026 = vmul.f32 %v3945, %v4010
        %v4027 = vmul.f32 %v3947, %v4011
        %v4028 = vpack.c.bf16 %v4013, %v4012
        %v4029 = vpack.c.bf16 %v4015, %v4014
        %v4030 = vpack.c.bf16 %v4017, %v4016
        %v4031 = vpack.c.bf16 %v4019, %v4018
        %v4032 = vpack.c.bf16 %v4021, %v4020
        %v4033 = vpack.c.bf16 %v4023, %v4022
        %v4034 = vpack.c.bf16 %v4025, %v4024
        %v4035 = vpack.c.bf16 %v4027, %v4026
        %4038 = vrot.lane.b32.xlu0 %v2811, 64
        %v4039 = vpop.permute.xlu0 %4038
        %4040 = vrot.lane.b32.xlu0 %v2814, 64
        %v4041 = vpop.permute.xlu0 %4040
        %v4045 = vsel %vm3115, %v4028, 0
        %v4048 = vsel %vm3115, %v4029, 0
        %4050 = vmatprep.subr.bf16.mxu0 0
        %4051 = vmatpush1.bf16.msra.mxu0 %v4039
        %4052 = vmatprep.subr.bf16.mxu0 0
        %4053 = vmatpush1.bf16.msra.mxu0 %v4041
        %4054 = vmatprep.subr.bf16.mxu0 0
        %4055 = vmatpush1.bf16.msra.mxu0 0
        %4056 = vmatprep.subr.bf16.mxu0 0
        %4057 = vmatpush1.bf16.msra.mxu0 0
        %4058 = vmatprep.subr.bf16.mxu0 0
        %4059 = vmatpush1.bf16.msra.mxu0 0
        %4060 = vmatprep.subr.bf16.mxu0 0
        %4061 = vmatpush1.bf16.msra.mxu0 0
        %4062 = vmatprep.subr.bf16.mxu0 0
        %4063 = vmatpush1.bf16.msra.mxu0 0
        %4064 = vmatprep.subr.bf16.mxu0 0
        %4065 = vmatpush1.bf16.msra.mxu0 0
        %4066 = vmatprep.subr.bf16.mxu0 0
        %4067 = vmatpush1.bf16.msra.mxu0 0
        %4068 = vmatprep.subr.bf16.mxu0 0
        %4069 = vmatpush1.bf16.msra.mxu0 0
        %4070 = vmatprep.subr.bf16.mxu0 0
        %4071 = vmatpush1.bf16.msra.mxu0 0
        %4072 = vmatprep.subr.bf16.mxu0 0
        %4073 = vmatpush1.bf16.msra.mxu0 0
        %4074 = vmatprep.subr.bf16.mxu0 0
        %4075 = vmatpush1.bf16.msra.mxu0 0
        %4076 = vmatprep.subr.bf16.mxu0 0
        %4077 = vmatpush1.bf16.msra.mxu0 0
        %4078 = vmatprep.subr.bf16.mxu0 0
        %4079 = vmatpush1.bf16.msra.mxu0 0
        %4080 = vmatprep.subr.bf16.mxu0 0
        %4081 = vmatpush1.bf16.msra.mxu0 0
        %4082 = vmatprep.mubr.bf16.mxu0 0
        %4083 = vmatmul.mubr.bf16.gmra.mrb[0].mxu0 %v4045
        %v4084 = vpop.f32.mrb[0].mxu0
        %v4085 = vadd.f32 0.0, %v4084
        %v4086 = vpop.f32.mrb[0].mxu0
        %v4087 = vpop.f32.mrb[0].mxu0
        %v4088 = vadd.f32 0.0, %v4087
        %v4089 = vpop.f32.mrb[0].mxu0
        %4090 = vmatprep.mubr.bf16.mxu0 0
        %4091 = vmatmul.mubr.bf16.gmra.mrb[0].mxu0 %v4048
        %v4092 = vpop.f32.mrb[0].mxu0
        %v4093 = vadd.f32 0.0, %v4092
        %v4094 = vpop.f32.mrb[0].mxu0
        %v4095 = vpop.f32.mrb[0].mxu0
        %v4096 = vadd.f32 0.0, %v4095
        %v4097 = vpop.f32.mrb[0].mxu0
        %4098 = vdwg.mxu0
        %4101 = vrot.lane.b32.xlu0 %v2817, 64
        %v4102 = vpop.permute.xlu0 %4101
        %4103 = vrot.lane.b32.xlu0 %v2820, 64
        %v4104 = vpop.permute.xlu0 %4103
        %v4108 = vsel %vm3115, %v4030, 0
        %v4111 = vsel %vm3115, %v4031, 0
        %4113 = vmatprep.subr.bf16.mxu0 0
        %4114 = vmatpush1.bf16.msra.mxu0 %v4102
        %4115 = vmatprep.subr.bf16.mxu0 0
        %4116 = vmatpush1.bf16.msra.mxu0 %v4104
        %4117 = vmatprep.subr.bf16.mxu0 0
        %4118 = vmatpush1.bf16.msra.mxu0 0
        %4119 = vmatprep.subr.bf16.mxu0 0
        %4120 = vmatpush1.bf16.msra.mxu0 0
        %4121 = vmatprep.subr.bf16.mxu0 0
        %4122 = vmatpush1.bf16.msra.mxu0 0
        %4123 = vmatprep.subr.bf16.mxu0 0
        %4124 = vmatpush1.bf16.msra.mxu0 0
        %4125 = vmatprep.subr.bf16.mxu0 0
        %4126 = vmatpush1.bf16.msra.mxu0 0
        %4127 = vmatprep.subr.bf16.mxu0 0
        %4128 = vmatpush1.bf16.msra.mxu0 0
        %4129 = vmatprep.subr.bf16.mxu0 0
        %4130 = vmatpush1.bf16.msra.mxu0 0
        %4131 = vmatprep.subr.bf16.mxu0 0
        %4132 = vmatpush1.bf16.msra.mxu0 0
        %4133 = vmatprep.subr.bf16.mxu0 0
        %4134 = vmatpush1.bf16.msra.mxu0 0
        %4135 = vmatprep.subr.bf16.mxu0 0
        %4136 = vmatpush1.bf16.msra.mxu0 0
        %4137 = vmatprep.subr.bf16.mxu0 0
        %4138 = vmatpush1.bf16.msra.mxu0 0
        %4139 = vmatprep.subr.bf16.mxu0 0
        %4140 = vmatpush1.bf16.msra.mxu0 0
        %4141 = vmatprep.subr.bf16.mxu0 0
        %4142 = vmatpush1.bf16.msra.mxu0 0
        %4143 = vmatprep.subr.bf16.mxu0 0
        %4144 = vmatpush1.bf16.msra.mxu0 0
        %4145 = vmatprep.mubr.bf16.mxu0 0
        %4146 = vmatmul.mubr.bf16.gmra.mrb[0].mxu0 %v4108
        %v4147 = vpop.f32.mrb[0].mxu0
        %v4148 = vadd.f32 0.0, %v4147
        %v4149 = vpop.f32.mrb[0].mxu0
        %v4150 = vpop.f32.mrb[0].mxu0
        %v4151 = vadd.f32 0.0, %v4150
        %v4152 = vpop.f32.mrb[0].mxu0
        %4153 = vmatprep.mubr.bf16.mxu0 0
        %4154 = vmatmul.mubr.bf16.gmra.mrb[0].mxu0 %v4111
        %v4155 = vpop.f32.mrb[0].mxu0
        %v4156 = vadd.f32 0.0, %v4155
        %v4157 = vpop.f32.mrb[0].mxu0
        %v4158 = vpop.f32.mrb[0].mxu0
        %v4159 = vadd.f32 0.0, %v4158
        %v4160 = vpop.f32.mrb[0].mxu0
        %4161 = vdwg.mxu0
        %4164 = vrot.lane.b32.xlu0 %v2823, 64
        %v4165 = vpop.permute.xlu0 %4164
        %4166 = vrot.lane.b32.xlu0 %v2826, 64
        %v4167 = vpop.permute.xlu0 %4166
        %v4171 = vsel %vm3115, %v4032, 0
        %v4174 = vsel %vm3115, %v4033, 0
        %4176 = vmatprep.subr.bf16.mxu0 0
        %4177 = vmatpush1.bf16.msra.mxu0 %v4165
        %4178 = vmatprep.subr.bf16.mxu0 0
        %4179 = vmatpush1.bf16.msra.mxu0 %v4167
        %4180 = vmatprep.subr.bf16.mxu0 0
        %4181 = vmatpush1.bf16.msra.mxu0 0
        %4182 = vmatprep.subr.bf16.mxu0 0
        %4183 = vmatpush1.bf16.msra.mxu0 0
        %4184 = vmatprep.subr.bf16.mxu0 0
        %4185 = vmatpush1.bf16.msra.mxu0 0
        %4186 = vmatprep.subr.bf16.mxu0 0
        %4187 = vmatpush1.bf16.msra.mxu0 0
        %4188 = vmatprep.subr.bf16.mxu0 0
        %4189 = vmatpush1.bf16.msra.mxu0 0
        %4190 = vmatprep.subr.bf16.mxu0 0
        %4191 = vmatpush1.bf16.msra.mxu0 0
        %4192 = vmatprep.subr.bf16.mxu0 0
        %4193 = vmatpush1.bf16.msra.mxu0 0
        %4194 = vmatprep.subr.bf16.mxu0 0
        %4195 = vmatpush1.bf16.msra.mxu0 0
        %4196 = vmatprep.subr.bf16.mxu0 0
        %4197 = vmatpush1.bf16.msra.mxu0 0
        %4198 = vmatprep.subr.bf16.mxu0 0
        %4199 = vmatpush1.bf16.msra.mxu0 0
        %4200 = vmatprep.subr.bf16.mxu0 0
        %4201 = vmatpush1.bf16.msra.mxu0 0
        %4202 = vmatprep.subr.bf16.mxu0 0
        %4203 = vmatpush1.bf16.msra.mxu0 0
        %4204 = vmatprep.subr.bf16.mxu0 0
        %4205 = vmatpush1.bf16.msra.mxu0 0
        %4206 = vmatprep.subr.bf16.mxu0 0
        %4207 = vmatpush1.bf16.msra.mxu0 0
        %4208 = vmatprep.mubr.bf16.mxu0 0
        %4209 = vmatmul.mubr.bf16.gmra.mrb[0].mxu0 %v4171
        %v4210 = vpop.f32.mrb[0].mxu0
        %v4211 = vadd.f32 0.0, %v4210
        %v4212 = vpop.f32.mrb[0].mxu0
        %v4213 = vpop.f32.mrb[0].mxu0
        %v4214 = vadd.f32 0.0, %v4213
        %v4215 = vpop.f32.mrb[0].mxu0
        %4216 = vmatprep.mubr.bf16.mxu0 0
        %4217 = vmatmul.mubr.bf16.gmra.mrb[0].mxu0 %v4174
        %v4218 = vpop.f32.mrb[0].mxu0
        %v4219 = vadd.f32 0.0, %v4218
        %v4220 = vpop.f32.mrb[0].mxu0
        %v4221 = vpop.f32.mrb[0].mxu0
        %v4222 = vadd.f32 0.0, %v4221
        %v4223 = vpop.f32.mrb[0].mxu0
        %4224 = vdwg.mxu0
        %4227 = vrot.lane.b32.xlu0 %v2829, 64
        %v4228 = vpop.permute.xlu0 %4227
        %4229 = vrot.lane.b32.xlu0 %v2832, 64
        %v4230 = vpop.permute.xlu0 %4229
        %v4234 = vsel %vm3115, %v4034, 0
        %v4237 = vsel %vm3115, %v4035, 0
        %4239 = vmatprep.subr.bf16.mxu0 0
        %4240 = vmatpush1.bf16.msra.mxu0 %v4228
        %4241 = vmatprep.subr.bf16.mxu0 0
        %4242 = vmatpush1.bf16.msra.mxu0 %v4230
        %4243 = vmatprep.subr.bf16.mxu0 0
        %4244 = vmatpush1.bf16.msra.mxu0 0
        %4245 = vmatprep.subr.bf16.mxu0 0
        %4246 = vmatpush1.bf16.msra.mxu0 0
        %4247 = vmatprep.subr.bf16.mxu0 0
        %4248 = vmatpush1.bf16.msra.mxu0 0
        %4249 = vmatprep.subr.bf16.mxu0 0
        %4250 = vmatpush1.bf16.msra.mxu0 0
        %4251 = vmatprep.subr.bf16.mxu0 0
        %4252 = vmatpush1.bf16.msra.mxu0 0
        %4253 = vmatprep.subr.bf16.mxu0 0
        %4254 = vmatpush1.bf16.msra.mxu0 0
        %4255 = vmatprep.subr.bf16.mxu0 0
        %4256 = vmatpush1.bf16.msra.mxu0 0
        %4257 = vmatprep.subr.bf16.mxu0 0
        %4258 = vmatpush1.bf16.msra.mxu0 0
        %4259 = vmatprep.subr.bf16.mxu0 0
        %4260 = vmatpush1.bf16.msra.mxu0 0
        %4261 = vmatprep.subr.bf16.mxu0 0
        %4262 = vmatpush1.bf16.msra.mxu0 0
        %4263 = vmatprep.subr.bf16.mxu0 0
        %4264 = vmatpush1.bf16.msra.mxu0 0
        %4265 = vmatprep.subr.bf16.mxu0 0
        %4266 = vmatpush1.bf16.msra.mxu0 0
        %4267 = vmatprep.subr.bf16.mxu0 0
        %4268 = vmatpush1.bf16.msra.mxu0 0
        %4269 = vmatprep.subr.bf16.mxu0 0
        %4270 = vmatpush1.bf16.msra.mxu0 0
        %4271 = vmatprep.mubr.bf16.mxu0 0
        %4272 = vmatmul.mubr.bf16.gmra.mrb[0].mxu0 %v4234
        %v4273 = vpop.f32.mrb[0].mxu0
        %v4274 = vadd.f32 0.0, %v4273
        %v4275 = vpop.f32.mrb[0].mxu0
        %v4276 = vpop.f32.mrb[0].mxu0
        %v4277 = vadd.f32 0.0, %v4276
        %v4278 = vpop.f32.mrb[0].mxu0
        %4279 = vmatprep.mubr.bf16.mxu0 0
        %4280 = vmatmul.mubr.bf16.gmra.mrb[0].mxu0 %v4237
        %v4281 = vpop.f32.mrb[0].mxu0
        %v4282 = vadd.f32 0.0, %v4281
        %v4283 = vpop.f32.mrb[0].mxu0
        %v4284 = vpop.f32.mrb[0].mxu0
        %v4285 = vadd.f32 0.0, %v4284
        %v4286 = vpop.f32.mrb[0].mxu0
        %4287 = vdwg.mxu0
        %v4288 = vld [vmem:[#allocation7 + $0x60] sm:$0xff]
        %v4289 = vld [vmem:[#allocation7 + $0x68] sm:$0xf]
        %v4290 = vld [vmem:[#allocation7 + $0x6c] sm:$0xff]
        %v4291 = vld [vmem:[#allocation7 + $0x74] sm:$0xf]
        %v4292 = vld [vmem:[#allocation7 + $0x78] sm:$0xff]
        %v4293 = vld [vmem:[#allocation7 + $0x80] sm:$0xf]
        %v4294 = vld [vmem:[#allocation7 + $0x84] sm:$0xff]
        %v4295 = vld [vmem:[#allocation7 + $0x8c] sm:$0xf]
        %v4296 = vld [vmem:[#allocation7 + $0x90] sm:$0xff]
        %v4297 = vld [vmem:[#allocation7 + $0x98] sm:$0xf]
        %v4298 = vld [vmem:[#allocation7 + $0x9c] sm:$0xff]
        %v4299 = vld [vmem:[#allocation7 + $0xa4] sm:$0xf]
        %v4300 = vld [vmem:[#allocation7 + $0xa8] sm:$0xff]
        %v4301 = vld [vmem:[#allocation7 + $0xb0] sm:$0xf]
        %v4302 = vld [vmem:[#allocation7 + $0xb4] sm:$0xff]
        %v4303 = vld [vmem:[#allocation7 + $0xbc] sm:$0xf]
        %v4304 = vpack.c.bf16 %v4088, %v4085
        %v4305 = vpack.c.bf16 %v4096, %v4093
        %v4306 = vpack.c.bf16 %v4151, %v4148
        %v4307 = vpack.c.bf16 %v4159, %v4156
        %v4308 = vpack.c.bf16 %v4214, %v4211
        %v4309 = vpack.c.bf16 %v4222, %v4219
        %v4310 = vpack.c.bf16 %v4277, %v4274
        %v4311 = vpack.c.bf16 %v4285, %v4282
        %v4328 = vunpack.c.l.b16 %v4288
        %v4329 = vunpack.c.h.b16 %v4288
        %v4330 = vunpack.c.l.b16 %v4289
        %v4331 = vunpack.c.l.b16 %v4290
        %v4332 = vunpack.c.h.b16 %v4290
        %v4333 = vunpack.c.l.b16 %v4291
        %v4334 = vunpack.c.l.b16 %v4292
        %v4335 = vunpack.c.h.b16 %v4292
        %v4336 = vunpack.c.l.b16 %v4293
        %v4337 = vunpack.c.l.b16 %v4294
        %v4338 = vunpack.c.h.b16 %v4294
        %v4339 = vunpack.c.l.b16 %v4295
        %v4340 = vunpack.c.l.b16 %v4296
        %v4341 = vunpack.c.h.b16 %v4296
        %v4342 = vunpack.c.l.b16 %v4297
        %v4343 = vunpack.c.l.b16 %v4298
        %v4344 = vunpack.c.h.b16 %v4298
        %v4345 = vunpack.c.l.b16 %v4299
        %v4346 = vunpack.c.l.b16 %v4300
        %v4347 = vunpack.c.h.b16 %v4300
        %v4348 = vunpack.c.l.b16 %v4301
        %v4349 = vunpack.c.l.b16 %v4302
        %v4350 = vunpack.c.h.b16 %v4302
        %v4351 = vunpack.c.l.b16 %v4303
        %v4352 = vpack.c.b16 %v4331, %v4328
        %v4353 = vpack.c.b16 %v4332, %v4329
        %v4354 = vpack.c.b16 %v4333, %v4330
        %v4355 = vpack.c.b16 %v4337, %v4334
        %v4356 = vpack.c.b16 %v4338, %v4335
        %v4357 = vpack.c.b16 %v4339, %v4336
        %v4358 = vpack.c.b16 %v4343, %v4340
        %v4359 = vpack.c.b16 %v4344, %v4341
        %v4360 = vpack.c.b16 %v4345, %v4342
        %v4361 = vpack.c.b16 %v4349, %v4346
        %v4362 = vpack.c.b16 %v4350, %v4347
        %v4363 = vpack.c.b16 %v4351, %v4348
        %v4377 = vsel %vm2846, %v4304, 0
        %v4380 = vsel %vm2846, %v4305, 0
        %v4383 = vsel %vm2846, %v4306, 0
        %v4386 = vsel %vm2846, %v4307, 0
        %v4389 = vsel %vm2846, %v4308, 0
        %v4392 = vsel %vm2846, %v4309, 0
        %v4395 = vsel %vm2846, %v4310, 0
        %v4398 = vsel %vm2846, %v4311, 0
        %4400 = vmatprep.subr.bf16.mxu0 %v4353
        %4401 = vmatpush1.bf16.msra.mxu0 %v4352
        %4402 = vmatprep.subr.bf16.mxu0 %v4356
        %4403 = vmatpush1.bf16.msra.mxu0 %v4355
        %4404 = vmatprep.subr.bf16.mxu0 %v4359
        %4405 = vmatpush1.bf16.msra.mxu0 %v4358
        %4406 = vmatprep.subr.bf16.mxu0 %v4362
        %4407 = vmatpush1.bf16.msra.mxu0 %v4361
        %4408 = vmatprep.subr.bf16.mxu0 0
        %4409 = vmatpush1.bf16.msra.mxu0 0
        %4410 = vmatprep.subr.bf16.mxu0 0
        %4411 = vmatpush1.bf16.msra.mxu0 0
        %4412 = vmatprep.subr.bf16.mxu0 0
        %4413 = vmatpush1.bf16.msra.mxu0 0
        %4414 = vmatprep.subr.bf16.mxu0 0
        %4415 = vmatpush1.bf16.msra.mxu0 0
        %4416 = vmatprep.subr.bf16.mxu0 0
        %4417 = vmatpush1.bf16.msra.mxu0 0
        %4418 = vmatprep.subr.bf16.mxu0 0
        %4419 = vmatpush1.bf16.msra.mxu0 0
        %4420 = vmatprep.subr.bf16.mxu0 0
        %4421 = vmatpush1.bf16.msra.mxu0 0
        %4422 = vmatprep.subr.bf16.mxu0 0
        %4423 = vmatpush1.bf16.msra.mxu0 0
        %4424 = vmatprep.subr.bf16.mxu0 0
        %4425 = vmatpush1.bf16.msra.mxu0 0
        %4426 = vmatprep.subr.bf16.mxu0 0
        %4427 = vmatpush1.bf16.msra.mxu0 0
        %4428 = vmatprep.subr.bf16.mxu0 0
        %4429 = vmatpush1.bf16.msra.mxu0 0
        %4430 = vmatprep.subr.bf16.mxu0 0
        %4431 = vmatpush1.bf16.msra.mxu0 0
        %4432 = vmatprep.mubr.bf16.mxu0 0
        %4433 = vmatmul.mubr.bf16.gmra.mrb[0].mxu0 %v4377
        %v4434 = vpop.f32.mrb[0].mxu0
        %v4435 = vadd.f32 0.0, %v4434
        %v4436 = vpop.f32.mrb[0].mxu0
        %v4437 = vadd.f32 0.0, %v4436
        %v4438 = vpop.f32.mrb[0].mxu0
        %v4439 = vadd.f32 0.0, %v4438
        %v4440 = vpop.f32.mrb[0].mxu0
        %v4441 = vadd.f32 0.0, %v4440
        %4442 = vmatprep.mubr.bf16.mxu0 0
        %4443 = vmatmul.mubr.bf16.gmra.mrb[0].mxu0 %v4380
        %v4444 = vpop.f32.mrb[0].mxu0
        %v4445 = vadd.f32 0.0, %v4444
        %v4446 = vpop.f32.mrb[0].mxu0
        %v4447 = vadd.f32 0.0, %v4446
        %v4448 = vpop.f32.mrb[0].mxu0
        %v4449 = vadd.f32 0.0, %v4448
        %v4450 = vpop.f32.mrb[0].mxu0
        %v4451 = vadd.f32 0.0, %v4450
        %4452 = vmatprep.mubr.bf16.mxu0 0
        %4453 = vmatmul.mubr.bf16.gmra.mrb[0].mxu0 %v4383
        %v4454 = vpop.f32.mrb[0].mxu0
        %v4455 = vadd.f32 0.0, %v4454
        %v4456 = vpop.f32.mrb[0].mxu0
        %v4457 = vadd.f32 0.0, %v4456
        %v4458 = vpop.f32.mrb[0].mxu0
        %v4459 = vadd.f32 0.0, %v4458
        %v4460 = vpop.f32.mrb[0].mxu0
        %v4461 = vadd.f32 0.0, %v4460
        %4462 = vmatprep.mubr.bf16.mxu0 0
        %4463 = vmatmul.mubr.bf16.gmra.mrb[0].mxu0 %v4386
        %v4464 = vpop.f32.mrb[0].mxu0
        %v4465 = vadd.f32 0.0, %v4464
        %v4466 = vpop.f32.mrb[0].mxu0
        %v4467 = vadd.f32 0.0, %v4466
        %v4468 = vpop.f32.mrb[0].mxu0
        %v4469 = vadd.f32 0.0, %v4468
        %v4470 = vpop.f32.mrb[0].mxu0
        %v4471 = vadd.f32 0.0, %v4470
        %4472 = vmatprep.mubr.bf16.mxu0 0
        %4473 = vmatmul.mubr.bf16.gmra.mrb[0].mxu0 %v4389
        %v4474 = vpop.f32.mrb[0].mxu0
        %v4475 = vadd.f32 0.0, %v4474
        %v4476 = vpop.f32.mrb[0].mxu0
        %v4477 = vadd.f32 0.0, %v4476
        %v4478 = vpop.f32.mrb[0].mxu0
        %v4479 = vadd.f32 0.0, %v4478
        %v4480 = vpop.f32.mrb[0].mxu0
        %v4481 = vadd.f32 0.0, %v4480
        %4482 = vmatprep.mubr.bf16.mxu0 0
        %4483 = vmatmul.mubr.bf16.gmra.mrb[0].mxu0 %v4392
        %v4484 = vpop.f32.mrb[0].mxu0
        %v4485 = vadd.f32 0.0, %v4484
        %v4486 = vpop.f32.mrb[0].mxu0
        %v4487 = vadd.f32 0.0, %v4486
        %v4488 = vpop.f32.mrb[0].mxu0
        %v4489 = vadd.f32 0.0, %v4488
        %v4490 = vpop.f32.mrb[0].mxu0
        %v4491 = vadd.f32 0.0, %v4490
        %4492 = vmatprep.mubr.bf16.mxu0 0
        %4493 = vmatmul.mubr.bf16.gmra.mrb[0].mxu0 %v4395
        %v4494 = vpop.f32.mrb[0].mxu0
        %v4495 = vadd.f32 0.0, %v4494
        %v4496 = vpop.f32.mrb[0].mxu0
        %v4497 = vadd.f32 0.0, %v4496
        %v4498 = vpop.f32.mrb[0].mxu0
        %v4499 = vadd.f32 0.0, %v4498
        %v4500 = vpop.f32.mrb[0].mxu0
        %v4501 = vadd.f32 0.0, %v4500
        %4502 = vmatprep.mubr.bf16.mxu0 0
        %4503 = vmatmul.mubr.bf16.gmra.mrb[0].mxu0 %v4398
        %v4504 = vpop.f32.mrb[0].mxu0
        %v4505 = vadd.f32 0.0, %v4504
        %v4506 = vpop.f32.mrb[0].mxu0
        %v4507 = vadd.f32 0.0, %v4506
        %v4508 = vpop.f32.mrb[0].mxu0
        %v4509 = vadd.f32 0.0, %v4508
        %v4510 = vpop.f32.mrb[0].mxu0
        %v4511 = vadd.f32 0.0, %v4510
        %4512 = vdwg.mxu0
        %4513 = vmatprep.subr.bf16.mxu0 0
        %4514 = vmatpush1.bf16.msra.mxu0 %v4354
        %4515 = vmatprep.subr.bf16.mxu0 0
        %4516 = vmatpush1.bf16.msra.mxu0 %v4357
        %4517 = vmatprep.subr.bf16.mxu0 0
        %4518 = vmatpush1.bf16.msra.mxu0 %v4360
        %4519 = vmatprep.subr.bf16.mxu0 0
        %4520 = vmatpush1.bf16.msra.mxu0 %v4363
        %4521 = vmatprep.subr.bf16.mxu0 0
        %4522 = vmatpush1.bf16.msra.mxu0 0
        %4523 = vmatprep.subr.bf16.mxu0 0
        %4524 = vmatpush1.bf16.msra.mxu0 0
        %4525 = vmatprep.subr.bf16.mxu0 0
        %4526 = vmatpush1.bf16.msra.mxu0 0
        %4527 = vmatprep.subr.bf16.mxu0 0
        %4528 = vmatpush1.bf16.msra.mxu0 0
        %4529 = vmatprep.subr.bf16.mxu0 0
        %4530 = vmatpush1.bf16.msra.mxu0 0
        %4531 = vmatprep.subr.bf16.mxu0 0
        %4532 = vmatpush1.bf16.msra.mxu0 0
        %4533 = vmatprep.subr.bf16.mxu0 0
        %4534 = vmatpush1.bf16.msra.mxu0 0
        %4535 = vmatprep.subr.bf16.mxu0 0
        %4536 = vmatpush1.bf16.msra.mxu0 0
        %4537 = vmatprep.subr.bf16.mxu0 0
        %4538 = vmatpush1.bf16.msra.mxu0 0
        %4539 = vmatprep.subr.bf16.mxu0 0
        %4540 = vmatpush1.bf16.msra.mxu0 0
        %4541 = vmatprep.subr.bf16.mxu0 0
        %4542 = vmatpush1.bf16.msra.mxu0 0
        %4543 = vmatprep.subr.bf16.mxu0 0
        %4544 = vmatpush1.bf16.msra.mxu0 0
        %4545 = vmatprep.mubr.bf16.mxu0 0
        %4546 = vmatmul.mubr.bf16.gmra.mrb[0].mxu0 %v4377
        %v4547 = vpop.f32.mrb[0].mxu0
        %v4548 = vadd.f32 0.0, %v4547
        %v4549 = vpop.f32.mrb[0].mxu0
        %v4550 = vpop.f32.mrb[0].mxu0
        %v4551 = vadd.f32 0.0, %v4550
        %v4552 = vpop.f32.mrb[0].mxu0
        %4553 = vmatprep.mubr.bf16.mxu0 0
        %4554 = vmatmul.mubr.bf16.gmra.mrb[0].mxu0 %v4380
        %v4555 = vpop.f32.mrb[0].mxu0
        %v4556 = vadd.f32 0.0, %v4555
        %v4557 = vpop.f32.mrb[0].mxu0
        %v4558 = vpop.f32.mrb[0].mxu0
        %v4559 = vadd.f32 0.0, %v4558
        %v4560 = vpop.f32.mrb[0].mxu0
        %4561 = vmatprep.mubr.bf16.mxu0 0
        %4562 = vmatmul.mubr.bf16.gmra.mrb[0].mxu0 %v4383
        %v4563 = vpop.f32.mrb[0].mxu0
        %v4564 = vadd.f32 0.0, %v4563
        %v4565 = vpop.f32.mrb[0].mxu0
        %v4566 = vpop.f32.mrb[0].mxu0
        %v4567 = vadd.f32 0.0, %v4566
        %v4568 = vpop.f32.mrb[0].mxu0
        %4569 = vmatprep.mubr.bf16.mxu0 0
        %4570 = vmatmul.mubr.bf16.gmra.mrb[0].mxu0 %v4386
        %v4571 = vpop.f32.mrb[0].mxu0
        %v4572 = vadd.f32 0.0, %v4571
        %v4573 = vpop.f32.mrb[0].mxu0
        %v4574 = vpop.f32.mrb[0].mxu0
        %v4575 = vadd.f32 0.0, %v4574
        %v4576 = vpop.f32.mrb[0].mxu0
        %4577 = vmatprep.mubr.bf16.mxu0 0
        %4578 = vmatmul.mubr.bf16.gmra.mrb[0].mxu0 %v4389
        %v4579 = vpop.f32.mrb[0].mxu0
        %v4580 = vadd.f32 0.0, %v4579
        %v4581 = vpop.f32.mrb[0].mxu0
        %v4582 = vpop.f32.mrb[0].mxu0
        %v4583 = vadd.f32 0.0, %v4582
        %v4584 = vpop.f32.mrb[0].mxu0
        %4585 = vmatprep.mubr.bf16.mxu0 0
        %4586 = vmatmul.mubr.bf16.gmra.mrb[0].mxu0 %v4392
        %v4587 = vpop.f32.mrb[0].mxu0
        %v4588 = vadd.f32 0.0, %v4587
        %v4589 = vpop.f32.mrb[0].mxu0
        %v4590 = vpop.f32.mrb[0].mxu0
        %v4591 = vadd.f32 0.0, %v4590
        %v4592 = vpop.f32.mrb[0].mxu0
        %4593 = vmatprep.mubr.bf16.mxu0 0
        %4594 = vmatmul.mubr.bf16.gmra.mrb[0].mxu0 %v4395
        %v4595 = vpop.f32.mrb[0].mxu0
        %v4596 = vadd.f32 0.0, %v4595
        %v4597 = vpop.f32.mrb[0].mxu0
        %v4598 = vpop.f32.mrb[0].mxu0
        %v4599 = vadd.f32 0.0, %v4598
        %v4600 = vpop.f32.mrb[0].mxu0
        %4601 = vmatprep.mubr.bf16.mxu0 0
        %4602 = vmatmul.mubr.bf16.gmra.mrb[0].mxu0 %v4398
        %v4603 = vpop.f32.mrb[0].mxu0
        %v4604 = vadd.f32 0.0, %v4603
        %v4605 = vpop.f32.mrb[0].mxu0
        %v4606 = vpop.f32.mrb[0].mxu0
        %v4607 = vadd.f32 0.0, %v4606
        %v4608 = vpop.f32.mrb[0].mxu0
        %4609 = vdwg.mxu0
        %v4626 = vunpack.c.l.b16 %v3520
        %v4627 = vunpack.c.h.b16 %v3520
        %v4628 = vunpack.c.l.b16 %v3521
        %v4629 = vunpack.c.l.b16 %v3522
        %v4630 = vunpack.c.h.b16 %v3522
        %v4631 = vunpack.c.l.b16 %v3523
        %v4632 = vunpack.c.l.b16 %v3524
        %v4633 = vunpack.c.h.b16 %v3524
        %v4634 = vunpack.c.l.b16 %v3525
        %v4635 = vunpack.c.l.b16 %v3526
        %v4636 = vunpack.c.h.b16 %v3526
        %v4637 = vunpack.c.l.b16 %v3527
        %v4638 = vunpack.c.l.b16 %v3528
        %v4639 = vunpack.c.h.b16 %v3528
        %v4640 = vunpack.c.l.b16 %v3529
        %v4641 = vunpack.c.l.b16 %v3530
        %v4642 = vunpack.c.h.b16 %v3530
        %v4643 = vunpack.c.l.b16 %v3531
        %v4644 = vunpack.c.l.b16 %v3532
        %v4645 = vunpack.c.h.b16 %v3532
        %v4646 = vunpack.c.l.b16 %v3533
        %v4647 = vunpack.c.l.b16 %v3534
        %v4648 = vunpack.c.h.b16 %v3534
        %v4649 = vunpack.c.l.b16 %v3535
        %v4650 = vpack.c.b16 %v4629, %v4626
        %v4651 = vpack.c.b16 %v4630, %v4627
        %v4652 = vpack.c.b16 %v4631, %v4628
        %v4653 = vpack.c.b16 %v4635, %v4632
        %v4654 = vpack.c.b16 %v4636, %v4633
        %v4655 = vpack.c.b16 %v4637, %v4634
        %v4656 = vpack.c.b16 %v4641, %v4638
        %v4657 = vpack.c.b16 %v4642, %v4639
        %v4658 = vpack.c.b16 %v4643, %v4640
        %v4659 = vpack.c.b16 %v4647, %v4644
        %v4660 = vpack.c.b16 %v4648, %v4645
        %v4661 = vpack.c.b16 %v4649, %v4646
        %v4675 = vsel %vm2846, %v3536, 0
        %v4678 = vsel %vm2846, %v3537, 0
        %v4681 = vsel %vm2846, %v3538, 0
        %v4684 = vsel %vm2846, %v3539, 0
        %v4687 = vsel %vm2846, %v3540, 0
        %v4690 = vsel %vm2846, %v3541, 0
        %v4693 = vsel %vm2846, %v3542, 0
        %v4696 = vsel %vm2846, %v3543, 0
        %4698 = vmatprep.subr.bf16.mxu0 %v4651
        %4699 = vmatpush1.bf16.msra.mxu0 %v4650
        %4700 = vmatprep.subr.bf16.mxu0 %v4654
        %4701 = vmatpush1.bf16.msra.mxu0 %v4653
        %4702 = vmatprep.subr.bf16.mxu0 %v4657
        %4703 = vmatpush1.bf16.msra.mxu0 %v4656
        %4704 = vmatprep.subr.bf16.mxu0 %v4660
        %4705 = vmatpush1.bf16.msra.mxu0 %v4659
        %4706 = vmatprep.subr.bf16.mxu0 0
        %4707 = vmatpush1.bf16.msra.mxu0 0
        %4708 = vmatprep.subr.bf16.mxu0 0
        %4709 = vmatpush1.bf16.msra.mxu0 0
        %4710 = vmatprep.subr.bf16.mxu0 0
        %4711 = vmatpush1.bf16.msra.mxu0 0
        %4712 = vmatprep.subr.bf16.mxu0 0
        %4713 = vmatpush1.bf16.msra.mxu0 0
        %4714 = vmatprep.subr.bf16.mxu0 0
        %4715 = vmatpush1.bf16.msra.mxu0 0
        %4716 = vmatprep.subr.bf16.mxu0 0
        %4717 = vmatpush1.bf16.msra.mxu0 0
        %4718 = vmatprep.subr.bf16.mxu0 0
        %4719 = vmatpush1.bf16.msra.mxu0 0
        %4720 = vmatprep.subr.bf16.mxu0 0
        %4721 = vmatpush1.bf16.msra.mxu0 0
        %4722 = vmatprep.subr.bf16.mxu0 0
        %4723 = vmatpush1.bf16.msra.mxu0 0
        %4724 = vmatprep.subr.bf16.mxu0 0
        %4725 = vmatpush1.bf16.msra.mxu0 0
        %4726 = vmatprep.subr.bf16.mxu0 0
        %4727 = vmatpush1.bf16.msra.mxu0 0
        %4728 = vmatprep.subr.bf16.mxu0 0
        %4729 = vmatpush1.bf16.msra.mxu0 0
        %4730 = vmatprep.mubr.bf16.mxu0 0
        %4731 = vmatmul.mubr.bf16.gmra.mrb[0].mxu0 %v4675
        %v4732 = vpop.f32.mrb[0].mxu0
        %v4733 = vadd.f32 %v4435, %v4732
        %v4734 = vpop.f32.mrb[0].mxu0
        %v4735 = vadd.f32 %v4437, %v4734
        %v4736 = vpop.f32.mrb[0].mxu0
        %v4737 = vadd.f32 %v4439, %v4736
        %v4738 = vpop.f32.mrb[0].mxu0
        %v4739 = vadd.f32 %v4441, %v4738
        %4740 = vmatprep.mubr.bf16.mxu0 0
        %4741 = vmatmul.mubr.bf16.gmra.mrb[0].mxu0 %v4678
        %v4742 = vpop.f32.mrb[0].mxu0
        %v4743 = vadd.f32 %v4445, %v4742
        %v4744 = vpop.f32.mrb[0].mxu0
        %v4745 = vadd.f32 %v4447, %v4744
        %v4746 = vpop.f32.mrb[0].mxu0
        %v4747 = vadd.f32 %v4449, %v4746
        %v4748 = vpop.f32.mrb[0].mxu0
        %v4749 = vadd.f32 %v4451, %v4748
        %4750 = vmatprep.mubr.bf16.mxu0 0
        %4751 = vmatmul.mubr.bf16.gmra.mrb[0].mxu0 %v4681
        %v4752 = vpop.f32.mrb[0].mxu0
        %v4753 = vadd.f32 %v4455, %v4752
        %v4754 = vpop.f32.mrb[0].mxu0
        %v4755 = vadd.f32 %v4457, %v4754
        %v4756 = vpop.f32.mrb[0].mxu0
        %v4757 = vadd.f32 %v4459, %v4756
        %v4758 = vpop.f32.mrb[0].mxu0
        %v4759 = vadd.f32 %v4461, %v4758
        %4760 = vmatprep.mubr.bf16.mxu0 0
        %4761 = vmatmul.mubr.bf16.gmra.mrb[0].mxu0 %v4684
        %v4762 = vpop.f32.mrb[0].mxu0
        %v4763 = vadd.f32 %v4465, %v4762
        %v4764 = vpop.f32.mrb[0].mxu0
        %v4765 = vadd.f32 %v4467, %v4764
        %v4766 = vpop.f32.mrb[0].mxu0
        %v4767 = vadd.f32 %v4469, %v4766
        %v4768 = vpop.f32.mrb[0].mxu0
        %v4769 = vadd.f32 %v4471, %v4768
        %4770 = vmatprep.mubr.bf16.mxu0 0
        %4771 = vmatmul.mubr.bf16.gmra.mrb[0].mxu0 %v4687
        %v4772 = vpop.f32.mrb[0].mxu0
        %v4773 = vadd.f32 %v4475, %v4772
        %v4774 = vpop.f32.mrb[0].mxu0
        %v4775 = vadd.f32 %v4477, %v4774
        %v4776 = vpop.f32.mrb[0].mxu0
        %v4777 = vadd.f32 %v4479, %v4776
        %v4778 = vpop.f32.mrb[0].mxu0
        %v4779 = vadd.f32 %v4481, %v4778
        %4780 = vmatprep.mubr.bf16.mxu0 0
        %4781 = vmatmul.mubr.bf16.gmra.mrb[0].mxu0 %v4690
        %v4782 = vpop.f32.mrb[0].mxu0
        %v4783 = vadd.f32 %v4485, %v4782
        %v4784 = vpop.f32.mrb[0].mxu0
        %v4785 = vadd.f32 %v4487, %v4784
        %v4786 = vpop.f32.mrb[0].mxu0
        %v4787 = vadd.f32 %v4489, %v4786
        %v4788 = vpop.f32.mrb[0].mxu0
        %v4789 = vadd.f32 %v4491, %v4788
        %4790 = vmatprep.mubr.bf16.mxu0 0
        %4791 = vmatmul.mubr.bf16.gmra.mrb[0].mxu0 %v4693
        %v4792 = vpop.f32.mrb[0].mxu0
        %v4793 = vadd.f32 %v4495, %v4792
        %v4794 = vpop.f32.mrb[0].mxu0
        %v4795 = vadd.f32 %v4497, %v4794
        %v4796 = vpop.f32.mrb[0].mxu0
        %v4797 = vadd.f32 %v4499, %v4796
        %v4798 = vpop.f32.mrb[0].mxu0
        %v4799 = vadd.f32 %v4501, %v4798
        %4800 = vmatprep.mubr.bf16.mxu0 0
        %4801 = vmatmul.mubr.bf16.gmra.mrb[0].mxu0 %v4696
        %v4802 = vpop.f32.mrb[0].mxu0
        %v4803 = vadd.f32 %v4505, %v4802
        %v4804 = vpop.f32.mrb[0].mxu0
        %v4805 = vadd.f32 %v4507, %v4804
        %v4806 = vpop.f32.mrb[0].mxu0
        %v4807 = vadd.f32 %v4509, %v4806
        %v4808 = vpop.f32.mrb[0].mxu0
        %v4809 = vadd.f32 %v4511, %v4808
        %4810 = vdwg.mxu0
        %4811 = vmatprep.subr.bf16.mxu0 0
        %4812 = vmatpush1.bf16.msra.mxu0 %v4652
        %4813 = vmatprep.subr.bf16.mxu0 0
        %4814 = vmatpush1.bf16.msra.mxu0 %v4655
        %4815 = vmatprep.subr.bf16.mxu0 0
        %4816 = vmatpush1.bf16.msra.mxu0 %v4658
        %4817 = vmatprep.subr.bf16.mxu0 0
        %4818 = vmatpush1.bf16.msra.mxu0 %v4661
        %4819 = vmatprep.subr.bf16.mxu0 0
        %4820 = vmatpush1.bf16.msra.mxu0 0
        %4821 = vmatprep.subr.bf16.mxu0 0
        %4822 = vmatpush1.bf16.msra.mxu0 0
        %4823 = vmatprep.subr.bf16.mxu0 0
        %4824 = vmatpush1.bf16.msra.mxu0 0
        %4825 = vmatprep.subr.bf16.mxu0 0
        %4826 = vmatpush1.bf16.msra.mxu0 0
        %4827 = vmatprep.subr.bf16.mxu0 0
        %4828 = vmatpush1.bf16.msra.mxu0 0
        %4829 = vmatprep.subr.bf16.mxu0 0
        %4830 = vmatpush1.bf16.msra.mxu0 0
        %4831 = vmatprep.subr.bf16.mxu0 0
        %4832 = vmatpush1.bf16.msra.mxu0 0
        %4833 = vmatprep.subr.bf16.mxu0 0
        %4834 = vmatpush1.bf16.msra.mxu0 0
        %4835 = vmatprep.subr.bf16.mxu0 0
        %4836 = vmatpush1.bf16.msra.mxu0 0
        %4837 = vmatprep.subr.bf16.mxu0 0
        %4838 = vmatpush1.bf16.msra.mxu0 0
        %4839 = vmatprep.subr.bf16.mxu0 0
        %4840 = vmatpush1.bf16.msra.mxu0 0
        %4841 = vmatprep.subr.bf16.mxu0 0
        %4842 = vmatpush1.bf16.msra.mxu0 0
        %4843 = vmatprep.mubr.bf16.mxu0 0
        %4844 = vmatmul.mubr.bf16.gmra.mrb[0].mxu0 %v4675
        %v4845 = vpop.f32.mrb[0].mxu0
        %v4846 = vadd.f32 %v4548, %v4845
        %v4847 = vpop.f32.mrb[0].mxu0
        %v4848 = vpop.f32.mrb[0].mxu0
        %v4849 = vadd.f32 %v4551, %v4848
        %v4850 = vpop.f32.mrb[0].mxu0
        %4851 = vmatprep.mubr.bf16.mxu0 0
        %4852 = vmatmul.mubr.bf16.gmra.mrb[0].mxu0 %v4678
        %v4853 = vpop.f32.mrb[0].mxu0
        %v4854 = vadd.f32 %v4556, %v4853
        %v4855 = vpop.f32.mrb[0].mxu0
        %v4856 = vpop.f32.mrb[0].mxu0
        %v4857 = vadd.f32 %v4559, %v4856
        %v4858 = vpop.f32.mrb[0].mxu0
        %4859 = vmatprep.mubr.bf16.mxu0 0
        %4860 = vmatmul.mubr.bf16.gmra.mrb[0].mxu0 %v4681
        %v4861 = vpop.f32.mrb[0].mxu0
        %v4862 = vadd.f32 %v4564, %v4861
        %v4863 = vpop.f32.mrb[0].mxu0
        %v4864 = vpop.f32.mrb[0].mxu0
        %v4865 = vadd.f32 %v4567, %v4864
        %v4866 = vpop.f32.mrb[0].mxu0
        %4867 = vmatprep.mubr.bf16.mxu0 0
        %4868 = vmatmul.mubr.bf16.gmra.mrb[0].mxu0 %v4684
        %v4869 = vpop.f32.mrb[0].mxu0
        %v4870 = vadd.f32 %v4572, %v4869
        %v4871 = vpop.f32.mrb[0].mxu0
        %v4872 = vpop.f32.mrb[0].mxu0
        %v4873 = vadd.f32 %v4575, %v4872
        %v4874 = vpop.f32.mrb[0].mxu0
        %4875 = vmatprep.mubr.bf16.mxu0 0
        %4876 = vmatmul.mubr.bf16.gmra.mrb[0].mxu0 %v4687
        %v4877 = vpop.f32.mrb[0].mxu0
        %v4878 = vadd.f32 %v4580, %v4877
        %v4879 = vpop.f32.mrb[0].mxu0
        %v4880 = vpop.f32.mrb[0].mxu0
        %v4881 = vadd.f32 %v4583, %v4880
        %v4882 = vpop.f32.mrb[0].mxu0
        %4883 = vmatprep.mubr.bf16.mxu0 0
        %4884 = vmatmul.mubr.bf16.gmra.mrb[0].mxu0 %v4690
        %v4885 = vpop.f32.mrb[0].mxu0
        %v4886 = vadd.f32 %v4588, %v4885
        %v4887 = vpop.f32.mrb[0].mxu0
        %v4888 = vpop.f32.mrb[0].mxu0
        %v4889 = vadd.f32 %v4591, %v4888
        %v4890 = vpop.f32.mrb[0].mxu0
        %4891 = vmatprep.mubr.bf16.mxu0 0
        %4892 = vmatmul.mubr.bf16.gmra.mrb[0].mxu0 %v4693
        %v4893 = vpop.f32.mrb[0].mxu0
        %v4894 = vadd.f32 %v4596, %v4893
        %v4895 = vpop.f32.mrb[0].mxu0
        %v4896 = vpop.f32.mrb[0].mxu0
        %v4897 = vadd.f32 %v4599, %v4896
        %v4898 = vpop.f32.mrb[0].mxu0
        %4899 = vmatprep.mubr.bf16.mxu0 0
        %4900 = vmatmul.mubr.bf16.gmra.mrb[0].mxu0 %v4696
        %v4901 = vpop.f32.mrb[0].mxu0
        %v4902 = vadd.f32 %v4604, %v4901
        %v4903 = vpop.f32.mrb[0].mxu0
        %v4904 = vpop.f32.mrb[0].mxu0
        %v4905 = vadd.f32 %v4607, %v4904
        %v4906 = vpop.f32.mrb[0].mxu0
        %4907 = vdwg.mxu0
        %v4909 = vsel %vm2846, %v2764, 0
        %v4912 = vsel %vm2846, %v2767, 0
        %v4915 = vsel %vm2846, %v2788, 0
        %v4918 = vsel %vm2846, %v2791, 0
        %4920 = vmatprep.subr.bf16.mxu0 0
        %4921 = vmatpush1.bf16.xpose.msra.mxu0 %v4915
        %4922 = vmatprep.subr.bf16.mxu0 0
        %4923 = vmatpush1.bf16.xpose.msra.mxu0 %v4918
        %4924 = vmatprep.subr.bf16.mxu0 0
        %4925 = vmatpush1.bf16.xpose.msra.mxu0 0
        %4926 = vmatprep.subr.bf16.mxu0 0
        %4927 = vmatpush1.bf16.xpose.msra.mxu0 0
        %4928 = vmatprep.subr.bf16.mxu0 0
        %4929 = vmatpush1.bf16.xpose.msra.mxu0 0
        %4930 = vmatprep.subr.bf16.mxu0 0
        %4931 = vmatpush1.bf16.xpose.msra.mxu0 0
        %4932 = vmatprep.subr.bf16.mxu0 0
        %4933 = vmatpush1.bf16.xpose.msra.mxu0 0
        %4934 = vmatprep.subr.bf16.mxu0 0
        %4935 = vmatpush1.bf16.xpose.msra.mxu0 0
        %4936 = vmatprep.subr.bf16.mxu0 0
        %4937 = vmatpush1.bf16.xpose.msra.mxu0 0
        %4938 = vmatprep.subr.bf16.mxu0 0
        %4939 = vmatpush1.bf16.xpose.msra.mxu0 0
        %4940 = vmatprep.subr.bf16.mxu0 0
        %4941 = vmatpush1.bf16.xpose.msra.mxu0 0
        %4942 = vmatprep.subr.bf16.mxu0 0
        %4943 = vmatpush1.bf16.xpose.msra.mxu0 0
        %4944 = vmatprep.subr.bf16.mxu0 0
        %4945 = vmatpush1.bf16.xpose.msra.mxu0 0
        %4946 = vmatprep.subr.bf16.mxu0 0
        %4947 = vmatpush1.bf16.xpose.msra.mxu0 0
        %4948 = vmatprep.subr.bf16.mxu0 0
        %4949 = vmatpush1.bf16.xpose.msra.mxu0 0
        %4950 = vmatprep.subr.bf16.mxu0 0
        %4951 = vmatpush1.bf16.xpose.msra.mxu0 0
        %4952 = vmatprep.mubr.bf16.mxu0 0
        %4953 = vmatmul.mubr.bf16.gmra.mrb[0].mxu0 %v4909
        %v4954 = vpop.f32.mrb[0].mxu0
        %v4955 = vadd.f32 0.0, %v4954
        %v4956 = vpop.f32.mrb[0].mxu0
        %v4957 = vpop.f32.mrb[0].mxu0
        %v4958 = vadd.f32 0.0, %v4957
        %v4959 = vpop.f32.mrb[0].mxu0
        %4960 = vmatprep.mubr.bf16.mxu0 0
        %4961 = vmatmul.mubr.bf16.gmra.mrb[0].mxu0 %v4912
        %v4962 = vpop.f32.mrb[0].mxu0
        %v4963 = vadd.f32 0.0, %v4962
        %v4964 = vpop.f32.mrb[0].mxu0
        %v4965 = vpop.f32.mrb[0].mxu0
        %v4966 = vadd.f32 0.0, %v4965
        %v4967 = vpop.f32.mrb[0].mxu0
        %4968 = vdwg.mxu0
        %v4970 = vsel %vm2846, %v2770, 0
        %v4973 = vsel %vm2846, %v2773, 0
        %v4976 = vsel %vm2846, %v2794, 0
        %v4979 = vsel %vm2846, %v2797, 0
        %4981 = vmatprep.subr.bf16.mxu0 0
        %4982 = vmatpush1.bf16.xpose.msra.mxu0 %v4976
        %4983 = vmatprep.subr.bf16.mxu0 0
        %4984 = vmatpush1.bf16.xpose.msra.mxu0 %v4979
        %4985 = vmatprep.subr.bf16.mxu0 0
        %4986 = vmatpush1.bf16.xpose.msra.mxu0 0
        %4987 = vmatprep.subr.bf16.mxu0 0
        %4988 = vmatpush1.bf16.xpose.msra.mxu0 0
        %4989 = vmatprep.subr.bf16.mxu0 0
        %4990 = vmatpush1.bf16.xpose.msra.mxu0 0
        %4991 = vmatprep.subr.bf16.mxu0 0
        %4992 = vmatpush1.bf16.xpose.msra.mxu0 0
        %4993 = vmatprep.subr.bf16.mxu0 0
        %4994 = vmatpush1.bf16.xpose.msra.mxu0 0
        %4995 = vmatprep.subr.bf16.mxu0 0
        %4996 = vmatpush1.bf16.xpose.msra.mxu0 0
        %4997 = vmatprep.subr.bf16.mxu0 0
        %4998 = vmatpush1.bf16.xpose.msra.mxu0 0
        %4999 = vmatprep.subr.bf16.mxu0 0
        %5000 = vmatpush1.bf16.xpose.msra.mxu0 0
        %5001 = vmatprep.subr.bf16.mxu0 0
        %5002 = vmatpush1.bf16.xpose.msra.mxu0 0
        %5003 = vmatprep.subr.bf16.mxu0 0
        %5004 = vmatpush1.bf16.xpose.msra.mxu0 0
        %5005 = vmatprep.subr.bf16.mxu0 0
        %5006 = vmatpush1.bf16.xpose.msra.mxu0 0
        %5007 = vmatprep.subr.bf16.mxu0 0
        %5008 = vmatpush1.bf16.xpose.msra.mxu0 0
        %5009 = vmatprep.subr.bf16.mxu0 0
        %5010 = vmatpush1.bf16.xpose.msra.mxu0 0
        %5011 = vmatprep.subr.bf16.mxu0 0
        %5012 = vmatpush1.bf16.xpose.msra.mxu0 0
        %5013 = vmatprep.mubr.bf16.mxu0 0
        %5014 = vmatmul.mubr.bf16.gmra.mrb[0].mxu0 %v4970
        %v5015 = vpop.f32.mrb[0].mxu0
        %v5016 = vadd.f32 0.0, %v5015
        %v5017 = vpop.f32.mrb[0].mxu0
        %v5018 = vpop.f32.mrb[0].mxu0
        %v5019 = vadd.f32 0.0, %v5018
        %v5020 = vpop.f32.mrb[0].mxu0
        %5021 = vmatprep.mubr.bf16.mxu0 0
        %5022 = vmatmul.mubr.bf16.gmra.mrb[0].mxu0 %v4973
        %v5023 = vpop.f32.mrb[0].mxu0
        %v5024 = vadd.f32 0.0, %v5023
        %v5025 = vpop.f32.mrb[0].mxu0
        %v5026 = vpop.f32.mrb[0].mxu0
        %v5027 = vadd.f32 0.0, %v5026
        %v5028 = vpop.f32.mrb[0].mxu0
        %5029 = vdwg.mxu0
        %v5031 = vsel %vm2846, %v2776, 0
        %v5034 = vsel %vm2846, %v2779, 0
        %v5037 = vsel %vm2846, %v2800, 0
        %v5040 = vsel %vm2846, %v2803, 0
        %5042 = vmatprep.subr.bf16.mxu0 0
        %5043 = vmatpush1.bf16.xpose.msra.mxu0 %v5037
        %5044 = vmatprep.subr.bf16.mxu0 0
        %5045 = vmatpush1.bf16.xpose.msra.mxu0 %v5040
        %5046 = vmatprep.subr.bf16.mxu0 0
        %5047 = vmatpush1.bf16.xpose.msra.mxu0 0
        %5048 = vmatprep.subr.bf16.mxu0 0
        %5049 = vmatpush1.bf16.xpose.msra.mxu0 0
        %5050 = vmatprep.subr.bf16.mxu0 0
        %5051 = vmatpush1.bf16.xpose.msra.mxu0 0
        %5052 = vmatprep.subr.bf16.mxu0 0
        %5053 = vmatpush1.bf16.xpose.msra.mxu0 0
        %5054 = vmatprep.subr.bf16.mxu0 0
        %5055 = vmatpush1.bf16.xpose.msra.mxu0 0
        %5056 = vmatprep.subr.bf16.mxu0 0
        %5057 = vmatpush1.bf16.xpose.msra.mxu0 0
        %5058 = vmatprep.subr.bf16.mxu0 0
        %5059 = vmatpush1.bf16.xpose.msra.mxu0 0
        %5060 = vmatprep.subr.bf16.mxu0 0
        %5061 = vmatpush1.bf16.xpose.msra.mxu0 0
        %5062 = vmatprep.subr.bf16.mxu0 0
        %5063 = vmatpush1.bf16.xpose.msra.mxu0 0
        %5064 = vmatprep.subr.bf16.mxu0 0
        %5065 = vmatpush1.bf16.xpose.msra.mxu0 0
        %5066 = vmatprep.subr.bf16.mxu0 0
        %5067 = vmatpush1.bf16.xpose.msra.mxu0 0
        %5068 = vmatprep.subr.bf16.mxu0 0
        %5069 = vmatpush1.bf16.xpose.msra.mxu0 0
        %5070 = vmatprep.subr.bf16.mxu0 0
        %5071 = vmatpush1.bf16.xpose.msra.mxu0 0
        %5072 = vmatprep.subr.bf16.mxu0 0
        %5073 = vmatpush1.bf16.xpose.msra.mxu0 0
        %5074 = vmatprep.mubr.bf16.mxu0 0
        %5075 = vmatmul.mubr.bf16.gmra.mrb[0].mxu0 %v5031
        %v5076 = vpop.f32.mrb[0].mxu0
        %v5077 = vadd.f32 0.0, %v5076
        %v5078 = vpop.f32.mrb[0].mxu0
        %v5079 = vpop.f32.mrb[0].mxu0
        %v5080 = vadd.f32 0.0, %v5079
        %v5081 = vpop.f32.mrb[0].mxu0
        %5082 = vmatprep.mubr.bf16.mxu0 0
        %5083 = vmatmul.mubr.bf16.gmra.mrb[0].mxu0 %v5034
        %v5084 = vpop.f32.mrb[0].mxu0
        %v5085 = vadd.f32 0.0, %v5084
        %v5086 = vpop.f32.mrb[0].mxu0
        %v5087 = vpop.f32.mrb[0].mxu0
        %v5088 = vadd.f32 0.0, %v5087
        %v5089 = vpop.f32.mrb[0].mxu0
        %5090 = vdwg.mxu0
        %v5092 = vsel %vm2846, %v2782, 0
        %v5095 = vsel %vm2846, %v2785, 0
        %v5098 = vsel %vm2846, %v2806, 0
        %v5101 = vsel %vm2846, %v2809, 0
        %5103 = vmatprep.subr.bf16.mxu0 0
        %5104 = vmatpush1.bf16.xpose.msra.mxu0 %v5098
        %5105 = vmatprep.subr.bf16.mxu0 0
        %5106 = vmatpush1.bf16.xpose.msra.mxu0 %v5101
        %5107 = vmatprep.subr.bf16.mxu0 0
        %5108 = vmatpush1.bf16.xpose.msra.mxu0 0
        %5109 = vmatprep.subr.bf16.mxu0 0
        %5110 = vmatpush1.bf16.xpose.msra.mxu0 0
        %5111 = vmatprep.subr.bf16.mxu0 0
        %5112 = vmatpush1.bf16.xpose.msra.mxu0 0
        %5113 = vmatprep.subr.bf16.mxu0 0
        %5114 = vmatpush1.bf16.xpose.msra.mxu0 0
        %5115 = vmatprep.subr.bf16.mxu0 0
        %5116 = vmatpush1.bf16.xpose.msra.mxu0 0
        %5117 = vmatprep.subr.bf16.mxu0 0
        %5118 = vmatpush1.bf16.xpose.msra.mxu0 0
        %5119 = vmatprep.subr.bf16.mxu0 0
        %5120 = vmatpush1.bf16.xpose.msra.mxu0 0
        %5121 = vmatprep.subr.bf16.mxu0 0
        %5122 = vmatpush1.bf16.xpose.msra.mxu0 0
        %5123 = vmatprep.subr.bf16.mxu0 0
        %5124 = vmatpush1.bf16.xpose.msra.mxu0 0
        %5125 = vmatprep.subr.bf16.mxu0 0
        %5126 = vmatpush1.bf16.xpose.msra.mxu0 0
        %5127 = vmatprep.subr.bf16.mxu0 0
        %5128 = vmatpush1.bf16.xpose.msra.mxu0 0
        %5129 = vmatprep.subr.bf16.mxu0 0
        %5130 = vmatpush1.bf16.xpose.msra.mxu0 0
        %5131 = vmatprep.subr.bf16.mxu0 0
        %5132 = vmatpush1.bf16.xpose.msra.mxu0 0
        %5133 = vmatprep.subr.bf16.mxu0 0
        %5134 = vmatpush1.bf16.xpose.msra.mxu0 0
        %5135 = vmatprep.mubr.bf16.mxu0 0
        %5136 = vmatmul.mubr.bf16.gmra.mrb[0].mxu0 %v5092
        %v5137 = vpop.f32.mrb[0].mxu0
        %v5138 = vadd.f32 0.0, %v5137
        %v5139 = vpop.f32.mrb[0].mxu0
        %v5140 = vpop.f32.mrb[0].mxu0
        %v5141 = vadd.f32 0.0, %v5140
        %v5142 = vpop.f32.mrb[0].mxu0
        %5143 = vmatprep.mubr.bf16.mxu0 0
        %5144 = vmatmul.mubr.bf16.gmra.mrb[0].mxu0 %v5095
        %v5145 = vpop.f32.mrb[0].mxu0
        %v5146 = vadd.f32 0.0, %v5145
        %v5147 = vpop.f32.mrb[0].mxu0
        %v5148 = vpop.f32.mrb[0].mxu0
        %v5149 = vadd.f32 0.0, %v5148
        %v5150 = vpop.f32.mrb[0].mxu0
        %5151 = vdwg.mxu0
        %v5152 = vsel %vm3095, %v4955, -inf
        %v5153 = vsel %vm3096, %v4958, -inf
        %v5154 = vsel %vm3097, %v4963, -inf
        %v5155 = vsel %vm3098, %v4966, -inf
        %v5156 = vsel %vm3095, %v5016, -inf
        %v5157 = vsel %vm3096, %v5019, -inf
        %v5158 = vsel %vm3097, %v5024, -inf
        %v5159 = vsel %vm3098, %v5027, -inf
        %v5160 = vsel %vm3095, %v5077, -inf
        %v5161 = vsel %vm3096, %v5080, -inf
        %v5162 = vsel %vm3097, %v5085, -inf
        %v5163 = vsel %vm3098, %v5088, -inf
        %v5164 = vsel %vm3095, %v5138, -inf
        %v5165 = vsel %vm3096, %v5141, -inf
        %v5166 = vsel %vm3097, %v5146, -inf
        %v5167 = vsel %vm3098, %v5149, -inf
        %v5168 = vsel %vm3115, %v5152, -inf
        %5169 = vmax.xlane.f32.xlu0 %v5168
        %v5170 = vpop.xlane.xlu0 %5169
        %v5171 = vsel %vm3115, %v5153, -inf
        %5172 = vmax.xlane.f32.xlu0 %v5171
        %v5173 = vpop.xlane.xlu0 %5172
        %v5174 = vsel %vm3115, %v5154, -inf
        %5175 = vmax.xlane.f32.xlu0 %v5174
        %v5176 = vpop.xlane.xlu0 %5175
        %v5177 = vsel %vm3115, %v5155, -inf
        %5178 = vmax.xlane.f32.xlu0 %v5177
        %v5179 = vpop.xlane.xlu0 %5178
        %v5180 = vsel %vm3115, %v5156, -inf
        %5181 = vmax.xlane.f32.xlu0 %v5180
        %v5182 = vpop.xlane.xlu0 %5181
        %v5183 = vsel %vm3115, %v5157, -inf
        %5184 = vmax.xlane.f32.xlu0 %v5183
        %v5185 = vpop.xlane.xlu0 %5184
        %v5186 = vsel %vm3115, %v5158, -inf
        %5187 = vmax.xlane.f32.xlu0 %v5186
        %v5188 = vpop.xlane.xlu0 %5187
        %v5189 = vsel %vm3115, %v5159, -inf
        %5190 = vmax.xlane.f32.xlu0 %v5189
        %v5191 = vpop.xlane.xlu0 %5190
        %v5192 = vsel %vm3115, %v5160, -inf
        %5193 = vmax.xlane.f32.xlu0 %v5192
        %v5194 = vpop.xlane.xlu0 %5193
        %v5195 = vsel %vm3115, %v5161, -inf
        %5196 = vmax.xlane.f32.xlu0 %v5195
        %v5197 = vpop.xlane.xlu0 %5196
        %v5198 = vsel %vm3115, %v5162, -inf
        %5199 = vmax.xlane.f32.xlu0 %v5198
        %v5200 = vpop.xlane.xlu0 %5199
        %v5201 = vsel %vm3115, %v5163, -inf
        %5202 = vmax.xlane.f32.xlu0 %v5201
        %v5203 = vpop.xlane.xlu0 %5202
        %v5204 = vsel %vm3115, %v5164, -inf
        %5205 = vmax.xlane.f32.xlu0 %v5204
        %v5206 = vpop.xlane.xlu0 %5205
        %v5207 = vsel %vm3115, %v5165, -inf
        %5208 = vmax.xlane.f32.xlu0 %v5207
        %v5209 = vpop.xlane.xlu0 %5208
        %v5210 = vsel %vm3115, %v5166, -inf
        %5211 = vmax.xlane.f32.xlu0 %v5210
        %v5212 = vpop.xlane.xlu0 %5211
        %v5213 = vsel %vm3115, %v5167, -inf
        %5214 = vmax.xlane.f32.xlu0 %v5213
        %v5215 = vpop.xlane.xlu0 %5214
        %v5216 = vsub.f32 %v5152, %v5170
        %v5217 = vsub.f32 %v5153, %v5173
        %v5218 = vsub.f32 %v5154, %v5176
        %v5219 = vsub.f32 %v5155, %v5179
        %v5220 = vsub.f32 %v5156, %v5182
        %v5221 = vsub.f32 %v5157, %v5185
        %v5222 = vsub.f32 %v5158, %v5188
        %v5223 = vsub.f32 %v5159, %v5191
        %v5224 = vsub.f32 %v5160, %v5194
        %v5225 = vsub.f32 %v5161, %v5197
        %v5226 = vsub.f32 %v5162, %v5200
        %v5227 = vsub.f32 %v5163, %v5203
        %v5228 = vsub.f32 %v5164, %v5206
        %v5229 = vsub.f32 %v5165, %v5209
        %v5230 = vsub.f32 %v5166, %v5212
        %v5231 = vsub.f32 %v5167, %v5215
        %v5232 = vmul.f32 %v5216, 1.442695
        %v5233 = vpow.pop %v5232
        %v5234 = vmul.f32 %v5217, 1.442695
        %v5235 = vpow.pop %v5234
        %v5236 = vmul.f32 %v5218, 1.442695
        %v5237 = vpow.pop %v5236
        %v5238 = vmul.f32 %v5219, 1.442695
        %v5239 = vpow.pop %v5238
        %v5240 = vmul.f32 %v5220, 1.442695
        %v5241 = vpow.pop %v5240
        %v5242 = vmul.f32 %v5221, 1.442695
        %v5243 = vpow.pop %v5242
        %v5244 = vmul.f32 %v5222, 1.442695
        %v5245 = vpow.pop %v5244
        %v5246 = vmul.f32 %v5223, 1.442695
        %v5247 = vpow.pop %v5246
        %v5248 = vmul.f32 %v5224, 1.442695
        %v5249 = vpow.pop %v5248
        %v5250 = vmul.f32 %v5225, 1.442695
        %v5251 = vpow.pop %v5250
        %v5252 = vmul.f32 %v5226, 1.442695
        %v5253 = vpow.pop %v5252
        %v5254 = vmul.f32 %v5227, 1.442695
        %v5255 = vpow.pop %v5254
        %v5256 = vmul.f32 %v5228, 1.442695
        %v5257 = vpow.pop %v5256
        %v5258 = vmul.f32 %v5229, 1.442695
        %v5259 = vpow.pop %v5258
        %v5260 = vmul.f32 %v5230, 1.442695
        %v5261 = vpow.pop %v5260
        %v5262 = vmul.f32 %v5231, 1.442695
        %v5263 = vpow.pop %v5262
        %v5264 = vsel %vm3115, %v5233, 0.0
        %5265 = vadd.xlane.f32.xlu0 %v5264
        %v5266 = vpop.xlane.xlu0 %5265
        %v5267 = vsel %vm3115, %v5235, 0.0
        %5268 = vadd.xlane.f32.xlu0 %v5267
        %v5269 = vpop.xlane.xlu0 %5268
        %v5270 = vsel %vm3115, %v5237, 0.0
        %5271 = vadd.xlane.f32.xlu0 %v5270
        %v5272 = vpop.xlane.xlu0 %5271
        %v5273 = vsel %vm3115, %v5239, 0.0
        %5274 = vadd.xlane.f32.xlu0 %v5273
        %v5275 = vpop.xlane.xlu0 %5274
        %v5276 = vsel %vm3115, %v5241, 0.0
        %5277 = vadd.xlane.f32.xlu0 %v5276
        %v5278 = vpop.xlane.xlu0 %5277
        %v5279 = vsel %vm3115, %v5243, 0.0
        %5280 = vadd.xlane.f32.xlu0 %v5279
        %v5281 = vpop.xlane.xlu0 %5280
        %v5282 = vsel %vm3115, %v5245, 0.0
        %5283 = vadd.xlane.f32.xlu0 %v5282
        %v5284 = vpop.xlane.xlu0 %5283
        %v5285 = vsel %vm3115, %v5247, 0.0
        %5286 = vadd.xlane.f32.xlu0 %v5285
        %v5287 = vpop.xlane.xlu0 %5286
        %v5288 = vsel %vm3115, %v5249, 0.0
        %5289 = vadd.xlane.f32.xlu0 %v5288
        %v5290 = vpop.xlane.xlu0 %5289
        %v5291 = vsel %vm3115, %v5251, 0.0
        %5292 = vadd.xlane.f32.xlu0 %v5291
        %v5293 = vpop.xlane.xlu0 %5292
        %v5294 = vsel %vm3115, %v5253, 0.0
        %5295 = vadd.xlane.f32.xlu0 %v5294
        %v5296 = vpop.xlane.xlu0 %5295
        %v5297 = vsel %vm3115, %v5255, 0.0
        %5298 = vadd.xlane.f32.xlu0 %v5297
        %v5299 = vpop.xlane.xlu0 %5298
        %v5300 = vsel %vm3115, %v5257, 0.0
        %5301 = vadd.xlane.f32.xlu0 %v5300
        %v5302 = vpop.xlane.xlu0 %5301
        %v5303 = vsel %vm3115, %v5259, 0.0
        %5304 = vadd.xlane.f32.xlu0 %v5303
        %v5305 = vpop.xlane.xlu0 %5304
        %v5306 = vsel %vm3115, %v5261, 0.0
        %5307 = vadd.xlane.f32.xlu0 %v5306
        %v5308 = vpop.xlane.xlu0 %5307
        %v5309 = vsel %vm3115, %v5263, 0.0
        %5310 = vadd.xlane.f32.xlu0 %v5309
        %v5311 = vpop.xlane.xlu0 %5310
        %v5312 = vrcp.pop %v5266
        %v5313 = vrcp.pop %v5269
        %v5314 = vrcp.pop %v5272
        %v5315 = vrcp.pop %v5275
        %v5316 = vrcp.pop %v5278
        %v5317 = vrcp.pop %v5281
        %v5318 = vrcp.pop %v5284
        %v5319 = vrcp.pop %v5287
        %v5320 = vrcp.pop %v5290
        %v5321 = vrcp.pop %v5293
        %v5322 = vrcp.pop %v5296
        %v5323 = vrcp.pop %v5299
        %v5324 = vrcp.pop %v5302
        %v5325 = vrcp.pop %v5305
        %v5326 = vrcp.pop %v5308
        %v5327 = vrcp.pop %v5311
        %v5328 = vmul.f32 %v5233, %v5312
        %v5329 = vmul.f32 %v5235, %v5313
        %v5330 = vmul.f32 %v5237, %v5314
        %v5331 = vmul.f32 %v5239, %v5315
        %v5332 = vmul.f32 %v5241, %v5316
        %v5333 = vmul.f32 %v5243, %v5317
        %v5334 = vmul.f32 %v5245, %v5318
        %v5335 = vmul.f32 %v5247, %v5319
        %v5336 = vmul.f32 %v5249, %v5320
        %v5337 = vmul.f32 %v5251, %v5321
        %v5338 = vmul.f32 %v5253, %v5322
        %v5339 = vmul.f32 %v5255, %v5323
        %v5340 = vmul.f32 %v5257, %v5324
        %v5341 = vmul.f32 %v5259, %v5325
        %v5342 = vmul.f32 %v5261, %v5326
        %v5343 = vmul.f32 %v5263, %v5327
        %v5344 = vpack.c.bf16 %v5329, %v5328
        %v5345 = vpack.c.bf16 %v5331, %v5330
        %v5346 = vpack.c.bf16 %v5333, %v5332
        %v5347 = vpack.c.bf16 %v5335, %v5334
        %v5348 = vpack.c.bf16 %v5337, %v5336
        %v5349 = vpack.c.bf16 %v5339, %v5338
        %v5350 = vpack.c.bf16 %v5341, %v5340
        %v5351 = vpack.c.bf16 %v5343, %v5342
        %v5353 = vsel %vm3115, %v5344, 0
        %v5356 = vsel %vm3115, %v5345, 0
        %5358 = vmatprep.subr.bf16.mxu0 0
        %5359 = vmatpush1.bf16.msra.mxu0 %v2812
        %5360 = vmatprep.subr.bf16.mxu0 0
        %5361 = vmatpush1.bf16.msra.mxu0 %v2815
        %5362 = vmatprep.subr.bf16.mxu0 0
        %5363 = vmatpush1.bf16.msra.mxu0 0
        %5364 = vmatprep.subr.bf16.mxu0 0
        %5365 = vmatpush1.bf16.msra.mxu0 0
        %5366 = vmatprep.subr.bf16.mxu0 0
        %5367 = vmatpush1.bf16.msra.mxu0 0
        %5368 = vmatprep.subr.bf16.mxu0 0
        %5369 = vmatpush1.bf16.msra.mxu0 0
        %5370 = vmatprep.subr.bf16.mxu0 0
        %5371 = vmatpush1.bf16.msra.mxu0 0
        %5372 = vmatprep.subr.bf16.mxu0 0
        %5373 = vmatpush1.bf16.msra.mxu0 0
        %5374 = vmatprep.subr.bf16.mxu0 0
        %5375 = vmatpush1.bf16.msra.mxu0 0
        %5376 = vmatprep.subr.bf16.mxu0 0
        %5377 = vmatpush1.bf16.msra.mxu0 0
        %5378 = vmatprep.subr.bf16.mxu0 0
        %5379 = vmatpush1.bf16.msra.mxu0 0
        %5380 = vmatprep.subr.bf16.mxu0 0
        %5381 = vmatpush1.bf16.msra.mxu0 0
        %5382 = vmatprep.subr.bf16.mxu0 0
        %5383 = vmatpush1.bf16.msra.mxu0 0
        %5384 = vmatprep.subr.bf16.mxu0 0
        %5385 = vmatpush1.bf16.msra.mxu0 0
        %5386 = vmatprep.subr.bf16.mxu0 0
        %5387 = vmatpush1.bf16.msra.mxu0 0
        %5388 = vmatprep.subr.bf16.mxu0 0
        %5389 = vmatpush1.bf16.msra.mxu0 0
        %5390 = vmatprep.mubr.bf16.mxu0 0
        %5391 = vmatmul.mubr.bf16.gmra.mrb[0].mxu0 %v5353
        %v5392 = vpop.f32.mrb[0].mxu0
        %v5393 = vadd.f32 0.0, %v5392
        %v5394 = vpop.f32.mrb[0].mxu0
        %v5395 = vpop.f32.mrb[0].mxu0
        %v5396 = vadd.f32 0.0, %v5395
        %v5397 = vpop.f32.mrb[0].mxu0
        %5398 = vmatprep.mubr.bf16.mxu0 0
        %5399 = vmatmul.mubr.bf16.gmra.mrb[0].mxu0 %v5356
        %v5400 = vpop.f32.mrb[0].mxu0
        %v5401 = vadd.f32 0.0, %v5400
        %v5402 = vpop.f32.mrb[0].mxu0
        %v5403 = vpop.f32.mrb[0].mxu0
        %v5404 = vadd.f32 0.0, %v5403
        %v5405 = vpop.f32.mrb[0].mxu0
        %5406 = vdwg.mxu0
        %v5408 = vsel %vm3115, %v5346, 0
        %v5411 = vsel %vm3115, %v5347, 0
        %5413 = vmatprep.subr.bf16.mxu0 0
        %5414 = vmatpush1.bf16.msra.mxu0 %v2818
        %5415 = vmatprep.subr.bf16.mxu0 0
        %5416 = vmatpush1.bf16.msra.mxu0 %v2821
        %5417 = vmatprep.subr.bf16.mxu0 0
        %5418 = vmatpush1.bf16.msra.mxu0 0
        %5419 = vmatprep.subr.bf16.mxu0 0
        %5420 = vmatpush1.bf16.msra.mxu0 0
        %5421 = vmatprep.subr.bf16.mxu0 0
        %5422 = vmatpush1.bf16.msra.mxu0 0
        %5423 = vmatprep.subr.bf16.mxu0 0
        %5424 = vmatpush1.bf16.msra.mxu0 0
        %5425 = vmatprep.subr.bf16.mxu0 0
        %5426 = vmatpush1.bf16.msra.mxu0 0
        %5427 = vmatprep.subr.bf16.mxu0 0
        %5428 = vmatpush1.bf16.msra.mxu0 0
        %5429 = vmatprep.subr.bf16.mxu0 0
        %5430 = vmatpush1.bf16.msra.mxu0 0
        %5431 = vmatprep.subr.bf16.mxu0 0
        %5432 = vmatpush1.bf16.msra.mxu0 0
        %5433 = vmatprep.subr.bf16.mxu0 0
        %5434 = vmatpush1.bf16.msra.mxu0 0
        %5435 = vmatprep.subr.bf16.mxu0 0
        %5436 = vmatpush1.bf16.msra.mxu0 0
        %5437 = vmatprep.subr.bf16.mxu0 0
        %5438 = vmatpush1.bf16.msra.mxu0 0
        %5439 = vmatprep.subr.bf16.mxu0 0
        %5440 = vmatpush1.bf16.msra.mxu0 0
        %5441 = vmatprep.subr.bf16.mxu0 0
        %5442 = vmatpush1.bf16.msra.mxu0 0
        %5443 = vmatprep.subr.bf16.mxu0 0
        %5444 = vmatpush1.bf16.msra.mxu0 0
        %5445 = vmatprep.mubr.bf16.mxu0 0
        %5446 = vmatmul.mubr.bf16.gmra.mrb[0].mxu0 %v5408
        %v5447 = vpop.f32.mrb[0].mxu0
        %v5448 = vadd.f32 0.0, %v5447
        %v5449 = vpop.f32.mrb[0].mxu0
        %v5450 = vpop.f32.mrb[0].mxu0
        %v5451 = vadd.f32 0.0, %v5450
        %v5452 = vpop.f32.mrb[0].mxu0
        %5453 = vmatprep.mubr.bf16.mxu0 0
        %5454 = vmatmul.mubr.bf16.gmra.mrb[0].mxu0 %v5411
        %v5455 = vpop.f32.mrb[0].mxu0
        %v5456 = vadd.f32 0.0, %v5455
        %v5457 = vpop.f32.mrb[0].mxu0
        %v5458 = vpop.f32.mrb[0].mxu0
        %v5459 = vadd.f32 0.0, %v5458
        %v5460 = vpop.f32.mrb[0].mxu0
        %5461 = vdwg.mxu0
        %v5463 = vsel %vm3115, %v5348, 0
        %v5466 = vsel %vm3115, %v5349, 0
        %5468 = vmatprep.subr.bf16.mxu0 0
        %5469 = vmatpush1.bf16.msra.mxu0 %v2824
        %5470 = vmatprep.subr.bf16.mxu0 0
        %5471 = vmatpush1.bf16.msra.mxu0 %v2827
        %5472 = vmatprep.subr.bf16.mxu0 0
        %5473 = vmatpush1.bf16.msra.mxu0 0
        %5474 = vmatprep.subr.bf16.mxu0 0
        %5475 = vmatpush1.bf16.msra.mxu0 0
        %5476 = vmatprep.subr.bf16.mxu0 0
        %5477 = vmatpush1.bf16.msra.mxu0 0
        %5478 = vmatprep.subr.bf16.mxu0 0
        %5479 = vmatpush1.bf16.msra.mxu0 0
        %5480 = vmatprep.subr.bf16.mxu0 0
        %5481 = vmatpush1.bf16.msra.mxu0 0
        %5482 = vmatprep.subr.bf16.mxu0 0
        %5483 = vmatpush1.bf16.msra.mxu0 0
        %5484 = vmatprep.subr.bf16.mxu0 0
        %5485 = vmatpush1.bf16.msra.mxu0 0
        %5486 = vmatprep.subr.bf16.mxu0 0
        %5487 = vmatpush1.bf16.msra.mxu0 0
        %5488 = vmatprep.subr.bf16.mxu0 0
        %5489 = vmatpush1.bf16.msra.mxu0 0
        %5490 = vmatprep.subr.bf16.mxu0 0
        %5491 = vmatpush1.bf16.msra.mxu0 0
        %5492 = vmatprep.subr.bf16.mxu0 0
        %5493 = vmatpush1.bf16.msra.mxu0 0
        %5494 = vmatprep.subr.bf16.mxu0 0
        %5495 = vmatpush1.bf16.msra.mxu0 0
        %5496 = vmatprep.subr.bf16.mxu0 0
        %5497 = vmatpush1.bf16.msra.mxu0 0
        %5498 = vmatprep.subr.bf16.mxu0 0
        %5499 = vmatpush1.bf16.msra.mxu0 0
        %5500 = vmatprep.mubr.bf16.mxu0 0
        %5501 = vmatmul.mubr.bf16.gmra.mrb[0].mxu0 %v5463
        %v5502 = vpop.f32.mrb[0].mxu0
        %v5503 = vadd.f32 0.0, %v5502
        %v5504 = vpop.f32.mrb[0].mxu0
        %v5505 = vpop.f32.mrb[0].mxu0
        %v5506 = vadd.f32 0.0, %v5505
        %v5507 = vpop.f32.mrb[0].mxu0
        %5508 = vmatprep.mubr.bf16.mxu0 0
        %5509 = vmatmul.mubr.bf16.gmra.mrb[0].mxu0 %v5466
        %v5510 = vpop.f32.mrb[0].mxu0
        %v5511 = vadd.f32 0.0, %v5510
        %v5512 = vpop.f32.mrb[0].mxu0
        %v5513 = vpop.f32.mrb[0].mxu0
        %v5514 = vadd.f32 0.0, %v5513
        %v5515 = vpop.f32.mrb[0].mxu0
        %5516 = vdwg.mxu0
        %v5518 = vsel %vm3115, %v5350, 0
        %v5521 = vsel %vm3115, %v5351, 0
        %5523 = vmatprep.subr.bf16.mxu0 0
        %5524 = vmatpush1.bf16.msra.mxu0 %v2830
        %5525 = vmatprep.subr.bf16.mxu0 0
        %5526 = vmatpush1.bf16.msra.mxu0 %v2833
        %5527 = vmatprep.subr.bf16.mxu0 0
        %5528 = vmatpush1.bf16.msra.mxu0 0
        %5529 = vmatprep.subr.bf16.mxu0 0
        %5530 = vmatpush1.bf16.msra.mxu0 0
        %5531 = vmatprep.subr.bf16.mxu0 0
        %5532 = vmatpush1.bf16.msra.mxu0 0
        %5533 = vmatprep.subr.bf16.mxu0 0
        %5534 = vmatpush1.bf16.msra.mxu0 0
        %5535 = vmatprep.subr.bf16.mxu0 0
        %5536 = vmatpush1.bf16.msra.mxu0 0
        %5537 = vmatprep.subr.bf16.mxu0 0
        %5538 = vmatpush1.bf16.msra.mxu0 0
        %5539 = vmatprep.subr.bf16.mxu0 0
        %5540 = vmatpush1.bf16.msra.mxu0 0
        %5541 = vmatprep.subr.bf16.mxu0 0
        %5542 = vmatpush1.bf16.msra.mxu0 0
        %5543 = vmatprep.subr.bf16.mxu0 0
        %5544 = vmatpush1.bf16.msra.mxu0 0
        %5545 = vmatprep.subr.bf16.mxu0 0
        %5546 = vmatpush1.bf16.msra.mxu0 0
        %5547 = vmatprep.subr.bf16.mxu0 0
        %5548 = vmatpush1.bf16.msra.mxu0 0
        %5549 = vmatprep.subr.bf16.mxu0 0
        %5550 = vmatpush1.bf16.msra.mxu0 0
        %5551 = vmatprep.subr.bf16.mxu0 0
        %5552 = vmatpush1.bf16.msra.mxu0 0
        %5553 = vmatprep.subr.bf16.mxu0 0
        %5554 = vmatpush1.bf16.msra.mxu0 0
        %5555 = vmatprep.mubr.bf16.mxu0 0
        %5556 = vmatmul.mubr.bf16.gmra.mrb[0].mxu0 %v5518
        %v5557 = vpop.f32.mrb[0].mxu0
        %v5558 = vadd.f32 0.0, %v5557
        %v5559 = vpop.f32.mrb[0].mxu0
        %v5560 = vpop.f32.mrb[0].mxu0
        %v5561 = vadd.f32 0.0, %v5560
        %v5562 = vpop.f32.mrb[0].mxu0
        %5563 = vmatprep.mubr.bf16.mxu0 0
        %5564 = vmatmul.mubr.bf16.gmra.mrb[0].mxu0 %v5521
        %v5565 = vpop.f32.mrb[0].mxu0
        %v5566 = vadd.f32 0.0, %v5565
        %v5567 = vpop.f32.mrb[0].mxu0
        %v5568 = vpop.f32.mrb[0].mxu0
        %v5569 = vadd.f32 0.0, %v5568
        %v5570 = vpop.f32.mrb[0].mxu0
        %5571 = vdwg.mxu0
        %v5572 = vld [vmem:[#allocation7 + $0xc0] sm:$0xff]
        %v5573 = vld [vmem:[#allocation7 + $0xc8] sm:$0xf]
        %v5574 = vld [vmem:[#allocation7 + $0xcc] sm:$0xff]
        %v5575 = vld [vmem:[#allocation7 + $0xd4] sm:$0xf]
        %v5576 = vld [vmem:[#allocation7 + $0xd8] sm:$0xff]
        %v5577 = vld [vmem:[#allocation7 + $0xe0] sm:$0xf]
        %v5578 = vld [vmem:[#allocation7 + $0xe4] sm:$0xff]
        %v5579 = vld [vmem:[#allocation7 + $0xec] sm:$0xf]
        %v5580 = vld [vmem:[#allocation7 + $0xf0] sm:$0xff]
        %v5581 = vld [vmem:[#allocation7 + $0xf8] sm:$0xf]
        %v5582 = vld [vmem:[#allocation7 + $0xfc] sm:$0xff]
        %v5583 = vld [vmem:[#allocation7 + $0x104] sm:$0xf]
        %v5584 = vld [vmem:[#allocation7 + $0x108] sm:$0xff]
        %v5585 = vld [vmem:[#allocation7 + $0x110] sm:$0xf]
        %v5586 = vld [vmem:[#allocation7 + $0x114] sm:$0xff]
        %v5587 = vld [vmem:[#allocation7 + $0x11c] sm:$0xf]
        %v5588 = vpack.c.bf16 %v5396, %v5393
        %v5589 = vpack.c.bf16 %v5404, %v5401
        %v5590 = vpack.c.bf16 %v5451, %v5448
        %v5591 = vpack.c.bf16 %v5459, %v5456
        %v5592 = vpack.c.bf16 %v5506, %v5503
        %v5593 = vpack.c.bf16 %v5514, %v5511
        %v5594 = vpack.c.bf16 %v5561, %v5558
        %v5595 = vpack.c.bf16 %v5569, %v5566
        %v5612 = vunpack.c.l.b16 %v5572
        %v5613 = vunpack.c.h.b16 %v5572
        %v5614 = vunpack.c.l.b16 %v5573
        %v5615 = vunpack.c.l.b16 %v5574
        %v5616 = vunpack.c.h.b16 %v5574
        %v5617 = vunpack.c.l.b16 %v5575
        %v5618 = vunpack.c.l.b16 %v5576
        %v5619 = vunpack.c.h.b16 %v5576
        %v5620 = vunpack.c.l.b16 %v5577
        %v5621 = vunpack.c.l.b16 %v5578
        %v5622 = vunpack.c.h.b16 %v5578
        %v5623 = vunpack.c.l.b16 %v5579
        %v5624 = vunpack.c.l.b16 %v5580
        %v5625 = vunpack.c.h.b16 %v5580
        %v5626 = vunpack.c.l.b16 %v5581
        %v5627 = vunpack.c.l.b16 %v5582
        %v5628 = vunpack.c.h.b16 %v5582
        %v5629 = vunpack.c.l.b16 %v5583
        %v5630 = vunpack.c.l.b16 %v5584
        %v5631 = vunpack.c.h.b16 %v5584
        %v5632 = vunpack.c.l.b16 %v5585
        %v5633 = vunpack.c.l.b16 %v5586
        %v5634 = vunpack.c.h.b16 %v5586
        %v5635 = vunpack.c.l.b16 %v5587
        %v5636 = vpack.c.b16 %v5615, %v5612
        %v5637 = vpack.c.b16 %v5616, %v5613
        %v5638 = vpack.c.b16 %v5617, %v5614
        %v5639 = vpack.c.b16 %v5621, %v5618
        %v5640 = vpack.c.b16 %v5622, %v5619
        %v5641 = vpack.c.b16 %v5623, %v5620
        %v5642 = vpack.c.b16 %v5627, %v5624
        %v5643 = vpack.c.b16 %v5628, %v5625
        %v5644 = vpack.c.b16 %v5629, %v5626
        %v5645 = vpack.c.b16 %v5633, %v5630
        %v5646 = vpack.c.b16 %v5634, %v5631
        %v5647 = vpack.c.b16 %v5635, %v5632
        %v5661 = vsel %vm2846, %v5588, 0
        %v5664 = vsel %vm2846, %v5589, 0
        %v5667 = vsel %vm2846, %v5590, 0
        %v5670 = vsel %vm2846, %v5591, 0
        %v5673 = vsel %vm2846, %v5592, 0
        %v5676 = vsel %vm2846, %v5593, 0
        %v5679 = vsel %vm2846, %v5594, 0
        %v5682 = vsel %vm2846, %v5595, 0
        %5684 = vmatprep.subr.bf16.mxu0 %v5637
        %5685 = vmatpush1.bf16.msra.mxu0 %v5636
        %5686 = vmatprep.subr.bf16.mxu0 %v5640
        %5687 = vmatpush1.bf16.msra.mxu0 %v5639
        %5688 = vmatprep.subr.bf16.mxu0 %v5643
        %5689 = vmatpush1.bf16.msra.mxu0 %v5642
        %5690 = vmatprep.subr.bf16.mxu0 %v5646
        %5691 = vmatpush1.bf16.msra.mxu0 %v5645
        %5692 = vmatprep.subr.bf16.mxu0 0
        %5693 = vmatpush1.bf16.msra.mxu0 0
        %5694 = vmatprep.subr.bf16.mxu0 0
        %5695 = vmatpush1.bf16.msra.mxu0 0
        %5696 = vmatprep.subr.bf16.mxu0 0
        %5697 = vmatpush1.bf16.msra.mxu0 0
        %5698 = vmatprep.subr.bf16.mxu0 0
        %5699 = vmatpush1.bf16.msra.mxu0 0
        %5700 = vmatprep.subr.bf16.mxu0 0
        %5701 = vmatpush1.bf16.msra.mxu0 0
        %5702 = vmatprep.subr.bf16.mxu0 0
        %5703 = vmatpush1.bf16.msra.mxu0 0
        %5704 = vmatprep.subr.bf16.mxu0 0
        %5705 = vmatpush1.bf16.msra.mxu0 0
        %5706 = vmatprep.subr.bf16.mxu0 0
        %5707 = vmatpush1.bf16.msra.mxu0 0
        %5708 = vmatprep.subr.bf16.mxu0 0
        %5709 = vmatpush1.bf16.msra.mxu0 0
        %5710 = vmatprep.subr.bf16.mxu0 0
        %5711 = vmatpush1.bf16.msra.mxu0 0
        %5712 = vmatprep.subr.bf16.mxu0 0
        %5713 = vmatpush1.bf16.msra.mxu0 0
        %5714 = vmatprep.subr.bf16.mxu0 0
        %5715 = vmatpush1.bf16.msra.mxu0 0
        %5716 = vmatprep.mubr.bf16.mxu0 0
        %5717 = vmatmul.mubr.bf16.gmra.mrb[0].mxu0 %v5661
        %v5718 = vpop.f32.mrb[0].mxu0
        %v5719 = vadd.f32 0.0, %v5718
        %v5720 = vpop.f32.mrb[0].mxu0
        %v5721 = vadd.f32 0.0, %v5720
        %v5722 = vpop.f32.mrb[0].mxu0
        %v5723 = vadd.f32 0.0, %v5722
        %v5724 = vpop.f32.mrb[0].mxu0
        %v5725 = vadd.f32 0.0, %v5724
        %5726 = vmatprep.mubr.bf16.mxu0 0
        %5727 = vmatmul.mubr.bf16.gmra.mrb[0].mxu0 %v5664
        %v5728 = vpop.f32.mrb[0].mxu0
        %v5729 = vadd.f32 0.0, %v5728
        %v5730 = vpop.f32.mrb[0].mxu0
        %v5731 = vadd.f32 0.0, %v5730
        %v5732 = vpop.f32.mrb[0].mxu0
        %v5733 = vadd.f32 0.0, %v5732
        %v5734 = vpop.f32.mrb[0].mxu0
        %v5735 = vadd.f32 0.0, %v5734
        %5736 = vmatprep.mubr.bf16.mxu0 0
        %5737 = vmatmul.mubr.bf16.gmra.mrb[0].mxu0 %v5667
        %v5738 = vpop.f32.mrb[0].mxu0
        %v5739 = vadd.f32 0.0, %v5738
        %v5740 = vpop.f32.mrb[0].mxu0
        %v5741 = vadd.f32 0.0, %v5740
        %v5742 = vpop.f32.mrb[0].mxu0
        %v5743 = vadd.f32 0.0, %v5742
        %v5744 = vpop.f32.mrb[0].mxu0
        %v5745 = vadd.f32 0.0, %v5744
        %5746 = vmatprep.mubr.bf16.mxu0 0
        %5747 = vmatmul.mubr.bf16.gmra.mrb[0].mxu0 %v5670
        %v5748 = vpop.f32.mrb[0].mxu0
        %v5749 = vadd.f32 0.0, %v5748
        %v5750 = vpop.f32.mrb[0].mxu0
        %v5751 = vadd.f32 0.0, %v5750
        %v5752 = vpop.f32.mrb[0].mxu0
        %v5753 = vadd.f32 0.0, %v5752
        %v5754 = vpop.f32.mrb[0].mxu0
        %v5755 = vadd.f32 0.0, %v5754
        %5756 = vmatprep.mubr.bf16.mxu0 0
        %5757 = vmatmul.mubr.bf16.gmra.mrb[0].mxu0 %v5673
        %v5758 = vpop.f32.mrb[0].mxu0
        %v5759 = vadd.f32 0.0, %v5758
        %v5760 = vpop.f32.mrb[0].mxu0
        %v5761 = vadd.f32 0.0, %v5760
        %v5762 = vpop.f32.mrb[0].mxu0
        %v5763 = vadd.f32 0.0, %v5762
        %v5764 = vpop.f32.mrb[0].mxu0
        %v5765 = vadd.f32 0.0, %v5764
        %5766 = vmatprep.mubr.bf16.mxu0 0
        %5767 = vmatmul.mubr.bf16.gmra.mrb[0].mxu0 %v5676
        %v5768 = vpop.f32.mrb[0].mxu0
        %v5769 = vadd.f32 0.0, %v5768
        %v5770 = vpop.f32.mrb[0].mxu0
        %v5771 = vadd.f32 0.0, %v5770
        %v5772 = vpop.f32.mrb[0].mxu0
        %v5773 = vadd.f32 0.0, %v5772
        %v5774 = vpop.f32.mrb[0].mxu0
        %v5775 = vadd.f32 0.0, %v5774
        %5776 = vmatprep.mubr.bf16.mxu0 0
        %5777 = vmatmul.mubr.bf16.gmra.mrb[0].mxu0 %v5679
        %v5778 = vpop.f32.mrb[0].mxu0
        %v5779 = vadd.f32 0.0, %v5778
        %v5780 = vpop.f32.mrb[0].mxu0
        %v5781 = vadd.f32 0.0, %v5780
        %v5782 = vpop.f32.mrb[0].mxu0
        %v5783 = vadd.f32 0.0, %v5782
        %v5784 = vpop.f32.mrb[0].mxu0
        %v5785 = vadd.f32 0.0, %v5784
        %5786 = vmatprep.mubr.bf16.mxu0 0
        %5787 = vmatmul.mubr.bf16.gmra.mrb[0].mxu0 %v5682
        %v5788 = vpop.f32.mrb[0].mxu0
        %v5789 = vadd.f32 0.0, %v5788
        %v5790 = vpop.f32.mrb[0].mxu0
        %v5791 = vadd.f32 0.0, %v5790
        %v5792 = vpop.f32.mrb[0].mxu0
        %v5793 = vadd.f32 0.0, %v5792
        %v5794 = vpop.f32.mrb[0].mxu0
        %v5795 = vadd.f32 0.0, %v5794
        %5796 = vdwg.mxu0
        %5797 = vmatprep.subr.bf16.mxu0 0
        %5798 = vmatpush1.bf16.msra.mxu0 %v5638
        %5799 = vmatprep.subr.bf16.mxu0 0
        %5800 = vmatpush1.bf16.msra.mxu0 %v5641
        %5801 = vmatprep.subr.bf16.mxu0 0
        %5802 = vmatpush1.bf16.msra.mxu0 %v5644
        %5803 = vmatprep.subr.bf16.mxu0 0
        %5804 = vmatpush1.bf16.msra.mxu0 %v5647
        %5805 = vmatprep.subr.bf16.mxu0 0
        %5806 = vmatpush1.bf16.msra.mxu0 0
        %5807 = vmatprep.subr.bf16.mxu0 0
        %5808 = vmatpush1.bf16.msra.mxu0 0
        %5809 = vmatprep.subr.bf16.mxu0 0
        %5810 = vmatpush1.bf16.msra.mxu0 0
        %5811 = vmatprep.subr.bf16.mxu0 0
        %5812 = vmatpush1.bf16.msra.mxu0 0
        %5813 = vmatprep.subr.bf16.mxu0 0
        %5814 = vmatpush1.bf16.msra.mxu0 0
        %5815 = vmatprep.subr.bf16.mxu0 0
        %5816 = vmatpush1.bf16.msra.mxu0 0
        %5817 = vmatprep.subr.bf16.mxu0 0
        %5818 = vmatpush1.bf16.msra.mxu0 0
        %5819 = vmatprep.subr.bf16.mxu0 0
        %5820 = vmatpush1.bf16.msra.mxu0 0
        %5821 = vmatprep.subr.bf16.mxu0 0
        %5822 = vmatpush1.bf16.msra.mxu0 0
        %5823 = vmatprep.subr.bf16.mxu0 0
        %5824 = vmatpush1.bf16.msra.mxu0 0
        %5825 = vmatprep.subr.bf16.mxu0 0
        %5826 = vmatpush1.bf16.msra.mxu0 0
        %5827 = vmatprep.subr.bf16.mxu0 0
        %5828 = vmatpush1.bf16.msra.mxu0 0
        %5829 = vmatprep.mubr.bf16.mxu0 0
        %5830 = vmatmul.mubr.bf16.gmra.mrb[0].mxu0 %v5661
        %v5831 = vpop.f32.mrb[0].mxu0
        %v5832 = vadd.f32 0.0, %v5831
        %v5833 = vpop.f32.mrb[0].mxu0
        %v5834 = vpop.f32.mrb[0].mxu0
        %v5835 = vadd.f32 0.0, %v5834
        %v5836 = vpop.f32.mrb[0].mxu0
        %5837 = vmatprep.mubr.bf16.mxu0 0
        %5838 = vmatmul.mubr.bf16.gmra.mrb[0].mxu0 %v5664
        %v5839 = vpop.f32.mrb[0].mxu0
        %v5840 = vadd.f32 0.0, %v5839
        %v5841 = vpop.f32.mrb[0].mxu0
        %v5842 = vpop.f32.mrb[0].mxu0
        %v5843 = vadd.f32 0.0, %v5842
        %v5844 = vpop.f32.mrb[0].mxu0
        %5845 = vmatprep.mubr.bf16.mxu0 0
        %5846 = vmatmul.mubr.bf16.gmra.mrb[0].mxu0 %v5667
        %v5847 = vpop.f32.mrb[0].mxu0
        %v5848 = vadd.f32 0.0, %v5847
        %v5849 = vpop.f32.mrb[0].mxu0
        %v5850 = vpop.f32.mrb[0].mxu0
        %v5851 = vadd.f32 0.0, %v5850
        %v5852 = vpop.f32.mrb[0].mxu0
        %5853 = vmatprep.mubr.bf16.mxu0 0
        %5854 = vmatmul.mubr.bf16.gmra.mrb[0].mxu0 %v5670
        %v5855 = vpop.f32.mrb[0].mxu0
        %v5856 = vadd.f32 0.0, %v5855
        %v5857 = vpop.f32.mrb[0].mxu0
        %v5858 = vpop.f32.mrb[0].mxu0
        %v5859 = vadd.f32 0.0, %v5858
        %v5860 = vpop.f32.mrb[0].mxu0
        %5861 = vmatprep.mubr.bf16.mxu0 0
        %5862 = vmatmul.mubr.bf16.gmra.mrb[0].mxu0 %v5673
        %v5863 = vpop.f32.mrb[0].mxu0
        %v5864 = vadd.f32 0.0, %v5863
        %v5865 = vpop.f32.mrb[0].mxu0
        %v5866 = vpop.f32.mrb[0].mxu0
        %v5867 = vadd.f32 0.0, %v5866
        %v5868 = vpop.f32.mrb[0].mxu0
        %5869 = vmatprep.mubr.bf16.mxu0 0
        %5870 = vmatmul.mubr.bf16.gmra.mrb[0].mxu0 %v5676
        %v5871 = vpop.f32.mrb[0].mxu0
        %v5872 = vadd.f32 0.0, %v5871
        %v5873 = vpop.f32.mrb[0].mxu0
        %v5874 = vpop.f32.mrb[0].mxu0
        %v5875 = vadd.f32 0.0, %v5874
        %v5876 = vpop.f32.mrb[0].mxu0
        %5877 = vmatprep.mubr.bf16.mxu0 0
        %5878 = vmatmul.mubr.bf16.gmra.mrb[0].mxu0 %v5679
        %v5879 = vpop.f32.mrb[0].mxu0
        %v5880 = vadd.f32 0.0, %v5879
        %v5881 = vpop.f32.mrb[0].mxu0
        %v5882 = vpop.f32.mrb[0].mxu0
        %v5883 = vadd.f32 0.0, %v5882
        %v5884 = vpop.f32.mrb[0].mxu0
        %5885 = vmatprep.mubr.bf16.mxu0 0
        %5886 = vmatmul.mubr.bf16.gmra.mrb[0].mxu0 %v5682
        %v5887 = vpop.f32.mrb[0].mxu0
        %v5888 = vadd.f32 0.0, %v5887
        %v5889 = vpop.f32.mrb[0].mxu0
        %v5890 = vpop.f32.mrb[0].mxu0
        %v5891 = vadd.f32 0.0, %v5890
        %v5892 = vpop.f32.mrb[0].mxu0
        %5893 = vdwg.mxu0
        %v5894 = vadd.f32 %v4733, %v5719
        %v5895 = vadd.f32 %v4735, %v5721
        %v5896 = vadd.f32 %v4846, %v5832
        %v5897 = vadd.f32 %v4737, %v5723
        %v5898 = vadd.f32 %v4739, %v5725
        %v5899 = vadd.f32 %v4849, %v5835
        %v5900 = vadd.f32 %v4743, %v5729
        %v5901 = vadd.f32 %v4745, %v5731
        %v5902 = vadd.f32 %v4854, %v5840
        %v5903 = vadd.f32 %v4747, %v5733
        %v5904 = vadd.f32 %v4749, %v5735
        %v5905 = vadd.f32 %v4857, %v5843
        %v5906 = vadd.f32 %v4753, %v5739
        %v5907 = vadd.f32 %v4755, %v5741
        %v5908 = vadd.f32 %v4862, %v5848
        %v5909 = vadd.f32 %v4757, %v5743
        %v5910 = vadd.f32 %v4759, %v5745
        %v5911 = vadd.f32 %v4865, %v5851
        %v5912 = vadd.f32 %v4763, %v5749
        %v5913 = vadd.f32 %v4765, %v5751
        %v5914 = vadd.f32 %v4870, %v5856
        %v5915 = vadd.f32 %v4767, %v5753
        %v5916 = vadd.f32 %v4769, %v5755
        %v5917 = vadd.f32 %v4873, %v5859
        %v5918 = vadd.f32 %v4773, %v5759
        %v5919 = vadd.f32 %v4775, %v5761
        %v5920 = vadd.f32 %v4878, %v5864
        %v5921 = vadd.f32 %v4777, %v5763
        %v5922 = vadd.f32 %v4779, %v5765
        %v5923 = vadd.f32 %v4881, %v5867
        %v5924 = vadd.f32 %v4783, %v5769
        %v5925 = vadd.f32 %v4785, %v5771
        %v5926 = vadd.f32 %v4886, %v5872
        %v5927 = vadd.f32 %v4787, %v5773
        %v5928 = vadd.f32 %v4789, %v5775
        %v5929 = vadd.f32 %v4889, %v5875
        %v5930 = vadd.f32 %v4793, %v5779
        %v5931 = vadd.f32 %v4795, %v5781
        %v5932 = vadd.f32 %v4894, %v5880
        %v5933 = vadd.f32 %v4797, %v5783
        %v5934 = vadd.f32 %v4799, %v5785
        %v5935 = vadd.f32 %v4897, %v5883
        %v5936 = vadd.f32 %v4803, %v5789
        %v5937 = vadd.f32 %v4805, %v5791
        %v5938 = vadd.f32 %v4902, %v5888
        %v5939 = vadd.f32 %v4807, %v5793
        %v5940 = vadd.f32 %v4809, %v5795
        %v5941 = vadd.f32 %v4905, %v5891
        %5944 = vrot.lane.b32.xlu0 %v2764, 64
        %v5945 = vpop.permute.xlu0 %5944
        %5946 = vrot.lane.b32.xlu0 %v2767, 64
        %v5947 = vpop.permute.xlu0 %5946
        %5950 = vrot.lane.b32.xlu0 %v2788, 64
        %v5951 = vpop.permute.xlu0 %5950
        %5952 = vrot.lane.b32.xlu0 %v2791, 64
        %v5953 = vpop.permute.xlu0 %5952
        %v5955 = vsel %vm2846, %v5945, 0
        %v5958 = vsel %vm2846, %v5947, 0
        %v5961 = vsel %vm2846, %v5951, 0
        %v5964 = vsel %vm2846, %v5953, 0
        %5966 = vmatprep.subr.bf16.mxu0 0
        %5967 = vmatpush1.bf16.xpose.msra.mxu0 %v5961
        %5968 = vmatprep.subr.bf16.mxu0 0
        %5969 = vmatpush1.bf16.xpose.msra.mxu0 %v5964
        %5970 = vmatprep.subr.bf16.mxu0 0
        %5971 = vmatpush1.bf16.xpose.msra.mxu0 0
        %5972 = vmatprep.subr.bf16.mxu0 0
        %5973 = vmatpush1.bf16.xpose.msra.mxu0 0
        %5974 = vmatprep.subr.bf16.mxu0 0
        %5975 = vmatpush1.bf16.xpose.msra.mxu0 0
        %5976 = vmatprep.subr.bf16.mxu0 0
        %5977 = vmatpush1.bf16.xpose.msra.mxu0 0
        %5978 = vmatprep.subr.bf16.mxu0 0
        %5979 = vmatpush1.bf16.xpose.msra.mxu0 0
        %5980 = vmatprep.subr.bf16.mxu0 0
        %5981 = vmatpush1.bf16.xpose.msra.mxu0 0
        %5982 = vmatprep.subr.bf16.mxu0 0
        %5983 = vmatpush1.bf16.xpose.msra.mxu0 0
        %5984 = vmatprep.subr.bf16.mxu0 0
        %5985 = vmatpush1.bf16.xpose.msra.mxu0 0
        %5986 = vmatprep.subr.bf16.mxu0 0
        %5987 = vmatpush1.bf16.xpose.msra.mxu0 0
        %5988 = vmatprep.subr.bf16.mxu0 0
        %5989 = vmatpush1.bf16.xpose.msra.mxu0 0
        %5990 = vmatprep.subr.bf16.mxu0 0
        %5991 = vmatpush1.bf16.xpose.msra.mxu0 0
        %5992 = vmatprep.subr.bf16.mxu0 0
        %5993 = vmatpush1.bf16.xpose.msra.mxu0 0
        %5994 = vmatprep.subr.bf16.mxu0 0
        %5995 = vmatpush1.bf16.xpose.msra.mxu0 0
        %5996 = vmatprep.subr.bf16.mxu0 0
        %5997 = vmatpush1.bf16.xpose.msra.mxu0 0
        %5998 = vmatprep.mubr.bf16.mxu0 0
        %5999 = vmatmul.mubr.bf16.gmra.mrb[0].mxu0 %v5955
        %v6000 = vpop.f32.mrb[0].mxu0
        %v6001 = vadd.f32 0.0, %v6000
        %v6002 = vpop.f32.mrb[0].mxu0
        %v6003 = vpop.f32.mrb[0].mxu0
        %v6004 = vadd.f32 0.0, %v6003
        %v6005 = vpop.f32.mrb[0].mxu0
        %6006 = vmatprep.mubr.bf16.mxu0 0
        %6007 = vmatmul.mubr.bf16.gmra.mrb[0].mxu0 %v5958
        %v6008 = vpop.f32.mrb[0].mxu0
        %v6009 = vadd.f32 0.0, %v6008
        %v6010 = vpop.f32.mrb[0].mxu0
        %v6011 = vpop.f32.mrb[0].mxu0
        %v6012 = vadd.f32 0.0, %v6011
        %v6013 = vpop.f32.mrb[0].mxu0
        %6014 = vdwg.mxu0
        %6017 = vrot.lane.b32.xlu0 %v2770, 64
        %v6018 = vpop.permute.xlu0 %6017
        %6019 = vrot.lane.b32.xlu0 %v2773, 64
        %v6020 = vpop.permute.xlu0 %6019
        %6023 = vrot.lane.b32.xlu0 %v2794, 64
        %v6024 = vpop.permute.xlu0 %6023
        %6025 = vrot.lane.b32.xlu0 %v2797, 64
        %v6026 = vpop.permute.xlu0 %6025
        %v6028 = vsel %vm2846, %v6018, 0
        %v6031 = vsel %vm2846, %v6020, 0
        %v6034 = vsel %vm2846, %v6024, 0
        %v6037 = vsel %vm2846, %v6026, 0
        %6039 = vmatprep.subr.bf16.mxu0 0
        %6040 = vmatpush1.bf16.xpose.msra.mxu0 %v6034
        %6041 = vmatprep.subr.bf16.mxu0 0
        %6042 = vmatpush1.bf16.xpose.msra.mxu0 %v6037
        %6043 = vmatprep.subr.bf16.mxu0 0
        %6044 = vmatpush1.bf16.xpose.msra.mxu0 0
        %6045 = vmatprep.subr.bf16.mxu0 0
        %6046 = vmatpush1.bf16.xpose.msra.mxu0 0
        %6047 = vmatprep.subr.bf16.mxu0 0
        %6048 = vmatpush1.bf16.xpose.msra.mxu0 0
        %6049 = vmatprep.subr.bf16.mxu0 0
        %6050 = vmatpush1.bf16.xpose.msra.mxu0 0
        %6051 = vmatprep.subr.bf16.mxu0 0
        %6052 = vmatpush1.bf16.xpose.msra.mxu0 0
        %6053 = vmatprep.subr.bf16.mxu0 0
        %6054 = vmatpush1.bf16.xpose.msra.mxu0 0
        %6055 = vmatprep.subr.bf16.mxu0 0
        %6056 = vmatpush1.bf16.xpose.msra.mxu0 0
        %6057 = vmatprep.subr.bf16.mxu0 0
        %6058 = vmatpush1.bf16.xpose.msra.mxu0 0
        %6059 = vmatprep.subr.bf16.mxu0 0
        %6060 = vmatpush1.bf16.xpose.msra.mxu0 0
        %6061 = vmatprep.subr.bf16.mxu0 0
        %6062 = vmatpush1.bf16.xpose.msra.mxu0 0
        %6063 = vmatprep.subr.bf16.mxu0 0
        %6064 = vmatpush1.bf16.xpose.msra.mxu0 0
        %6065 = vmatprep.subr.bf16.mxu0 0
        %6066 = vmatpush1.bf16.xpose.msra.mxu0 0
        %6067 = vmatprep.subr.bf16.mxu0 0
        %6068 = vmatpush1.bf16.xpose.msra.mxu0 0
        %6069 = vmatprep.subr.bf16.mxu0 0
        %6070 = vmatpush1.bf16.xpose.msra.mxu0 0
        %6071 = vmatprep.mubr.bf16.mxu0 0
        %6072 = vmatmul.mubr.bf16.gmra.mrb[0].mxu0 %v6028
        %v6073 = vpop.f32.mrb[0].mxu0
        %v6074 = vadd.f32 0.0, %v6073
        %v6075 = vpop.f32.mrb[0].mxu0
        %v6076 = vpop.f32.mrb[0].mxu0
        %v6077 = vadd.f32 0.0, %v6076
        %v6078 = vpop.f32.mrb[0].mxu0
        %6079 = vmatprep.mubr.bf16.mxu0 0
        %6080 = vmatmul.mubr.bf16.gmra.mrb[0].mxu0 %v6031
        %v6081 = vpop.f32.mrb[0].mxu0
        %v6082 = vadd.f32 0.0, %v6081
        %v6083 = vpop.f32.mrb[0].mxu0
        %v6084 = vpop.f32.mrb[0].mxu0
        %v6085 = vadd.f32 0.0, %v6084
        %v6086 = vpop.f32.mrb[0].mxu0
        %6087 = vdwg.mxu0
        %6090 = vrot.lane.b32.xlu0 %v2776, 64
        %v6091 = vpop.permute.xlu0 %6090
        %6092 = vrot.lane.b32.xlu0 %v2779, 64
        %v6093 = vpop.permute.xlu0 %6092
        %6096 = vrot.lane.b32.xlu0 %v2800, 64
        %v6097 = vpop.permute.xlu0 %6096
        %6098 = vrot.lane.b32.xlu0 %v2803, 64
        %v6099 = vpop.permute.xlu0 %6098
        %v6101 = vsel %vm2846, %v6091, 0
        %v6104 = vsel %vm2846, %v6093, 0
        %v6107 = vsel %vm2846, %v6097, 0
        %v6110 = vsel %vm2846, %v6099, 0
        %6112 = vmatprep.subr.bf16.mxu0 0
        %6113 = vmatpush1.bf16.xpose.msra.mxu0 %v6107
        %6114 = vmatprep.subr.bf16.mxu0 0
        %6115 = vmatpush1.bf16.xpose.msra.mxu0 %v6110
        %6116 = vmatprep.subr.bf16.mxu0 0
        %6117 = vmatpush1.bf16.xpose.msra.mxu0 0
        %6118 = vmatprep.subr.bf16.mxu0 0
        %6119 = vmatpush1.bf16.xpose.msra.mxu0 0
        %6120 = vmatprep.subr.bf16.mxu0 0
        %6121 = vmatpush1.bf16.xpose.msra.mxu0 0
        %6122 = vmatprep.subr.bf16.mxu0 0
        %6123 = vmatpush1.bf16.xpose.msra.mxu0 0
        %6124 = vmatprep.subr.bf16.mxu0 0
        %6125 = vmatpush1.bf16.xpose.msra.mxu0 0
        %6126 = vmatprep.subr.bf16.mxu0 0
        %6127 = vmatpush1.bf16.xpose.msra.mxu0 0
        %6128 = vmatprep.subr.bf16.mxu0 0
        %6129 = vmatpush1.bf16.xpose.msra.mxu0 0
        %6130 = vmatprep.subr.bf16.mxu0 0
        %6131 = vmatpush1.bf16.xpose.msra.mxu0 0
        %6132 = vmatprep.subr.bf16.mxu0 0
        %6133 = vmatpush1.bf16.xpose.msra.mxu0 0
        %6134 = vmatprep.subr.bf16.mxu0 0
        %6135 = vmatpush1.bf16.xpose.msra.mxu0 0
        %6136 = vmatprep.subr.bf16.mxu0 0
        %6137 = vmatpush1.bf16.xpose.msra.mxu0 0
        %6138 = vmatprep.subr.bf16.mxu0 0
        %6139 = vmatpush1.bf16.xpose.msra.mxu0 0
        %6140 = vmatprep.subr.bf16.mxu0 0
        %6141 = vmatpush1.bf16.xpose.msra.mxu0 0
        %6142 = vmatprep.subr.bf16.mxu0 0
        %6143 = vmatpush1.bf16.xpose.msra.mxu0 0
        %6144 = vmatprep.mubr.bf16.mxu0 0
        %6145 = vmatmul.mubr.bf16.gmra.mrb[0].mxu0 %v6101
        %v6146 = vpop.f32.mrb[0].mxu0
        %v6147 = vadd.f32 0.0, %v6146
        %v6148 = vpop.f32.mrb[0].mxu0
        %v6149 = vpop.f32.mrb[0].mxu0
        %v6150 = vadd.f32 0.0, %v6149
        %v6151 = vpop.f32.mrb[0].mxu0
        %6152 = vmatprep.mubr.bf16.mxu0 0
        %6153 = vmatmul.mubr.bf16.gmra.mrb[0].mxu0 %v6104
        %v6154 = vpop.f32.mrb[0].mxu0
        %v6155 = vadd.f32 0.0, %v6154
        %v6156 = vpop.f32.mrb[0].mxu0
        %v6157 = vpop.f32.mrb[0].mxu0
        %v6158 = vadd.f32 0.0, %v6157
        %v6159 = vpop.f32.mrb[0].mxu0
        %6160 = vdwg.mxu0
        %6163 = vrot.lane.b32.xlu0 %v2782, 64
        %v6164 = vpop.permute.xlu0 %6163
        %6165 = vrot.lane.b32.xlu0 %v2785, 64
        %v6166 = vpop.permute.xlu0 %6165
        %6169 = vrot.lane.b32.xlu0 %v2806, 64
        %v6170 = vpop.permute.xlu0 %6169
        %6171 = vrot.lane.b32.xlu0 %v2809, 64
        %v6172 = vpop.permute.xlu0 %6171
        %v6174 = vsel %vm2846, %v6164, 0
        %v6177 = vsel %vm2846, %v6166, 0
        %v6180 = vsel %vm2846, %v6170, 0
        %v6183 = vsel %vm2846, %v6172, 0
        %6185 = vmatprep.subr.bf16.mxu0 0
        %6186 = vmatpush1.bf16.xpose.msra.mxu0 %v6180
        %6187 = vmatprep.subr.bf16.mxu0 0
        %6188 = vmatpush1.bf16.xpose.msra.mxu0 %v6183
        %6189 = vmatprep.subr.bf16.mxu0 0
        %6190 = vmatpush1.bf16.xpose.msra.mxu0 0
        %6191 = vmatprep.subr.bf16.mxu0 0
        %6192 = vmatpush1.bf16.xpose.msra.mxu0 0
        %6193 = vmatprep.subr.bf16.mxu0 0
        %6194 = vmatpush1.bf16.xpose.msra.mxu0 0
        %6195 = vmatprep.subr.bf16.mxu0 0
        %6196 = vmatpush1.bf16.xpose.msra.mxu0 0
        %6197 = vmatprep.subr.bf16.mxu0 0
        %6198 = vmatpush1.bf16.xpose.msra.mxu0 0
        %6199 = vmatprep.subr.bf16.mxu0 0
        %6200 = vmatpush1.bf16.xpose.msra.mxu0 0
        %6201 = vmatprep.subr.bf16.mxu0 0
        %6202 = vmatpush1.bf16.xpose.msra.mxu0 0
        %6203 = vmatprep.subr.bf16.mxu0 0
        %6204 = vmatpush1.bf16.xpose.msra.mxu0 0
        %6205 = vmatprep.subr.bf16.mxu0 0
        %6206 = vmatpush1.bf16.xpose.msra.mxu0 0
        %6207 = vmatprep.subr.bf16.mxu0 0
        %6208 = vmatpush1.bf16.xpose.msra.mxu0 0
        %6209 = vmatprep.subr.bf16.mxu0 0
        %6210 = vmatpush1.bf16.xpose.msra.mxu0 0
        %6211 = vmatprep.subr.bf16.mxu0 0
        %6212 = vmatpush1.bf16.xpose.msra.mxu0 0
        %6213 = vmatprep.subr.bf16.mxu0 0
        %6214 = vmatpush1.bf16.xpose.msra.mxu0 0
        %6215 = vmatprep.subr.bf16.mxu0 0
        %6216 = vmatpush1.bf16.xpose.msra.mxu0 0
        %6217 = vmatprep.mubr.bf16.mxu0 0
        %6218 = vmatmul.mubr.bf16.gmra.mrb[0].mxu0 %v6174
        %v6219 = vpop.f32.mrb[0].mxu0
        %v6220 = vadd.f32 0.0, %v6219
        %v6221 = vpop.f32.mrb[0].mxu0
        %v6222 = vpop.f32.mrb[0].mxu0
        %v6223 = vadd.f32 0.0, %v6222
        %v6224 = vpop.f32.mrb[0].mxu0
        %6225 = vmatprep.mubr.bf16.mxu0 0
        %6226 = vmatmul.mubr.bf16.gmra.mrb[0].mxu0 %v6177
        %v6227 = vpop.f32.mrb[0].mxu0
        %v6228 = vadd.f32 0.0, %v6227
        %v6229 = vpop.f32.mrb[0].mxu0
        %v6230 = vpop.f32.mrb[0].mxu0
        %v6231 = vadd.f32 0.0, %v6230
        %v6232 = vpop.f32.mrb[0].mxu0
        %6233 = vdwg.mxu0
        %v6234 = vsel %vm3095, %v6001, -inf
        %v6235 = vsel %vm3096, %v6004, -inf
        %v6236 = vsel %vm3097, %v6009, -inf
        %v6237 = vsel %vm3098, %v6012, -inf
        %v6238 = vsel %vm3095, %v6074, -inf
        %v6239 = vsel %vm3096, %v6077, -inf
        %v6240 = vsel %vm3097, %v6082, -inf
        %v6241 = vsel %vm3098, %v6085, -inf
        %v6242 = vsel %vm3095, %v6147, -inf
        %v6243 = vsel %vm3096, %v6150, -inf
        %v6244 = vsel %vm3097, %v6155, -inf
        %v6245 = vsel %vm3098, %v6158, -inf
        %v6246 = vsel %vm3095, %v6220, -inf
        %v6247 = vsel %vm3096, %v6223, -inf
        %v6248 = vsel %vm3097, %v6228, -inf
        %v6249 = vsel %vm3098, %v6231, -inf
        %v6250 = vsel %vm3115, %v6234, -inf
        %6251 = vmax.xlane.f32.xlu0 %v6250
        %v6252 = vpop.xlane.xlu0 %6251
        %v6253 = vsel %vm3115, %v6235, -inf
        %6254 = vmax.xlane.f32.xlu0 %v6253
        %v6255 = vpop.xlane.xlu0 %6254
        %v6256 = vsel %vm3115, %v6236, -inf
        %6257 = vmax.xlane.f32.xlu0 %v6256
        %v6258 = vpop.xlane.xlu0 %6257
        %v6259 = vsel %vm3115, %v6237, -inf
        %6260 = vmax.xlane.f32.xlu0 %v6259
        %v6261 = vpop.xlane.xlu0 %6260
        %v6262 = vsel %vm3115, %v6238, -inf
        %6263 = vmax.xlane.f32.xlu0 %v6262
        %v6264 = vpop.xlane.xlu0 %6263
        %v6265 = vsel %vm3115, %v6239, -inf
        %6266 = vmax.xlane.f32.xlu0 %v6265
        %v6267 = vpop.xlane.xlu0 %6266
        %v6268 = vsel %vm3115, %v6240, -inf
        %6269 = vmax.xlane.f32.xlu0 %v6268
        %v6270 = vpop.xlane.xlu0 %6269
        %v6271 = vsel %vm3115, %v6241, -inf
        %6272 = vmax.xlane.f32.xlu0 %v6271
        %v6273 = vpop.xlane.xlu0 %6272
        %v6274 = vsel %vm3115, %v6242, -inf
        %6275 = vmax.xlane.f32.xlu0 %v6274
        %v6276 = vpop.xlane.xlu0 %6275
        %v6277 = vsel %vm3115, %v6243, -inf
        %6278 = vmax.xlane.f32.xlu0 %v6277
        %v6279 = vpop.xlane.xlu0 %6278
        %v6280 = vsel %vm3115, %v6244, -inf
        %6281 = vmax.xlane.f32.xlu0 %v6280
        %v6282 = vpop.xlane.xlu0 %6281
        %v6283 = vsel %vm3115, %v6245, -inf
        %6284 = vmax.xlane.f32.xlu0 %v6283
        %v6285 = vpop.xlane.xlu0 %6284
        %v6286 = vsel %vm3115, %v6246, -inf
        %6287 = vmax.xlane.f32.xlu0 %v6286
        %v6288 = vpop.xlane.xlu0 %6287
        %v6289 = vsel %vm3115, %v6247, -inf
        %6290 = vmax.xlane.f32.xlu0 %v6289
        %v6291 = vpop.xlane.xlu0 %6290
        %v6292 = vsel %vm3115, %v6248, -inf
        %6293 = vmax.xlane.f32.xlu0 %v6292
        %v6294 = vpop.xlane.xlu0 %6293
        %v6295 = vsel %vm3115, %v6249, -inf
        %6296 = vmax.xlane.f32.xlu0 %v6295
        %v6297 = vpop.xlane.xlu0 %6296
        %v6298 = vsub.f32 %v6234, %v6252
        %v6299 = vsub.f32 %v6235, %v6255
        %v6300 = vsub.f32 %v6236, %v6258
        %v6301 = vsub.f32 %v6237, %v6261
        %v6302 = vsub.f32 %v6238, %v6264
        %v6303 = vsub.f32 %v6239, %v6267
        %v6304 = vsub.f32 %v6240, %v6270
        %v6305 = vsub.f32 %v6241, %v6273
        %v6306 = vsub.f32 %v6242, %v6276
        %v6307 = vsub.f32 %v6243, %v6279
        %v6308 = vsub.f32 %v6244, %v6282
        %v6309 = vsub.f32 %v6245, %v6285
        %v6310 = vsub.f32 %v6246, %v6288
        %v6311 = vsub.f32 %v6247, %v6291
        %v6312 = vsub.f32 %v6248, %v6294
        %v6313 = vsub.f32 %v6249, %v6297
        %v6314 = vmul.f32 %v6298, 1.442695
        %v6315 = vpow.pop %v6314
        %v6316 = vmul.f32 %v6299, 1.442695
        %v6317 = vpow.pop %v6316
        %v6318 = vmul.f32 %v6300, 1.442695
        %v6319 = vpow.pop %v6318
        %v6320 = vmul.f32 %v6301, 1.442695
        %v6321 = vpow.pop %v6320
        %v6322 = vmul.f32 %v6302, 1.442695
        %v6323 = vpow.pop %v6322
        %v6324 = vmul.f32 %v6303, 1.442695
        %v6325 = vpow.pop %v6324
        %v6326 = vmul.f32 %v6304, 1.442695
        %v6327 = vpow.pop %v6326
        %v6328 = vmul.f32 %v6305, 1.442695
        %v6329 = vpow.pop %v6328
        %v6330 = vmul.f32 %v6306, 1.442695
        %v6331 = vpow.pop %v6330
        %v6332 = vmul.f32 %v6307, 1.442695
        %v6333 = vpow.pop %v6332
        %v6334 = vmul.f32 %v6308, 1.442695
        %v6335 = vpow.pop %v6334
        %v6336 = vmul.f32 %v6309, 1.442695
        %v6337 = vpow.pop %v6336
        %v6338 = vmul.f32 %v6310, 1.442695
        %v6339 = vpow.pop %v6338
        %v6340 = vmul.f32 %v6311, 1.442695
        %v6341 = vpow.pop %v6340
        %v6342 = vmul.f32 %v6312, 1.442695
        %v6343 = vpow.pop %v6342
        %v6344 = vmul.f32 %v6313, 1.442695
        %v6345 = vpow.pop %v6344
        %v6346 = vsel %vm3115, %v6315, 0.0
        %6347 = vadd.xlane.f32.xlu0 %v6346
        %v6348 = vpop.xlane.xlu0 %6347
        %v6349 = vsel %vm3115, %v6317, 0.0
        %6350 = vadd.xlane.f32.xlu0 %v6349
        %v6351 = vpop.xlane.xlu0 %6350
        %v6352 = vsel %vm3115, %v6319, 0.0
        %6353 = vadd.xlane.f32.xlu0 %v6352
        %v6354 = vpop.xlane.xlu0 %6353
        %v6355 = vsel %vm3115, %v6321, 0.0
        %6356 = vadd.xlane.f32.xlu0 %v6355
        %v6357 = vpop.xlane.xlu0 %6356
        %v6358 = vsel %vm3115, %v6323, 0.0
        %6359 = vadd.xlane.f32.xlu0 %v6358
        %v6360 = vpop.xlane.xlu0 %6359
        %v6361 = vsel %vm3115, %v6325, 0.0
        %6362 = vadd.xlane.f32.xlu0 %v6361
        %v6363 = vpop.xlane.xlu0 %6362
        %v6364 = vsel %vm3115, %v6327, 0.0
        %6365 = vadd.xlane.f32.xlu0 %v6364
        %v6366 = vpop.xlane.xlu0 %6365
        %v6367 = vsel %vm3115, %v6329, 0.0
        %6368 = vadd.xlane.f32.xlu0 %v6367
        %v6369 = vpop.xlane.xlu0 %6368
        %v6370 = vsel %vm3115, %v6331, 0.0
        %6371 = vadd.xlane.f32.xlu0 %v6370
        %v6372 = vpop.xlane.xlu0 %6371
        %v6373 = vsel %vm3115, %v6333, 0.0
        %6374 = vadd.xlane.f32.xlu0 %v6373
        %v6375 = vpop.xlane.xlu0 %6374
        %v6376 = vsel %vm3115, %v6335, 0.0
        %6377 = vadd.xlane.f32.xlu0 %v6376
        %v6378 = vpop.xlane.xlu0 %6377
        %v6379 = vsel %vm3115, %v6337, 0.0
        %6380 = vadd.xlane.f32.xlu0 %v6379
        %v6381 = vpop.xlane.xlu0 %6380
        %v6382 = vsel %vm3115, %v6339, 0.0
        %6383 = vadd.xlane.f32.xlu0 %v6382
        %v6384 = vpop.xlane.xlu0 %6383
        %v6385 = vsel %vm3115, %v6341, 0.0
        %6386 = vadd.xlane.f32.xlu0 %v6385
        %v6387 = vpop.xlane.xlu0 %6386
        %v6388 = vsel %vm3115, %v6343, 0.0
        %6389 = vadd.xlane.f32.xlu0 %v6388
        %v6390 = vpop.xlane.xlu0 %6389
        %v6391 = vsel %vm3115, %v6345, 0.0
        %6392 = vadd.xlane.f32.xlu0 %v6391
        %v6393 = vpop.xlane.xlu0 %6392
        %v6394 = vrcp.pop %v6348
        %v6395 = vrcp.pop %v6351
        %v6396 = vrcp.pop %v6354
        %v6397 = vrcp.pop %v6357
        %v6398 = vrcp.pop %v6360
        %v6399 = vrcp.pop %v6363
        %v6400 = vrcp.pop %v6366
        %v6401 = vrcp.pop %v6369
        %v6402 = vrcp.pop %v6372
        %v6403 = vrcp.pop %v6375
        %v6404 = vrcp.pop %v6378
        %v6405 = vrcp.pop %v6381
        %v6406 = vrcp.pop %v6384
        %v6407 = vrcp.pop %v6387
        %v6408 = vrcp.pop %v6390
        %v6409 = vrcp.pop %v6393
        %v6410 = vmul.f32 %v6315, %v6394
        %v6411 = vmul.f32 %v6317, %v6395
        %v6412 = vmul.f32 %v6319, %v6396
        %v6413 = vmul.f32 %v6321, %v6397
        %v6414 = vmul.f32 %v6323, %v6398
        %v6415 = vmul.f32 %v6325, %v6399
        %v6416 = vmul.f32 %v6327, %v6400
        %v6417 = vmul.f32 %v6329, %v6401
        %v6418 = vmul.f32 %v6331, %v6402
        %v6419 = vmul.f32 %v6333, %v6403
        %v6420 = vmul.f32 %v6335, %v6404
        %v6421 = vmul.f32 %v6337, %v6405
        %v6422 = vmul.f32 %v6339, %v6406
        %v6423 = vmul.f32 %v6341, %v6407
        %v6424 = vmul.f32 %v6343, %v6408
        %v6425 = vmul.f32 %v6345, %v6409
        %v6426 = vpack.c.bf16 %v6411, %v6410
        %v6427 = vpack.c.bf16 %v6413, %v6412
        %v6428 = vpack.c.bf16 %v6415, %v6414
        %v6429 = vpack.c.bf16 %v6417, %v6416
        %v6430 = vpack.c.bf16 %v6419, %v6418
        %v6431 = vpack.c.bf16 %v6421, %v6420
        %v6432 = vpack.c.bf16 %v6423, %v6422
        %v6433 = vpack.c.bf16 %v6425, %v6424
        %6436 = vrot.lane.b32.xlu0 %v2812, 64
        %v6437 = vpop.permute.xlu0 %6436
        %6438 = vrot.lane.b32.xlu0 %v2815, 64
        %v6439 = vpop.permute.xlu0 %6438
        %v6443 = vsel %vm3115, %v6426, 0
        %v6446 = vsel %vm3115, %v6427, 0
        %6448 = vmatprep.subr.bf16.mxu0 0
        %6449 = vmatpush1.bf16.msra.mxu0 %v6437
        %6450 = vmatprep.subr.bf16.mxu0 0
        %6451 = vmatpush1.bf16.msra.mxu0 %v6439
        %6452 = vmatprep.subr.bf16.mxu0 0
        %6453 = vmatpush1.bf16.msra.mxu0 0
        %6454 = vmatprep.subr.bf16.mxu0 0
        %6455 = vmatpush1.bf16.msra.mxu0 0
        %6456 = vmatprep.subr.bf16.mxu0 0
        %6457 = vmatpush1.bf16.msra.mxu0 0
        %6458 = vmatprep.subr.bf16.mxu0 0
        %6459 = vmatpush1.bf16.msra.mxu0 0
        %6460 = vmatprep.subr.bf16.mxu0 0
        %6461 = vmatpush1.bf16.msra.mxu0 0
        %6462 = vmatprep.subr.bf16.mxu0 0
        %6463 = vmatpush1.bf16.msra.mxu0 0
        %6464 = vmatprep.subr.bf16.mxu0 0
        %6465 = vmatpush1.bf16.msra.mxu0 0
        %6466 = vmatprep.subr.bf16.mxu0 0
        %6467 = vmatpush1.bf16.msra.mxu0 0
        %6468 = vmatprep.subr.bf16.mxu0 0
        %6469 = vmatpush1.bf16.msra.mxu0 0
        %6470 = vmatprep.subr.bf16.mxu0 0
        %6471 = vmatpush1.bf16.msra.mxu0 0
        %6472 = vmatprep.subr.bf16.mxu0 0
        %6473 = vmatpush1.bf16.msra.mxu0 0
        %6474 = vmatprep.subr.bf16.mxu0 0
        %6475 = vmatpush1.bf16.msra.mxu0 0
        %6476 = vmatprep.subr.bf16.mxu0 0
        %6477 = vmatpush1.bf16.msra.mxu0 0
        %6478 = vmatprep.subr.bf16.mxu0 0
        %6479 = vmatpush1.bf16.msra.mxu0 0
        %6480 = vmatprep.mubr.bf16.mxu0 0
        %6481 = vmatmul.mubr.bf16.gmra.mrb[0].mxu0 %v6443
        %v6482 = vpop.f32.mrb[0].mxu0
        %v6483 = vadd.f32 0.0, %v6482
        %v6484 = vpop.f32.mrb[0].mxu0
        %v6485 = vpop.f32.mrb[0].mxu0
        %v6486 = vadd.f32 0.0, %v6485
        %v6487 = vpop.f32.mrb[0].mxu0
        %6488 = vmatprep.mubr.bf16.mxu0 0
        %6489 = vmatmul.mubr.bf16.gmra.mrb[0].mxu0 %v6446
        %v6490 = vpop.f32.mrb[0].mxu0
        %v6491 = vadd.f32 0.0, %v6490
        %v6492 = vpop.f32.mrb[0].mxu0
        %v6493 = vpop.f32.mrb[0].mxu0
        %v6494 = vadd.f32 0.0, %v6493
        %v6495 = vpop.f32.mrb[0].mxu0
        %6496 = vdwg.mxu0
        %6499 = vrot.lane.b32.xlu0 %v2818, 64
        %v6500 = vpop.permute.xlu0 %6499
        %6501 = vrot.lane.b32.xlu0 %v2821, 64
        %v6502 = vpop.permute.xlu0 %6501
        %v6506 = vsel %vm3115, %v6428, 0
        %v6509 = vsel %vm3115, %v6429, 0
        %6511 = vmatprep.subr.bf16.mxu0 0
        %6512 = vmatpush1.bf16.msra.mxu0 %v6500
        %6513 = vmatprep.subr.bf16.mxu0 0
        %6514 = vmatpush1.bf16.msra.mxu0 %v6502
        %6515 = vmatprep.subr.bf16.mxu0 0
        %6516 = vmatpush1.bf16.msra.mxu0 0
        %6517 = vmatprep.subr.bf16.mxu0 0
        %6518 = vmatpush1.bf16.msra.mxu0 0
        %6519 = vmatprep.subr.bf16.mxu0 0
        %6520 = vmatpush1.bf16.msra.mxu0 0
        %6521 = vmatprep.subr.bf16.mxu0 0
        %6522 = vmatpush1.bf16.msra.mxu0 0
        %6523 = vmatprep.subr.bf16.mxu0 0
        %6524 = vmatpush1.bf16.msra.mxu0 0
        %6525 = vmatprep.subr.bf16.mxu0 0
        %6526 = vmatpush1.bf16.msra.mxu0 0
        %6527 = vmatprep.subr.bf16.mxu0 0
        %6528 = vmatpush1.bf16.msra.mxu0 0
        %6529 = vmatprep.subr.bf16.mxu0 0
        %6530 = vmatpush1.bf16.msra.mxu0 0
        %6531 = vmatprep.subr.bf16.mxu0 0
        %6532 = vmatpush1.bf16.msra.mxu0 0
        %6533 = vmatprep.subr.bf16.mxu0 0
        %6534 = vmatpush1.bf16.msra.mxu0 0
        %6535 = vmatprep.subr.bf16.mxu0 0
        %6536 = vmatpush1.bf16.msra.mxu0 0
        %6537 = vmatprep.subr.bf16.mxu0 0
        %6538 = vmatpush1.bf16.msra.mxu0 0
        %6539 = vmatprep.subr.bf16.mxu0 0
        %6540 = vmatpush1.bf16.msra.mxu0 0
        %6541 = vmatprep.subr.bf16.mxu0 0
        %6542 = vmatpush1.bf16.msra.mxu0 0
        %6543 = vmatprep.mubr.bf16.mxu0 0
        %6544 = vmatmul.mubr.bf16.gmra.mrb[0].mxu0 %v6506
        %v6545 = vpop.f32.mrb[0].mxu0
        %v6546 = vadd.f32 0.0, %v6545
        %v6547 = vpop.f32.mrb[0].mxu0
        %v6548 = vpop.f32.mrb[0].mxu0
        %v6549 = vadd.f32 0.0, %v6548
        %v6550 = vpop.f32.mrb[0].mxu0
        %6551 = vmatprep.mubr.bf16.mxu0 0
        %6552 = vmatmul.mubr.bf16.gmra.mrb[0].mxu0 %v6509
        %v6553 = vpop.f32.mrb[0].mxu0
        %v6554 = vadd.f32 0.0, %v6553
        %v6555 = vpop.f32.mrb[0].mxu0
        %v6556 = vpop.f32.mrb[0].mxu0
        %v6557 = vadd.f32 0.0, %v6556
        %v6558 = vpop.f32.mrb[0].mxu0
        %6559 = vdwg.mxu0
        %6562 = vrot.lane.b32.xlu0 %v2824, 64
        %v6563 = vpop.permute.xlu0 %6562
        %6564 = vrot.lane.b32.xlu0 %v2827, 64
        %v6565 = vpop.permute.xlu0 %6564
        %v6569 = vsel %vm3115, %v6430, 0
        %v6572 = vsel %vm3115, %v6431, 0
        %6574 = vmatprep.subr.bf16.mxu0 0
        %6575 = vmatpush1.bf16.msra.mxu0 %v6563
        %6576 = vmatprep.subr.bf16.mxu0 0
        %6577 = vmatpush1.bf16.msra.mxu0 %v6565
        %6578 = vmatprep.subr.bf16.mxu0 0
        %6579 = vmatpush1.bf16.msra.mxu0 0
        %6580 = vmatprep.subr.bf16.mxu0 0
        %6581 = vmatpush1.bf16.msra.mxu0 0
        %6582 = vmatprep.subr.bf16.mxu0 0
        %6583 = vmatpush1.bf16.msra.mxu0 0
        %6584 = vmatprep.subr.bf16.mxu0 0
        %6585 = vmatpush1.bf16.msra.mxu0 0
        %6586 = vmatprep.subr.bf16.mxu0 0
        %6587 = vmatpush1.bf16.msra.mxu0 0
        %6588 = vmatprep.subr.bf16.mxu0 0
        %6589 = vmatpush1.bf16.msra.mxu0 0
        %6590 = vmatprep.subr.bf16.mxu0 0
        %6591 = vmatpush1.bf16.msra.mxu0 0
        %6592 = vmatprep.subr.bf16.mxu0 0
        %6593 = vmatpush1.bf16.msra.mxu0 0
        %6594 = vmatprep.subr.bf16.mxu0 0
        %6595 = vmatpush1.bf16.msra.mxu0 0
        %6596 = vmatprep.subr.bf16.mxu0 0
        %6597 = vmatpush1.bf16.msra.mxu0 0
        %6598 = vmatprep.subr.bf16.mxu0 0
        %6599 = vmatpush1.bf16.msra.mxu0 0
        %6600 = vmatprep.subr.bf16.mxu0 0
        %6601 = vmatpush1.bf16.msra.mxu0 0
        %6602 = vmatprep.subr.bf16.mxu0 0
        %6603 = vmatpush1.bf16.msra.mxu0 0
        %6604 = vmatprep.subr.bf16.mxu0 0
        %6605 = vmatpush1.bf16.msra.mxu0 0
        %6606 = vmatprep.mubr.bf16.mxu0 0
        %6607 = vmatmul.mubr.bf16.gmra.mrb[0].mxu0 %v6569
        %v6608 = vpop.f32.mrb[0].mxu0
        %v6609 = vadd.f32 0.0, %v6608
        %v6610 = vpop.f32.mrb[0].mxu0
        %v6611 = vpop.f32.mrb[0].mxu0
        %v6612 = vadd.f32 0.0, %v6611
        %v6613 = vpop.f32.mrb[0].mxu0
        %6614 = vmatprep.mubr.bf16.mxu0 0
        %6615 = vmatmul.mubr.bf16.gmra.mrb[0].mxu0 %v6572
        %v6616 = vpop.f32.mrb[0].mxu0
        %v6617 = vadd.f32 0.0, %v6616
        %v6618 = vpop.f32.mrb[0].mxu0
        %v6619 = vpop.f32.mrb[0].mxu0
        %v6620 = vadd.f32 0.0, %v6619
        %v6621 = vpop.f32.mrb[0].mxu0
        %6622 = vdwg.mxu0
        %6625 = vrot.lane.b32.xlu0 %v2830, 64
        %v6626 = vpop.permute.xlu0 %6625
        %6627 = vrot.lane.b32.xlu0 %v2833, 64
        %v6628 = vpop.permute.xlu0 %6627
        %v6632 = vsel %vm3115, %v6432, 0
        %v6635 = vsel %vm3115, %v6433, 0
        %6637 = vmatprep.subr.bf16.mxu0 0
        %6638 = vmatpush1.bf16.msra.mxu0 %v6626
        %6639 = vmatprep.subr.bf16.mxu0 0
        %6640 = vmatpush1.bf16.msra.mxu0 %v6628
        %6641 = vmatprep.subr.bf16.mxu0 0
        %6642 = vmatpush1.bf16.msra.mxu0 0
        %6643 = vmatprep.subr.bf16.mxu0 0
        %6644 = vmatpush1.bf16.msra.mxu0 0
        %6645 = vmatprep.subr.bf16.mxu0 0
        %6646 = vmatpush1.bf16.msra.mxu0 0
        %6647 = vmatprep.subr.bf16.mxu0 0
        %6648 = vmatpush1.bf16.msra.mxu0 0
        %6649 = vmatprep.subr.bf16.mxu0 0
        %6650 = vmatpush1.bf16.msra.mxu0 0
        %6651 = vmatprep.subr.bf16.mxu0 0
        %6652 = vmatpush1.bf16.msra.mxu0 0
        %6653 = vmatprep.subr.bf16.mxu0 0
        %6654 = vmatpush1.bf16.msra.mxu0 0
        %6655 = vmatprep.subr.bf16.mxu0 0
        %6656 = vmatpush1.bf16.msra.mxu0 0
        %6657 = vmatprep.subr.bf16.mxu0 0
        %6658 = vmatpush1.bf16.msra.mxu0 0
        %6659 = vmatprep.subr.bf16.mxu0 0
        %6660 = vmatpush1.bf16.msra.mxu0 0
        %6661 = vmatprep.subr.bf16.mxu0 0
        %6662 = vmatpush1.bf16.msra.mxu0 0
        %6663 = vmatprep.subr.bf16.mxu0 0
        %6664 = vmatpush1.bf16.msra.mxu0 0
        %6665 = vmatprep.subr.bf16.mxu0 0
        %6666 = vmatpush1.bf16.msra.mxu0 0
        %6667 = vmatprep.subr.bf16.mxu0 0
        %6668 = vmatpush1.bf16.msra.mxu0 0
        %6669 = vmatprep.mubr.bf16.mxu0 0
        %6670 = vmatmul.mubr.bf16.gmra.mrb[0].mxu0 %v6632
        %v6671 = vpop.f32.mrb[0].mxu0
        %v6672 = vadd.f32 0.0, %v6671
        %v6673 = vpop.f32.mrb[0].mxu0
        %v6674 = vpop.f32.mrb[0].mxu0
        %v6675 = vadd.f32 0.0, %v6674
        %v6676 = vpop.f32.mrb[0].mxu0
        %6677 = vmatprep.mubr.bf16.mxu0 0
        %6678 = vmatmul.mubr.bf16.gmra.mrb[0].mxu0 %v6635
        %v6679 = vpop.f32.mrb[0].mxu0
        %v6680 = vadd.f32 0.0, %v6679
        %v6681 = vpop.f32.mrb[0].mxu0
        %v6682 = vpop.f32.mrb[0].mxu0
        %v6683 = vadd.f32 0.0, %v6682
        %v6684 = vpop.f32.mrb[0].mxu0
        %6685 = vdwg.mxu0
        %v6686 = vld [vmem:[#allocation7 + $0x120] sm:$0xff]
        %v6687 = vld [vmem:[#allocation7 + $0x128] sm:$0xf]
        %v6688 = vld [vmem:[#allocation7 + $0x12c] sm:$0xff]
        %v6689 = vld [vmem:[#allocation7 + $0x134] sm:$0xf]
        %v6690 = vld [vmem:[#allocation7 + $0x138] sm:$0xff]
        %v6691 = vld [vmem:[#allocation7 + $0x140] sm:$0xf]
        %v6692 = vld [vmem:[#allocation7 + $0x144] sm:$0xff]
        %v6693 = vld [vmem:[#allocation7 + $0x14c] sm:$0xf]
        %v6694 = vld [vmem:[#allocation7 + $0x150] sm:$0xff]
        %v6695 = vld [vmem:[#allocation7 + $0x158] sm:$0xf]
        %v6696 = vld [vmem:[#allocation7 + $0x15c] sm:$0xff]
        %v6697 = vld [vmem:[#allocation7 + $0x164] sm:$0xf]
        %v6698 = vld [vmem:[#allocation7 + $0x168] sm:$0xff]
        %v6699 = vld [vmem:[#allocation7 + $0x170] sm:$0xf]
        %v6700 = vld [vmem:[#allocation7 + $0x174] sm:$0xff]
        %v6701 = vld [vmem:[#allocation7 + $0x17c] sm:$0xf]
        %v6702 = vpack.c.bf16 %v6486, %v6483
        %v6703 = vpack.c.bf16 %v6494, %v6491
        %v6704 = vpack.c.bf16 %v6549, %v6546
        %v6705 = vpack.c.bf16 %v6557, %v6554
        %v6706 = vpack.c.bf16 %v6612, %v6609
        %v6707 = vpack.c.bf16 %v6620, %v6617
        %v6708 = vpack.c.bf16 %v6675, %v6672
        %v6709 = vpack.c.bf16 %v6683, %v6680
        %v6726 = vunpack.c.l.b16 %v6686
        %v6727 = vunpack.c.h.b16 %v6686
        %v6728 = vunpack.c.l.b16 %v6687
        %v6729 = vunpack.c.l.b16 %v6688
        %v6730 = vunpack.c.h.b16 %v6688
        %v6731 = vunpack.c.l.b16 %v6689
        %v6732 = vunpack.c.l.b16 %v6690
        %v6733 = vunpack.c.h.b16 %v6690
        %v6734 = vunpack.c.l.b16 %v6691
        %v6735 = vunpack.c.l.b16 %v6692
        %v6736 = vunpack.c.h.b16 %v6692
        %v6737 = vunpack.c.l.b16 %v6693
        %v6738 = vunpack.c.l.b16 %v6694
        %v6739 = vunpack.c.h.b16 %v6694
        %v6740 = vunpack.c.l.b16 %v6695
        %v6741 = vunpack.c.l.b16 %v6696
        %v6742 = vunpack.c.h.b16 %v6696
        %v6743 = vunpack.c.l.b16 %v6697
        %v6744 = vunpack.c.l.b16 %v6698
        %v6745 = vunpack.c.h.b16 %v6698
        %v6746 = vunpack.c.l.b16 %v6699
        %v6747 = vunpack.c.l.b16 %v6700
        %v6748 = vunpack.c.h.b16 %v6700
        %v6749 = vunpack.c.l.b16 %v6701
        %v6750 = vpack.c.b16 %v6729, %v6726
        %v6751 = vpack.c.b16 %v6730, %v6727
        %v6752 = vpack.c.b16 %v6731, %v6728
        %v6753 = vpack.c.b16 %v6735, %v6732
        %v6754 = vpack.c.b16 %v6736, %v6733
        %v6755 = vpack.c.b16 %v6737, %v6734
        %v6756 = vpack.c.b16 %v6741, %v6738
        %v6757 = vpack.c.b16 %v6742, %v6739
        %v6758 = vpack.c.b16 %v6743, %v6740
        %v6759 = vpack.c.b16 %v6747, %v6744
        %v6760 = vpack.c.b16 %v6748, %v6745
        %v6761 = vpack.c.b16 %v6749, %v6746
        %v6775 = vsel %vm2846, %v6702, 0
        %v6778 = vsel %vm2846, %v6703, 0
        %v6781 = vsel %vm2846, %v6704, 0
        %v6784 = vsel %vm2846, %v6705, 0
        %v6787 = vsel %vm2846, %v6706, 0
        %v6790 = vsel %vm2846, %v6707, 0
        %v6793 = vsel %vm2846, %v6708, 0
        %v6796 = vsel %vm2846, %v6709, 0
        %6798 = vmatprep.subr.bf16.mxu0 %v6751
        %6799 = vmatpush1.bf16.msra.mxu0 %v6750
        %6800 = vmatprep.subr.bf16.mxu0 %v6754
        %6801 = vmatpush1.bf16.msra.mxu0 %v6753
        %6802 = vmatprep.subr.bf16.mxu0 %v6757
        %6803 = vmatpush1.bf16.msra.mxu0 %v6756
        %6804 = vmatprep.subr.bf16.mxu0 %v6760
        %6805 = vmatpush1.bf16.msra.mxu0 %v6759
        %6806 = vmatprep.subr.bf16.mxu0 0
        %6807 = vmatpush1.bf16.msra.mxu0 0
        %6808 = vmatprep.subr.bf16.mxu0 0
        %6809 = vmatpush1.bf16.msra.mxu0 0
        %6810 = vmatprep.subr.bf16.mxu0 0
        %6811 = vmatpush1.bf16.msra.mxu0 0
        %6812 = vmatprep.subr.bf16.mxu0 0
        %6813 = vmatpush1.bf16.msra.mxu0 0
        %6814 = vmatprep.subr.bf16.mxu0 0
        %6815 = vmatpush1.bf16.msra.mxu0 0
        %6816 = vmatprep.subr.bf16.mxu0 0
        %6817 = vmatpush1.bf16.msra.mxu0 0
        %6818 = vmatprep.subr.bf16.mxu0 0
        %6819 = vmatpush1.bf16.msra.mxu0 0
        %6820 = vmatprep.subr.bf16.mxu0 0
        %6821 = vmatpush1.bf16.msra.mxu0 0
        %6822 = vmatprep.subr.bf16.mxu0 0
        %6823 = vmatpush1.bf16.msra.mxu0 0
        %6824 = vmatprep.subr.bf16.mxu0 0
        %6825 = vmatpush1.bf16.msra.mxu0 0
        %6826 = vmatprep.subr.bf16.mxu0 0
        %6827 = vmatpush1.bf16.msra.mxu0 0
        %6828 = vmatprep.subr.bf16.mxu0 0
        %6829 = vmatpush1.bf16.msra.mxu0 0
        %6830 = vmatprep.mubr.bf16.mxu0 0
        %6831 = vmatmul.mubr.bf16.gmra.mrb[0].mxu0 %v6775
        %v6832 = vpop.f32.mrb[0].mxu0
        %v6833 = vadd.f32 0.0, %v6832
        %v6834 = vpop.f32.mrb[0].mxu0
        %v6835 = vadd.f32 0.0, %v6834
        %v6836 = vpop.f32.mrb[0].mxu0
        %v6837 = vadd.f32 0.0, %v6836
        %v6838 = vpop.f32.mrb[0].mxu0
        %v6839 = vadd.f32 0.0, %v6838
        %6840 = vmatprep.mubr.bf16.mxu0 0
        %6841 = vmatmul.mubr.bf16.gmra.mrb[0].mxu0 %v6778
        %v6842 = vpop.f32.mrb[0].mxu0
        %v6843 = vadd.f32 0.0, %v6842
        %v6844 = vpop.f32.mrb[0].mxu0
        %v6845 = vadd.f32 0.0, %v6844
        %v6846 = vpop.f32.mrb[0].mxu0
        %v6847 = vadd.f32 0.0, %v6846
        %v6848 = vpop.f32.mrb[0].mxu0
        %v6849 = vadd.f32 0.0, %v6848
        %6850 = vmatprep.mubr.bf16.mxu0 0
        %6851 = vmatmul.mubr.bf16.gmra.mrb[0].mxu0 %v6781
        %v6852 = vpop.f32.mrb[0].mxu0
        %v6853 = vadd.f32 0.0, %v6852
        %v6854 = vpop.f32.mrb[0].mxu0
        %v6855 = vadd.f32 0.0, %v6854
        %v6856 = vpop.f32.mrb[0].mxu0
        %v6857 = vadd.f32 0.0, %v6856
        %v6858 = vpop.f32.mrb[0].mxu0
        %v6859 = vadd.f32 0.0, %v6858
        %6860 = vmatprep.mubr.bf16.mxu0 0
        %6861 = vmatmul.mubr.bf16.gmra.mrb[0].mxu0 %v6784
        %v6862 = vpop.f32.mrb[0].mxu0
        %v6863 = vadd.f32 0.0, %v6862
        %v6864 = vpop.f32.mrb[0].mxu0
        %v6865 = vadd.f32 0.0, %v6864
        %v6866 = vpop.f32.mrb[0].mxu0
        %v6867 = vadd.f32 0.0, %v6866
        %v6868 = vpop.f32.mrb[0].mxu0
        %v6869 = vadd.f32 0.0, %v6868
        %6870 = vmatprep.mubr.bf16.mxu0 0
        %6871 = vmatmul.mubr.bf16.gmra.mrb[0].mxu0 %v6787
        %v6872 = vpop.f32.mrb[0].mxu0
        %v6873 = vadd.f32 0.0, %v6872
        %v6874 = vpop.f32.mrb[0].mxu0
        %v6875 = vadd.f32 0.0, %v6874
        %v6876 = vpop.f32.mrb[0].mxu0
        %v6877 = vadd.f32 0.0, %v6876
        %v6878 = vpop.f32.mrb[0].mxu0
        %v6879 = vadd.f32 0.0, %v6878
        %6880 = vmatprep.mubr.bf16.mxu0 0
        %6881 = vmatmul.mubr.bf16.gmra.mrb[0].mxu0 %v6790
        %v6882 = vpop.f32.mrb[0].mxu0
        %v6883 = vadd.f32 0.0, %v6882
        %v6884 = vpop.f32.mrb[0].mxu0
        %v6885 = vadd.f32 0.0, %v6884
        %v6886 = vpop.f32.mrb[0].mxu0
        %v6887 = vadd.f32 0.0, %v6886
        %v6888 = vpop.f32.mrb[0].mxu0
        %v6889 = vadd.f32 0.0, %v6888
        %6890 = vmatprep.mubr.bf16.mxu0 0
        %6891 = vmatmul.mubr.bf16.gmra.mrb[0].mxu0 %v6793
        %v6892 = vpop.f32.mrb[0].mxu0
        %v6893 = vadd.f32 0.0, %v6892
        %v6894 = vpop.f32.mrb[0].mxu0
        %v6895 = vadd.f32 0.0, %v6894
        %v6896 = vpop.f32.mrb[0].mxu0
        %v6897 = vadd.f32 0.0, %v6896
        %v6898 = vpop.f32.mrb[0].mxu0
        %v6899 = vadd.f32 0.0, %v6898
        %6900 = vmatprep.mubr.bf16.mxu0 0
        %6901 = vmatmul.mubr.bf16.gmra.mrb[0].mxu0 %v6796
        %v6902 = vpop.f32.mrb[0].mxu0
        %v6903 = vadd.f32 0.0, %v6902
        %v6904 = vpop.f32.mrb[0].mxu0
        %v6905 = vadd.f32 0.0, %v6904
        %v6906 = vpop.f32.mrb[0].mxu0
        %v6907 = vadd.f32 0.0, %v6906
        %v6908 = vpop.f32.mrb[0].mxu0
        %v6909 = vadd.f32 0.0, %v6908
        %6910 = vdwg.mxu0
        %6911 = vmatprep.subr.bf16.mxu0 0
        %6912 = vmatpush1.bf16.msra.mxu0 %v6752
        %6913 = vmatprep.subr.bf16.mxu0 0
        %6914 = vmatpush1.bf16.msra.mxu0 %v6755
        %6915 = vmatprep.subr.bf16.mxu0 0
        %6916 = vmatpush1.bf16.msra.mxu0 %v6758
        %6917 = vmatprep.subr.bf16.mxu0 0
        %6918 = vmatpush1.bf16.msra.mxu0 %v6761
        %6919 = vmatprep.subr.bf16.mxu0 0
        %6920 = vmatpush1.bf16.msra.mxu0 0
        %6921 = vmatprep.subr.bf16.mxu0 0
        %6922 = vmatpush1.bf16.msra.mxu0 0
        %6923 = vmatprep.subr.bf16.mxu0 0
        %6924 = vmatpush1.bf16.msra.mxu0 0
        %6925 = vmatprep.subr.bf16.mxu0 0
        %6926 = vmatpush1.bf16.msra.mxu0 0
        %6927 = vmatprep.subr.bf16.mxu0 0
        %6928 = vmatpush1.bf16.msra.mxu0 0
        %6929 = vmatprep.subr.bf16.mxu0 0
        %6930 = vmatpush1.bf16.msra.mxu0 0
        %6931 = vmatprep.subr.bf16.mxu0 0
        %6932 = vmatpush1.bf16.msra.mxu0 0
        %6933 = vmatprep.subr.bf16.mxu0 0
        %6934 = vmatpush1.bf16.msra.mxu0 0
        %6935 = vmatprep.subr.bf16.mxu0 0
        %6936 = vmatpush1.bf16.msra.mxu0 0
        %6937 = vmatprep.subr.bf16.mxu0 0
        %6938 = vmatpush1.bf16.msra.mxu0 0
        %6939 = vmatprep.subr.bf16.mxu0 0
        %6940 = vmatpush1.bf16.msra.mxu0 0
        %6941 = vmatprep.subr.bf16.mxu0 0
        %6942 = vmatpush1.bf16.msra.mxu0 0
        %6943 = vmatprep.mubr.bf16.mxu0 0
        %6944 = vmatmul.mubr.bf16.gmra.mrb[0].mxu0 %v6775
        %v6945 = vpop.f32.mrb[0].mxu0
        %v6946 = vadd.f32 0.0, %v6945
        %v6947 = vpop.f32.mrb[0].mxu0
        %v6948 = vpop.f32.mrb[0].mxu0
        %v6949 = vadd.f32 0.0, %v6948
        %v6950 = vpop.f32.mrb[0].mxu0
        %6951 = vmatprep.mubr.bf16.mxu0 0
        %6952 = vmatmul.mubr.bf16.gmra.mrb[0].mxu0 %v6778
        %v6953 = vpop.f32.mrb[0].mxu0
        %v6954 = vadd.f32 0.0, %v6953
        %v6955 = vpop.f32.mrb[0].mxu0
        %v6956 = vpop.f32.mrb[0].mxu0
        %v6957 = vadd.f32 0.0, %v6956
        %v6958 = vpop.f32.mrb[0].mxu0
        %6959 = vmatprep.mubr.bf16.mxu0 0
        %6960 = vmatmul.mubr.bf16.gmra.mrb[0].mxu0 %v6781
        %v6961 = vpop.f32.mrb[0].mxu0
        %v6962 = vadd.f32 0.0, %v6961
        %v6963 = vpop.f32.mrb[0].mxu0
        %v6964 = vpop.f32.mrb[0].mxu0
        %v6965 = vadd.f32 0.0, %v6964
        %v6966 = vpop.f32.mrb[0].mxu0
        %6967 = vmatprep.mubr.bf16.mxu0 0
        %6968 = vmatmul.mubr.bf16.gmra.mrb[0].mxu0 %v6784
        %v6969 = vpop.f32.mrb[0].mxu0
        %v6970 = vadd.f32 0.0, %v6969
        %v6971 = vpop.f32.mrb[0].mxu0
        %v6972 = vpop.f32.mrb[0].mxu0
        %v6973 = vadd.f32 0.0, %v6972
        %v6974 = vpop.f32.mrb[0].mxu0
        %6975 = vmatprep.mubr.bf16.mxu0 0
        %6976 = vmatmul.mubr.bf16.gmra.mrb[0].mxu0 %v6787
        %v6977 = vpop.f32.mrb[0].mxu0
        %v6978 = vadd.f32 0.0, %v6977
        %v6979 = vpop.f32.mrb[0].mxu0
        %v6980 = vpop.f32.mrb[0].mxu0
        %v6981 = vadd.f32 0.0, %v6980
        %v6982 = vpop.f32.mrb[0].mxu0
        %6983 = vmatprep.mubr.bf16.mxu0 0
        %6984 = vmatmul.mubr.bf16.gmra.mrb[0].mxu0 %v6790
        %v6985 = vpop.f32.mrb[0].mxu0
        %v6986 = vadd.f32 0.0, %v6985
        %v6987 = vpop.f32.mrb[0].mxu0
        %v6988 = vpop.f32.mrb[0].mxu0
        %v6989 = vadd.f32 0.0, %v6988
        %v6990 = vpop.f32.mrb[0].mxu0
        %6991 = vmatprep.mubr.bf16.mxu0 0
        %6992 = vmatmul.mubr.bf16.gmra.mrb[0].mxu0 %v6793
        %v6993 = vpop.f32.mrb[0].mxu0
        %v6994 = vadd.f32 0.0, %v6993
        %v6995 = vpop.f32.mrb[0].mxu0
        %v6996 = vpop.f32.mrb[0].mxu0
        %v6997 = vadd.f32 0.0, %v6996
        %v6998 = vpop.f32.mrb[0].mxu0
        %6999 = vmatprep.mubr.bf16.mxu0 0
        %7000 = vmatmul.mubr.bf16.gmra.mrb[0].mxu0 %v6796
        %v7001 = vpop.f32.mrb[0].mxu0
        %v7002 = vadd.f32 0.0, %v7001
        %v7003 = vpop.f32.mrb[0].mxu0
        %v7004 = vpop.f32.mrb[0].mxu0
        %v7005 = vadd.f32 0.0, %v7004
        %v7006 = vpop.f32.mrb[0].mxu0
        %7007 = vdwg.mxu0
        %v7008 = vadd.f32 %v5894, %v6833
        %v7009 = vadd.f32 %v5895, %v6835
        %v7010 = vadd.f32 %v5896, %v6946
        %v7011 = vadd.f32 %v5897, %v6837
        %v7012 = vadd.f32 %v5898, %v6839
        %v7013 = vadd.f32 %v5899, %v6949
        %v7014 = vadd.f32 %v5900, %v6843
        %v7015 = vadd.f32 %v5901, %v6845
        %v7016 = vadd.f32 %v5902, %v6954
        %v7017 = vadd.f32 %v5903, %v6847
        %v7018 = vadd.f32 %v5904, %v6849
        %v7019 = vadd.f32 %v5905, %v6957
        %v7020 = vadd.f32 %v5906, %v6853
        %v7021 = vadd.f32 %v5907, %v6855
        %v7022 = vadd.f32 %v5908, %v6962
        %v7023 = vadd.f32 %v5909, %v6857
        %v7024 = vadd.f32 %v5910, %v6859
        %v7025 = vadd.f32 %v5911, %v6965
        %v7026 = vadd.f32 %v5912, %v6863
        %v7027 = vadd.f32 %v5913, %v6865
        %v7028 = vadd.f32 %v5914, %v6970
        %v7029 = vadd.f32 %v5915, %v6867
        %v7030 = vadd.f32 %v5916, %v6869
        %v7031 = vadd.f32 %v5917, %v6973
        %v7032 = vadd.f32 %v5918, %v6873
        %v7033 = vadd.f32 %v5919, %v6875
        %v7034 = vadd.f32 %v5920, %v6978
        %v7035 = vadd.f32 %v5921, %v6877
        %v7036 = vadd.f32 %v5922, %v6879
        %v7037 = vadd.f32 %v5923, %v6981
        %v7038 = vadd.f32 %v5924, %v6883
        %v7039 = vadd.f32 %v5925, %v6885
        %v7040 = vadd.f32 %v5926, %v6986
        %v7041 = vadd.f32 %v5927, %v6887
        %v7042 = vadd.f32 %v5928, %v6889
        %v7043 = vadd.f32 %v5929, %v6989
        %v7044 = vadd.f32 %v5930, %v6893
        %v7045 = vadd.f32 %v5931, %v6895
        %v7046 = vadd.f32 %v5932, %v6994
        %v7047 = vadd.f32 %v5933, %v6897
        %v7048 = vadd.f32 %v5934, %v6899
        %v7049 = vadd.f32 %v5935, %v6997
        %v7050 = vadd.f32 %v5936, %v6903
        %v7051 = vadd.f32 %v5937, %v6905
        %v7052 = vadd.f32 %v5938, %v7002
        %v7053 = vadd.f32 %v5939, %v6907
        %v7054 = vadd.f32 %v5940, %v6909
        %v7055 = vadd.f32 %v5941, %v7005
        %v7057 = vsel %vm2846, %v2765, 0
        %v7060 = vsel %vm2846, %v2768, 0
        %v7063 = vsel %vm2846, %v2789, 0
        %v7066 = vsel %vm2846, %v2792, 0
        %7068 = vmatprep.subr.bf16.mxu0 0
        %7069 = vmatpush1.bf16.xpose.msra.mxu0 %v7063
        %7070 = vmatprep.subr.bf16.mxu0 0
        %7071 = vmatpush1.bf16.xpose.msra.mxu0 %v7066
        %7072 = vmatprep.subr.bf16.mxu0 0
        %7073 = vmatpush1.bf16.xpose.msra.mxu0 0
        %7074 = vmatprep.subr.bf16.mxu0 0
        %7075 = vmatpush1.bf16.xpose.msra.mxu0 0
        %7076 = vmatprep.subr.bf16.mxu0 0
        %7077 = vmatpush1.bf16.xpose.msra.mxu0 0
        %7078 = vmatprep.subr.bf16.mxu0 0
        %7079 = vmatpush1.bf16.xpose.msra.mxu0 0
        %7080 = vmatprep.subr.bf16.mxu0 0
        %7081 = vmatpush1.bf16.xpose.msra.mxu0 0
        %7082 = vmatprep.subr.bf16.mxu0 0
        %7083 = vmatpush1.bf16.xpose.msra.mxu0 0
        %7084 = vmatprep.subr.bf16.mxu0 0
        %7085 = vmatpush1.bf16.xpose.msra.mxu0 0
        %7086 = vmatprep.subr.bf16.mxu0 0
        %7087 = vmatpush1.bf16.xpose.msra.mxu0 0
        %7088 = vmatprep.subr.bf16.mxu0 0
        %7089 = vmatpush1.bf16.xpose.msra.mxu0 0
        %7090 = vmatprep.subr.bf16.mxu0 0
        %7091 = vmatpush1.bf16.xpose.msra.mxu0 0
        %7092 = vmatprep.subr.bf16.mxu0 0
        %7093 = vmatpush1.bf16.xpose.msra.mxu0 0
        %7094 = vmatprep.subr.bf16.mxu0 0
        %7095 = vmatpush1.bf16.xpose.msra.mxu0 0
        %7096 = vmatprep.subr.bf16.mxu0 0
        %7097 = vmatpush1.bf16.xpose.msra.mxu0 0
        %7098 = vmatprep.subr.bf16.mxu0 0
        %7099 = vmatpush1.bf16.xpose.msra.mxu0 0
        %7100 = vmatprep.mubr.bf16.mxu0 0
        %7101 = vmatmul.mubr.bf16.gmra.mrb[0].mxu0 %v7057
        %v7102 = vpop.f32.mrb[0].mxu0
        %v7103 = vadd.f32 0.0, %v7102
        %v7104 = vpop.f32.mrb[0].mxu0
        %v7105 = vpop.f32.mrb[0].mxu0
        %v7106 = vadd.f32 0.0, %v7105
        %v7107 = vpop.f32.mrb[0].mxu0
        %7108 = vmatprep.mubr.bf16.mxu0 0
        %7109 = vmatmul.mubr.bf16.gmra.mrb[0].mxu0 %v7060
        %v7110 = vpop.f32.mrb[0].mxu0
        %v7111 = vadd.f32 0.0, %v7110
        %v7112 = vpop.f32.mrb[0].mxu0
        %v7113 = vpop.f32.mrb[0].mxu0
        %v7114 = vadd.f32 0.0, %v7113
        %v7115 = vpop.f32.mrb[0].mxu0
        %7116 = vdwg.mxu0
        %v7118 = vsel %vm2846, %v2771, 0
        %v7121 = vsel %vm2846, %v2774, 0
        %v7124 = vsel %vm2846, %v2795, 0
        %v7127 = vsel %vm2846, %v2798, 0
        %7129 = vmatprep.subr.bf16.mxu0 0
        %7130 = vmatpush1.bf16.xpose.msra.mxu0 %v7124
        %7131 = vmatprep.subr.bf16.mxu0 0
        %7132 = vmatpush1.bf16.xpose.msra.mxu0 %v7127
        %7133 = vmatprep.subr.bf16.mxu0 0
        %7134 = vmatpush1.bf16.xpose.msra.mxu0 0
        %7135 = vmatprep.subr.bf16.mxu0 0
        %7136 = vmatpush1.bf16.xpose.msra.mxu0 0
        %7137 = vmatprep.subr.bf16.mxu0 0
        %7138 = vmatpush1.bf16.xpose.msra.mxu0 0
        %7139 = vmatprep.subr.bf16.mxu0 0
        %7140 = vmatpush1.bf16.xpose.msra.mxu0 0
        %7141 = vmatprep.subr.bf16.mxu0 0
        %7142 = vmatpush1.bf16.xpose.msra.mxu0 0
        %7143 = vmatprep.subr.bf16.mxu0 0
        %7144 = vmatpush1.bf16.xpose.msra.mxu0 0
        %7145 = vmatprep.subr.bf16.mxu0 0
        %7146 = vmatpush1.bf16.xpose.msra.mxu0 0
        %7147 = vmatprep.subr.bf16.mxu0 0
        %7148 = vmatpush1.bf16.xpose.msra.mxu0 0
        %7149 = vmatprep.subr.bf16.mxu0 0
        %7150 = vmatpush1.bf16.xpose.msra.mxu0 0
        %7151 = vmatprep.subr.bf16.mxu0 0
        %7152 = vmatpush1.bf16.xpose.msra.mxu0 0
        %7153 = vmatprep.subr.bf16.mxu0 0
        %7154 = vmatpush1.bf16.xpose.msra.mxu0 0
        %7155 = vmatprep.subr.bf16.mxu0 0
        %7156 = vmatpush1.bf16.xpose.msra.mxu0 0
        %7157 = vmatprep.subr.bf16.mxu0 0
        %7158 = vmatpush1.bf16.xpose.msra.mxu0 0
        %7159 = vmatprep.subr.bf16.mxu0 0
        %7160 = vmatpush1.bf16.xpose.msra.mxu0 0
        %7161 = vmatprep.mubr.bf16.mxu0 0
        %7162 = vmatmul.mubr.bf16.gmra.mrb[0].mxu0 %v7118
        %v7163 = vpop.f32.mrb[0].mxu0
        %v7164 = vadd.f32 0.0, %v7163
        %v7165 = vpop.f32.mrb[0].mxu0
        %v7166 = vpop.f32.mrb[0].mxu0
        %v7167 = vadd.f32 0.0, %v7166
        %v7168 = vpop.f32.mrb[0].mxu0
        %7169 = vmatprep.mubr.bf16.mxu0 0
        %7170 = vmatmul.mubr.bf16.gmra.mrb[0].mxu0 %v7121
        %v7171 = vpop.f32.mrb[0].mxu0
        %v7172 = vadd.f32 0.0, %v7171
        %v7173 = vpop.f32.mrb[0].mxu0
        %v7174 = vpop.f32.mrb[0].mxu0
        %v7175 = vadd.f32 0.0, %v7174
        %v7176 = vpop.f32.mrb[0].mxu0
        %7177 = vdwg.mxu0
        %v7179 = vsel %vm2846, %v2777, 0
        %v7182 = vsel %vm2846, %v2780, 0
        %v7185 = vsel %vm2846, %v2801, 0
        %v7188 = vsel %vm2846, %v2804, 0
        %7190 = vmatprep.subr.bf16.mxu0 0
        %7191 = vmatpush1.bf16.xpose.msra.mxu0 %v7185
        %7192 = vmatprep.subr.bf16.mxu0 0
        %7193 = vmatpush1.bf16.xpose.msra.mxu0 %v7188
        %7194 = vmatprep.subr.bf16.mxu0 0
        %7195 = vmatpush1.bf16.xpose.msra.mxu0 0
        %7196 = vmatprep.subr.bf16.mxu0 0
        %7197 = vmatpush1.bf16.xpose.msra.mxu0 0
        %7198 = vmatprep.subr.bf16.mxu0 0
        %7199 = vmatpush1.bf16.xpose.msra.mxu0 0
        %7200 = vmatprep.subr.bf16.mxu0 0
        %7201 = vmatpush1.bf16.xpose.msra.mxu0 0
        %7202 = vmatprep.subr.bf16.mxu0 0
        %7203 = vmatpush1.bf16.xpose.msra.mxu0 0
        %7204 = vmatprep.subr.bf16.mxu0 0
        %7205 = vmatpush1.bf16.xpose.msra.mxu0 0
        %7206 = vmatprep.subr.bf16.mxu0 0
        %7207 = vmatpush1.bf16.xpose.msra.mxu0 0
        %7208 = vmatprep.subr.bf16.mxu0 0
        %7209 = vmatpush1.bf16.xpose.msra.mxu0 0
        %7210 = vmatprep.subr.bf16.mxu0 0
        %7211 = vmatpush1.bf16.xpose.msra.mxu0 0
        %7212 = vmatprep.subr.bf16.mxu0 0
        %7213 = vmatpush1.bf16.xpose.msra.mxu0 0
        %7214 = vmatprep.subr.bf16.mxu0 0
        %7215 = vmatpush1.bf16.xpose.msra.mxu0 0
        %7216 = vmatprep.subr.bf16.mxu0 0
        %7217 = vmatpush1.bf16.xpose.msra.mxu0 0
        %7218 = vmatprep.subr.bf16.mxu0 0
        %7219 = vmatpush1.bf16.xpose.msra.mxu0 0
        %7220 = vmatprep.subr.bf16.mxu0 0
        %7221 = vmatpush1.bf16.xpose.msra.mxu0 0
        %7222 = vmatprep.mubr.bf16.mxu0 0
        %7223 = vmatmul.mubr.bf16.gmra.mrb[0].mxu0 %v7179
        %v7224 = vpop.f32.mrb[0].mxu0
        %v7225 = vadd.f32 0.0, %v7224
        %v7226 = vpop.f32.mrb[0].mxu0
        %v7227 = vpop.f32.mrb[0].mxu0
        %v7228 = vadd.f32 0.0, %v7227
        %v7229 = vpop.f32.mrb[0].mxu0
        %7230 = vmatprep.mubr.bf16.mxu0 0
        %7231 = vmatmul.mubr.bf16.gmra.mrb[0].mxu0 %v7182
        %v7232 = vpop.f32.mrb[0].mxu0
        %v7233 = vadd.f32 0.0, %v7232
        %v7234 = vpop.f32.mrb[0].mxu0
        %v7235 = vpop.f32.mrb[0].mxu0
        %v7236 = vadd.f32 0.0, %v7235
        %v7237 = vpop.f32.mrb[0].mxu0
        %7238 = vdwg.mxu0
        %v7240 = vsel %vm2846, %v2783, 0
        %v7243 = vsel %vm2846, %v2786, 0
        %v7246 = vsel %vm2846, %v2807, 0
        %v7249 = vsel %vm2846, %v2810, 0
        %7251 = vmatprep.subr.bf16.mxu0 0
        %7252 = vmatpush1.bf16.xpose.msra.mxu0 %v7246
        %7253 = vmatprep.subr.bf16.mxu0 0
        %7254 = vmatpush1.bf16.xpose.msra.mxu0 %v7249
        %7255 = vmatprep.subr.bf16.mxu0 0
        %7256 = vmatpush1.bf16.xpose.msra.mxu0 0
        %7257 = vmatprep.subr.bf16.mxu0 0
        %7258 = vmatpush1.bf16.xpose.msra.mxu0 0
        %7259 = vmatprep.subr.bf16.mxu0 0
        %7260 = vmatpush1.bf16.xpose.msra.mxu0 0
        %7261 = vmatprep.subr.bf16.mxu0 0
        %7262 = vmatpush1.bf16.xpose.msra.mxu0 0
        %7263 = vmatprep.subr.bf16.mxu0 0
        %7264 = vmatpush1.bf16.xpose.msra.mxu0 0
        %7265 = vmatprep.subr.bf16.mxu0 0
        %7266 = vmatpush1.bf16.xpose.msra.mxu0 0
        %7267 = vmatprep.subr.bf16.mxu0 0
        %7268 = vmatpush1.bf16.xpose.msra.mxu0 0
        %7269 = vmatprep.subr.bf16.mxu0 0
        %7270 = vmatpush1.bf16.xpose.msra.mxu0 0
        %7271 = vmatprep.subr.bf16.mxu0 0
        %7272 = vmatpush1.bf16.xpose.msra.mxu0 0
        %7273 = vmatprep.subr.bf16.mxu0 0
        %7274 = vmatpush1.bf16.xpose.msra.mxu0 0
        %7275 = vmatprep.subr.bf16.mxu0 0
        %7276 = vmatpush1.bf16.xpose.msra.mxu0 0
        %7277 = vmatprep.subr.bf16.mxu0 0
        %7278 = vmatpush1.bf16.xpose.msra.mxu0 0
        %7279 = vmatprep.subr.bf16.mxu0 0
        %7280 = vmatpush1.bf16.xpose.msra.mxu0 0
        %7281 = vmatprep.subr.bf16.mxu0 0
        %7282 = vmatpush1.bf16.xpose.msra.mxu0 0
        %7283 = vmatprep.mubr.bf16.mxu0 0
        %7284 = vmatmul.mubr.bf16.gmra.mrb[0].mxu0 %v7240
        %v7285 = vpop.f32.mrb[0].mxu0
        %v7286 = vadd.f32 0.0, %v7285
        %v7287 = vpop.f32.mrb[0].mxu0
        %v7288 = vpop.f32.mrb[0].mxu0
        %v7289 = vadd.f32 0.0, %v7288
        %v7290 = vpop.f32.mrb[0].mxu0
        %7291 = vmatprep.mubr.bf16.mxu0 0
        %7292 = vmatmul.mubr.bf16.gmra.mrb[0].mxu0 %v7243
        %v7293 = vpop.f32.mrb[0].mxu0
        %v7294 = vadd.f32 0.0, %v7293
        %v7295 = vpop.f32.mrb[0].mxu0
        %v7296 = vpop.f32.mrb[0].mxu0
        %v7297 = vadd.f32 0.0, %v7296
        %v7298 = vpop.f32.mrb[0].mxu0
        %7299 = vdwg.mxu0
        %v7300 = vsel %vm3095, %v7103, -inf
        %v7301 = vsel %vm3096, %v7106, -inf
        %v7302 = vsel %vm3097, %v7111, -inf
        %v7303 = vsel %vm3098, %v7114, -inf
        %v7304 = vsel %vm3095, %v7164, -inf
        %v7305 = vsel %vm3096, %v7167, -inf
        %v7306 = vsel %vm3097, %v7172, -inf
        %v7307 = vsel %vm3098, %v7175, -inf
        %v7308 = vsel %vm3095, %v7225, -inf
        %v7309 = vsel %vm3096, %v7228, -inf
        %v7310 = vsel %vm3097, %v7233, -inf
        %v7311 = vsel %vm3098, %v7236, -inf
        %v7312 = vsel %vm3095, %v7286, -inf
        %v7313 = vsel %vm3096, %v7289, -inf
        %v7314 = vsel %vm3097, %v7294, -inf
        %v7315 = vsel %vm3098, %v7297, -inf
        %v7316 = vsel %vm3115, %v7300, -inf
        %7317 = vmax.xlane.f32.xlu0 %v7316
        %v7318 = vpop.xlane.xlu0 %7317
        %v7319 = vsel %vm3115, %v7301, -inf
        %7320 = vmax.xlane.f32.xlu0 %v7319
        %v7321 = vpop.xlane.xlu0 %7320
        %v7322 = vsel %vm3115, %v7302, -inf
        %7323 = vmax.xlane.f32.xlu0 %v7322
        %v7324 = vpop.xlane.xlu0 %7323
        %v7325 = vsel %vm3115, %v7303, -inf
        %7326 = vmax.xlane.f32.xlu0 %v7325
        %v7327 = vpop.xlane.xlu0 %7326
        %v7328 = vsel %vm3115, %v7304, -inf
        %7329 = vmax.xlane.f32.xlu0 %v7328
        %v7330 = vpop.xlane.xlu0 %7329
        %v7331 = vsel %vm3115, %v7305, -inf
        %7332 = vmax.xlane.f32.xlu0 %v7331
        %v7333 = vpop.xlane.xlu0 %7332
        %v7334 = vsel %vm3115, %v7306, -inf
        %7335 = vmax.xlane.f32.xlu0 %v7334
        %v7336 = vpop.xlane.xlu0 %7335
        %v7337 = vsel %vm3115, %v7307, -inf
        %7338 = vmax.xlane.f32.xlu0 %v7337
        %v7339 = vpop.xlane.xlu0 %7338
        %v7340 = vsel %vm3115, %v7308, -inf
        %7341 = vmax.xlane.f32.xlu0 %v7340
        %v7342 = vpop.xlane.xlu0 %7341
        %v7343 = vsel %vm3115, %v7309, -inf
        %7344 = vmax.xlane.f32.xlu0 %v7343
        %v7345 = vpop.xlane.xlu0 %7344
        %v7346 = vsel %vm3115, %v7310, -inf
        %7347 = vmax.xlane.f32.xlu0 %v7346
        %v7348 = vpop.xlane.xlu0 %7347
        %v7349 = vsel %vm3115, %v7311, -inf
        %7350 = vmax.xlane.f32.xlu0 %v7349
        %v7351 = vpop.xlane.xlu0 %7350
        %v7352 = vsel %vm3115, %v7312, -inf
        %7353 = vmax.xlane.f32.xlu0 %v7352
        %v7354 = vpop.xlane.xlu0 %7353
        %v7355 = vsel %vm3115, %v7313, -inf
        %7356 = vmax.xlane.f32.xlu0 %v7355
        %v7357 = vpop.xlane.xlu0 %7356
        %v7358 = vsel %vm3115, %v7314, -inf
        %7359 = vmax.xlane.f32.xlu0 %v7358
        %v7360 = vpop.xlane.xlu0 %7359
        %v7361 = vsel %vm3115, %v7315, -inf
        %7362 = vmax.xlane.f32.xlu0 %v7361
        %v7363 = vpop.xlane.xlu0 %7362
        %v7364 = vsub.f32 %v7300, %v7318
        %v7365 = vsub.f32 %v7301, %v7321
        %v7366 = vsub.f32 %v7302, %v7324
        %v7367 = vsub.f32 %v7303, %v7327
        %v7368 = vsub.f32 %v7304, %v7330
        %v7369 = vsub.f32 %v7305, %v7333
        %v7370 = vsub.f32 %v7306, %v7336
        %v7371 = vsub.f32 %v7307, %v7339
        %v7372 = vsub.f32 %v7308, %v7342
        %v7373 = vsub.f32 %v7309, %v7345
        %v7374 = vsub.f32 %v7310, %v7348
        %v7375 = vsub.f32 %v7311, %v7351
        %v7376 = vsub.f32 %v7312, %v7354
        %v7377 = vsub.f32 %v7313, %v7357
        %v7378 = vsub.f32 %v7314, %v7360
        %v7379 = vsub.f32 %v7315, %v7363
        %v7380 = vmul.f32 %v7364, 1.442695
        %v7381 = vpow.pop %v7380
        %v7382 = vmul.f32 %v7365, 1.442695
        %v7383 = vpow.pop %v7382
        %v7384 = vmul.f32 %v7366, 1.442695
        %v7385 = vpow.pop %v7384
        %v7386 = vmul.f32 %v7367, 1.442695
        %v7387 = vpow.pop %v7386
        %v7388 = vmul.f32 %v7368, 1.442695
        %v7389 = vpow.pop %v7388
        %v7390 = vmul.f32 %v7369, 1.442695
        %v7391 = vpow.pop %v7390
        %v7392 = vmul.f32 %v7370, 1.442695
        %v7393 = vpow.pop %v7392
        %v7394 = vmul.f32 %v7371, 1.442695
        %v7395 = vpow.pop %v7394
        %v7396 = vmul.f32 %v7372, 1.442695
        %v7397 = vpow.pop %v7396
        %v7398 = vmul.f32 %v7373, 1.442695
        %v7399 = vpow.pop %v7398
        %v7400 = vmul.f32 %v7374, 1.442695
        %v7401 = vpow.pop %v7400
        %v7402 = vmul.f32 %v7375, 1.442695
        %v7403 = vpow.pop %v7402
        %v7404 = vmul.f32 %v7376, 1.442695
        %v7405 = vpow.pop %v7404
        %v7406 = vmul.f32 %v7377, 1.442695
        %v7407 = vpow.pop %v7406
        %v7408 = vmul.f32 %v7378, 1.442695
        %v7409 = vpow.pop %v7408
        %v7410 = vmul.f32 %v7379, 1.442695
        %v7411 = vpow.pop %v7410
        %v7412 = vsel %vm3115, %v7381, 0.0
        %7413 = vadd.xlane.f32.xlu0 %v7412
        %v7414 = vpop.xlane.xlu0 %7413
        %v7415 = vsel %vm3115, %v7383, 0.0
        %7416 = vadd.xlane.f32.xlu0 %v7415
        %v7417 = vpop.xlane.xlu0 %7416
        %v7418 = vsel %vm3115, %v7385, 0.0
        %7419 = vadd.xlane.f32.xlu0 %v7418
        %v7420 = vpop.xlane.xlu0 %7419
        %v7421 = vsel %vm3115, %v7387, 0.0
        %7422 = vadd.xlane.f32.xlu0 %v7421
        %v7423 = vpop.xlane.xlu0 %7422
        %v7424 = vsel %vm3115, %v7389, 0.0
        %7425 = vadd.xlane.f32.xlu0 %v7424
        %v7426 = vpop.xlane.xlu0 %7425
        %v7427 = vsel %vm3115, %v7391, 0.0
        %7428 = vadd.xlane.f32.xlu0 %v7427
        %v7429 = vpop.xlane.xlu0 %7428
        %v7430 = vsel %vm3115, %v7393, 0.0
        %7431 = vadd.xlane.f32.xlu0 %v7430
        %v7432 = vpop.xlane.xlu0 %7431
        %v7433 = vsel %vm3115, %v7395, 0.0
        %7434 = vadd.xlane.f32.xlu0 %v7433
        %v7435 = vpop.xlane.xlu0 %7434
        %v7436 = vsel %vm3115, %v7397, 0.0
        %7437 = vadd.xlane.f32.xlu0 %v7436
        %v7438 = vpop.xlane.xlu0 %7437
        %v7439 = vsel %vm3115, %v7399, 0.0
        %7440 = vadd.xlane.f32.xlu0 %v7439
        %v7441 = vpop.xlane.xlu0 %7440
        %v7442 = vsel %vm3115, %v7401, 0.0
        %7443 = vadd.xlane.f32.xlu0 %v7442
        %v7444 = vpop.xlane.xlu0 %7443
        %v7445 = vsel %vm3115, %v7403, 0.0
        %7446 = vadd.xlane.f32.xlu0 %v7445
        %v7447 = vpop.xlane.xlu0 %7446
        %v7448 = vsel %vm3115, %v7405, 0.0
        %7449 = vadd.xlane.f32.xlu0 %v7448
        %v7450 = vpop.xlane.xlu0 %7449
        %v7451 = vsel %vm3115, %v7407, 0.0
        %7452 = vadd.xlane.f32.xlu0 %v7451
        %v7453 = vpop.xlane.xlu0 %7452
        %v7454 = vsel %vm3115, %v7409, 0.0
        %7455 = vadd.xlane.f32.xlu0 %v7454
        %v7456 = vpop.xlane.xlu0 %7455
        %v7457 = vsel %vm3115, %v7411, 0.0
        %7458 = vadd.xlane.f32.xlu0 %v7457
        %v7459 = vpop.xlane.xlu0 %7458
        %v7460 = vrcp.pop %v7414
        %v7461 = vrcp.pop %v7417
        %v7462 = vrcp.pop %v7420
        %v7463 = vrcp.pop %v7423
        %v7464 = vrcp.pop %v7426
        %v7465 = vrcp.pop %v7429
        %v7466 = vrcp.pop %v7432
        %v7467 = vrcp.pop %v7435
        %v7468 = vrcp.pop %v7438
        %v7469 = vrcp.pop %v7441
        %v7470 = vrcp.pop %v7444
        %v7471 = vrcp.pop %v7447
        %v7472 = vrcp.pop %v7450
        %v7473 = vrcp.pop %v7453
        %v7474 = vrcp.pop %v7456
        %v7475 = vrcp.pop %v7459
        %v7476 = vmul.f32 %v7381, %v7460
        %v7477 = vmul.f32 %v7383, %v7461
        %v7478 = vmul.f32 %v7385, %v7462
        %v7479 = vmul.f32 %v7387, %v7463
        %v7480 = vmul.f32 %v7389, %v7464
        %v7481 = vmul.f32 %v7391, %v7465
        %v7482 = vmul.f32 %v7393, %v7466
        %v7483 = vmul.f32 %v7395, %v7467
        %v7484 = vmul.f32 %v7397, %v7468
        %v7485 = vmul.f32 %v7399, %v7469
        %v7486 = vmul.f32 %v7401, %v7470
        %v7487 = vmul.f32 %v7403, %v7471
        %v7488 = vmul.f32 %v7405, %v7472
        %v7489 = vmul.f32 %v7407, %v7473
        %v7490 = vmul.f32 %v7409, %v7474
        %v7491 = vmul.f32 %v7411, %v7475
        %v7492 = vpack.c.bf16 %v7477, %v7476
        %v7493 = vpack.c.bf16 %v7479, %v7478
        %v7494 = vpack.c.bf16 %v7481, %v7480
        %v7495 = vpack.c.bf16 %v7483, %v7482
        %v7496 = vpack.c.bf16 %v7485, %v7484
        %v7497 = vpack.c.bf16 %v7487, %v7486
        %v7498 = vpack.c.bf16 %v7489, %v7488
        %v7499 = vpack.c.bf16 %v7491, %v7490
        %v7501 = vsel %vm3115, %v7492, 0
        %v7504 = vsel %vm3115, %v7493, 0
        %7506 = vmatprep.subr.bf16.mxu0 0
        %7507 = vmatpush1.bf16.msra.mxu0 %v2813
        %7508 = vmatprep.subr.bf16.mxu0 0
        %7509 = vmatpush1.bf16.msra.mxu0 %v2816
        %7510 = vmatprep.subr.bf16.mxu0 0
        %7511 = vmatpush1.bf16.msra.mxu0 0
        %7512 = vmatprep.subr.bf16.mxu0 0
        %7513 = vmatpush1.bf16.msra.mxu0 0
        %7514 = vmatprep.subr.bf16.mxu0 0
        %7515 = vmatpush1.bf16.msra.mxu0 0
        %7516 = vmatprep.subr.bf16.mxu0 0
        %7517 = vmatpush1.bf16.msra.mxu0 0
        %7518 = vmatprep.subr.bf16.mxu0 0
        %7519 = vmatpush1.bf16.msra.mxu0 0
        %7520 = vmatprep.subr.bf16.mxu0 0
        %7521 = vmatpush1.bf16.msra.mxu0 0
        %7522 = vmatprep.subr.bf16.mxu0 0
        %7523 = vmatpush1.bf16.msra.mxu0 0
        %7524 = vmatprep.subr.bf16.mxu0 0
        %7525 = vmatpush1.bf16.msra.mxu0 0
        %7526 = vmatprep.subr.bf16.mxu0 0
        %7527 = vmatpush1.bf16.msra.mxu0 0
        %7528 = vmatprep.subr.bf16.mxu0 0
        %7529 = vmatpush1.bf16.msra.mxu0 0
        %7530 = vmatprep.subr.bf16.mxu0 0
        %7531 = vmatpush1.bf16.msra.mxu0 0
        %7532 = vmatprep.subr.bf16.mxu0 0
        %7533 = vmatpush1.bf16.msra.mxu0 0
        %7534 = vmatprep.subr.bf16.mxu0 0
        %7535 = vmatpush1.bf16.msra.mxu0 0
        %7536 = vmatprep.subr.bf16.mxu0 0
        %7537 = vmatpush1.bf16.msra.mxu0 0
        %7538 = vmatprep.mubr.bf16.mxu0 0
        %7539 = vmatmul.mubr.bf16.gmra.mrb[0].mxu0 %v7501
        %v7540 = vpop.f32.mrb[0].mxu0
        %v7541 = vadd.f32 0.0, %v7540
        %v7542 = vpop.f32.mrb[0].mxu0
        %v7543 = vpop.f32.mrb[0].mxu0
        %v7544 = vadd.f32 0.0, %v7543
        %v7545 = vpop.f32.mrb[0].mxu0
        %7546 = vmatprep.mubr.bf16.mxu0 0
        %7547 = vmatmul.mubr.bf16.gmra.mrb[0].mxu0 %v7504
        %v7548 = vpop.f32.mrb[0].mxu0
        %v7549 = vadd.f32 0.0, %v7548
        %v7550 = vpop.f32.mrb[0].mxu0
        %v7551 = vpop.f32.mrb[0].mxu0
        %v7552 = vadd.f32 0.0, %v7551
        %v7553 = vpop.f32.mrb[0].mxu0
        %7554 = vdwg.mxu0
        %v7556 = vsel %vm3115, %v7494, 0
        %v7559 = vsel %vm3115, %v7495, 0
        %7561 = vmatprep.subr.bf16.mxu0 0
        %7562 = vmatpush1.bf16.msra.mxu0 %v2819
        %7563 = vmatprep.subr.bf16.mxu0 0
        %7564 = vmatpush1.bf16.msra.mxu0 %v2822
        %7565 = vmatprep.subr.bf16.mxu0 0
        %7566 = vmatpush1.bf16.msra.mxu0 0
        %7567 = vmatprep.subr.bf16.mxu0 0
        %7568 = vmatpush1.bf16.msra.mxu0 0
        %7569 = vmatprep.subr.bf16.mxu0 0
        %7570 = vmatpush1.bf16.msra.mxu0 0
        %7571 = vmatprep.subr.bf16.mxu0 0
        %7572 = vmatpush1.bf16.msra.mxu0 0
        %7573 = vmatprep.subr.bf16.mxu0 0
        %7574 = vmatpush1.bf16.msra.mxu0 0
        %7575 = vmatprep.subr.bf16.mxu0 0
        %7576 = vmatpush1.bf16.msra.mxu0 0
        %7577 = vmatprep.subr.bf16.mxu0 0
        %7578 = vmatpush1.bf16.msra.mxu0 0
        %7579 = vmatprep.subr.bf16.mxu0 0
        %7580 = vmatpush1.bf16.msra.mxu0 0
        %7581 = vmatprep.subr.bf16.mxu0 0
        %7582 = vmatpush1.bf16.msra.mxu0 0
        %7583 = vmatprep.subr.bf16.mxu0 0
        %7584 = vmatpush1.bf16.msra.mxu0 0
        %7585 = vmatprep.subr.bf16.mxu0 0
        %7586 = vmatpush1.bf16.msra.mxu0 0
        %7587 = vmatprep.subr.bf16.mxu0 0
        %7588 = vmatpush1.bf16.msra.mxu0 0
        %7589 = vmatprep.subr.bf16.mxu0 0
        %7590 = vmatpush1.bf16.msra.mxu0 0
        %7591 = vmatprep.subr.bf16.mxu0 0
        %7592 = vmatpush1.bf16.msra.mxu0 0
        %7593 = vmatprep.mubr.bf16.mxu0 0
        %7594 = vmatmul.mubr.bf16.gmra.mrb[0].mxu0 %v7556
        %v7595 = vpop.f32.mrb[0].mxu0
        %v7596 = vadd.f32 0.0, %v7595
        %v7597 = vpop.f32.mrb[0].mxu0
        %v7598 = vpop.f32.mrb[0].mxu0
        %v7599 = vadd.f32 0.0, %v7598
        %v7600 = vpop.f32.mrb[0].mxu0
        %7601 = vmatprep.mubr.bf16.mxu0 0
        %7602 = vmatmul.mubr.bf16.gmra.mrb[0].mxu0 %v7559
        %v7603 = vpop.f32.mrb[0].mxu0
        %v7604 = vadd.f32 0.0, %v7603
        %v7605 = vpop.f32.mrb[0].mxu0
        %v7606 = vpop.f32.mrb[0].mxu0
        %v7607 = vadd.f32 0.0, %v7606
        %v7608 = vpop.f32.mrb[0].mxu0
        %7609 = vdwg.mxu0
        %v7611 = vsel %vm3115, %v7496, 0
        %v7614 = vsel %vm3115, %v7497, 0
        %7616 = vmatprep.subr.bf16.mxu0 0
        %7617 = vmatpush1.bf16.msra.mxu0 %v2825
        %7618 = vmatprep.subr.bf16.mxu0 0
        %7619 = vmatpush1.bf16.msra.mxu0 %v2828
        %7620 = vmatprep.subr.bf16.mxu0 0
        %7621 = vmatpush1.bf16.msra.mxu0 0
        %7622 = vmatprep.subr.bf16.mxu0 0
        %7623 = vmatpush1.bf16.msra.mxu0 0
        %7624 = vmatprep.subr.bf16.mxu0 0
        %7625 = vmatpush1.bf16.msra.mxu0 0
        %7626 = vmatprep.subr.bf16.mxu0 0
        %7627 = vmatpush1.bf16.msra.mxu0 0
        %7628 = vmatprep.subr.bf16.mxu0 0
        %7629 = vmatpush1.bf16.msra.mxu0 0
        %7630 = vmatprep.subr.bf16.mxu0 0
        %7631 = vmatpush1.bf16.msra.mxu0 0
        %7632 = vmatprep.subr.bf16.mxu0 0
        %7633 = vmatpush1.bf16.msra.mxu0 0
        %7634 = vmatprep.subr.bf16.mxu0 0
        %7635 = vmatpush1.bf16.msra.mxu0 0
        %7636 = vmatprep.subr.bf16.mxu0 0
        %7637 = vmatpush1.bf16.msra.mxu0 0
        %7638 = vmatprep.subr.bf16.mxu0 0
        %7639 = vmatpush1.bf16.msra.mxu0 0
        %7640 = vmatprep.subr.bf16.mxu0 0
        %7641 = vmatpush1.bf16.msra.mxu0 0
        %7642 = vmatprep.subr.bf16.mxu0 0
        %7643 = vmatpush1.bf16.msra.mxu0 0
        %7644 = vmatprep.subr.bf16.mxu0 0
        %7645 = vmatpush1.bf16.msra.mxu0 0
        %7646 = vmatprep.subr.bf16.mxu0 0
        %7647 = vmatpush1.bf16.msra.mxu0 0
        %7648 = vmatprep.mubr.bf16.mxu0 0
        %7649 = vmatmul.mubr.bf16.gmra.mrb[0].mxu0 %v7611
        %v7650 = vpop.f32.mrb[0].mxu0
        %v7651 = vadd.f32 0.0, %v7650
        %v7652 = vpop.f32.mrb[0].mxu0
        %v7653 = vpop.f32.mrb[0].mxu0
        %v7654 = vadd.f32 0.0, %v7653
        %v7655 = vpop.f32.mrb[0].mxu0
        %7656 = vmatprep.mubr.bf16.mxu0 0
        %7657 = vmatmul.mubr.bf16.gmra.mrb[0].mxu0 %v7614
        %v7658 = vpop.f32.mrb[0].mxu0
        %v7659 = vadd.f32 0.0, %v7658
        %v7660 = vpop.f32.mrb[0].mxu0
        %v7661 = vpop.f32.mrb[0].mxu0
        %v7662 = vadd.f32 0.0, %v7661
        %v7663 = vpop.f32.mrb[0].mxu0
        %7664 = vdwg.mxu0
        %v7666 = vsel %vm3115, %v7498, 0
        %v7669 = vsel %vm3115, %v7499, 0
        %7671 = vmatprep.subr.bf16.mxu0 0
        %7672 = vmatpush1.bf16.msra.mxu0 %v2831
        %7673 = vmatprep.subr.bf16.mxu0 0
        %7674 = vmatpush1.bf16.msra.mxu0 %v2834
        %7675 = vmatprep.subr.bf16.mxu0 0
        %7676 = vmatpush1.bf16.msra.mxu0 0
        %7677 = vmatprep.subr.bf16.mxu0 0
        %7678 = vmatpush1.bf16.msra.mxu0 0
        %7679 = vmatprep.subr.bf16.mxu0 0
        %7680 = vmatpush1.bf16.msra.mxu0 0
        %7681 = vmatprep.subr.bf16.mxu0 0
        %7682 = vmatpush1.bf16.msra.mxu0 0
        %7683 = vmatprep.subr.bf16.mxu0 0
        %7684 = vmatpush1.bf16.msra.mxu0 0
        %7685 = vmatprep.subr.bf16.mxu0 0
        %7686 = vmatpush1.bf16.msra.mxu0 0
        %7687 = vmatprep.subr.bf16.mxu0 0
        %7688 = vmatpush1.bf16.msra.mxu0 0
        %7689 = vmatprep.subr.bf16.mxu0 0
        %7690 = vmatpush1.bf16.msra.mxu0 0
        %7691 = vmatprep.subr.bf16.mxu0 0
        %7692 = vmatpush1.bf16.msra.mxu0 0
        %7693 = vmatprep.subr.bf16.mxu0 0
        %7694 = vmatpush1.bf16.msra.mxu0 0
        %7695 = vmatprep.subr.bf16.mxu0 0
        %7696 = vmatpush1.bf16.msra.mxu0 0
        %7697 = vmatprep.subr.bf16.mxu0 0
        %7698 = vmatpush1.bf16.msra.mxu0 0
        %7699 = vmatprep.subr.bf16.mxu0 0
        %7700 = vmatpush1.bf16.msra.mxu0 0
        %7701 = vmatprep.subr.bf16.mxu0 0
        %7702 = vmatpush1.bf16.msra.mxu0 0
        %7703 = vmatprep.mubr.bf16.mxu0 0
        %7704 = vmatmul.mubr.bf16.gmra.mrb[0].mxu0 %v7666
        %v7705 = vpop.f32.mrb[0].mxu0
        %v7706 = vadd.f32 0.0, %v7705
        %v7707 = vpop.f32.mrb[0].mxu0
        %v7708 = vpop.f32.mrb[0].mxu0
        %v7709 = vadd.f32 0.0, %v7708
        %v7710 = vpop.f32.mrb[0].mxu0
        %7711 = vmatprep.mubr.bf16.mxu0 0
        %7712 = vmatmul.mubr.bf16.gmra.mrb[0].mxu0 %v7669
        %v7713 = vpop.f32.mrb[0].mxu0
        %v7714 = vadd.f32 0.0, %v7713
        %v7715 = vpop.f32.mrb[0].mxu0
        %v7716 = vpop.f32.mrb[0].mxu0
        %v7717 = vadd.f32 0.0, %v7716
        %v7718 = vpop.f32.mrb[0].mxu0
        %7719 = vdwg.mxu0
        %v7720 = vld [vmem:[#allocation7 + $0x180] sm:$0xff]
        %v7721 = vld [vmem:[#allocation7 + $0x188] sm:$0xf]
        %v7722 = vld [vmem:[#allocation7 + $0x18c] sm:$0xff]
        %v7723 = vld [vmem:[#allocation7 + $0x194] sm:$0xf]
        %v7724 = vld [vmem:[#allocation7 + $0x198] sm:$0xff]
        %v7725 = vld [vmem:[#allocation7 + $0x1a0] sm:$0xf]
        %v7726 = vld [vmem:[#allocation7 + $0x1a4] sm:$0xff]
        %v7727 = vld [vmem:[#allocation7 + $0x1ac] sm:$0xf]
        %v7728 = vld [vmem:[#allocation7 + $0x1b0] sm:$0xff]
        %v7729 = vld [vmem:[#allocation7 + $0x1b8] sm:$0xf]
        %v7730 = vld [vmem:[#allocation7 + $0x1bc] sm:$0xff]
        %v7731 = vld [vmem:[#allocation7 + $0x1c4] sm:$0xf]
        %v7732 = vld [vmem:[#allocation7 + $0x1c8] sm:$0xff]
        %v7733 = vld [vmem:[#allocation7 + $0x1d0] sm:$0xf]
        %v7734 = vld [vmem:[#allocation7 + $0x1d4] sm:$0xff]
        %v7735 = vld [vmem:[#allocation7 + $0x1dc] sm:$0xf]
        %v7736 = vpack.c.bf16 %v7544, %v7541
        %v7737 = vpack.c.bf16 %v7552, %v7549
        %v7738 = vpack.c.bf16 %v7599, %v7596
        %v7739 = vpack.c.bf16 %v7607, %v7604
        %v7740 = vpack.c.bf16 %v7654, %v7651
        %v7741 = vpack.c.bf16 %v7662, %v7659
        %v7742 = vpack.c.bf16 %v7709, %v7706
        %v7743 = vpack.c.bf16 %v7717, %v7714
        %v7760 = vunpack.c.l.b16 %v7720
        %v7761 = vunpack.c.h.b16 %v7720
        %v7762 = vunpack.c.l.b16 %v7721
        %v7763 = vunpack.c.l.b16 %v7722
        %v7764 = vunpack.c.h.b16 %v7722
        %v7765 = vunpack.c.l.b16 %v7723
        %v7766 = vunpack.c.l.b16 %v7724
        %v7767 = vunpack.c.h.b16 %v7724
        %v7768 = vunpack.c.l.b16 %v7725
        %v7769 = vunpack.c.l.b16 %v7726
        %v7770 = vunpack.c.h.b16 %v7726
        %v7771 = vunpack.c.l.b16 %v7727
        %v7772 = vunpack.c.l.b16 %v7728
        %v7773 = vunpack.c.h.b16 %v7728
        %v7774 = vunpack.c.l.b16 %v7729
        %v7775 = vunpack.c.l.b16 %v7730
        %v7776 = vunpack.c.h.b16 %v7730
        %v7777 = vunpack.c.l.b16 %v7731
        %v7778 = vunpack.c.l.b16 %v7732
        %v7779 = vunpack.c.h.b16 %v7732
        %v7780 = vunpack.c.l.b16 %v7733
        %v7781 = vunpack.c.l.b16 %v7734
        %v7782 = vunpack.c.h.b16 %v7734
        %v7783 = vunpack.c.l.b16 %v7735
        %v7784 = vpack.c.b16 %v7763, %v7760
        %v7785 = vpack.c.b16 %v7764, %v7761
        %v7786 = vpack.c.b16 %v7765, %v7762
        %v7787 = vpack.c.b16 %v7769, %v7766
        %v7788 = vpack.c.b16 %v7770, %v7767
        %v7789 = vpack.c.b16 %v7771, %v7768
        %v7790 = vpack.c.b16 %v7775, %v7772
        %v7791 = vpack.c.b16 %v7776, %v7773
        %v7792 = vpack.c.b16 %v7777, %v7774
        %v7793 = vpack.c.b16 %v7781, %v7778
        %v7794 = vpack.c.b16 %v7782, %v7779
        %v7795 = vpack.c.b16 %v7783, %v7780
        %v7809 = vsel %vm2846, %v7736, 0
        %v7812 = vsel %vm2846, %v7737, 0
        %v7815 = vsel %vm2846, %v7738, 0
        %v7818 = vsel %vm2846, %v7739, 0
        %v7821 = vsel %vm2846, %v7740, 0
        %v7824 = vsel %vm2846, %v7741, 0
        %v7827 = vsel %vm2846, %v7742, 0
        %v7830 = vsel %vm2846, %v7743, 0
        %7832 = vmatprep.subr.bf16.mxu0 %v7785
        %7833 = vmatpush1.bf16.msra.mxu0 %v7784
        %7834 = vmatprep.subr.bf16.mxu0 %v7788
        %7835 = vmatpush1.bf16.msra.mxu0 %v7787
        %7836 = vmatprep.subr.bf16.mxu0 %v7791
        %7837 = vmatpush1.bf16.msra.mxu0 %v7790
        %7838 = vmatprep.subr.bf16.mxu0 %v7794
        %7839 = vmatpush1.bf16.msra.mxu0 %v7793
        %7840 = vmatprep.subr.bf16.mxu0 0
        %7841 = vmatpush1.bf16.msra.mxu0 0
        %7842 = vmatprep.subr.bf16.mxu0 0
        %7843 = vmatpush1.bf16.msra.mxu0 0
        %7844 = vmatprep.subr.bf16.mxu0 0
        %7845 = vmatpush1.bf16.msra.mxu0 0
        %7846 = vmatprep.subr.bf16.mxu0 0
        %7847 = vmatpush1.bf16.msra.mxu0 0
        %7848 = vmatprep.subr.bf16.mxu0 0
        %7849 = vmatpush1.bf16.msra.mxu0 0
        %7850 = vmatprep.subr.bf16.mxu0 0
        %7851 = vmatpush1.bf16.msra.mxu0 0
        %7852 = vmatprep.subr.bf16.mxu0 0
        %7853 = vmatpush1.bf16.msra.mxu0 0
        %7854 = vmatprep.subr.bf16.mxu0 0
        %7855 = vmatpush1.bf16.msra.mxu0 0
        %7856 = vmatprep.subr.bf16.mxu0 0
        %7857 = vmatpush1.bf16.msra.mxu0 0
        %7858 = vmatprep.subr.bf16.mxu0 0
        %7859 = vmatpush1.bf16.msra.mxu0 0
        %7860 = vmatprep.subr.bf16.mxu0 0
        %7861 = vmatpush1.bf16.msra.mxu0 0
        %7862 = vmatprep.subr.bf16.mxu0 0
        %7863 = vmatpush1.bf16.msra.mxu0 0
        %7864 = vmatprep.mubr.bf16.mxu0 0
        %7865 = vmatmul.mubr.bf16.gmra.mrb[0].mxu0 %v7809
        %v7866 = vpop.f32.mrb[0].mxu0
        %v7867 = vadd.f32 0.0, %v7866
        %v7868 = vpop.f32.mrb[0].mxu0
        %v7869 = vadd.f32 0.0, %v7868
        %v7870 = vpop.f32.mrb[0].mxu0
        %v7871 = vadd.f32 0.0, %v7870
        %v7872 = vpop.f32.mrb[0].mxu0
        %v7873 = vadd.f32 0.0, %v7872
        %7874 = vmatprep.mubr.bf16.mxu0 0
        %7875 = vmatmul.mubr.bf16.gmra.mrb[0].mxu0 %v7812
        %v7876 = vpop.f32.mrb[0].mxu0
        %v7877 = vadd.f32 0.0, %v7876
        %v7878 = vpop.f32.mrb[0].mxu0
        %v7879 = vadd.f32 0.0, %v7878
        %v7880 = vpop.f32.mrb[0].mxu0
        %v7881 = vadd.f32 0.0, %v7880
        %v7882 = vpop.f32.mrb[0].mxu0
        %v7883 = vadd.f32 0.0, %v7882
        %7884 = vmatprep.mubr.bf16.mxu0 0
        %7885 = vmatmul.mubr.bf16.gmra.mrb[0].mxu0 %v7815
        %v7886 = vpop.f32.mrb[0].mxu0
        %v7887 = vadd.f32 0.0, %v7886
        %v7888 = vpop.f32.mrb[0].mxu0
        %v7889 = vadd.f32 0.0, %v7888
        %v7890 = vpop.f32.mrb[0].mxu0
        %v7891 = vadd.f32 0.0, %v7890
        %v7892 = vpop.f32.mrb[0].mxu0
        %v7893 = vadd.f32 0.0, %v7892
        %7894 = vmatprep.mubr.bf16.mxu0 0
        %7895 = vmatmul.mubr.bf16.gmra.mrb[0].mxu0 %v7818
        %v7896 = vpop.f32.mrb[0].mxu0
        %v7897 = vadd.f32 0.0, %v7896
        %v7898 = vpop.f32.mrb[0].mxu0
        %v7899 = vadd.f32 0.0, %v7898
        %v7900 = vpop.f32.mrb[0].mxu0
        %v7901 = vadd.f32 0.0, %v7900
        %v7902 = vpop.f32.mrb[0].mxu0
        %v7903 = vadd.f32 0.0, %v7902
        %7904 = vmatprep.mubr.bf16.mxu0 0
        %7905 = vmatmul.mubr.bf16.gmra.mrb[0].mxu0 %v7821
        %v7906 = vpop.f32.mrb[0].mxu0
        %v7907 = vadd.f32 0.0, %v7906
        %v7908 = vpop.f32.mrb[0].mxu0
        %v7909 = vadd.f32 0.0, %v7908
        %v7910 = vpop.f32.mrb[0].mxu0
        %v7911 = vadd.f32 0.0, %v7910
        %v7912 = vpop.f32.mrb[0].mxu0
        %v7913 = vadd.f32 0.0, %v7912
        %7914 = vmatprep.mubr.bf16.mxu0 0
        %7915 = vmatmul.mubr.bf16.gmra.mrb[0].mxu0 %v7824
        %v7916 = vpop.f32.mrb[0].mxu0
        %v7917 = vadd.f32 0.0, %v7916
        %v7918 = vpop.f32.mrb[0].mxu0
        %v7919 = vadd.f32 0.0, %v7918
        %v7920 = vpop.f32.mrb[0].mxu0
        %v7921 = vadd.f32 0.0, %v7920
        %v7922 = vpop.f32.mrb[0].mxu0
        %v7923 = vadd.f32 0.0, %v7922
        %7924 = vmatprep.mubr.bf16.mxu0 0
        %7925 = vmatmul.mubr.bf16.gmra.mrb[0].mxu0 %v7827
        %v7926 = vpop.f32.mrb[0].mxu0
        %v7927 = vadd.f32 0.0, %v7926
        %v7928 = vpop.f32.mrb[0].mxu0
        %v7929 = vadd.f32 0.0, %v7928
        %v7930 = vpop.f32.mrb[0].mxu0
        %v7931 = vadd.f32 0.0, %v7930
        %v7932 = vpop.f32.mrb[0].mxu0
        %v7933 = vadd.f32 0.0, %v7932
        %7934 = vmatprep.mubr.bf16.mxu0 0
        %7935 = vmatmul.mubr.bf16.gmra.mrb[0].mxu0 %v7830
        %v7936 = vpop.f32.mrb[0].mxu0
        %v7937 = vadd.f32 0.0, %v7936
        %v7938 = vpop.f32.mrb[0].mxu0
        %v7939 = vadd.f32 0.0, %v7938
        %v7940 = vpop.f32.mrb[0].mxu0
        %v7941 = vadd.f32 0.0, %v7940
        %v7942 = vpop.f32.mrb[0].mxu0
        %v7943 = vadd.f32 0.0, %v7942
        %7944 = vdwg.mxu0
        %7945 = vmatprep.subr.bf16.mxu0 0
        %7946 = vmatpush1.bf16.msra.mxu0 %v7786
        %7947 = vmatprep.subr.bf16.mxu0 0
        %7948 = vmatpush1.bf16.msra.mxu0 %v7789
        %7949 = vmatprep.subr.bf16.mxu0 0
        %7950 = vmatpush1.bf16.msra.mxu0 %v7792
        %7951 = vmatprep.subr.bf16.mxu0 0
        %7952 = vmatpush1.bf16.msra.mxu0 %v7795
        %7953 = vmatprep.subr.bf16.mxu0 0
        %7954 = vmatpush1.bf16.msra.mxu0 0
        %7955 = vmatprep.subr.bf16.mxu0 0
        %7956 = vmatpush1.bf16.msra.mxu0 0
        %7957 = vmatprep.subr.bf16.mxu0 0
        %7958 = vmatpush1.bf16.msra.mxu0 0
        %7959 = vmatprep.subr.bf16.mxu0 0
        %7960 = vmatpush1.bf16.msra.mxu0 0
        %7961 = vmatprep.subr.bf16.mxu0 0
        %7962 = vmatpush1.bf16.msra.mxu0 0
        %7963 = vmatprep.subr.bf16.mxu0 0
        %7964 = vmatpush1.bf16.msra.mxu0 0
        %7965 = vmatprep.subr.bf16.mxu0 0
        %7966 = vmatpush1.bf16.msra.mxu0 0
        %7967 = vmatprep.subr.bf16.mxu0 0
        %7968 = vmatpush1.bf16.msra.mxu0 0
        %7969 = vmatprep.subr.bf16.mxu0 0
        %7970 = vmatpush1.bf16.msra.mxu0 0
        %7971 = vmatprep.subr.bf16.mxu0 0
        %7972 = vmatpush1.bf16.msra.mxu0 0
        %7973 = vmatprep.subr.bf16.mxu0 0
        %7974 = vmatpush1.bf16.msra.mxu0 0
        %7975 = vmatprep.subr.bf16.mxu0 0
        %7976 = vmatpush1.bf16.msra.mxu0 0
        %7977 = vmatprep.mubr.bf16.mxu0 0
        %7978 = vmatmul.mubr.bf16.gmra.mrb[0].mxu0 %v7809
        %v7979 = vpop.f32.mrb[0].mxu0
        %v7980 = vadd.f32 0.0, %v7979
        %v7981 = vpop.f32.mrb[0].mxu0
        %v7982 = vpop.f32.mrb[0].mxu0
        %v7983 = vadd.f32 0.0, %v7982
        %v7984 = vpop.f32.mrb[0].mxu0
        %7985 = vmatprep.mubr.bf16.mxu0 0
        %7986 = vmatmul.mubr.bf16.gmra.mrb[0].mxu0 %v7812
        %v7987 = vpop.f32.mrb[0].mxu0
        %v7988 = vadd.f32 0.0, %v7987
        %v7989 = vpop.f32.mrb[0].mxu0
        %v7990 = vpop.f32.mrb[0].mxu0
        %v7991 = vadd.f32 0.0, %v7990
        %v7992 = vpop.f32.mrb[0].mxu0
        %7993 = vmatprep.mubr.bf16.mxu0 0
        %7994 = vmatmul.mubr.bf16.gmra.mrb[0].mxu0 %v7815
        %v7995 = vpop.f32.mrb[0].mxu0
        %v7996 = vadd.f32 0.0, %v7995
        %v7997 = vpop.f32.mrb[0].mxu0
        %v7998 = vpop.f32.mrb[0].mxu0
        %v7999 = vadd.f32 0.0, %v7998
        %v8000 = vpop.f32.mrb[0].mxu0
        %8001 = vmatprep.mubr.bf16.mxu0 0
        %8002 = vmatmul.mubr.bf16.gmra.mrb[0].mxu0 %v7818
        %v8003 = vpop.f32.mrb[0].mxu0
        %v8004 = vadd.f32 0.0, %v8003
        %v8005 = vpop.f32.mrb[0].mxu0
        %v8006 = vpop.f32.mrb[0].mxu0
        %v8007 = vadd.f32 0.0, %v8006
        %v8008 = vpop.f32.mrb[0].mxu0
        %8009 = vmatprep.mubr.bf16.mxu0 0
        %8010 = vmatmul.mubr.bf16.gmra.mrb[0].mxu0 %v7821
        %v8011 = vpop.f32.mrb[0].mxu0
        %v8012 = vadd.f32 0.0, %v8011
        %v8013 = vpop.f32.mrb[0].mxu0
        %v8014 = vpop.f32.mrb[0].mxu0
        %v8015 = vadd.f32 0.0, %v8014
        %v8016 = vpop.f32.mrb[0].mxu0
        %8017 = vmatprep.mubr.bf16.mxu0 0
        %8018 = vmatmul.mubr.bf16.gmra.mrb[0].mxu0 %v7824
        %v8019 = vpop.f32.mrb[0].mxu0
        %v8020 = vadd.f32 0.0, %v8019
        %v8021 = vpop.f32.mrb[0].mxu0
        %v8022 = vpop.f32.mrb[0].mxu0
        %v8023 = vadd.f32 0.0, %v8022
        %v8024 = vpop.f32.mrb[0].mxu0
        %8025 = vmatprep.mubr.bf16.mxu0 0
        %8026 = vmatmul.mubr.bf16.gmra.mrb[0].mxu0 %v7827
        %v8027 = vpop.f32.mrb[0].mxu0
        %v8028 = vadd.f32 0.0, %v8027
        %v8029 = vpop.f32.mrb[0].mxu0
        %v8030 = vpop.f32.mrb[0].mxu0
        %v8031 = vadd.f32 0.0, %v8030
        %v8032 = vpop.f32.mrb[0].mxu0
        %8033 = vmatprep.mubr.bf16.mxu0 0
        %8034 = vmatmul.mubr.bf16.gmra.mrb[0].mxu0 %v7830
        %v8035 = vpop.f32.mrb[0].mxu0
        %v8036 = vadd.f32 0.0, %v8035
        %v8037 = vpop.f32.mrb[0].mxu0
        %v8038 = vpop.f32.mrb[0].mxu0
        %v8039 = vadd.f32 0.0, %v8038
        %v8040 = vpop.f32.mrb[0].mxu0
        %8041 = vdwg.mxu0
        %v8042 = vadd.f32 %v7008, %v7867
        %v8043 = vadd.f32 %v7009, %v7869
        %v8044 = vadd.f32 %v7010, %v7980
        %v8045 = vadd.f32 %v7011, %v7871
        %v8046 = vadd.f32 %v7012, %v7873
        %v8047 = vadd.f32 %v7013, %v7983
        %v8048 = vadd.f32 %v7014, %v7877
        %v8049 = vadd.f32 %v7015, %v7879
        %v8050 = vadd.f32 %v7016, %v7988
        %v8051 = vadd.f32 %v7017, %v7881
        %v8052 = vadd.f32 %v7018, %v7883
        %v8053 = vadd.f32 %v7019, %v7991
        %v8054 = vadd.f32 %v7020, %v7887
        %v8055 = vadd.f32 %v7021, %v7889
        %v8056 = vadd.f32 %v7022, %v7996
        %v8057 = vadd.f32 %v7023, %v7891
        %v8058 = vadd.f32 %v7024, %v7893
        %v8059 = vadd.f32 %v7025, %v7999
        %v8060 = vadd.f32 %v7026, %v7897
        %v8061 = vadd.f32 %v7027, %v7899
        %v8062 = vadd.f32 %v7028, %v8004
        %v8063 = vadd.f32 %v7029, %v7901
        %v8064 = vadd.f32 %v7030, %v7903
        %v8065 = vadd.f32 %v7031, %v8007
        %v8066 = vadd.f32 %v7032, %v7907
        %v8067 = vadd.f32 %v7033, %v7909
        %v8068 = vadd.f32 %v7034, %v8012
        %v8069 = vadd.f32 %v7035, %v7911
        %v8070 = vadd.f32 %v7036, %v7913
        %v8071 = vadd.f32 %v7037, %v8015
        %v8072 = vadd.f32 %v7038, %v7917
        %v8073 = vadd.f32 %v7039, %v7919
        %v8074 = vadd.f32 %v7040, %v8020
        %v8075 = vadd.f32 %v7041, %v7921
        %v8076 = vadd.f32 %v7042, %v7923
        %v8077 = vadd.f32 %v7043, %v8023
        %v8078 = vadd.f32 %v7044, %v7927
        %v8079 = vadd.f32 %v7045, %v7929
        %v8080 = vadd.f32 %v7046, %v8028
        %v8081 = vadd.f32 %v7047, %v7931
        %v8082 = vadd.f32 %v7048, %v7933
        %v8083 = vadd.f32 %v7049, %v8031
        %v8084 = vadd.f32 %v7050, %v7937
        %v8085 = vadd.f32 %v7051, %v7939
        %v8086 = vadd.f32 %v7052, %v8036
        %v8087 = vadd.f32 %v7053, %v7941
        %v8088 = vadd.f32 %v7054, %v7943
        %v8089 = vadd.f32 %v7055, %v8039
        %8092 = vrot.lane.b32.xlu0 %v2765, 64
        %v8093 = vpop.permute.xlu0 %8092
        %8094 = vrot.lane.b32.xlu0 %v2768, 64
        %v8095 = vpop.permute.xlu0 %8094
        %8098 = vrot.lane.b32.xlu0 %v2789, 64
        %v8099 = vpop.permute.xlu0 %8098
        %8100 = vrot.lane.b32.xlu0 %v2792, 64
        %v8101 = vpop.permute.xlu0 %8100
        %v8103 = vsel %vm2846, %v8093, 0
        %v8106 = vsel %vm2846, %v8095, 0
        %v8109 = vsel %vm2846, %v8099, 0
        %v8112 = vsel %vm2846, %v8101, 0
        %8114 = vmatprep.subr.bf16.mxu0 0
        %8115 = vmatpush1.bf16.xpose.msra.mxu0 %v8109
        %8116 = vmatprep.subr.bf16.mxu0 0
        %8117 = vmatpush1.bf16.xpose.msra.mxu0 %v8112
        %8118 = vmatprep.subr.bf16.mxu0 0
        %8119 = vmatpush1.bf16.xpose.msra.mxu0 0
        %8120 = vmatprep.subr.bf16.mxu0 0
        %8121 = vmatpush1.bf16.xpose.msra.mxu0 0
        %8122 = vmatprep.subr.bf16.mxu0 0
        %8123 = vmatpush1.bf16.xpose.msra.mxu0 0
        %8124 = vmatprep.subr.bf16.mxu0 0
        %8125 = vmatpush1.bf16.xpose.msra.mxu0 0
        %8126 = vmatprep.subr.bf16.mxu0 0
        %8127 = vmatpush1.bf16.xpose.msra.mxu0 0
        %8128 = vmatprep.subr.bf16.mxu0 0
        %8129 = vmatpush1.bf16.xpose.msra.mxu0 0
        %8130 = vmatprep.subr.bf16.mxu0 0
        %8131 = vmatpush1.bf16.xpose.msra.mxu0 0
        %8132 = vmatprep.subr.bf16.mxu0 0
        %8133 = vmatpush1.bf16.xpose.msra.mxu0 0
        %8134 = vmatprep.subr.bf16.mxu0 0
        %8135 = vmatpush1.bf16.xpose.msra.mxu0 0
        %8136 = vmatprep.subr.bf16.mxu0 0
        %8137 = vmatpush1.bf16.xpose.msra.mxu0 0
        %8138 = vmatprep.subr.bf16.mxu0 0
        %8139 = vmatpush1.bf16.xpose.msra.mxu0 0
        %8140 = vmatprep.subr.bf16.mxu0 0
        %8141 = vmatpush1.bf16.xpose.msra.mxu0 0
        %8142 = vmatprep.subr.bf16.mxu0 0
        %8143 = vmatpush1.bf16.xpose.msra.mxu0 0
        %8144 = vmatprep.subr.bf16.mxu0 0
        %8145 = vmatpush1.bf16.xpose.msra.mxu0 0
        %8146 = vmatprep.mubr.bf16.mxu0 0
        %8147 = vmatmul.mubr.bf16.gmra.mrb[0].mxu0 %v8103
        %v8148 = vpop.f32.mrb[0].mxu0
        %v8149 = vadd.f32 0.0, %v8148
        %v8150 = vpop.f32.mrb[0].mxu0
        %v8151 = vpop.f32.mrb[0].mxu0
        %v8152 = vadd.f32 0.0, %v8151
        %v8153 = vpop.f32.mrb[0].mxu0
        %8154 = vmatprep.mubr.bf16.mxu0 0
        %8155 = vmatmul.mubr.bf16.gmra.mrb[0].mxu0 %v8106
        %v8156 = vpop.f32.mrb[0].mxu0
        %v8157 = vadd.f32 0.0, %v8156
        %v8158 = vpop.f32.mrb[0].mxu0
        %v8159 = vpop.f32.mrb[0].mxu0
        %v8160 = vadd.f32 0.0, %v8159
        %v8161 = vpop.f32.mrb[0].mxu0
        %8162 = vdwg.mxu0
        %8165 = vrot.lane.b32.xlu0 %v2771, 64
        %v8166 = vpop.permute.xlu0 %8165
        %8167 = vrot.lane.b32.xlu0 %v2774, 64
        %v8168 = vpop.permute.xlu0 %8167
        %8171 = vrot.lane.b32.xlu0 %v2795, 64
        %v8172 = vpop.permute.xlu0 %8171
        %8173 = vrot.lane.b32.xlu0 %v2798, 64
        %v8174 = vpop.permute.xlu0 %8173
        %v8176 = vsel %vm2846, %v8166, 0
        %v8179 = vsel %vm2846, %v8168, 0
        %v8182 = vsel %vm2846, %v8172, 0
        %v8185 = vsel %vm2846, %v8174, 0
        %8187 = vmatprep.subr.bf16.mxu0 0
        %8188 = vmatpush1.bf16.xpose.msra.mxu0 %v8182
        %8189 = vmatprep.subr.bf16.mxu0 0
        %8190 = vmatpush1.bf16.xpose.msra.mxu0 %v8185
        %8191 = vmatprep.subr.bf16.mxu0 0
        %8192 = vmatpush1.bf16.xpose.msra.mxu0 0
        %8193 = vmatprep.subr.bf16.mxu0 0
        %8194 = vmatpush1.bf16.xpose.msra.mxu0 0
        %8195 = vmatprep.subr.bf16.mxu0 0
        %8196 = vmatpush1.bf16.xpose.msra.mxu0 0
        %8197 = vmatprep.subr.bf16.mxu0 0
        %8198 = vmatpush1.bf16.xpose.msra.mxu0 0
        %8199 = vmatprep.subr.bf16.mxu0 0
        %8200 = vmatpush1.bf16.xpose.msra.mxu0 0
        %8201 = vmatprep.subr.bf16.mxu0 0
        %8202 = vmatpush1.bf16.xpose.msra.mxu0 0
        %8203 = vmatprep.subr.bf16.mxu0 0
        %8204 = vmatpush1.bf16.xpose.msra.mxu0 0
        %8205 = vmatprep.subr.bf16.mxu0 0
        %8206 = vmatpush1.bf16.xpose.msra.mxu0 0
        %8207 = vmatprep.subr.bf16.mxu0 0
        %8208 = vmatpush1.bf16.xpose.msra.mxu0 0
        %8209 = vmatprep.subr.bf16.mxu0 0
        %8210 = vmatpush1.bf16.xpose.msra.mxu0 0
        %8211 = vmatprep.subr.bf16.mxu0 0
        %8212 = vmatpush1.bf16.xpose.msra.mxu0 0
        %8213 = vmatprep.subr.bf16.mxu0 0
        %8214 = vmatpush1.bf16.xpose.msra.mxu0 0
        %8215 = vmatprep.subr.bf16.mxu0 0
        %8216 = vmatpush1.bf16.xpose.msra.mxu0 0
        %8217 = vmatprep.subr.bf16.mxu0 0
        %8218 = vmatpush1.bf16.xpose.msra.mxu0 0
        %8219 = vmatprep.mubr.bf16.mxu0 0
        %8220 = vmatmul.mubr.bf16.gmra.mrb[0].mxu0 %v8176
        %v8221 = vpop.f32.mrb[0].mxu0
        %v8222 = vadd.f32 0.0, %v8221
        %v8223 = vpop.f32.mrb[0].mxu0
        %v8224 = vpop.f32.mrb[0].mxu0
        %v8225 = vadd.f32 0.0, %v8224
        %v8226 = vpop.f32.mrb[0].mxu0
        %8227 = vmatprep.mubr.bf16.mxu0 0
        %8228 = vmatmul.mubr.bf16.gmra.mrb[0].mxu0 %v8179
        %v8229 = vpop.f32.mrb[0].mxu0
        %v8230 = vadd.f32 0.0, %v8229
        %v8231 = vpop.f32.mrb[0].mxu0
        %v8232 = vpop.f32.mrb[0].mxu0
        %v8233 = vadd.f32 0.0, %v8232
        %v8234 = vpop.f32.mrb[0].mxu0
        %8235 = vdwg.mxu0
        %8238 = vrot.lane.b32.xlu0 %v2777, 64
        %v8239 = vpop.permute.xlu0 %8238
        %8240 = vrot.lane.b32.xlu0 %v2780, 64
        %v8241 = vpop.permute.xlu0 %8240
        %8244 = vrot.lane.b32.xlu0 %v2801, 64
        %v8245 = vpop.permute.xlu0 %8244
        %8246 = vrot.lane.b32.xlu0 %v2804, 64
        %v8247 = vpop.permute.xlu0 %8246
        %v8249 = vsel %vm2846, %v8239, 0
        %v8252 = vsel %vm2846, %v8241, 0
        %v8255 = vsel %vm2846, %v8245, 0
        %v8258 = vsel %vm2846, %v8247, 0
        %8260 = vmatprep.subr.bf16.mxu0 0
        %8261 = vmatpush1.bf16.xpose.msra.mxu0 %v8255
        %8262 = vmatprep.subr.bf16.mxu0 0
        %8263 = vmatpush1.bf16.xpose.msra.mxu0 %v8258
        %8264 = vmatprep.subr.bf16.mxu0 0
        %8265 = vmatpush1.bf16.xpose.msra.mxu0 0
        %8266 = vmatprep.subr.bf16.mxu0 0
        %8267 = vmatpush1.bf16.xpose.msra.mxu0 0
        %8268 = vmatprep.subr.bf16.mxu0 0
        %8269 = vmatpush1.bf16.xpose.msra.mxu0 0
        %8270 = vmatprep.subr.bf16.mxu0 0
        %8271 = vmatpush1.bf16.xpose.msra.mxu0 0
        %8272 = vmatprep.subr.bf16.mxu0 0
        %8273 = vmatpush1.bf16.xpose.msra.mxu0 0
        %8274 = vmatprep.subr.bf16.mxu0 0
        %8275 = vmatpush1.bf16.xpose.msra.mxu0 0
        %8276 = vmatprep.subr.bf16.mxu0 0
        %8277 = vmatpush1.bf16.xpose.msra.mxu0 0
        %8278 = vmatprep.subr.bf16.mxu0 0
        %8279 = vmatpush1.bf16.xpose.msra.mxu0 0
        %8280 = vmatprep.subr.bf16.mxu0 0
        %8281 = vmatpush1.bf16.xpose.msra.mxu0 0
        %8282 = vmatprep.subr.bf16.mxu0 0
        %8283 = vmatpush1.bf16.xpose.msra.mxu0 0
        %8284 = vmatprep.subr.bf16.mxu0 0
        %8285 = vmatpush1.bf16.xpose.msra.mxu0 0
        %8286 = vmatprep.subr.bf16.mxu0 0
        %8287 = vmatpush1.bf16.xpose.msra.mxu0 0
        %8288 = vmatprep.subr.bf16.mxu0 0
        %8289 = vmatpush1.bf16.xpose.msra.mxu0 0
        %8290 = vmatprep.subr.bf16.mxu0 0
        %8291 = vmatpush1.bf16.xpose.msra.mxu0 0
        %8292 = vmatprep.mubr.bf16.mxu0 0
        %8293 = vmatmul.mubr.bf16.gmra.mrb[0].mxu0 %v8249
        %v8294 = vpop.f32.mrb[0].mxu0
        %v8295 = vadd.f32 0.0, %v8294
        %v8296 = vpop.f32.mrb[0].mxu0
        %v8297 = vpop.f32.mrb[0].mxu0
        %v8298 = vadd.f32 0.0, %v8297
        %v8299 = vpop.f32.mrb[0].mxu0
        %8300 = vmatprep.mubr.bf16.mxu0 0
        %8301 = vmatmul.mubr.bf16.gmra.mrb[0].mxu0 %v8252
        %v8302 = vpop.f32.mrb[0].mxu0
        %v8303 = vadd.f32 0.0, %v8302
        %v8304 = vpop.f32.mrb[0].mxu0
        %v8305 = vpop.f32.mrb[0].mxu0
        %v8306 = vadd.f32 0.0, %v8305
        %v8307 = vpop.f32.mrb[0].mxu0
        %8308 = vdwg.mxu0
        %8311 = vrot.lane.b32.xlu0 %v2783, 64
        %v8312 = vpop.permute.xlu0 %8311
        %8313 = vrot.lane.b32.xlu0 %v2786, 64
        %v8314 = vpop.permute.xlu0 %8313
        %8317 = vrot.lane.b32.xlu0 %v2807, 64
        %v8318 = vpop.permute.xlu0 %8317
        %8319 = vrot.lane.b32.xlu0 %v2810, 64
        %v8320 = vpop.permute.xlu0 %8319
        %v8322 = vsel %vm2846, %v8312, 0
        %v8325 = vsel %vm2846, %v8314, 0
        %v8328 = vsel %vm2846, %v8318, 0
        %v8331 = vsel %vm2846, %v8320, 0
        %8333 = vmatprep.subr.bf16.mxu0 0
        %8334 = vmatpush1.bf16.xpose.msra.mxu0 %v8328
        %8335 = vmatprep.subr.bf16.mxu0 0
        %8336 = vmatpush1.bf16.xpose.msra.mxu0 %v8331
        %8337 = vmatprep.subr.bf16.mxu0 0
        %8338 = vmatpush1.bf16.xpose.msra.mxu0 0
        %8339 = vmatprep.subr.bf16.mxu0 0
        %8340 = vmatpush1.bf16.xpose.msra.mxu0 0
        %8341 = vmatprep.subr.bf16.mxu0 0
        %8342 = vmatpush1.bf16.xpose.msra.mxu0 0
        %8343 = vmatprep.subr.bf16.mxu0 0
        %8344 = vmatpush1.bf16.xpose.msra.mxu0 0
        %8345 = vmatprep.subr.bf16.mxu0 0
        %8346 = vmatpush1.bf16.xpose.msra.mxu0 0
        %8347 = vmatprep.subr.bf16.mxu0 0
        %8348 = vmatpush1.bf16.xpose.msra.mxu0 0
        %8349 = vmatprep.subr.bf16.mxu0 0
        %8350 = vmatpush1.bf16.xpose.msra.mxu0 0
        %8351 = vmatprep.subr.bf16.mxu0 0
        %8352 = vmatpush1.bf16.xpose.msra.mxu0 0
        %8353 = vmatprep.subr.bf16.mxu0 0
        %8354 = vmatpush1.bf16.xpose.msra.mxu0 0
        %8355 = vmatprep.subr.bf16.mxu0 0
        %8356 = vmatpush1.bf16.xpose.msra.mxu0 0
        %8357 = vmatprep.subr.bf16.mxu0 0
        %8358 = vmatpush1.bf16.xpose.msra.mxu0 0
        %8359 = vmatprep.subr.bf16.mxu0 0
        %8360 = vmatpush1.bf16.xpose.msra.mxu0 0
        %8361 = vmatprep.subr.bf16.mxu0 0
        %8362 = vmatpush1.bf16.xpose.msra.mxu0 0
        %8363 = vmatprep.subr.bf16.mxu0 0
        %8364 = vmatpush1.bf16.xpose.msra.mxu0 0
        %8365 = vmatprep.mubr.bf16.mxu0 0
        %8366 = vmatmul.mubr.bf16.gmra.mrb[0].mxu0 %v8322
        %v8367 = vpop.f32.mrb[0].mxu0
        %v8368 = vadd.f32 0.0, %v8367
        %v8369 = vpop.f32.mrb[0].mxu0
        %v8370 = vpop.f32.mrb[0].mxu0
        %v8371 = vadd.f32 0.0, %v8370
        %v8372 = vpop.f32.mrb[0].mxu0
        %8373 = vmatprep.mubr.bf16.mxu0 0
        %8374 = vmatmul.mubr.bf16.gmra.mrb[0].mxu0 %v8325
        %v8375 = vpop.f32.mrb[0].mxu0
        %v8376 = vadd.f32 0.0, %v8375
        %v8377 = vpop.f32.mrb[0].mxu0
        %v8378 = vpop.f32.mrb[0].mxu0
        %v8379 = vadd.f32 0.0, %v8378
        %v8380 = vpop.f32.mrb[0].mxu0
        %8381 = vdwg.mxu0
        %v8382 = vsel %vm3095, %v8149, -inf
        %v8383 = vsel %vm3096, %v8152, -inf
        %v8384 = vsel %vm3097, %v8157, -inf
        %v8385 = vsel %vm3098, %v8160, -inf
        %v8386 = vsel %vm3095, %v8222, -inf
        %v8387 = vsel %vm3096, %v8225, -inf
        %v8388 = vsel %vm3097, %v8230, -inf
        %v8389 = vsel %vm3098, %v8233, -inf
        %v8390 = vsel %vm3095, %v8295, -inf
        %v8391 = vsel %vm3096, %v8298, -inf
        %v8392 = vsel %vm3097, %v8303, -inf
        %v8393 = vsel %vm3098, %v8306, -inf
        %v8394 = vsel %vm3095, %v8368, -inf
        %v8395 = vsel %vm3096, %v8371, -inf
        %v8396 = vsel %vm3097, %v8376, -inf
        %v8397 = vsel %vm3098, %v8379, -inf
        %v8398 = vsel %vm3115, %v8382, -inf
        %8399 = vmax.xlane.f32.xlu0 %v8398
        %v8400 = vpop.xlane.xlu0 %8399
        %v8401 = vsel %vm3115, %v8383, -inf
        %8402 = vmax.xlane.f32.xlu0 %v8401
        %v8403 = vpop.xlane.xlu0 %8402
        %v8404 = vsel %vm3115, %v8384, -inf
        %8405 = vmax.xlane.f32.xlu0 %v8404
        %v8406 = vpop.xlane.xlu0 %8405
        %v8407 = vsel %vm3115, %v8385, -inf
        %8408 = vmax.xlane.f32.xlu0 %v8407
        %v8409 = vpop.xlane.xlu0 %8408
        %v8410 = vsel %vm3115, %v8386, -inf
        %8411 = vmax.xlane.f32.xlu0 %v8410
        %v8412 = vpop.xlane.xlu0 %8411
        %v8413 = vsel %vm3115, %v8387, -inf
        %8414 = vmax.xlane.f32.xlu0 %v8413
        %v8415 = vpop.xlane.xlu0 %8414
        %v8416 = vsel %vm3115, %v8388, -inf
        %8417 = vmax.xlane.f32.xlu0 %v8416
        %v8418 = vpop.xlane.xlu0 %8417
        %v8419 = vsel %vm3115, %v8389, -inf
        %8420 = vmax.xlane.f32.xlu0 %v8419
        %v8421 = vpop.xlane.xlu0 %8420
        %v8422 = vsel %vm3115, %v8390, -inf
        %8423 = vmax.xlane.f32.xlu0 %v8422
        %v8424 = vpop.xlane.xlu0 %8423
        %v8425 = vsel %vm3115, %v8391, -inf
        %8426 = vmax.xlane.f32.xlu0 %v8425
        %v8427 = vpop.xlane.xlu0 %8426
        %v8428 = vsel %vm3115, %v8392, -inf
        %8429 = vmax.xlane.f32.xlu0 %v8428
        %v8430 = vpop.xlane.xlu0 %8429
        %v8431 = vsel %vm3115, %v8393, -inf
        %8432 = vmax.xlane.f32.xlu0 %v8431
        %v8433 = vpop.xlane.xlu0 %8432
        %v8434 = vsel %vm3115, %v8394, -inf
        %8435 = vmax.xlane.f32.xlu0 %v8434
        %v8436 = vpop.xlane.xlu0 %8435
        %v8437 = vsel %vm3115, %v8395, -inf
        %8438 = vmax.xlane.f32.xlu0 %v8437
        %v8439 = vpop.xlane.xlu0 %8438
        %v8440 = vsel %vm3115, %v8396, -inf
        %8441 = vmax.xlane.f32.xlu0 %v8440
        %v8442 = vpop.xlane.xlu0 %8441
        %v8443 = vsel %vm3115, %v8397, -inf
        %8444 = vmax.xlane.f32.xlu0 %v8443
        %v8445 = vpop.xlane.xlu0 %8444
        %v8446 = vsub.f32 %v8382, %v8400
        %v8447 = vsub.f32 %v8383, %v8403
        %v8448 = vsub.f32 %v8384, %v8406
        %v8449 = vsub.f32 %v8385, %v8409
        %v8450 = vsub.f32 %v8386, %v8412
        %v8451 = vsub.f32 %v8387, %v8415
        %v8452 = vsub.f32 %v8388, %v8418
        %v8453 = vsub.f32 %v8389, %v8421
        %v8454 = vsub.f32 %v8390, %v8424
        %v8455 = vsub.f32 %v8391, %v8427
        %v8456 = vsub.f32 %v8392, %v8430
        %v8457 = vsub.f32 %v8393, %v8433
        %v8458 = vsub.f32 %v8394, %v8436
        %v8459 = vsub.f32 %v8395, %v8439
        %v8460 = vsub.f32 %v8396, %v8442
        %v8461 = vsub.f32 %v8397, %v8445
        %v8462 = vmul.f32 %v8446, 1.442695
        %v8463 = vpow.pop %v8462
        %v8464 = vmul.f32 %v8447, 1.442695
        %v8465 = vpow.pop %v8464
        %v8466 = vmul.f32 %v8448, 1.442695
        %v8467 = vpow.pop %v8466
        %v8468 = vmul.f32 %v8449, 1.442695
        %v8469 = vpow.pop %v8468
        %v8470 = vmul.f32 %v8450, 1.442695
        %v8471 = vpow.pop %v8470
        %v8472 = vmul.f32 %v8451, 1.442695
        %v8473 = vpow.pop %v8472
        %v8474 = vmul.f32 %v8452, 1.442695
        %v8475 = vpow.pop %v8474
        %v8476 = vmul.f32 %v8453, 1.442695
        %v8477 = vpow.pop %v8476
        %v8478 = vmul.f32 %v8454, 1.442695
        %v8479 = vpow.pop %v8478
        %v8480 = vmul.f32 %v8455, 1.442695
        %v8481 = vpow.pop %v8480
        %v8482 = vmul.f32 %v8456, 1.442695
        %v8483 = vpow.pop %v8482
        %v8484 = vmul.f32 %v8457, 1.442695
        %v8485 = vpow.pop %v8484
        %v8486 = vmul.f32 %v8458, 1.442695
        %v8487 = vpow.pop %v8486
        %v8488 = vmul.f32 %v8459, 1.442695
        %v8489 = vpow.pop %v8488
        %v8490 = vmul.f32 %v8460, 1.442695
        %v8491 = vpow.pop %v8490
        %v8492 = vmul.f32 %v8461, 1.442695
        %v8493 = vpow.pop %v8492
        %v8494 = vsel %vm3115, %v8463, 0.0
        %8495 = vadd.xlane.f32.xlu0 %v8494
        %v8496 = vpop.xlane.xlu0 %8495
        %v8497 = vsel %vm3115, %v8465, 0.0
        %8498 = vadd.xlane.f32.xlu0 %v8497
        %v8499 = vpop.xlane.xlu0 %8498
        %v8500 = vsel %vm3115, %v8467, 0.0
        %8501 = vadd.xlane.f32.xlu0 %v8500
        %v8502 = vpop.xlane.xlu0 %8501
        %v8503 = vsel %vm3115, %v8469, 0.0
        %8504 = vadd.xlane.f32.xlu0 %v8503
        %v8505 = vpop.xlane.xlu0 %8504
        %v8506 = vsel %vm3115, %v8471, 0.0
        %8507 = vadd.xlane.f32.xlu0 %v8506
        %v8508 = vpop.xlane.xlu0 %8507
        %v8509 = vsel %vm3115, %v8473, 0.0
        %8510 = vadd.xlane.f32.xlu0 %v8509
        %v8511 = vpop.xlane.xlu0 %8510
        %v8512 = vsel %vm3115, %v8475, 0.0
        %8513 = vadd.xlane.f32.xlu0 %v8512
        %v8514 = vpop.xlane.xlu0 %8513
        %v8515 = vsel %vm3115, %v8477, 0.0
        %8516 = vadd.xlane.f32.xlu0 %v8515
        %v8517 = vpop.xlane.xlu0 %8516
        %v8518 = vsel %vm3115, %v8479, 0.0
        %8519 = vadd.xlane.f32.xlu0 %v8518
        %v8520 = vpop.xlane.xlu0 %8519
        %v8521 = vsel %vm3115, %v8481, 0.0
        %8522 = vadd.xlane.f32.xlu0 %v8521
        %v8523 = vpop.xlane.xlu0 %8522
        %v8524 = vsel %vm3115, %v8483, 0.0
        %8525 = vadd.xlane.f32.xlu0 %v8524
        %v8526 = vpop.xlane.xlu0 %8525
        %v8527 = vsel %vm3115, %v8485, 0.0
        %8528 = vadd.xlane.f32.xlu0 %v8527
        %v8529 = vpop.xlane.xlu0 %8528
        %v8530 = vsel %vm3115, %v8487, 0.0
        %8531 = vadd.xlane.f32.xlu0 %v8530
        %v8532 = vpop.xlane.xlu0 %8531
        %v8533 = vsel %vm3115, %v8489, 0.0
        %8534 = vadd.xlane.f32.xlu0 %v8533
        %v8535 = vpop.xlane.xlu0 %8534
        %v8536 = vsel %vm3115, %v8491, 0.0
        %8537 = vadd.xlane.f32.xlu0 %v8536
        %v8538 = vpop.xlane.xlu0 %8537
        %v8539 = vsel %vm3115, %v8493, 0.0
        %8540 = vadd.xlane.f32.xlu0 %v8539
        %v8541 = vpop.xlane.xlu0 %8540
        %v8542 = vrcp.pop %v8496
        %v8543 = vrcp.pop %v8499
        %v8544 = vrcp.pop %v8502
        %v8545 = vrcp.pop %v8505
        %v8546 = vrcp.pop %v8508
        %v8547 = vrcp.pop %v8511
        %v8548 = vrcp.pop %v8514
        %v8549 = vrcp.pop %v8517
        %v8550 = vrcp.pop %v8520
        %v8551 = vrcp.pop %v8523
        %v8552 = vrcp.pop %v8526
        %v8553 = vrcp.pop %v8529
        %v8554 = vrcp.pop %v8532
        %v8555 = vrcp.pop %v8535
        %v8556 = vrcp.pop %v8538
        %v8557 = vrcp.pop %v8541
        %v8558 = vmul.f32 %v8463, %v8542
        %v8559 = vmul.f32 %v8465, %v8543
        %v8560 = vmul.f32 %v8467, %v8544
        %v8561 = vmul.f32 %v8469, %v8545
        %v8562 = vmul.f32 %v8471, %v8546
        %v8563 = vmul.f32 %v8473, %v8547
        %v8564 = vmul.f32 %v8475, %v8548
        %v8565 = vmul.f32 %v8477, %v8549
        %v8566 = vmul.f32 %v8479, %v8550
        %v8567 = vmul.f32 %v8481, %v8551
        %v8568 = vmul.f32 %v8483, %v8552
        %v8569 = vmul.f32 %v8485, %v8553
        %v8570 = vmul.f32 %v8487, %v8554
        %v8571 = vmul.f32 %v8489, %v8555
        %v8572 = vmul.f32 %v8491, %v8556
        %v8573 = vmul.f32 %v8493, %v8557
        %v8574 = vpack.c.bf16 %v8559, %v8558
        %v8575 = vpack.c.bf16 %v8561, %v8560
        %v8576 = vpack.c.bf16 %v8563, %v8562
        %v8577 = vpack.c.bf16 %v8565, %v8564
        %v8578 = vpack.c.bf16 %v8567, %v8566
        %v8579 = vpack.c.bf16 %v8569, %v8568
        %v8580 = vpack.c.bf16 %v8571, %v8570
        %v8581 = vpack.c.bf16 %v8573, %v8572
        %8584 = vrot.lane.b32.xlu0 %v2813, 64
        %v8585 = vpop.permute.xlu0 %8584
        %8586 = vrot.lane.b32.xlu0 %v2816, 64
        %v8587 = vpop.permute.xlu0 %8586
        %v8591 = vsel %vm3115, %v8574, 0
        %v8594 = vsel %vm3115, %v8575, 0
        %8596 = vmatprep.subr.bf16.mxu0 0
        %8597 = vmatpush1.bf16.msra.mxu0 %v8585
        %8598 = vmatprep.subr.bf16.mxu0 0
        %8599 = vmatpush1.bf16.msra.mxu0 %v8587
        %8600 = vmatprep.subr.bf16.mxu0 0
        %8601 = vmatpush1.bf16.msra.mxu0 0
        %8602 = vmatprep.subr.bf16.mxu0 0
        %8603 = vmatpush1.bf16.msra.mxu0 0
        %8604 = vmatprep.subr.bf16.mxu0 0
        %8605 = vmatpush1.bf16.msra.mxu0 0
        %8606 = vmatprep.subr.bf16.mxu0 0
        %8607 = vmatpush1.bf16.msra.mxu0 0
        %8608 = vmatprep.subr.bf16.mxu0 0
        %8609 = vmatpush1.bf16.msra.mxu0 0
        %8610 = vmatprep.subr.bf16.mxu0 0
        %8611 = vmatpush1.bf16.msra.mxu0 0
        %8612 = vmatprep.subr.bf16.mxu0 0
        %8613 = vmatpush1.bf16.msra.mxu0 0
        %8614 = vmatprep.subr.bf16.mxu0 0
        %8615 = vmatpush1.bf16.msra.mxu0 0
        %8616 = vmatprep.subr.bf16.mxu0 0
        %8617 = vmatpush1.bf16.msra.mxu0 0
        %8618 = vmatprep.subr.bf16.mxu0 0
        %8619 = vmatpush1.bf16.msra.mxu0 0
        %8620 = vmatprep.subr.bf16.mxu0 0
        %8621 = vmatpush1.bf16.msra.mxu0 0
        %8622 = vmatprep.subr.bf16.mxu0 0
        %8623 = vmatpush1.bf16.msra.mxu0 0
        %8624 = vmatprep.subr.bf16.mxu0 0
        %8625 = vmatpush1.bf16.msra.mxu0 0
        %8626 = vmatprep.subr.bf16.mxu0 0
        %8627 = vmatpush1.bf16.msra.mxu0 0
        %8628 = vmatprep.mubr.bf16.mxu0 0
        %8629 = vmatmul.mubr.bf16.gmra.mrb[0].mxu0 %v8591
        %v8630 = vpop.f32.mrb[0].mxu0
        %v8631 = vadd.f32 0.0, %v8630
        %v8632 = vpop.f32.mrb[0].mxu0
        %v8633 = vpop.f32.mrb[0].mxu0
        %v8634 = vadd.f32 0.0, %v8633
        %v8635 = vpop.f32.mrb[0].mxu0
        %8636 = vmatprep.mubr.bf16.mxu0 0
        %8637 = vmatmul.mubr.bf16.gmra.mrb[0].mxu0 %v8594
        %v8638 = vpop.f32.mrb[0].mxu0
        %v8639 = vadd.f32 0.0, %v8638
        %v8640 = vpop.f32.mrb[0].mxu0
        %v8641 = vpop.f32.mrb[0].mxu0
        %v8642 = vadd.f32 0.0, %v8641
        %v8643 = vpop.f32.mrb[0].mxu0
        %8644 = vdwg.mxu0
        %8647 = vrot.lane.b32.xlu0 %v2819, 64
        %v8648 = vpop.permute.xlu0 %8647
        %8649 = vrot.lane.b32.xlu0 %v2822, 64
        %v8650 = vpop.permute.xlu0 %8649
        %v8654 = vsel %vm3115, %v8576, 0
        %v8657 = vsel %vm3115, %v8577, 0
        %8659 = vmatprep.subr.bf16.mxu0 0
        %8660 = vmatpush1.bf16.msra.mxu0 %v8648
        %8661 = vmatprep.subr.bf16.mxu0 0
        %8662 = vmatpush1.bf16.msra.mxu0 %v8650
        %8663 = vmatprep.subr.bf16.mxu0 0
        %8664 = vmatpush1.bf16.msra.mxu0 0
        %8665 = vmatprep.subr.bf16.mxu0 0
        %8666 = vmatpush1.bf16.msra.mxu0 0
        %8667 = vmatprep.subr.bf16.mxu0 0
        %8668 = vmatpush1.bf16.msra.mxu0 0
        %8669 = vmatprep.subr.bf16.mxu0 0
        %8670 = vmatpush1.bf16.msra.mxu0 0
        %8671 = vmatprep.subr.bf16.mxu0 0
        %8672 = vmatpush1.bf16.msra.mxu0 0
        %8673 = vmatprep.subr.bf16.mxu0 0
        %8674 = vmatpush1.bf16.msra.mxu0 0
        %8675 = vmatprep.subr.bf16.mxu0 0
        %8676 = vmatpush1.bf16.msra.mxu0 0
        %8677 = vmatprep.subr.bf16.mxu0 0
        %8678 = vmatpush1.bf16.msra.mxu0 0
        %8679 = vmatprep.subr.bf16.mxu0 0
        %8680 = vmatpush1.bf16.msra.mxu0 0
        %8681 = vmatprep.subr.bf16.mxu0 0
        %8682 = vmatpush1.bf16.msra.mxu0 0
        %8683 = vmatprep.subr.bf16.mxu0 0
        %8684 = vmatpush1.bf16.msra.mxu0 0
        %8685 = vmatprep.subr.bf16.mxu0 0
        %8686 = vmatpush1.bf16.msra.mxu0 0
        %8687 = vmatprep.subr.bf16.mxu0 0
        %8688 = vmatpush1.bf16.msra.mxu0 0
        %8689 = vmatprep.subr.bf16.mxu0 0
        %8690 = vmatpush1.bf16.msra.mxu0 0
        %8691 = vmatprep.mubr.bf16.mxu0 0
        %8692 = vmatmul.mubr.bf16.gmra.mrb[0].mxu0 %v8654
        %v8693 = vpop.f32.mrb[0].mxu0
        %v8694 = vadd.f32 0.0, %v8693
        %v8695 = vpop.f32.mrb[0].mxu0
        %v8696 = vpop.f32.mrb[0].mxu0
        %v8697 = vadd.f32 0.0, %v8696
        %v8698 = vpop.f32.mrb[0].mxu0
        %8699 = vmatprep.mubr.bf16.mxu0 0
        %8700 = vmatmul.mubr.bf16.gmra.mrb[0].mxu0 %v8657
        %v8701 = vpop.f32.mrb[0].mxu0
        %v8702 = vadd.f32 0.0, %v8701
        %v8703 = vpop.f32.mrb[0].mxu0
        %v8704 = vpop.f32.mrb[0].mxu0
        %v8705 = vadd.f32 0.0, %v8704
        %v8706 = vpop.f32.mrb[0].mxu0
        %8707 = vdwg.mxu0
        %8710 = vrot.lane.b32.xlu0 %v2825, 64
        %v8711 = vpop.permute.xlu0 %8710
        %8712 = vrot.lane.b32.xlu0 %v2828, 64
        %v8713 = vpop.permute.xlu0 %8712
        %v8717 = vsel %vm3115, %v8578, 0
        %v8720 = vsel %vm3115, %v8579, 0
        %8722 = vmatprep.subr.bf16.mxu0 0
        %8723 = vmatpush1.bf16.msra.mxu0 %v8711
        %8724 = vmatprep.subr.bf16.mxu0 0
        %8725 = vmatpush1.bf16.msra.mxu0 %v8713
        %8726 = vmatprep.subr.bf16.mxu0 0
        %8727 = vmatpush1.bf16.msra.mxu0 0
        %8728 = vmatprep.subr.bf16.mxu0 0
        %8729 = vmatpush1.bf16.msra.mxu0 0
        %8730 = vmatprep.subr.bf16.mxu0 0
        %8731 = vmatpush1.bf16.msra.mxu0 0
        %8732 = vmatprep.subr.bf16.mxu0 0
        %8733 = vmatpush1.bf16.msra.mxu0 0
        %8734 = vmatprep.subr.bf16.mxu0 0
        %8735 = vmatpush1.bf16.msra.mxu0 0
        %8736 = vmatprep.subr.bf16.mxu0 0
        %8737 = vmatpush1.bf16.msra.mxu0 0
        %8738 = vmatprep.subr.bf16.mxu0 0
        %8739 = vmatpush1.bf16.msra.mxu0 0
        %8740 = vmatprep.subr.bf16.mxu0 0
        %8741 = vmatpush1.bf16.msra.mxu0 0
        %8742 = vmatprep.subr.bf16.mxu0 0
        %8743 = vmatpush1.bf16.msra.mxu0 0
        %8744 = vmatprep.subr.bf16.mxu0 0
        %8745 = vmatpush1.bf16.msra.mxu0 0
        %8746 = vmatprep.subr.bf16.mxu0 0
        %8747 = vmatpush1.bf16.msra.mxu0 0
        %8748 = vmatprep.subr.bf16.mxu0 0
        %8749 = vmatpush1.bf16.msra.mxu0 0
        %8750 = vmatprep.subr.bf16.mxu0 0
        %8751 = vmatpush1.bf16.msra.mxu0 0
        %8752 = vmatprep.subr.bf16.mxu0 0
        %8753 = vmatpush1.bf16.msra.mxu0 0
        %8754 = vmatprep.mubr.bf16.mxu0 0
        %8755 = vmatmul.mubr.bf16.gmra.mrb[0].mxu0 %v8717
        %v8756 = vpop.f32.mrb[0].mxu0
        %v8757 = vadd.f32 0.0, %v8756
        %v8758 = vpop.f32.mrb[0].mxu0
        %v8759 = vpop.f32.mrb[0].mxu0
        %v8760 = vadd.f32 0.0, %v8759
        %v8761 = vpop.f32.mrb[0].mxu0
        %8762 = vmatprep.mubr.bf16.mxu0 0
        %8763 = vmatmul.mubr.bf16.gmra.mrb[0].mxu0 %v8720
        %v8764 = vpop.f32.mrb[0].mxu0
        %v8765 = vadd.f32 0.0, %v8764
        %v8766 = vpop.f32.mrb[0].mxu0
        %v8767 = vpop.f32.mrb[0].mxu0
        %v8768 = vadd.f32 0.0, %v8767
        %v8769 = vpop.f32.mrb[0].mxu0
        %8770 = vdwg.mxu0
        %8773 = vrot.lane.b32.xlu0 %v2831, 64
        %v8774 = vpop.permute.xlu0 %8773
        %8775 = vrot.lane.b32.xlu0 %v2834, 64
        %v8776 = vpop.permute.xlu0 %8775
        %v8780 = vsel %vm3115, %v8580, 0
        %v8783 = vsel %vm3115, %v8581, 0
        %8785 = vmatprep.subr.bf16.mxu0 0
        %8786 = vmatpush1.bf16.msra.mxu0 %v8774
        %8787 = vmatprep.subr.bf16.mxu0 0
        %8788 = vmatpush1.bf16.msra.mxu0 %v8776
        %8789 = vmatprep.subr.bf16.mxu0 0
        %8790 = vmatpush1.bf16.msra.mxu0 0
        %8791 = vmatprep.subr.bf16.mxu0 0
        %8792 = vmatpush1.bf16.msra.mxu0 0
        %8793 = vmatprep.subr.bf16.mxu0 0
        %8794 = vmatpush1.bf16.msra.mxu0 0
        %8795 = vmatprep.subr.bf16.mxu0 0
        %8796 = vmatpush1.bf16.msra.mxu0 0
        %8797 = vmatprep.subr.bf16.mxu0 0
        %8798 = vmatpush1.bf16.msra.mxu0 0
        %8799 = vmatprep.subr.bf16.mxu0 0
        %8800 = vmatpush1.bf16.msra.mxu0 0
        %8801 = vmatprep.subr.bf16.mxu0 0
        %8802 = vmatpush1.bf16.msra.mxu0 0
        %8803 = vmatprep.subr.bf16.mxu0 0
        %8804 = vmatpush1.bf16.msra.mxu0 0
        %8805 = vmatprep.subr.bf16.mxu0 0
        %8806 = vmatpush1.bf16.msra.mxu0 0
        %8807 = vmatprep.subr.bf16.mxu0 0
        %8808 = vmatpush1.bf16.msra.mxu0 0
        %8809 = vmatprep.subr.bf16.mxu0 0
        %8810 = vmatpush1.bf16.msra.mxu0 0
        %8811 = vmatprep.subr.bf16.mxu0 0
        %8812 = vmatpush1.bf16.msra.mxu0 0
        %8813 = vmatprep.subr.bf16.mxu0 0
        %8814 = vmatpush1.bf16.msra.mxu0 0
        %8815 = vmatprep.subr.bf16.mxu0 0
        %8816 = vmatpush1.bf16.msra.mxu0 0
        %8817 = vmatprep.mubr.bf16.mxu0 0
        %8818 = vmatmul.mubr.bf16.gmra.mrb[0].mxu0 %v8780
        %v8819 = vpop.f32.mrb[0].mxu0
        %v8820 = vadd.f32 0.0, %v8819
        %v8821 = vpop.f32.mrb[0].mxu0
        %v8822 = vpop.f32.mrb[0].mxu0
        %v8823 = vadd.f32 0.0, %v8822
        %v8824 = vpop.f32.mrb[0].mxu0
        %8825 = vmatprep.mubr.bf16.mxu0 0
        %8826 = vmatmul.mubr.bf16.gmra.mrb[0].mxu0 %v8783
        %v8827 = vpop.f32.mrb[0].mxu0
        %v8828 = vadd.f32 0.0, %v8827
        %v8829 = vpop.f32.mrb[0].mxu0
        %v8830 = vpop.f32.mrb[0].mxu0
        %v8831 = vadd.f32 0.0, %v8830
        %v8832 = vpop.f32.mrb[0].mxu0
        %8833 = vdwg.mxu0
        %v8834 = vld [vmem:[#allocation7 + $0x1e0] sm:$0xff]
        %v8835 = vld [vmem:[#allocation7 + $0x1e8] sm:$0xf]
        %v8836 = vld [vmem:[#allocation7 + $0x1ec] sm:$0xff]
        %v8837 = vld [vmem:[#allocation7 + $0x1f4] sm:$0xf]
        %v8838 = vld [vmem:[#allocation7 + $0x1f8] sm:$0xff]
        %v8839 = vld [vmem:[#allocation7 + $0x200] sm:$0xf]
        %v8840 = vld [vmem:[#allocation7 + $0x204] sm:$0xff]
        %v8841 = vld [vmem:[#allocation7 + $0x20c] sm:$0xf]
        %v8842 = vld [vmem:[#allocation7 + $0x210] sm:$0xff]
        %v8843 = vld [vmem:[#allocation7 + $0x218] sm:$0xf]
        %v8844 = vld [vmem:[#allocation7 + $0x21c] sm:$0xff]
        %v8845 = vld [vmem:[#allocation7 + $0x224] sm:$0xf]
        %v8846 = vld [vmem:[#allocation7 + $0x228] sm:$0xff]
        %v8847 = vld [vmem:[#allocation7 + $0x230] sm:$0xf]
        %v8848 = vld [vmem:[#allocation7 + $0x234] sm:$0xff]
        %v8849 = vld [vmem:[#allocation7 + $0x23c] sm:$0xf]
        %v8850 = vpack.c.bf16 %v8634, %v8631
        %v8851 = vpack.c.bf16 %v8642, %v8639
        %v8852 = vpack.c.bf16 %v8697, %v8694
        %v8853 = vpack.c.bf16 %v8705, %v8702
        %v8854 = vpack.c.bf16 %v8760, %v8757
        %v8855 = vpack.c.bf16 %v8768, %v8765
        %v8856 = vpack.c.bf16 %v8823, %v8820
        %v8857 = vpack.c.bf16 %v8831, %v8828
        %v8874 = vunpack.c.l.b16 %v8834
        %v8875 = vunpack.c.h.b16 %v8834
        %v8876 = vunpack.c.l.b16 %v8835
        %v8877 = vunpack.c.l.b16 %v8836
        %v8878 = vunpack.c.h.b16 %v8836
        %v8879 = vunpack.c.l.b16 %v8837
        %v8880 = vunpack.c.l.b16 %v8838
        %v8881 = vunpack.c.h.b16 %v8838
        %v8882 = vunpack.c.l.b16 %v8839
        %v8883 = vunpack.c.l.b16 %v8840
        %v8884 = vunpack.c.h.b16 %v8840
        %v8885 = vunpack.c.l.b16 %v8841
        %v8886 = vunpack.c.l.b16 %v8842
        %v8887 = vunpack.c.h.b16 %v8842
        %v8888 = vunpack.c.l.b16 %v8843
        %v8889 = vunpack.c.l.b16 %v8844
        %v8890 = vunpack.c.h.b16 %v8844
        %v8891 = vunpack.c.l.b16 %v8845
        %v8892 = vunpack.c.l.b16 %v8846
        %v8893 = vunpack.c.h.b16 %v8846
        %v8894 = vunpack.c.l.b16 %v8847
        %v8895 = vunpack.c.l.b16 %v8848
        %v8896 = vunpack.c.h.b16 %v8848
        %v8897 = vunpack.c.l.b16 %v8849
        %v8898 = vpack.c.b16 %v8877, %v8874
        %v8899 = vpack.c.b16 %v8878, %v8875
        %v8900 = vpack.c.b16 %v8879, %v8876
        %v8901 = vpack.c.b16 %v8883, %v8880
        %v8902 = vpack.c.b16 %v8884, %v8881
        %v8903 = vpack.c.b16 %v8885, %v8882
        %v8904 = vpack.c.b16 %v8889, %v8886
        %v8905 = vpack.c.b16 %v8890, %v8887
        %v8906 = vpack.c.b16 %v8891, %v8888
        %v8907 = vpack.c.b16 %v8895, %v8892
        %v8908 = vpack.c.b16 %v8896, %v8893
        %v8909 = vpack.c.b16 %v8897, %v8894
        %v8923 = vsel %vm2846, %v8850, 0
        %v8926 = vsel %vm2846, %v8851, 0
        %v8929 = vsel %vm2846, %v8852, 0
        %v8932 = vsel %vm2846, %v8853, 0
        %v8935 = vsel %vm2846, %v8854, 0
        %v8938 = vsel %vm2846, %v8855, 0
        %v8941 = vsel %vm2846, %v8856, 0
        %v8944 = vsel %vm2846, %v8857, 0
        %8946 = vmatprep.subr.bf16.mxu0 %v8899
        %8947 = vmatpush1.bf16.msra.mxu0 %v8898
        %8948 = vmatprep.subr.bf16.mxu0 %v8902
        %8949 = vmatpush1.bf16.msra.mxu0 %v8901
        %8950 = vmatprep.subr.bf16.mxu0 %v8905
        %8951 = vmatpush1.bf16.msra.mxu0 %v8904
        %8952 = vmatprep.subr.bf16.mxu0 %v8908
        %8953 = vmatpush1.bf16.msra.mxu0 %v8907
        %8954 = vmatprep.subr.bf16.mxu0 0
        %8955 = vmatpush1.bf16.msra.mxu0 0
        %8956 = vmatprep.subr.bf16.mxu0 0
        %8957 = vmatpush1.bf16.msra.mxu0 0
        %8958 = vmatprep.subr.bf16.mxu0 0
        %8959 = vmatpush1.bf16.msra.mxu0 0
        %8960 = vmatprep.subr.bf16.mxu0 0
        %8961 = vmatpush1.bf16.msra.mxu0 0
        %8962 = vmatprep.subr.bf16.mxu0 0
        %8963 = vmatpush1.bf16.msra.mxu0 0
        %8964 = vmatprep.subr.bf16.mxu0 0
        %8965 = vmatpush1.bf16.msra.mxu0 0
        %8966 = vmatprep.subr.bf16.mxu0 0
        %8967 = vmatpush1.bf16.msra.mxu0 0
        %8968 = vmatprep.subr.bf16.mxu0 0
        %8969 = vmatpush1.bf16.msra.mxu0 0
        %8970 = vmatprep.subr.bf16.mxu0 0
        %8971 = vmatpush1.bf16.msra.mxu0 0
        %8972 = vmatprep.subr.bf16.mxu0 0
        %8973 = vmatpush1.bf16.msra.mxu0 0
        %8974 = vmatprep.subr.bf16.mxu0 0
        %8975 = vmatpush1.bf16.msra.mxu0 0
        %8976 = vmatprep.subr.bf16.mxu0 0
        %8977 = vmatpush1.bf16.msra.mxu0 0
        %8978 = vmatprep.mubr.bf16.mxu0 0
        %8979 = vmatmul.mubr.bf16.gmra.mrb[0].mxu0 %v8923
        %v8980 = vpop.f32.mrb[0].mxu0
        %v8981 = vadd.f32 0.0, %v8980
        %v8982 = vpop.f32.mrb[0].mxu0
        %v8983 = vadd.f32 0.0, %v8982
        %v8984 = vpop.f32.mrb[0].mxu0
        %v8985 = vadd.f32 0.0, %v8984
        %v8986 = vpop.f32.mrb[0].mxu0
        %v8987 = vadd.f32 0.0, %v8986
        %8988 = vmatprep.mubr.bf16.mxu0 0
        %8989 = vmatmul.mubr.bf16.gmra.mrb[0].mxu0 %v8926
        %v8990 = vpop.f32.mrb[0].mxu0
        %v8991 = vadd.f32 0.0, %v8990
        %v8992 = vpop.f32.mrb[0].mxu0
        %v8993 = vadd.f32 0.0, %v8992
        %v8994 = vpop.f32.mrb[0].mxu0
        %v8995 = vadd.f32 0.0, %v8994
        %v8996 = vpop.f32.mrb[0].mxu0
        %v8997 = vadd.f32 0.0, %v8996
        %8998 = vmatprep.mubr.bf16.mxu0 0
        %8999 = vmatmul.mubr.bf16.gmra.mrb[0].mxu0 %v8929
        %v9000 = vpop.f32.mrb[0].mxu0
        %v9001 = vadd.f32 0.0, %v9000
        %v9002 = vpop.f32.mrb[0].mxu0
        %v9003 = vadd.f32 0.0, %v9002
        %v9004 = vpop.f32.mrb[0].mxu0
        %v9005 = vadd.f32 0.0, %v9004
        %v9006 = vpop.f32.mrb[0].mxu0
        %v9007 = vadd.f32 0.0, %v9006
        %9008 = vmatprep.mubr.bf16.mxu0 0
        %9009 = vmatmul.mubr.bf16.gmra.mrb[0].mxu0 %v8932
        %v9010 = vpop.f32.mrb[0].mxu0
        %v9011 = vadd.f32 0.0, %v9010
        %v9012 = vpop.f32.mrb[0].mxu0
        %v9013 = vadd.f32 0.0, %v9012
        %v9014 = vpop.f32.mrb[0].mxu0
        %v9015 = vadd.f32 0.0, %v9014
        %v9016 = vpop.f32.mrb[0].mxu0
        %v9017 = vadd.f32 0.0, %v9016
        %9018 = vmatprep.mubr.bf16.mxu0 0
        %9019 = vmatmul.mubr.bf16.gmra.mrb[0].mxu0 %v8935
        %v9020 = vpop.f32.mrb[0].mxu0
        %v9021 = vadd.f32 0.0, %v9020
        %v9022 = vpop.f32.mrb[0].mxu0
        %v9023 = vadd.f32 0.0, %v9022
        %v9024 = vpop.f32.mrb[0].mxu0
        %v9025 = vadd.f32 0.0, %v9024
        %v9026 = vpop.f32.mrb[0].mxu0
        %v9027 = vadd.f32 0.0, %v9026
        %9028 = vmatprep.mubr.bf16.mxu0 0
        %9029 = vmatmul.mubr.bf16.gmra.mrb[0].mxu0 %v8938
        %v9030 = vpop.f32.mrb[0].mxu0
        %v9031 = vadd.f32 0.0, %v9030
        %v9032 = vpop.f32.mrb[0].mxu0
        %v9033 = vadd.f32 0.0, %v9032
        %v9034 = vpop.f32.mrb[0].mxu0
        %v9035 = vadd.f32 0.0, %v9034
        %v9036 = vpop.f32.mrb[0].mxu0
        %v9037 = vadd.f32 0.0, %v9036
        %9038 = vmatprep.mubr.bf16.mxu0 0
        %9039 = vmatmul.mubr.bf16.gmra.mrb[0].mxu0 %v8941
        %v9040 = vpop.f32.mrb[0].mxu0
        %v9041 = vadd.f32 0.0, %v9040
        %v9042 = vpop.f32.mrb[0].mxu0
        %v9043 = vadd.f32 0.0, %v9042
        %v9044 = vpop.f32.mrb[0].mxu0
        %v9045 = vadd.f32 0.0, %v9044
        %v9046 = vpop.f32.mrb[0].mxu0
        %v9047 = vadd.f32 0.0, %v9046
        %9048 = vmatprep.mubr.bf16.mxu0 0
        %9049 = vmatmul.mubr.bf16.gmra.mrb[0].mxu0 %v8944
        %v9050 = vpop.f32.mrb[0].mxu0
        %v9051 = vadd.f32 0.0, %v9050
        %v9052 = vpop.f32.mrb[0].mxu0
        %v9053 = vadd.f32 0.0, %v9052
        %v9054 = vpop.f32.mrb[0].mxu0
        %v9055 = vadd.f32 0.0, %v9054
        %v9056 = vpop.f32.mrb[0].mxu0
        %v9057 = vadd.f32 0.0, %v9056
        %9058 = vdwg.mxu0
        %9059 = vmatprep.subr.bf16.mxu0 0
        %9060 = vmatpush1.bf16.msra.mxu0 %v8900
        %9061 = vmatprep.subr.bf16.mxu0 0
        %9062 = vmatpush1.bf16.msra.mxu0 %v8903
        %9063 = vmatprep.subr.bf16.mxu0 0
        %9064 = vmatpush1.bf16.msra.mxu0 %v8906
        %9065 = vmatprep.subr.bf16.mxu0 0
        %9066 = vmatpush1.bf16.msra.mxu0 %v8909
        %9067 = vmatprep.subr.bf16.mxu0 0
        %9068 = vmatpush1.bf16.msra.mxu0 0
        %9069 = vmatprep.subr.bf16.mxu0 0
        %9070 = vmatpush1.bf16.msra.mxu0 0
        %9071 = vmatprep.subr.bf16.mxu0 0
        %9072 = vmatpush1.bf16.msra.mxu0 0
        %9073 = vmatprep.subr.bf16.mxu0 0
        %9074 = vmatpush1.bf16.msra.mxu0 0
        %9075 = vmatprep.subr.bf16.mxu0 0
        %9076 = vmatpush1.bf16.msra.mxu0 0
        %9077 = vmatprep.subr.bf16.mxu0 0
        %9078 = vmatpush1.bf16.msra.mxu0 0
        %9079 = vmatprep.subr.bf16.mxu0 0
        %9080 = vmatpush1.bf16.msra.mxu0 0
        %9081 = vmatprep.subr.bf16.mxu0 0
        %9082 = vmatpush1.bf16.msra.mxu0 0
        %9083 = vmatprep.subr.bf16.mxu0 0
        %9084 = vmatpush1.bf16.msra.mxu0 0
        %9085 = vmatprep.subr.bf16.mxu0 0
        %9086 = vmatpush1.bf16.msra.mxu0 0
        %9087 = vmatprep.subr.bf16.mxu0 0
        %9088 = vmatpush1.bf16.msra.mxu0 0
        %9089 = vmatprep.subr.bf16.mxu0 0
        %9090 = vmatpush1.bf16.msra.mxu0 0
        %9091 = vmatprep.mubr.bf16.mxu0 0
        %9092 = vmatmul.mubr.bf16.gmra.mrb[0].mxu0 %v8923
        %v9093 = vpop.f32.mrb[0].mxu0
        %v9094 = vadd.f32 0.0, %v9093
        %v9095 = vpop.f32.mrb[0].mxu0
        %v9096 = vpop.f32.mrb[0].mxu0
        %v9097 = vadd.f32 0.0, %v9096
        %v9098 = vpop.f32.mrb[0].mxu0
        %9099 = vmatprep.mubr.bf16.mxu0 0
        %9100 = vmatmul.mubr.bf16.gmra.mrb[0].mxu0 %v8926
        %v9101 = vpop.f32.mrb[0].mxu0
        %v9102 = vadd.f32 0.0, %v9101
        %v9103 = vpop.f32.mrb[0].mxu0
        %v9104 = vpop.f32.mrb[0].mxu0
        %v9105 = vadd.f32 0.0, %v9104
        %v9106 = vpop.f32.mrb[0].mxu0
        %9107 = vmatprep.mubr.bf16.mxu0 0
        %9108 = vmatmul.mubr.bf16.gmra.mrb[0].mxu0 %v8929
        %v9109 = vpop.f32.mrb[0].mxu0
        %v9110 = vadd.f32 0.0, %v9109
        %v9111 = vpop.f32.mrb[0].mxu0
        %v9112 = vpop.f32.mrb[0].mxu0
        %v9113 = vadd.f32 0.0, %v9112
        %v9114 = vpop.f32.mrb[0].mxu0
        %9115 = vmatprep.mubr.bf16.mxu0 0
        %9116 = vmatmul.mubr.bf16.gmra.mrb[0].mxu0 %v8932
        %v9117 = vpop.f32.mrb[0].mxu0
        %v9118 = vadd.f32 0.0, %v9117
        %v9119 = vpop.f32.mrb[0].mxu0
        %v9120 = vpop.f32.mrb[0].mxu0
        %v9121 = vadd.f32 0.0, %v9120
        %v9122 = vpop.f32.mrb[0].mxu0
        %9123 = vmatprep.mubr.bf16.mxu0 0
        %9124 = vmatmul.mubr.bf16.gmra.mrb[0].mxu0 %v8935
        %v9125 = vpop.f32.mrb[0].mxu0
        %v9126 = vadd.f32 0.0, %v9125
        %v9127 = vpop.f32.mrb[0].mxu0
        %v9128 = vpop.f32.mrb[0].mxu0
        %v9129 = vadd.f32 0.0, %v9128
        %v9130 = vpop.f32.mrb[0].mxu0
        %9131 = vmatprep.mubr.bf16.mxu0 0
        %9132 = vmatmul.mubr.bf16.gmra.mrb[0].mxu0 %v8938
        %v9133 = vpop.f32.mrb[0].mxu0
        %v9134 = vadd.f32 0.0, %v9133
        %v9135 = vpop.f32.mrb[0].mxu0
        %v9136 = vpop.f32.mrb[0].mxu0
        %v9137 = vadd.f32 0.0, %v9136
        %v9138 = vpop.f32.mrb[0].mxu0
        %9139 = vmatprep.mubr.bf16.mxu0 0
        %9140 = vmatmul.mubr.bf16.gmra.mrb[0].mxu0 %v8941
        %v9141 = vpop.f32.mrb[0].mxu0
        %v9142 = vadd.f32 0.0, %v9141
        %v9143 = vpop.f32.mrb[0].mxu0
        %v9144 = vpop.f32.mrb[0].mxu0
        %v9145 = vadd.f32 0.0, %v9144
        %v9146 = vpop.f32.mrb[0].mxu0
        %9147 = vmatprep.mubr.bf16.mxu0 0
        %9148 = vmatmul.mubr.bf16.gmra.mrb[0].mxu0 %v8944
        %v9149 = vpop.f32.mrb[0].mxu0
        %v9150 = vadd.f32 0.0, %v9149
        %v9151 = vpop.f32.mrb[0].mxu0
        %v9152 = vpop.f32.mrb[0].mxu0
        %v9153 = vadd.f32 0.0, %v9152
        %v9154 = vpop.f32.mrb[0].mxu0
        %9155 = vdwg.mxu0
        %v9156 = vadd.f32 %v8042, %v8981
        %v9157 = vadd.f32 %v8043, %v8983
        %v9158 = vadd.f32 %v8044, %v9094
        %v9159 = vadd.f32 %v8045, %v8985
        %v9160 = vadd.f32 %v8046, %v8987
        %v9161 = vadd.f32 %v8047, %v9097
        %v9162 = vadd.f32 %v8048, %v8991
        %v9163 = vadd.f32 %v8049, %v8993
        %v9164 = vadd.f32 %v8050, %v9102
        %v9165 = vadd.f32 %v8051, %v8995
        %v9166 = vadd.f32 %v8052, %v8997
        %v9167 = vadd.f32 %v8053, %v9105
        %v9168 = vadd.f32 %v8054, %v9001
        %v9169 = vadd.f32 %v8055, %v9003
        %v9170 = vadd.f32 %v8056, %v9110
        %v9171 = vadd.f32 %v8057, %v9005
        %v9172 = vadd.f32 %v8058, %v9007
        %v9173 = vadd.f32 %v8059, %v9113
        %v9174 = vadd.f32 %v8060, %v9011
        %v9175 = vadd.f32 %v8061, %v9013
        %v9176 = vadd.f32 %v8062, %v9118
        %v9177 = vadd.f32 %v8063, %v9015
        %v9178 = vadd.f32 %v8064, %v9017
        %v9179 = vadd.f32 %v8065, %v9121
        %v9180 = vadd.f32 %v8066, %v9021
        %v9181 = vadd.f32 %v8067, %v9023
        %v9182 = vadd.f32 %v8068, %v9126
        %v9183 = vadd.f32 %v8069, %v9025
        %v9184 = vadd.f32 %v8070, %v9027
        %v9185 = vadd.f32 %v8071, %v9129
        %v9186 = vadd.f32 %v8072, %v9031
        %v9187 = vadd.f32 %v8073, %v9033
        %v9188 = vadd.f32 %v8074, %v9134
        %v9189 = vadd.f32 %v8075, %v9035
        %v9190 = vadd.f32 %v8076, %v9037
        %v9191 = vadd.f32 %v8077, %v9137
        %v9192 = vadd.f32 %v8078, %v9041
        %v9193 = vadd.f32 %v8079, %v9043
        %v9194 = vadd.f32 %v8080, %v9142
        %v9195 = vadd.f32 %v8081, %v9045
        %v9196 = vadd.f32 %v8082, %v9047
        %v9197 = vadd.f32 %v8083, %v9145
        %v9198 = vadd.f32 %v8084, %v9051
        %v9199 = vadd.f32 %v8085, %v9053
        %v9200 = vadd.f32 %v8086, %v9150
        %v9201 = vadd.f32 %v8087, %v9055
        %v9202 = vadd.f32 %v8088, %v9057
        %v9203 = vadd.f32 %v8089, %v9153
        %v9204 = vld [vmem:[%s3] sm:$0x7]
        %v9206 = vlaneseq
        %v9207 = vshrl.u32 %v9206, 7
        %v9208 = vsub.s32 0, %v9207
        %v9209 = vrot.slane %v9204, %v9208
        %v9210 = vlaneseq
        %v9211 = vshrl.u32 %v9210, 7
        %v9212 = vsub.s32 1, %v9211
        %v9213 = vrot.slane %v9204, %v9212
        %v9214 = vlaneseq
        %v9215 = vshrl.u32 %v9214, 7
        %v9216 = vsub.s32 2, %v9215
        %v9217 = vrot.slane %v9204, %v9216
        %v9221 = vadd.f32 %v9156, %v9209
        %v9222 = vadd.f32 %v9157, %v9213
        %v9223 = vadd.f32 %v9158, %v9217
        %v9224 = vadd.f32 %v9159, %v9209
        %v9225 = vadd.f32 %v9160, %v9213
        %v9226 = vadd.f32 %v9161, %v9217
        %v9227 = vadd.f32 %v9162, %v9209
        %v9228 = vadd.f32 %v9163, %v9213
        %v9229 = vadd.f32 %v9164, %v9217
        %v9230 = vadd.f32 %v9165, %v9209
        %v9231 = vadd.f32 %v9166, %v9213
        %v9232 = vadd.f32 %v9167, %v9217
        %v9233 = vadd.f32 %v9168, %v9209
        %v9234 = vadd.f32 %v9169, %v9213
        %v9235 = vadd.f32 %v9170, %v9217
        %v9236 = vadd.f32 %v9171, %v9209
        %v9237 = vadd.f32 %v9172, %v9213
        %v9238 = vadd.f32 %v9173, %v9217
        %v9239 = vadd.f32 %v9174, %v9209
        %v9240 = vadd.f32 %v9175, %v9213
        %v9241 = vadd.f32 %v9176, %v9217
        %v9242 = vadd.f32 %v9177, %v9209
        %v9243 = vadd.f32 %v9178, %v9213
        %v9244 = vadd.f32 %v9179, %v9217
        %v9245 = vadd.f32 %v9180, %v9209
        %v9246 = vadd.f32 %v9181, %v9213
        %v9247 = vadd.f32 %v9182, %v9217
        %v9248 = vadd.f32 %v9183, %v9209
        %v9249 = vadd.f32 %v9184, %v9213
        %v9250 = vadd.f32 %v9185, %v9217
        %v9251 = vadd.f32 %v9186, %v9209
        %v9252 = vadd.f32 %v9187, %v9213
        %v9253 = vadd.f32 %v9188, %v9217
        %v9254 = vadd.f32 %v9189, %v9209
        %v9255 = vadd.f32 %v9190, %v9213
        %v9256 = vadd.f32 %v9191, %v9217
        %v9257 = vadd.f32 %v9192, %v9209
        %v9258 = vadd.f32 %v9193, %v9213
        %v9259 = vadd.f32 %v9194, %v9217
        %v9260 = vadd.f32 %v9195, %v9209
        %v9261 = vadd.f32 %v9196, %v9213
        %v9262 = vadd.f32 %v9197, %v9217
        %v9263 = vadd.f32 %v9198, %v9209
        %v9264 = vadd.f32 %v9199, %v9213
        %v9265 = vadd.f32 %v9200, %v9217
        %v9266 = vadd.f32 %v9201, %v9209
        %v9267 = vadd.f32 %v9202, %v9213
        %v9268 = vadd.f32 %v9203, %v9217
        %v9269 = vpack.c.bf16 %v9224, %v9221
        %v9270 = vpack.c.bf16 %v9225, %v9222
        %v9271 = vpack.c.bf16 %v9226, %v9223
        %v9272 = vpack.c.bf16 %v9230, %v9227
        %v9273 = vpack.c.bf16 %v9231, %v9228
        %v9274 = vpack.c.bf16 %v9232, %v9229
        %v9275 = vpack.c.bf16 %v9236, %v9233
        %v9276 = vpack.c.bf16 %v9237, %v9234
        %v9277 = vpack.c.bf16 %v9238, %v9235
        %v9278 = vpack.c.bf16 %v9242, %v9239
        %v9279 = vpack.c.bf16 %v9243, %v9240
        %v9280 = vpack.c.bf16 %v9244, %v9241
        %v9281 = vpack.c.bf16 %v9248, %v9245
        %v9282 = vpack.c.bf16 %v9249, %v9246
        %v9283 = vpack.c.bf16 %v9250, %v9247
        %v9284 = vpack.c.bf16 %v9254, %v9251
        %v9285 = vpack.c.bf16 %v9255, %v9252
        %v9286 = vpack.c.bf16 %v9256, %v9253
        %v9287 = vpack.c.bf16 %v9260, %v9257
        %v9288 = vpack.c.bf16 %v9261, %v9258
        %v9289 = vpack.c.bf16 %v9262, %v9259
        %v9290 = vpack.c.bf16 %v9266, %v9263
        %v9291 = vpack.c.bf16 %v9267, %v9264
        %v9292 = vpack.c.bf16 %v9268, %v9265
        %v9317 = vunpack.c.l.b16 %v9269
        %v9318 = vunpack.c.l.b16 %v9270
        %v9319 = vunpack.c.l.b16 %v9271
        %v9320 = vunpack.c.h.b16 %v9269
        %v9321 = vunpack.c.h.b16 %v9270
        %v9322 = vunpack.c.h.b16 %v9271
        %v9323 = vunpack.c.l.b16 %v9272
        %v9324 = vunpack.c.l.b16 %v9273
        %v9325 = vunpack.c.l.b16 %v9274
        %v9326 = vunpack.c.h.b16 %v9272
        %v9327 = vunpack.c.h.b16 %v9273
        %v9328 = vunpack.c.h.b16 %v9274
        %v9329 = vunpack.c.l.b16 %v9275
        %v9330 = vunpack.c.l.b16 %v9276
        %v9331 = vunpack.c.l.b16 %v9277
        %v9332 = vunpack.c.h.b16 %v9275
        %v9333 = vunpack.c.h.b16 %v9276
        %v9334 = vunpack.c.h.b16 %v9277
        %v9335 = vunpack.c.l.b16 %v9278
        %v9336 = vunpack.c.l.b16 %v9279
        %v9337 = vunpack.c.l.b16 %v9280
        %v9338 = vunpack.c.h.b16 %v9278
        %v9339 = vunpack.c.h.b16 %v9279
        %v9340 = vunpack.c.h.b16 %v9280
        %v9341 = vunpack.c.l.b16 %v9281
        %v9342 = vunpack.c.l.b16 %v9282
        %v9343 = vunpack.c.l.b16 %v9283
        %v9344 = vunpack.c.h.b16 %v9281
        %v9345 = vunpack.c.h.b16 %v9282
        %v9346 = vunpack.c.h.b16 %v9283
        %v9347 = vunpack.c.l.b16 %v9284
        %v9348 = vunpack.c.l.b16 %v9285
        %v9349 = vunpack.c.l.b16 %v9286
        %v9350 = vunpack.c.h.b16 %v9284
        %v9351 = vunpack.c.h.b16 %v9285
        %v9352 = vunpack.c.h.b16 %v9286
        %v9353 = vunpack.c.l.b16 %v9287
        %v9354 = vunpack.c.l.b16 %v9288
        %v9355 = vunpack.c.l.b16 %v9289
        %v9356 = vunpack.c.h.b16 %v9287
        %v9357 = vunpack.c.h.b16 %v9288
        %v9358 = vunpack.c.h.b16 %v9289
        %v9359 = vunpack.c.l.b16 %v9290
        %v9360 = vunpack.c.l.b16 %v9291
        %v9361 = vunpack.c.l.b16 %v9292
        %v9362 = vunpack.c.h.b16 %v9290
        %v9363 = vunpack.c.h.b16 %v9291
        %v9364 = vunpack.c.h.b16 %v9292
        %v9365 = vpack.c.b16 %v9318, %v9317
        %v9366 = vpack.c.b16 %v9319, %v9319
        %v9367 = vpack.c.b16 %v9321, %v9320
        %v9368 = vpack.c.b16 %v9322, %v9322
        %v9369 = vpack.c.b16 %v9324, %v9323
        %v9370 = vpack.c.b16 %v9325, %v9325
        %v9371 = vpack.c.b16 %v9327, %v9326
        %v9372 = vpack.c.b16 %v9328, %v9328
        %v9373 = vpack.c.b16 %v9330, %v9329
        %v9374 = vpack.c.b16 %v9331, %v9331
        %v9375 = vpack.c.b16 %v9333, %v9332
        %v9376 = vpack.c.b16 %v9334, %v9334
        %v9377 = vpack.c.b16 %v9336, %v9335
        %v9378 = vpack.c.b16 %v9337, %v9337
        %v9379 = vpack.c.b16 %v9339, %v9338
        %v9380 = vpack.c.b16 %v9340, %v9340
        %v9381 = vpack.c.b16 %v9342, %v9341
        %v9382 = vpack.c.b16 %v9343, %v9343
        %v9383 = vpack.c.b16 %v9345, %v9344
        %v9384 = vpack.c.b16 %v9346, %v9346
        %v9385 = vpack.c.b16 %v9348, %v9347
        %v9386 = vpack.c.b16 %v9349, %v9349
        %v9387 = vpack.c.b16 %v9351, %v9350
        %v9388 = vpack.c.b16 %v9352, %v9352
        %v9389 = vpack.c.b16 %v9354, %v9353
        %v9390 = vpack.c.b16 %v9355, %v9355
        %v9391 = vpack.c.b16 %v9357, %v9356
        %v9392 = vpack.c.b16 %v9358, %v9358
        %v9393 = vpack.c.b16 %v9360, %v9359
        %v9394 = vpack.c.b16 %v9361, %v9361
        %v9395 = vpack.c.b16 %v9363, %v9362
        %v9396 = vpack.c.b16 %v9364, %v9364
        %9429 = vst [vmem:[%s245] sm:$0xff] %v9365
        %9430 = vst [vmem:[%s245 + $0x8] sm:$0xf] %v9366
        %9431 = vst [vmem:[%s245 + $0xc] sm:$0xff] %v9367
        %9432 = vst [vmem:[%s245 + $0x14] sm:$0xf] %v9368
        %9433 = vst [vmem:[%s245 + $0x18] sm:$0xff] %v9369
        %9434 = vst [vmem:[%s245 + $0x20] sm:$0xf] %v9370
        %9435 = vst [vmem:[%s245 + $0x24] sm:$0xff] %v9371
        %9436 = vst [vmem:[%s245 + $0x2c] sm:$0xf] %v9372
        %9437 = vst [vmem:[%s245 + $0x30] sm:$0xff] %v9373
        %9438 = vst [vmem:[%s245 + $0x38] sm:$0xf] %v9374
        %9439 = vst [vmem:[%s245 + $0x3c] sm:$0xff] %v9375
        %9440 = vst [vmem:[%s245 + $0x44] sm:$0xf] %v9376
        %9441 = vst [vmem:[%s245 + $0x48] sm:$0xff] %v9377
        %9442 = vst [vmem:[%s245 + $0x50] sm:$0xf] %v9378
        %9443 = vst [vmem:[%s245 + $0x54] sm:$0xff] %v9379
        %9444 = vst [vmem:[%s245 + $0x5c] sm:$0xf] %v9380
        %9445 = vst [vmem:[%s245 + $0x60] sm:$0xff] %v9381
        %9446 = vst [vmem:[%s245 + $0x68] sm:$0xf] %v9382
        %9447 = vst [vmem:[%s245 + $0x6c] sm:$0xff] %v9383
        %9448 = vst [vmem:[%s245 + $0x74] sm:$0xf] %v9384
        %9449 = vst [vmem:[%s245 + $0x78] sm:$0xff] %v9385
        %9450 = vst [vmem:[%s245 + $0x80] sm:$0xf] %v9386
        %9451 = vst [vmem:[%s245 + $0x84] sm:$0xff] %v9387
        %9452 = vst [vmem:[%s245 + $0x8c] sm:$0xf] %v9388
        %9453 = vst [vmem:[%s245 + $0x90] sm:$0xff] %v9389
        %9454 = vst [vmem:[%s245 + $0x98] sm:$0xf] %v9390
        %9455 = vst [vmem:[%s245 + $0x9c] sm:$0xff] %v9391
        %9456 = vst [vmem:[%s245 + $0xa4] sm:$0xf] %v9392
        %9457 = vst [vmem:[%s245 + $0xa8] sm:$0xff] %v9393
        %9458 = vst [vmem:[%s245 + $0xb0] sm:$0xf] %v9394
        %9459 = vst [vmem:[%s245 + $0xb4] sm:$0xff] %v9395
        %9460 = vst [vmem:[%s245 + $0xbc] sm:$0xf] %v9396
        %s9461 = sand.u32 %s119, 1
        %s9462 = scalar_lea.sflag [#allocation4], %s9461
        %s9463 = sand.u32 %s119, 1
        %s9464 = smul.addr %s9463, 192
        %s9465 = scalar_lea.vmem [#allocation8], %s9464
        // Predicated region
        $region49: #{multi_head_forward.1} parent=35 // pred_check
          %p9466 = pneg %p129
        $region50: #{multi_head_forward.1} parent=35 // pred_check_branch
          %9468 = sbr.rel (%p9466) target = $region52
        $region51: #{multi_head_forward.1} parent=35 // pred_region
          %s9469 = smul.u32 4, %s22
          %s9471 = ssub.s32 3072, 3072
          %9472 = vsyncadd %s9462, %s9471
          %s9473 = smul.addr %s9469, 12
          %s9474 = smul.addr %s9473, 64
          %s9475 = scalar_lea.hbm %s4, %s9474
          %s9476 = sshll.u32 %s9465, 4
          %s9477 = int_to_ptr.vmem [resolvable:$true] %s9476
          %9482 = dma.vmem_to_hbm [thread:$0]  %s9477, 3072, %s9475, %s9462, 192, 192, 12
        $region52: #{multi_head_forward.1} parent=35 // pred_fallthru
          _
      $region36: #{multi_head_forward.1} parent=5 // pred_fallthru
        _
      %p9483 = scmp.le.s32.totalorder 2, %s17
      // Predicated region
      $region53: #{multi_head_forward.1} parent=5 // pred_check
        %p9484 = pneg %p9483
      $region54: #{multi_head_forward.1} parent=5 // pred_check_branch
        %9486 = sbr.rel (%p9484) target = $region56
      $region55: #{multi_head_forward.1} parent=5 // pred_region
        %s9487 = ssub.s32 %s17, 2
        // Predicated region
        $region57: #{multi_head_forward.1} parent=55 // pred_check
          %p9488 = pneg %p135
        $region58: #{multi_head_forward.1} parent=55 // pred_check_branch
          %9490 = sbr.rel (%p9488) target = $region60
        $region59: #{multi_head_forward.1} parent=55 // pred_region
          %s9491 = sand.u32 %s120, 1
          %s9492 = scalar_lea.sflag [#allocation4], %s9491
          %s9493 = sand.u32 %s120, 1
          %s9494 = smul.addr %s9493, 192
          %s9495 = scalar_lea.vmem [#allocation8], %s9494
          %9496 = dma.done %s9492, 3072
        $region60: #{multi_head_forward.1} parent=55 // pred_fallthru
          _
      $region56: #{multi_head_forward.1} parent=5 // pred_fallthru
        _
    $region6: #{multi_head_forward.1} parent=1 // loop_footer
      %s21 = sadd.s32 1, %s17
    $region7: #{multi_head_forward.1} parent=1 // loop_footer_branch
      %16 = sbr.rel target = $region3
    $region8: #{multi_head_forward.1} parent=1 // loop_exit
      _
    %9497 = vsyncpa [#allocation3], 1
    %s9498 = scalar_lea.sflag [#allocation3], 1
    %9499 = vsyncpa %s9498, 1
    %9500 = vsyncpa [#allocation6], 1
    %9501 = vsyncpa [#allocation4], 1
    %s9502 = scalar_lea.sflag [#allocation4], 1
    %9503 = vsyncpa %s9502, 1

</llo_original>
